<compile_context>
chip_gen: v6e
topology: v6e:2x2x1
jax: 0.10.0
libtpu: 0.0.40
codegen_flags: <defaults>
</compile_context>

<pallas_src>
import functools

import jax
import jax.numpy as jnp
from jax.experimental import pallas as pl
from jax.experimental.pallas import tpu as pltpu

BN_EPS = 1e-5
LANE = 128
VMEM_LIMIT_BYTES = 32 * 1024 * 1024       # safe on v5e/v6e/v7x
_PATCH_TILE_BYTES = 4 * 1024 * 1024       # cap for one bf16 (tm, K) patch tile


def _round_up(x, m):
    return (x + m - 1) // m * m


def _tpu_generation():
    try:
        kind = jax.devices()[0].device_kind.lower()
    except Exception:
        return 6
    if "7" in kind:
        return 7
    if "v5" in kind:
        return 5
    if "v6" in kind:
        return 6
    return 6


_GEN = _tpu_generation()
# v5e/v6e: 128 MiB VMEM -> large M tiles (fewer grid steps).
# v7x: 64 MiB VMEM, 2 TensorCores -> cap at 512 and prefer >=2 parallel tiles.
TILE_M_CAP = 512 if _GEN >= 7 else 1024


def _choose_m_tiling(Mp, K):
    """Mp is a multiple of 8. Returns (tm, Mfull) with tm | Mfull, tm % 8 == 0
    and a double-buffered bf16 (tm, K) patch tile comfortably inside VMEM."""
    vmem_cap = max(8, (_PATCH_TILE_BYTES // max(2 * K, 1)) // 8 * 8)
    cap = max(8, min(TILE_M_CAP, vmem_cap))
    if Mp <= cap:
        tm = Mp
        if _GEN >= 7 and Mp >= 256 and Mp % 16 == 0:
            tm = Mp // 2          # give the second v7x TensorCore work
        return tm, Mp
    tm = cap
    return tm, _round_up(Mp, tm)


# ----------------------------------------------------------------------------
# Pallas kernels
# ----------------------------------------------------------------------------
def _fused_matmul_kernel(p_ref, w_ref, sc_ref, sh_ref, o_ref, *, act):
    """One (tm, K) @ (K, Np) MXU matmul (full K resident in VMEM) followed by
    per-output-channel affine + activation. f32 epilogue, single final cast."""
    acc = jnp.dot(p_ref[...], w_ref[...], preferred_element_type=jnp.float32)
    acc = acc * sc_ref[...] + sh_ref[...]
    if act == "relu":
        acc = jnp.maximum(acc, 0.0)
    elif act == "lrelu":
        acc = jnp.where(acc > 0.0, acc, 0.2 * acc)
    o_ref[...] = acc.astype(o_ref.dtype)


def fused_matmul(patches, m_valid, weight, scale, shift, act,
                 out_dtype=jnp.bfloat16):
    """patches: (Mp, Kp) bf16, rows >= m_valid, extra K columns already zero.
    weight: (K, N) with K <= Kp.  Grid is a single 'parallel' M axis; the full
    weight / scale / shift blocks stay resident across all M tiles."""
    Mp, Kp = patches.shape
    K, N = weight.shape
    Np = _round_up(N, LANE)

    tm, Mfull = _choose_m_tiling(Mp, Kp)
    if Mfull != Mp:                                # only for very large M
        patches = jnp.pad(patches, ((0, Mfull - Mp), (0, 0)))

    w = jnp.pad(weight.astype(jnp.bfloat16), ((0, Kp - K), (0, Np - N)))
    sc = jnp.pad(scale.astype(jnp.float32), (0, Np - N)).reshape(1, Np)
    sh = jnp.pad(shift.astype(jnp.float32), (0, Np - N)).reshape(1, Np)

    kern = functools.partial(_fused_matmul_kernel, act=act)
    out = pl.pallas_call(
        kern,
        out_shape=jax.ShapeDtypeStruct((Mfull, Np), out_dtype),
        grid=(Mfull // tm,),
        in_specs=[
            pl.BlockSpec((tm, Kp), lambda i: (i, 0)),
            pl.BlockSpec((Kp, Np), lambda i: (0, 0)),
            pl.BlockSpec((1, Np), lambda i: (0, 0)),
            pl.BlockSpec((1, Np), lambda i: (0, 0)),
        ],
        out_specs=pl.BlockSpec((tm, Np), lambda i: (i, 0)),
        compiler_params=pltpu.CompilerParams(
            dimension_semantics=("parallel",),
            vmem_limit_bytes=VMEM_LIMIT_BYTES,
        ),
    )(patches, w, sc, sh)
    return out[:m_valid, :N]


def _softmax_depth_kernel(s_ref, dc_ref, w_ref, dm_ref):
    """Softmax over depth + depth-map reduction.

    s_ref : (B, D, T) raw scores      w_ref : (B, D, T) softmax weights
    dc_ref: (1, D, 1) depth coords    dm_ref: (B, T) sum_d coord[d]*weight[d]
    """
    s = s_ref[...]
    m = jnp.max(s, axis=1, keepdims=True)
    e = jnp.exp(s - m)
    denom = jnp.sum(e, axis=1, keepdims=True)
    r = pl.reciprocal(denom, approx=True)
    r = r * (2.0 - denom * r)          # one Newton step -> near-exact 1/denom
    w = e * r
    w_ref[...] = w
    dm_ref[...] = jnp.sum(w * dc_ref[...], axis=1)


def softmax_depth(scores, depth_vals):
    """scores: (B, D, HW) f32. Block dims equal the full array dims when HW is
    not lane-aligned, so no pad copy of the scores volume is needed."""
    B, D, HW = scores.shape
    t = HW
    if HW % LANE == 0:
        for cand in (2048, 1024, 512, 256, 128):
            if HW % cand == 0:
                t = cand
                break
    scores = scores.astype(jnp.float32)
    dc = depth_vals.reshape(1, D, 1).astype(jnp.float32)
    w, dm = pl.pallas_call(
        _softmax_depth_kernel,
        out_shape=(
            jax.ShapeDtypeStruct((B, D, HW), jnp.float32),
            jax.ShapeDtypeStruct((B, HW), jnp.float32),
        ),
        grid=(HW // t,),
        in_specs=[
            pl.BlockSpec((B, D, t), lambda i: (0, 0, i)),
            pl.BlockSpec((1, D, 1), lambda i: (0, 0, 0)),
        ],
        out_specs=(
            pl.BlockSpec((B, D, t), lambda i: (0, 0, i)),
            pl.BlockSpec((B, t), lambda i: (0, i)),
        ),
        compiler_params=pltpu.CompilerParams(
            dimension_semantics=("parallel",),
            vmem_limit_bytes=VMEM_LIMIT_BYTES,
        ),
    )(scores, dc)
    return w, dm


# ----------------------------------------------------------------------------
# Conv building blocks (im2col glue in JAX, compute in the fused Pallas kernel)
# ----------------------------------------------------------------------------
def _im2col(xp, k, stride, k_pad_to):
    """Padded (B, Dp, Hp, Wp, C) volume -> patch matrix (M8, Kp) bf16.

    Single concatenate builds the patch matrix with the K zero-padding folded
    in (no second full-HBM pad pass).  Column order: flat(kd,kh,kw) * C + c.
    """
    B, Dp, Hp, Wp, C = xp.shape
    Do = (Dp - k) // stride + 1
    Ho = (Hp - k) // stride + 1
    Wo = (Wp - k) // stride + 1
    M = B * Do * Ho * Wo
    cols = []
    for kd in range(k):
        for kh in range(k):
            for kw in range(k):
                s = xp[:,
                       kd:kd + (Do - 1) * stride + 1:stride,
                       kh:kh + (Ho - 1) * stride + 1:stride,
                       kw:kw + (Wo - 1) * stride + 1:stride, :]
                cols.append(s.reshape(M, C))
    K = k * k * k * C
    Kp = max(k_pad_to, K)
    if Kp > K:
        cols.append(jnp.zeros((M, Kp - K), xp.dtype))
    p = jnp.concatenate(cols, axis=1)              # (M, Kp) in one pass
    M8 = _round_up(M, 8)
    if M8 != M:                                    # only for tiny volumes
        p = jnp.pad(p, ((0, M8 - M), (0, 0)))
    return p, (B, Do, Ho, Wo), M


def conv3d_block(x, w, scale, shift, act, *, k, stride=1, pad=0,
                 pad_mode="edge", out_dtype=jnp.bfloat16):
    """Cross-correlation Conv3d + folded bias/BN + activation.

    x: (B, D, H, W, Cin), w: (k, k, k, Cin, Cout)
    """
    if pad > 0:
        x = jnp.pad(x, ((0, 0), (pad, pad), (pad, pad), (pad, pad), (0, 0)),
                    mode=pad_mode)
    x = x.astype(jnp.bfloat16)
    cin = x.shape[-1]
    cout = w.shape[-1]
    K = k * k * k * cin
    Kp = _round_up(K, LANE)
    patches, (B, Do, Ho, Wo), M = _im2col(x, k, stride, Kp)
    out = fused_matmul(patches, M, w.reshape(K, cout), scale, shift, act,
                       out_dtype=out_dtype)
    return out.reshape(B, Do, Ho, Wo, cout)


def _upconv_weight_3x3(w):
    """(4,4,4,Cin,Cout) transpose-conv weight -> zero-stuffed subpixel weight
    (3,3,3,Cin,8*Cout); output channel = (pd*4+ph*2+pw)*Cout + c."""
    cin, cout = w.shape[3], w.shape[4]
    phases = []
    for pd in range(2):
        for ph in range(2):
            for pw in range(2):
                sub = w[pd::2, ph::2, pw::2]              # (2,2,2,cin,cout)
                sub = jnp.pad(sub, ((pd, 1 - pd), (ph, 1 - ph), (pw, 1 - pw),
                                    (0, 0), (0, 0)))      # -> (3,3,3,cin,cout)
                phases.append(sub)
    w3 = jnp.stack(phases, axis=4)                        # (3,3,3,cin,8,cout)
    return w3.reshape(3, 3, 3, cin, 8 * cout)


def upconv3d_block(x, w, scale, shift, act, out_dtype=jnp.bfloat16):
    """ConvTranspose3d(k=4, s=2, p=1) as ONE fused matmul: shared k=3 zero-pad
    im2col + zero-stuffed (3,3,3,Cin,8*Cout) subpixel weight (N = 8*Cout, up to
    fully lane-dense), then a single even/odd interleave reshape."""
    B, D, H, W, _ = x.shape
    cout = w.shape[-1]
    w3 = _upconv_weight_3x3(w)
    sc8 = jnp.tile(scale, 8)
    sh8 = jnp.tile(shift, 8)
    out = conv3d_block(x, w3, sc8, sh8, act, k=3, stride=1, pad=1,
                       pad_mode="constant", out_dtype=out_dtype)
    y = out.reshape(B, D, H, W, 2, 2, 2, cout)
    y = jnp.transpose(y, (0, 1, 4, 2, 5, 3, 6, 7))  # (B, D, pd, H, ph, W, pw, C)
    return y.reshape(B, 2 * D, 2 * H, 2 * W, cout)


# ----------------------------------------------------------------------------
# Deterministic parameter construction (mirrors OcclusionNet.__init__ shapes)
# ----------------------------------------------------------------------------
def _num_div2(n):
    c = 0
    while n % 2 == 0 and n > 1:
        n //= 2
        c += 1
    return c


def build_params(key, nf0, occnet_nf, side, depth):
    C = occnet_nf
    maxc = 4 * C
    num_down = min(_num_div2(depth), _num_div2(side))
    keys = iter(jax.random.split(key, 64))

    def conv_w(k, cin, cout):
        fan_in = k * k * k * cin
        return jax.random.normal(next(keys), (k, k, k, cin, cout),
                                 jnp.float32) / jnp.sqrt(float(fan_in))

    def bn_affine(c):
        gamma = jnp.ones((c,), jnp.float32)
        beta = jnp.zeros((c,), jnp.float32)
        # eval-mode BN with running_mean=0, running_var=1
        return gamma / jnp.sqrt(1.0 + BN_EPS), beta

    def bias_affine(c):
        b = jax.random.normal(next(keys), (c,), jnp.float32) * 0.01
        return jnp.ones((c,), jnp.float32), b

    params = {
        "depth_vals": jnp.arange(-(depth // 2), depth // 2,
                                 dtype=jnp.float32) / float(depth)
    }

    s, sh = bn_affine(C)
    params["prep"] = dict(w=conv_w(3, nf0 + 1, C), scale=s, shift=sh)
    s, sh = bn_affine(C)
    params["unet_in"] = dict(w=conv_w(3, C, C), scale=s, shift=sh)

    # UnetSkipConnectionBlock3d channel plan (outermost -> innermost)
    specs = [(min(2 ** i * C, maxc), min(2 ** (i + 1) * C, maxc), True)
             for i in range(num_down - 1)]
    specs.append((min(2 ** (num_down - 1) * C, maxc),
                  min(2 ** (num_down - 1) * C, maxc), False))

    levels = []
    for idx, (outer, inner, has_norm) in enumerate(specs):
        innermost = idx == len(specs) - 1
        up_in = inner if innermost else 2 * inner
        lvl = dict(down_w=conv_w(4, outer, inner), up_w=conv_w(4, up_in, outer))
        lvl["down_scale"], lvl["down_shift"] = (bn_affine(inner) if has_norm
                                                else bias_affine(inner))
        lvl["up_scale"], lvl["up_shift"] = (bn_affine(outer) if has_norm
                                            else bias_affine(outer))
        levels.append(lvl)
    params["levels"] = levels

    s, sh = bn_affine(C)
    params["unet_out"] = dict(w=conv_w(3, 2 * C, C), scale=s, shift=sh)
    sc, b = bias_affine(1)
    params["sm"] = dict(w=conv_w(3, 2 * C + 1, 1), scale=sc, shift=b)
    return params


# ----------------------------------------------------------------------------
# Forward pass (matches OcclusionNet.forward)
# ----------------------------------------------------------------------------
def occlusion_net_forward(params, x_ncdhw):
    B, nf0, D, H, W = x_ncdhw.shape
    x = jnp.transpose(x_ncdhw, (0, 2, 3, 4, 1)).astype(jnp.bfloat16)
    dvals = params["depth_vals"]                 # (D,) f32
    dc = jnp.broadcast_to(dvals.astype(jnp.bfloat16)[None, :, None, None, None],
                          (B, D, H, W, 1))

    # torch.cat((depth_coords, novel_img_frustrum), dim=1)
    feats = jnp.concatenate([dc, x], axis=-1)

    # occlusion_prep: Conv3dSame(nf0+1 -> C, k3, no bias) + BN + ReLU
    op = conv3d_block(feats, params["prep"]["w"], params["prep"]["scale"],
                      params["prep"]["shift"], act="relu", k=3, pad=1)

    # Unet3d
    u_in = conv3d_block(op, params["unet_in"]["w"], params["unet_in"]["scale"],
                        params["unet_in"]["shift"], act="lrelu", k=3, pad=1)

    def run_level(z, idx):
        lvl = params["levels"][idx]
        d = conv3d_block(z, lvl["down_w"], lvl["down_scale"], lvl["down_shift"],
                         act="lrelu", k=4, stride=2, pad=1)
        mid = run_level(d, idx + 1) if idx + 1 < len(params["levels"]) else d
        u = upconv3d_block(mid, lvl["up_w"], lvl["up_scale"], lvl["up_shift"],
                           act="relu")
        return jnp.concatenate([z, u], axis=-1)  # skip concat

    unet_mid = run_level(u_in, 0)
    frustrum_feats = conv3d_block(unet_mid, params["unet_out"]["w"],
                                  params["unet_out"]["scale"],
                                  params["unet_out"]["shift"],
                                  act="relu", k=3, pad=1)

    # softmax_net: Conv3dSame(2C+1 -> 1, bias) then Softmax over depth (dim=2)
    sm_in = jnp.concatenate([op, frustrum_feats, dc], axis=-1)
    scores = conv3d_block(sm_in, params["sm"]["w"], params["sm"]["scale"],
                          params["sm"]["shift"], act="none", k=3, pad=1,
                          out_dtype=jnp.float32)
    scores2 = scores[..., 0].reshape(B, D, H * W)

    w, dm = softmax_depth(scores2, dvals)

    frustrum_weights = w.reshape(B, D, H, W)[:, None]  # (B, 1, D, H, W) NCDHW
    depth_map = dm.reshape(B, H, W)[:, None]           # (B, 1, H, W)
    return frustrum_weights, depth_map


# ----------------------------------------------------------------------------
if __name__ == "__main__":
    B, nf0, occnet_nf = 1, 4, 4          # PyTorch forward requires batch=1
    side, depth = 8, 8                   # frustrum_dims = (side, side, depth)

    key = jax.random.PRNGKey(0)
    pkey, xkey = jax.random.split(key)
    params = build_params(pkey, nf0, occnet_nf, side, depth)
    novel_img_frustrum = jax.random.normal(
        xkey, (B, nf0, depth, side, side), jnp.float32)

    fwd = jax.jit(occlusion_net_forward)
    frustrum_weights, depth_map = fwd(params, novel_img_frustrum)
    jax.block_until_ready((frustrum_weights, depth_map))

    assert frustrum_weights.shape == (B, 1, depth, side, side)
    assert depth_map.shape == (B, 1, side, side)
    # softmax along depth sums to 1 (f32 softmax + Newton-refined reciprocal)
    assert jnp.allclose(frustrum_weights.sum(axis=2), 1.0, atol=1e-3)
    assert bool(jnp.all(jnp.isfinite(depth_map)))
    print("KERNEL_OK")
</pallas_src>

<mosaic_0001>
module attributes {stable_mosaic.version = 11 : i64} {
  func.func @_fused_matmul_kernel(%arg0: i32, %arg1: memref<512x256xbf16, #tpu.memory_space<vmem>>, %arg2: memref<256x128xbf16, #tpu.memory_space<vmem>>, %arg3: memref<1x128xf32, #tpu.memory_space<vmem>>, %arg4: memref<1x128xf32, #tpu.memory_space<vmem>>, %arg5: memref<512x128xbf16, #tpu.memory_space<vmem>>) attributes {dimension_semantics = [#tpu.dimension_semantics<parallel>], iteration_bounds = array<i64: 1>, scalar_prefetch = 0 : i64, scratch_operands = 0 : i64, tpu.core_type = #tpu.core_type<tc>, window_params = [{transform_indices = @transform_0, window_bounds = array<i64: 512, 256>}, {pipeline_mode = #tpu.pipeline_mode<synchronous>, transform_indices = @transform_1, window_bounds = array<i64: 256, 128>}, {pipeline_mode = #tpu.pipeline_mode<synchronous>, transform_indices = @transform_2, window_bounds = array<i64: 1, 128>}, {pipeline_mode = #tpu.pipeline_mode<synchronous>, transform_indices = @transform_3, window_bounds = array<i64: 1, 128>}, {transform_indices = @transform_4, window_bounds = array<i64: 512, 128>}]} {
    %c0 = arith.constant 0 : index
    %c0_0 = arith.constant 0 : index
    %0 = vector.load %arg1[%c0, %c0_0] : memref<512x256xbf16, #tpu.memory_space<vmem>>, vector<512x256xbf16>
    %c0_1 = arith.constant 0 : index
    %c0_2 = arith.constant 0 : index
    %1 = vector.load %arg2[%c0_1, %c0_2] : memref<256x128xbf16, #tpu.memory_space<vmem>>, vector<256x128xbf16>
    %cst = arith.constant dense<0.000000e+00> : vector<512x128xf32>
    %2 = tpu.matmul %0, %1, %cst {dimension_numbers = #tpu.dot_dimension_numbers<[1], [0], [0], [1], [0, 0, 1, 1], [], []>} : vector<512x256xbf16>, vector<256x128xbf16>, vector<512x128xf32> -> vector<512x128xf32>
    %c0_3 = arith.constant 0 : index
    %c0_4 = arith.constant 0 : index
    %3 = vector.load %arg3[%c0_3, %c0_4] : memref<1x128xf32, #tpu.memory_space<vmem>>, vector<1x128xf32>
    %4 = vector.broadcast %3 : vector<1x128xf32> to vector<512x128xf32>
    %5 = arith.mulf %2, %4 : vector<512x128xf32>
    %c0_5 = arith.constant 0 : index
    %c0_6 = arith.constant 0 : index
    %6 = vector.load %arg4[%c0_5, %c0_6] : memref<1x128xf32, #tpu.memory_space<vmem>>, vector<1x128xf32>
    %7 = vector.broadcast %6 : vector<1x128xf32> to vector<512x128xf32>
    %8 = arith.addf %5, %7 : vector<512x128xf32>
    %cst_7 = arith.constant 0.000000e+00 : f32
    %9 = vector.broadcast %cst_7 : f32 to vector<512x128xf32>
    %10 = arith.maximumf %8, %9 : vector<512x128xf32>
    %11 = arith.truncf %10 : vector<512x128xf32> to vector<512x128xbf16>
    %c0_8 = arith.constant 0 : index
    %c0_9 = arith.constant 0 : index
    %12 = vector.load %arg5[%c0_8, %c0_9] : memref<512x128xbf16, #tpu.memory_space<vmem>>, vector<512x128xbf16>
    tpu.vector_store %arg5[%c0_8, %c0_9], %11 {strides = array<i32>} : memref<512x128xbf16, #tpu.memory_space<vmem>>, vector<512x128xbf16>,
    return
  }
  func.func @transform_0(%arg0: i32) -> (i32, i32) {
    %c0_i32 = arith.constant 0 : i32
    %c0_i32_0 = arith.constant 0 : i32
    return %arg0, %c0_i32 : i32, i32
  }
  func.func @transform_1(%arg0: i32) -> (i32, i32) {
    %c0_i32 = arith.constant 0 : i32
    %c0_i32_0 = arith.constant 0 : i32
    %c0_i32_1 = arith.constant 0 : i32
    return %c0_i32, %c0_i32_0 : i32, i32
  }
  func.func @transform_2(%arg0: i32) -> (i32, i32) {
    %c0_i32 = arith.constant 0 : i32
    %c0_i32_0 = arith.constant 0 : i32
    %c0_i32_1 = arith.constant 0 : i32
    return %c0_i32, %c0_i32_0 : i32, i32
  }
  func.func @transform_3(%arg0: i32) -> (i32, i32) {
    %c0_i32 = arith.constant 0 : i32
    %c0_i32_0 = arith.constant 0 : i32
    %c0_i32_1 = arith.constant 0 : i32
    return %c0_i32, %c0_i32_0 : i32, i32
  }
  func.func @transform_4(%arg0: i32) -> (i32, i32) {
    %c0_i32 = arith.constant 0 : i32
    %c0_i32_0 = arith.constant 0 : i32
    return %arg0, %c0_i32 : i32, i32
  }
}

module attributes {stable_mosaic.version = 11 : i64} {
  func.func @_fused_matmul_kernel(%arg0: i32, %arg1: memref<512x128xbf16, #tpu.memory_space<vmem>>, %arg2: memref<128x128xbf16, #tpu.memory_space<vmem>>, %arg3: memref<1x128xf32, #tpu.memory_space<vmem>>, %arg4: memref<1x128xf32, #tpu.memory_space<vmem>>, %arg5: memref<512x128xbf16, #tpu.memory_space<vmem>>) attributes {dimension_semantics = [#tpu.dimension_semantics<parallel>], iteration_bounds = array<i64: 1>, scalar_prefetch = 0 : i64, scratch_operands = 0 : i64, tpu.core_type = #tpu.core_type<tc>, window_params = [{transform_indices = @transform_0, window_bounds = array<i64: 512, 128>}, {pipeline_mode = #tpu.pipeline_mode<synchronous>, transform_indices = @transform_1, window_bounds = array<i64: 128, 128>}, {pipeline_mode = #tpu.pipeline_mode<synchronous>, transform_indices = @transform_2, window_bounds = array<i64: 1, 128>}, {pipeline_mode = #tpu.pipeline_mode<synchronous>, transform_indices = @transform_3, window_bounds = array<i64: 1, 128>}, {transform_indices = @transform_4, window_bounds = array<i64: 512, 128>}]} {
    %c0 = arith.constant 0 : index
    %c0_0 = arith.constant 0 : index
    %0 = vector.load %arg1[%c0, %c0_0] : memref<512x128xbf16, #tpu.memory_space<vmem>>, vector<512x128xbf16>
    %c0_1 = arith.constant 0 : index
    %c0_2 = arith.constant 0 : index
    %1 = vector.load %arg2[%c0_1, %c0_2] : memref<128x128xbf16, #tpu.memory_space<vmem>>, vector<128x128xbf16>
    %cst = arith.constant dense<0.000000e+00> : vector<512x128xf32>
    %2 = tpu.matmul %0, %1, %cst {dimension_numbers = #tpu.dot_dimension_numbers<[1], [0], [0], [1], [0, 0, 1, 1], [], []>} : vector<512x128xbf16>, vector<128x128xbf16>, vector<512x128xf32> -> vector<512x128xf32>
    %c0_3 = arith.constant 0 : index
    %c0_4 = arith.constant 0 : index
    %3 = vector.load %arg3[%c0_3, %c0_4] : memref<1x128xf32, #tpu.memory_space<vmem>>, vector<1x128xf32>
    %4 = vector.broadcast %3 : vector<1x128xf32> to vector<512x128xf32>
    %5 = arith.mulf %2, %4 : vector<512x128xf32>
    %c0_5 = arith.constant 0 : index
    %c0_6 = arith.constant 0 : index
    %6 = vector.load %arg4[%c0_5, %c0_6] : memref<1x128xf32, #tpu.memory_space<vmem>>, vector<1x128xf32>
    %7 = vector.broadcast %6 : vector<1x128xf32> to vector<512x128xf32>
    %8 = arith.addf %5, %7 : vector<512x128xf32>
    %cst_7 = arith.constant 0.000000e+00 : f32
    %9 = vector.broadcast %cst_7 : f32 to vector<512x128xf32>
    %10 = arith.cmpf ogt, %8, %9 : vector<512x128xf32>
    %cst_8 = arith.constant 2.000000e-01 : f32
    %11 = vector.broadcast %cst_8 : f32 to vector<512x128xf32>
    %12 = arith.mulf %11, %8 : vector<512x128xf32>
    %13 = arith.select %10, %8, %12 : vector<512x128xi1>, vector<512x128xf32>
    %14 = arith.truncf %13 : vector<512x128xf32> to vector<512x128xbf16>
    %c0_9 = arith.constant 0 : index
    %c0_10 = arith.constant 0 : index
    %15 = vector.load %arg5[%c0_9, %c0_10] : memref<512x128xbf16, #tpu.memory_space<vmem>>, vector<512x128xbf16>
    tpu.vector_store %arg5[%c0_9, %c0_10], %14 {strides = array<i32>} : memref<512x128xbf16, #tpu.memory_space<vmem>>, vector<512x128xbf16>,
    return
  }
  func.func @transform_0(%arg0: i32) -> (i32, i32) {
    %c0_i32 = arith.constant 0 : i32
    %c0_i32_0 = arith.constant 0 : i32
    return %arg0, %c0_i32 : i32, i32
  }
  func.func @transform_1(%arg0: i32) -> (i32, i32) {
    %c0_i32 = arith.constant 0 : i32
    %c0_i32_0 = arith.constant 0 : i32
    %c0_i32_1 = arith.constant 0 : i32
    return %c0_i32, %c0_i32_0 : i32, i32
  }
  func.func @transform_2(%arg0: i32) -> (i32, i32) {
    %c0_i32 = arith.constant 0 : i32
    %c0_i32_0 = arith.constant 0 : i32
    %c0_i32_1 = arith.constant 0 : i32
    return %c0_i32, %c0_i32_0 : i32, i32
  }
  func.func @transform_3(%arg0: i32) -> (i32, i32) {
    %c0_i32 = arith.constant 0 : i32
    %c0_i32_0 = arith.constant 0 : i32
    %c0_i32_1 = arith.constant 0 : i32
    return %c0_i32, %c0_i32_0 : i32, i32
  }
  func.func @transform_4(%arg0: i32) -> (i32, i32) {
    %c0_i32 = arith.constant 0 : i32
    %c0_i32_0 = arith.constant 0 : i32
    return %arg0, %c0_i32 : i32, i32
  }
}

module attributes {stable_mosaic.version = 11 : i64} {
  func.func @_fused_matmul_kernel(%arg0: i32, %arg1: memref<64x256xbf16, #tpu.memory_space<vmem>>, %arg2: memref<256x128xbf16, #tpu.memory_space<vmem>>, %arg3: memref<1x128xf32, #tpu.memory_space<vmem>>, %arg4: memref<1x128xf32, #tpu.memory_space<vmem>>, %arg5: memref<64x128xbf16, #tpu.memory_space<vmem>>) attributes {dimension_semantics = [#tpu.dimension_semantics<parallel>], iteration_bounds = array<i64: 1>, scalar_prefetch = 0 : i64, scratch_operands = 0 : i64, tpu.core_type = #tpu.core_type<tc>, window_params = [{transform_indices = @transform_0, window_bounds = array<i64: 64, 256>}, {pipeline_mode = #tpu.pipeline_mode<synchronous>, transform_indices = @transform_1, window_bounds = array<i64: 256, 128>}, {pipeline_mode = #tpu.pipeline_mode<synchronous>, transform_indices = @transform_2, window_bounds = array<i64: 1, 128>}, {pipeline_mode = #tpu.pipeline_mode<synchronous>, transform_indices = @transform_3, window_bounds = array<i64: 1, 128>}, {transform_indices = @transform_4, window_bounds = array<i64: 64, 128>}]} {
    %c0 = arith.constant 0 : index
    %c0_0 = arith.constant 0 : index
    %0 = vector.load %arg1[%c0, %c0_0] : memref<64x256xbf16, #tpu.memory_space<vmem>>, vector<64x256xbf16>
    %c0_1 = arith.constant 0 : index
    %c0_2 = arith.constant 0 : index
    %1 = vector.load %arg2[%c0_1, %c0_2] : memref<256x128xbf16, #tpu.memory_space<vmem>>, vector<256x128xbf16>
    %cst = arith.constant dense<0.000000e+00> : vector<64x128xf32>
    %2 = tpu.matmul %0, %1, %cst {dimension_numbers = #tpu.dot_dimension_numbers<[1], [0], [0], [1], [0, 0, 1, 1], [], []>} : vector<64x256xbf16>, vector<256x128xbf16>, vector<64x128xf32> -> vector<64x128xf32>
    %c0_3 = arith.constant 0 : index
    %c0_4 = arith.constant 0 : index
    %3 = vector.load %arg3[%c0_3, %c0_4] : memref<1x128xf32, #tpu.memory_space<vmem>>, vector<1x128xf32>
    %4 = vector.broadcast %3 : vector<1x128xf32> to vector<64x128xf32>
    %5 = arith.mulf %2, %4 : vector<64x128xf32>
    %c0_5 = arith.constant 0 : index
    %c0_6 = arith.constant 0 : index
    %6 = vector.load %arg4[%c0_5, %c0_6] : memref<1x128xf32, #tpu.memory_space<vmem>>, vector<1x128xf32>
    %7 = vector.broadcast %6 : vector<1x128xf32> to vector<64x128xf32>
    %8 = arith.addf %5, %7 : vector<64x128xf32>
    %cst_7 = arith.constant 0.000000e+00 : f32
    %9 = vector.broadcast %cst_7 : f32 to vector<64x128xf32>
    %10 = arith.cmpf ogt, %8, %9 : vector<64x128xf32>
    %cst_8 = arith.constant 2.000000e-01 : f32
    %11 = vector.broadcast %cst_8 : f32 to vector<64x128xf32>
    %12 = arith.mulf %11, %8 : vector<64x128xf32>
    %13 = arith.select %10, %8, %12 : vector<64x128xi1>, vector<64x128xf32>
    %14 = arith.truncf %13 : vector<64x128xf32> to vector<64x128xbf16>
    %c0_9 = arith.constant 0 : index
    %c0_10 = arith.constant 0 : index
    %15 = vector.load %arg5[%c0_9, %c0_10] : memref<64x128xbf16, #tpu.memory_space<vmem>>, vector<64x128xbf16>
    tpu.vector_store %arg5[%c0_9, %c0_10], %14 {strides = array<i32>} : memref<64x128xbf16, #tpu.memory_space<vmem>>, vector<64x128xbf16>,
    return
  }
  func.func @transform_0(%arg0: i32) -> (i32, i32) {
    %c0_i32 = arith.constant 0 : i32
    %c0_i32_0 = arith.constant 0 : i32
    return %arg0, %c0_i32 : i32, i32
  }
  func.func @transform_1(%arg0: i32) -> (i32, i32) {
    %c0_i32 = arith.constant 0 : i32
    %c0_i32_0 = arith.constant 0 : i32
    %c0_i32_1 = arith.constant 0 : i32
    return %c0_i32, %c0_i32_0 : i32, i32
  }
  func.func @transform_2(%arg0: i32) -> (i32, i32) {
    %c0_i32 = arith.constant 0 : i32
    %c0_i32_0 = arith.constant 0 : i32
    %c0_i32_1 = arith.constant 0 : i32
    return %c0_i32, %c0_i32_0 : i32, i32
  }
  func.func @transform_3(%arg0: i32) -> (i32, i32) {
    %c0_i32 = arith.constant 0 : i32
    %c0_i32_0 = arith.constant 0 : i32
    %c0_i32_1 = arith.constant 0 : i32
    return %c0_i32, %c0_i32_0 : i32, i32
  }
  func.func @transform_4(%arg0: i32) -> (i32, i32) {
    %c0_i32 = arith.constant 0 : i32
    %c0_i32_0 = arith.constant 0 : i32
    return %arg0, %c0_i32 : i32, i32
  }
}

module attributes {stable_mosaic.version = 11 : i64} {
  func.func @_fused_matmul_kernel(%arg0: i32, %arg1: memref<8x512xbf16, #tpu.memory_space<vmem>>, %arg2: memref<512x128xbf16, #tpu.memory_space<vmem>>, %arg3: memref<1x128xf32, #tpu.memory_space<vmem>>, %arg4: memref<1x128xf32, #tpu.memory_space<vmem>>, %arg5: memref<8x128xbf16, #tpu.memory_space<vmem>>) attributes {dimension_semantics = [#tpu.dimension_semantics<parallel>], iteration_bounds = array<i64: 1>, scalar_prefetch = 0 : i64, scratch_operands = 0 : i64, tpu.core_type = #tpu.core_type<tc>, window_params = [{transform_indices = @transform_0, window_bounds = array<i64: 8, 512>}, {pipeline_mode = #tpu.pipeline_mode<synchronous>, transform_indices = @transform_1, window_bounds = array<i64: 512, 128>}, {pipeline_mode = #tpu.pipeline_mode<synchronous>, transform_indices = @transform_2, window_bounds = array<i64: 1, 128>}, {pipeline_mode = #tpu.pipeline_mode<synchronous>, transform_indices = @transform_3, window_bounds = array<i64: 1, 128>}, {transform_indices = @transform_4, window_bounds = array<i64: 8, 128>}]} {
    %c0 = arith.constant 0 : index
    %c0_0 = arith.constant 0 : index
    %0 = vector.load %arg1[%c0, %c0_0] : memref<8x512xbf16, #tpu.memory_space<vmem>>, vector<8x512xbf16>
    %c0_1 = arith.constant 0 : index
    %c0_2 = arith.constant 0 : index
    %1 = vector.load %arg2[%c0_1, %c0_2] : memref<512x128xbf16, #tpu.memory_space<vmem>>, vector<512x128xbf16>
    %cst = arith.constant dense<0.000000e+00> : vector<8x128xf32>
    %2 = tpu.matmul %0, %1, %cst {dimension_numbers = #tpu.dot_dimension_numbers<[1], [0], [0], [1], [0, 0, 1, 1], [], []>} : vector<8x512xbf16>, vector<512x128xbf16>, vector<8x128xf32> -> vector<8x128xf32>
    %c0_3 = arith.constant 0 : index
    %c0_4 = arith.constant 0 : index
    %3 = vector.load %arg3[%c0_3, %c0_4] : memref<1x128xf32, #tpu.memory_space<vmem>>, vector<1x128xf32>
    %4 = vector.broadcast %3 : vector<1x128xf32> to vector<8x128xf32>
    %5 = arith.mulf %2, %4 : vector<8x128xf32>
    %c0_5 = arith.constant 0 : index
    %c0_6 = arith.constant 0 : index
    %6 = vector.load %arg4[%c0_5, %c0_6] : memref<1x128xf32, #tpu.memory_space<vmem>>, vector<1x128xf32>
    %7 = vector.broadcast %6 : vector<1x128xf32> to vector<8x128xf32>
    %8 = arith.addf %5, %7 : vector<8x128xf32>
    %cst_7 = arith.constant 0.000000e+00 : f32
    %9 = vector.broadcast %cst_7 : f32 to vector<8x128xf32>
    %10 = arith.cmpf ogt, %8, %9 : vector<8x128xf32>
    %cst_8 = arith.constant 2.000000e-01 : f32
    %11 = vector.broadcast %cst_8 : f32 to vector<8x128xf32>
    %12 = arith.mulf %11, %8 : vector<8x128xf32>
    %13 = arith.select %10, %8, %12 : vector<8x128xi1>, vector<8x128xf32>
    %14 = arith.truncf %13 : vector<8x128xf32> to vector<8x128xbf16>
    %c0_9 = arith.constant 0 : index
    %c0_10 = arith.constant 0 : index
    %15 = vector.load %arg5[%c0_9, %c0_10] : memref<8x128xbf16, #tpu.memory_space<vmem>>, vector<8x128xbf16>
    tpu.vector_store %arg5[%c0_9, %c0_10], %14 {strides = array<i32>} : memref<8x128xbf16, #tpu.memory_space<vmem>>, vector<8x128xbf16>,
    return
  }
  func.func @transform_0(%arg0: i32) -> (i32, i32) {
    %c0_i32 = arith.constant 0 : i32
    %c0_i32_0 = arith.constant 0 : i32
    return %arg0, %c0_i32 : i32, i32
  }
  func.func @transform_1(%arg0: i32) -> (i32, i32) {
    %c0_i32 = arith.constant 0 : i32
    %c0_i32_0 = arith.constant 0 : i32
    %c0_i32_1 = arith.constant 0 : i32
    return %c0_i32, %c0_i32_0 : i32, i32
  }
  func.func @transform_2(%arg0: i32) -> (i32, i32) {
    %c0_i32 = arith.constant 0 : i32
    %c0_i32_0 = arith.constant 0 : i32
    %c0_i32_1 = arith.constant 0 : i32
    return %c0_i32, %c0_i32_0 : i32, i32
  }
  func.func @transform_3(%arg0: i32) -> (i32, i32) {
    %c0_i32 = arith.constant 0 : i32
    %c0_i32_0 = arith.constant 0 : i32
    %c0_i32_1 = arith.constant 0 : i32
    return %c0_i32, %c0_i32_0 : i32, i32
  }
  func.func @transform_4(%arg0: i32) -> (i32, i32) {
    %c0_i32 = arith.constant 0 : i32
    %c0_i32_0 = arith.constant 0 : i32
    return %arg0, %c0_i32 : i32, i32
  }
}

module attributes {stable_mosaic.version = 11 : i64} {
  func.func @_fused_matmul_kernel(%arg0: i32, %arg1: memref<8x1024xbf16, #tpu.memory_space<vmem>>, %arg2: memref<1024x128xbf16, #tpu.memory_space<vmem>>, %arg3: memref<1x128xf32, #tpu.memory_space<vmem>>, %arg4: memref<1x128xf32, #tpu.memory_space<vmem>>, %arg5: memref<8x128xbf16, #tpu.memory_space<vmem>>) attributes {dimension_semantics = [#tpu.dimension_semantics<parallel>], iteration_bounds = array<i64: 1>, scalar_prefetch = 0 : i64, scratch_operands = 0 : i64, tpu.core_type = #tpu.core_type<tc>, window_params = [{transform_indices = @transform_0, window_bounds = array<i64: 8, 1024>}, {pipeline_mode = #tpu.pipeline_mode<synchronous>, transform_indices = @transform_1, window_bounds = array<i64: 1024, 128>}, {pipeline_mode = #tpu.pipeline_mode<synchronous>, transform_indices = @transform_2, window_bounds = array<i64: 1, 128>}, {pipeline_mode = #tpu.pipeline_mode<synchronous>, transform_indices = @transform_3, window_bounds = array<i64: 1, 128>}, {transform_indices = @transform_4, window_bounds = array<i64: 8, 128>}]} {
    %c0 = arith.constant 0 : index
    %c0_0 = arith.constant 0 : index
    %0 = vector.load %arg1[%c0, %c0_0] : memref<8x1024xbf16, #tpu.memory_space<vmem>>, vector<8x1024xbf16>
    %c0_1 = arith.constant 0 : index
    %c0_2 = arith.constant 0 : index
    %1 = vector.load %arg2[%c0_1, %c0_2] : memref<1024x128xbf16, #tpu.memory_space<vmem>>, vector<1024x128xbf16>
    %cst = arith.constant dense<0.000000e+00> : vector<8x128xf32>
    %2 = tpu.matmul %0, %1, %cst {dimension_numbers = #tpu.dot_dimension_numbers<[1], [0], [0], [1], [0, 0, 1, 1], [], []>} : vector<8x1024xbf16>, vector<1024x128xbf16>, vector<8x128xf32> -> vector<8x128xf32>
    %c0_3 = arith.constant 0 : index
    %c0_4 = arith.constant 0 : index
    %3 = vector.load %arg3[%c0_3, %c0_4] : memref<1x128xf32, #tpu.memory_space<vmem>>, vector<1x128xf32>
    %4 = vector.broadcast %3 : vector<1x128xf32> to vector<8x128xf32>
    %5 = arith.mulf %2, %4 : vector<8x128xf32>
    %c0_5 = arith.constant 0 : index
    %c0_6 = arith.constant 0 : index
    %6 = vector.load %arg4[%c0_5, %c0_6] : memref<1x128xf32, #tpu.memory_space<vmem>>, vector<1x128xf32>
    %7 = vector.broadcast %6 : vector<1x128xf32> to vector<8x128xf32>
    %8 = arith.addf %5, %7 : vector<8x128xf32>
    %cst_7 = arith.constant 0.000000e+00 : f32
    %9 = vector.broadcast %cst_7 : f32 to vector<8x128xf32>
    %10 = arith.cmpf ogt, %8, %9 : vector<8x128xf32>
    %cst_8 = arith.constant 2.000000e-01 : f32
    %11 = vector.broadcast %cst_8 : f32 to vector<8x128xf32>
    %12 = arith.mulf %11, %8 : vector<8x128xf32>
    %13 = arith.select %10, %8, %12 : vector<8x128xi1>, vector<8x128xf32>
    %14 = arith.truncf %13 : vector<8x128xf32> to vector<8x128xbf16>
    %c0_9 = arith.constant 0 : index
    %c0_10 = arith.constant 0 : index
    %15 = vector.load %arg5[%c0_9, %c0_10] : memref<8x128xbf16, #tpu.memory_space<vmem>>, vector<8x128xbf16>
    tpu.vector_store %arg5[%c0_9, %c0_10], %14 {strides = array<i32>} : memref<8x128xbf16, #tpu.memory_space<vmem>>, vector<8x128xbf16>,
    return
  }
  func.func @transform_0(%arg0: i32) -> (i32, i32) {
    %c0_i32 = arith.constant 0 : i32
    %c0_i32_0 = arith.constant 0 : i32
    return %arg0, %c0_i32 : i32, i32
  }
  func.func @transform_1(%arg0: i32) -> (i32, i32) {
    %c0_i32 = arith.constant 0 : i32
    %c0_i32_0 = arith.constant 0 : i32
    %c0_i32_1 = arith.constant 0 : i32
    return %c0_i32, %c0_i32_0 : i32, i32
  }
  func.func @transform_2(%arg0: i32) -> (i32, i32) {
    %c0_i32 = arith.constant 0 : i32
    %c0_i32_0 = arith.constant 0 : i32
    %c0_i32_1 = arith.constant 0 : i32
    return %c0_i32, %c0_i32_0 : i32, i32
  }
  func.func @transform_3(%arg0: i32) -> (i32, i32) {
    %c0_i32 = arith.constant 0 : i32
    %c0_i32_0 = arith.constant 0 : i32
    %c0_i32_1 = arith.constant 0 : i32
    return %c0_i32, %c0_i32_0 : i32, i32
  }
  func.func @transform_4(%arg0: i32) -> (i32, i32) {
    %c0_i32 = arith.constant 0 : i32
    %c0_i32_0 = arith.constant 0 : i32
    return %arg0, %c0_i32 : i32, i32
  }
}

module attributes {stable_mosaic.version = 11 : i64} {
  func.func @_fused_matmul_kernel(%arg0: i32, %arg1: memref<8x512xbf16, #tpu.memory_space<vmem>>, %arg2: memref<512x128xbf16, #tpu.memory_space<vmem>>, %arg3: memref<1x128xf32, #tpu.memory_space<vmem>>, %arg4: memref<1x128xf32, #tpu.memory_space<vmem>>, %arg5: memref<8x128xbf16, #tpu.memory_space<vmem>>) attributes {dimension_semantics = [#tpu.dimension_semantics<parallel>], iteration_bounds = array<i64: 1>, scalar_prefetch = 0 : i64, scratch_operands = 0 : i64, tpu.core_type = #tpu.core_type<tc>, window_params = [{transform_indices = @transform_0, window_bounds = array<i64: 8, 512>}, {pipeline_mode = #tpu.pipeline_mode<synchronous>, transform_indices = @transform_1, window_bounds = array<i64: 512, 128>}, {pipeline_mode = #tpu.pipeline_mode<synchronous>, transform_indices = @transform_2, window_bounds = array<i64: 1, 128>}, {pipeline_mode = #tpu.pipeline_mode<synchronous>, transform_indices = @transform_3, window_bounds = array<i64: 1, 128>}, {transform_indices = @transform_4, window_bounds = array<i64: 8, 128>}]} {
    %c0 = arith.constant 0 : index
    %c0_0 = arith.constant 0 : index
    %0 = vector.load %arg1[%c0, %c0_0] : memref<8x512xbf16, #tpu.memory_space<vmem>>, vector<8x512xbf16>
    %c0_1 = arith.constant 0 : index
    %c0_2 = arith.constant 0 : index
    %1 = vector.load %arg2[%c0_1, %c0_2] : memref<512x128xbf16, #tpu.memory_space<vmem>>, vector<512x128xbf16>
    %cst = arith.constant dense<0.000000e+00> : vector<8x128xf32>
    %2 = tpu.matmul %0, %1, %cst {dimension_numbers = #tpu.dot_dimension_numbers<[1], [0], [0], [1], [0, 0, 1, 1], [], []>} : vector<8x512xbf16>, vector<512x128xbf16>, vector<8x128xf32> -> vector<8x128xf32>
    %c0_3 = arith.constant 0 : index
    %c0_4 = arith.constant 0 : index
    %3 = vector.load %arg3[%c0_3, %c0_4] : memref<1x128xf32, #tpu.memory_space<vmem>>, vector<1x128xf32>
    %4 = vector.broadcast %3 : vector<1x128xf32> to vector<8x128xf32>
    %5 = arith.mulf %2, %4 : vector<8x128xf32>
    %c0_5 = arith.constant 0 : index
    %c0_6 = arith.constant 0 : index
    %6 = vector.load %arg4[%c0_5, %c0_6] : memref<1x128xf32, #tpu.memory_space<vmem>>, vector<1x128xf32>
    %7 = vector.broadcast %6 : vector<1x128xf32> to vector<8x128xf32>
    %8 = arith.addf %5, %7 : vector<8x128xf32>
    %cst_7 = arith.constant 0.000000e+00 : f32
    %9 = vector.broadcast %cst_7 : f32 to vector<8x128xf32>
    %10 = arith.maximumf %8, %9 : vector<8x128xf32>
    %11 = arith.truncf %10 : vector<8x128xf32> to vector<8x128xbf16>
    %c0_8 = arith.constant 0 : index
    %c0_9 = arith.constant 0 : index
    %12 = vector.load %arg5[%c0_8, %c0_9] : memref<8x128xbf16, #tpu.memory_space<vmem>>, vector<8x128xbf16>
    tpu.vector_store %arg5[%c0_8, %c0_9], %11 {strides = array<i32>} : memref<8x128xbf16, #tpu.memory_space<vmem>>, vector<8x128xbf16>,
    return
  }
  func.func @transform_0(%arg0: i32) -> (i32, i32) {
    %c0_i32 = arith.constant 0 : i32
    %c0_i32_0 = arith.constant 0 : i32
    return %arg0, %c0_i32 : i32, i32
  }
  func.func @transform_1(%arg0: i32) -> (i32, i32) {
    %c0_i32 = arith.constant 0 : i32
    %c0_i32_0 = arith.constant 0 : i32
    %c0_i32_1 = arith.constant 0 : i32
    return %c0_i32, %c0_i32_0 : i32, i32
  }
  func.func @transform_2(%arg0: i32) -> (i32, i32) {
    %c0_i32 = arith.constant 0 : i32
    %c0_i32_0 = arith.constant 0 : i32
    %c0_i32_1 = arith.constant 0 : i32
    return %c0_i32, %c0_i32_0 : i32, i32
  }
  func.func @transform_3(%arg0: i32) -> (i32, i32) {
    %c0_i32 = arith.constant 0 : i32
    %c0_i32_0 = arith.constant 0 : i32
    %c0_i32_1 = arith.constant 0 : i32
    return %c0_i32, %c0_i32_0 : i32, i32
  }
  func.func @transform_4(%arg0: i32) -> (i32, i32) {
    %c0_i32 = arith.constant 0 : i32
    %c0_i32_0 = arith.constant 0 : i32
    return %arg0, %c0_i32 : i32, i32
  }
}

module attributes {stable_mosaic.version = 11 : i64} {
  func.func @_fused_matmul_kernel(%arg0: i32, %arg1: memref<8x896xbf16, #tpu.memory_space<vmem>>, %arg2: memref<896x128xbf16, #tpu.memory_space<vmem>>, %arg3: memref<1x128xf32, #tpu.memory_space<vmem>>, %arg4: memref<1x128xf32, #tpu.memory_space<vmem>>, %arg5: memref<8x128xbf16, #tpu.memory_space<vmem>>) attributes {dimension_semantics = [#tpu.dimension_semantics<parallel>], iteration_bounds = array<i64: 1>, scalar_prefetch = 0 : i64, scratch_operands = 0 : i64, tpu.core_type = #tpu.core_type<tc>, window_params = [{transform_indices = @transform_0, window_bounds = array<i64: 8, 896>}, {pipeline_mode = #tpu.pipeline_mode<synchronous>, transform_indices = @transform_1, window_bounds = array<i64: 896, 128>}, {pipeline_mode = #tpu.pipeline_mode<synchronous>, transform_indices = @transform_2, window_bounds = array<i64: 1, 128>}, {pipeline_mode = #tpu.pipeline_mode<synchronous>, transform_indices = @transform_3, window_bounds = array<i64: 1, 128>}, {transform_indices = @transform_4, window_bounds = array<i64: 8, 128>}]} {
    %c0 = arith.constant 0 : index
    %c0_0 = arith.constant 0 : index
    %0 = vector.load %arg1[%c0, %c0_0] : memref<8x896xbf16, #tpu.memory_space<vmem>>, vector<8x896xbf16>
    %c0_1 = arith.constant 0 : index
    %c0_2 = arith.constant 0 : index
    %1 = vector.load %arg2[%c0_1, %c0_2] : memref<896x128xbf16, #tpu.memory_space<vmem>>, vector<896x128xbf16>
    %cst = arith.constant dense<0.000000e+00> : vector<8x128xf32>
    %2 = tpu.matmul %0, %1, %cst {dimension_numbers = #tpu.dot_dimension_numbers<[1], [0], [0], [1], [0, 0, 1, 1], [], []>} : vector<8x896xbf16>, vector<896x128xbf16>, vector<8x128xf32> -> vector<8x128xf32>
    %c0_3 = arith.constant 0 : index
    %c0_4 = arith.constant 0 : index
    %3 = vector.load %arg3[%c0_3, %c0_4] : memref<1x128xf32, #tpu.memory_space<vmem>>, vector<1x128xf32>
    %4 = vector.broadcast %3 : vector<1x128xf32> to vector<8x128xf32>
    %5 = arith.mulf %2, %4 : vector<8x128xf32>
    %c0_5 = arith.constant 0 : index
    %c0_6 = arith.constant 0 : index
    %6 = vector.load %arg4[%c0_5, %c0_6] : memref<1x128xf32, #tpu.memory_space<vmem>>, vector<1x128xf32>
    %7 = vector.broadcast %6 : vector<1x128xf32> to vector<8x128xf32>
    %8 = arith.addf %5, %7 : vector<8x128xf32>
    %cst_7 = arith.constant 0.000000e+00 : f32
    %9 = vector.broadcast %cst_7 : f32 to vector<8x128xf32>
    %10 = arith.maximumf %8, %9 : vector<8x128xf32>
    %11 = arith.truncf %10 : vector<8x128xf32> to vector<8x128xbf16>
    %c0_8 = arith.constant 0 : index
    %c0_9 = arith.constant 0 : index
    %12 = vector.load %arg5[%c0_8, %c0_9] : memref<8x128xbf16, #tpu.memory_space<vmem>>, vector<8x128xbf16>
    tpu.vector_store %arg5[%c0_8, %c0_9], %11 {strides = array<i32>} : memref<8x128xbf16, #tpu.memory_space<vmem>>, vector<8x128xbf16>,
    return
  }
  func.func @transform_0(%arg0: i32) -> (i32, i32) {
    %c0_i32 = arith.constant 0 : i32
    %c0_i32_0 = arith.constant 0 : i32
    return %arg0, %c0_i32 : i32, i32
  }
  func.func @transform_1(%arg0: i32) -> (i32, i32) {
    %c0_i32 = arith.constant 0 : i32
    %c0_i32_0 = arith.constant 0 : i32
    %c0_i32_1 = arith.constant 0 : i32
    return %c0_i32, %c0_i32_0 : i32, i32
  }
  func.func @transform_2(%arg0: i32) -> (i32, i32) {
    %c0_i32 = arith.constant 0 : i32
    %c0_i32_0 = arith.constant 0 : i32
    %c0_i32_1 = arith.constant 0 : i32
    return %c0_i32, %c0_i32_0 : i32, i32
  }
  func.func @transform_3(%arg0: i32) -> (i32, i32) {
    %c0_i32 = arith.constant 0 : i32
    %c0_i32_0 = arith.constant 0 : i32
    %c0_i32_1 = arith.constant 0 : i32
    return %c0_i32, %c0_i32_0 : i32, i32
  }
  func.func @transform_4(%arg0: i32) -> (i32, i32) {
    %c0_i32 = arith.constant 0 : i32
    %c0_i32_0 = arith.constant 0 : i32
    return %arg0, %c0_i32 : i32, i32
  }
}

module attributes {stable_mosaic.version = 11 : i64} {
  func.func @_fused_matmul_kernel(%arg0: i32, %arg1: memref<64x512xbf16, #tpu.memory_space<vmem>>, %arg2: memref<512x128xbf16, #tpu.memory_space<vmem>>, %arg3: memref<1x128xf32, #tpu.memory_space<vmem>>, %arg4: memref<1x128xf32, #tpu.memory_space<vmem>>, %arg5: memref<64x128xbf16, #tpu.memory_space<vmem>>) attributes {dimension_semantics = [#tpu.dimension_semantics<parallel>], iteration_bounds = array<i64: 1>, scalar_prefetch = 0 : i64, scratch_operands = 0 : i64, tpu.core_type = #tpu.core_type<tc>, window_params = [{transform_indices = @transform_0, window_bounds = array<i64: 64, 512>}, {pipeline_mode = #tpu.pipeline_mode<synchronous>, transform_indices = @transform_1, window_bounds = array<i64: 512, 128>}, {pipeline_mode = #tpu.pipeline_mode<synchronous>, transform_indices = @transform_2, window_bounds = array<i64: 1, 128>}, {pipeline_mode = #tpu.pipeline_mode<synchronous>, transform_indices = @transform_3, window_bounds = array<i64: 1, 128>}, {transform_indices = @transform_4, window_bounds = array<i64: 64, 128>}]} {
    %c0 = arith.constant 0 : index
    %c0_0 = arith.constant 0 : index
    %0 = vector.load %arg1[%c0, %c0_0] : memref<64x512xbf16, #tpu.memory_space<vmem>>, vector<64x512xbf16>
    %c0_1 = arith.constant 0 : index
    %c0_2 = arith.constant 0 : index
    %1 = vector.load %arg2[%c0_1, %c0_2] : memref<512x128xbf16, #tpu.memory_space<vmem>>, vector<512x128xbf16>
    %cst = arith.constant dense<0.000000e+00> : vector<64x128xf32>
    %2 = tpu.matmul %0, %1, %cst {dimension_numbers = #tpu.dot_dimension_numbers<[1], [0], [0], [1], [0, 0, 1, 1], [], []>} : vector<64x512xbf16>, vector<512x128xbf16>, vector<64x128xf32> -> vector<64x128xf32>
    %c0_3 = arith.constant 0 : index
    %c0_4 = arith.constant 0 : index
    %3 = vector.load %arg3[%c0_3, %c0_4] : memref<1x128xf32, #tpu.memory_space<vmem>>, vector<1x128xf32>
    %4 = vector.broadcast %3 : vector<1x128xf32> to vector<64x128xf32>
    %5 = arith.mulf %2, %4 : vector<64x128xf32>
    %c0_5 = arith.constant 0 : index
    %c0_6 = arith.constant 0 : index
    %6 = vector.load %arg4[%c0_5, %c0_6] : memref<1x128xf32, #tpu.memory_space<vmem>>, vector<1x128xf32>
    %7 = vector.broadcast %6 : vector<1x128xf32> to vector<64x128xf32>
    %8 = arith.addf %5, %7 : vector<64x128xf32>
    %cst_7 = arith.constant 0.000000e+00 : f32
    %9 = vector.broadcast %cst_7 : f32 to vector<64x128xf32>
    %10 = arith.maximumf %8, %9 : vector<64x128xf32>
    %11 = arith.truncf %10 : vector<64x128xf32> to vector<64x128xbf16>
    %c0_8 = arith.constant 0 : index
    %c0_9 = arith.constant 0 : index
    %12 = vector.load %arg5[%c0_8, %c0_9] : memref<64x128xbf16, #tpu.memory_space<vmem>>, vector<64x128xbf16>
    tpu.vector_store %arg5[%c0_8, %c0_9], %11 {strides = array<i32>} : memref<64x128xbf16, #tpu.memory_space<vmem>>, vector<64x128xbf16>,
    return
  }
  func.func @transform_0(%arg0: i32) -> (i32, i32) {
    %c0_i32 = arith.constant 0 : i32
    %c0_i32_0 = arith.constant 0 : i32
    return %arg0, %c0_i32 : i32, i32
  }
  func.func @transform_1(%arg0: i32) -> (i32, i32) {
    %c0_i32 = arith.constant 0 : i32
    %c0_i32_0 = arith.constant 0 : i32
    %c0_i32_1 = arith.constant 0 : i32
    return %c0_i32, %c0_i32_0 : i32, i32
  }
  func.func @transform_2(%arg0: i32) -> (i32, i32) {
    %c0_i32 = arith.constant 0 : i32
    %c0_i32_0 = arith.constant 0 : i32
    %c0_i32_1 = arith.constant 0 : i32
    return %c0_i32, %c0_i32_0 : i32, i32
  }
  func.func @transform_3(%arg0: i32) -> (i32, i32) {
    %c0_i32 = arith.constant 0 : i32
    %c0_i32_0 = arith.constant 0 : i32
    %c0_i32_1 = arith.constant 0 : i32
    return %c0_i32, %c0_i32_0 : i32, i32
  }
  func.func @transform_4(%arg0: i32) -> (i32, i32) {
    %c0_i32 = arith.constant 0 : i32
    %c0_i32_0 = arith.constant 0 : i32
    return %arg0, %c0_i32 : i32, i32
  }
}

module attributes {stable_mosaic.version = 11 : i64} {
  func.func @_fused_matmul_kernel(%arg0: i32, %arg1: memref<512x256xbf16, #tpu.memory_space<vmem>>, %arg2: memref<256x128xbf16, #tpu.memory_space<vmem>>, %arg3: memref<1x128xf32, #tpu.memory_space<vmem>>, %arg4: memref<1x128xf32, #tpu.memory_space<vmem>>, %arg5: memref<512x128xf32, #tpu.memory_space<vmem>>) attributes {dimension_semantics = [#tpu.dimension_semantics<parallel>], iteration_bounds = array<i64: 1>, scalar_prefetch = 0 : i64, scratch_operands = 0 : i64, tpu.core_type = #tpu.core_type<tc>, window_params = [{transform_indices = @transform_0, window_bounds = array<i64: 512, 256>}, {pipeline_mode = #tpu.pipeline_mode<synchronous>, transform_indices = @transform_1, window_bounds = array<i64: 256, 128>}, {pipeline_mode = #tpu.pipeline_mode<synchronous>, transform_indices = @transform_2, window_bounds = array<i64: 1, 128>}, {pipeline_mode = #tpu.pipeline_mode<synchronous>, transform_indices = @transform_3, window_bounds = array<i64: 1, 128>}, {transform_indices = @transform_4, window_bounds = array<i64: 512, 128>}]} {
    %c0 = arith.constant 0 : index
    %c0_0 = arith.constant 0 : index
    %0 = vector.load %arg1[%c0, %c0_0] : memref<512x256xbf16, #tpu.memory_space<vmem>>, vector<512x256xbf16>
    %c0_1 = arith.constant 0 : index
    %c0_2 = arith.constant 0 : index
    %1 = vector.load %arg2[%c0_1, %c0_2] : memref<256x128xbf16, #tpu.memory_space<vmem>>, vector<256x128xbf16>
    %cst = arith.constant dense<0.000000e+00> : vector<512x128xf32>
    %2 = tpu.matmul %0, %1, %cst {dimension_numbers = #tpu.dot_dimension_numbers<[1], [0], [0], [1], [0, 0, 1, 1], [], []>} : vector<512x256xbf16>, vector<256x128xbf16>, vector<512x128xf32> -> vector<512x128xf32>
    %c0_3 = arith.constant 0 : index
    %c0_4 = arith.constant 0 : index
    %3 = vector.load %arg3[%c0_3, %c0_4] : memref<1x128xf32, #tpu.memory_space<vmem>>, vector<1x128xf32>
    %4 = vector.broadcast %3 : vector<1x128xf32> to vector<512x128xf32>
    %5 = arith.mulf %2, %4 : vector<512x128xf32>
    %c0_5 = arith.constant 0 : index
    %c0_6 = arith.constant 0 : index
    %6 = vector.load %arg4[%c0_5, %c0_6] : memref<1x128xf32, #tpu.memory_space<vmem>>, vector<1x128xf32>
    %7 = vector.broadcast %6 : vector<1x128xf32> to vector<512x128xf32>
    %8 = arith.addf %5, %7 : vector<512x128xf32>
    %c0_7 = arith.constant 0 : index
    %c0_8 = arith.constant 0 : index
    %9 = vector.load %arg5[%c0_7, %c0_8] : memref<512x128xf32, #tpu.memory_space<vmem>>, vector<512x128xf32>
    tpu.vector_store %arg5[%c0_7, %c0_8], %8 {strides = array<i32>} : memref<512x128xf32, #tpu.memory_space<vmem>>, vector<512x128xf32>,
    return
  }
  func.func @transform_0(%arg0: i32) -> (i32, i32) {
    %c0_i32 = arith.constant 0 : i32
    %c0_i32_0 = arith.constant 0 : i32
    return %arg0, %c0_i32 : i32, i32
  }
  func.func @transform_1(%arg0: i32) -> (i32, i32) {
    %c0_i32 = arith.constant 0 : i32
    %c0_i32_0 = arith.constant 0 : i32
    %c0_i32_1 = arith.constant 0 : i32
    return %c0_i32, %c0_i32_0 : i32, i32
  }
  func.func @transform_2(%arg0: i32) -> (i32, i32) {
    %c0_i32 = arith.constant 0 : i32
    %c0_i32_0 = arith.constant 0 : i32
    %c0_i32_1 = arith.constant 0 : i32
    return %c0_i32, %c0_i32_0 : i32, i32
  }
  func.func @transform_3(%arg0: i32) -> (i32, i32) {
    %c0_i32 = arith.constant 0 : i32
    %c0_i32_0 = arith.constant 0 : i32
    %c0_i32_1 = arith.constant 0 : i32
    return %c0_i32, %c0_i32_0 : i32, i32
  }
  func.func @transform_4(%arg0: i32) -> (i32, i32) {
    %c0_i32 = arith.constant 0 : i32
    %c0_i32_0 = arith.constant 0 : i32
    return %arg0, %c0_i32 : i32, i32
  }
}

module attributes {stable_mosaic.version = 11 : i64} {
  func.func @_softmax_depth_kernel(%arg0: i32, %arg1: memref<1x8x64xf32, #tpu.memory_space<vmem>>, %arg2: memref<1x8x1xf32, #tpu.memory_space<vmem>>, %arg3: memref<1x8x64xf32, #tpu.memory_space<vmem>>, %arg4: memref<1x64xf32, #tpu.memory_space<vmem>>) attributes {dimension_semantics = [#tpu.dimension_semantics<parallel>], iteration_bounds = array<i64: 1>, scalar_prefetch = 0 : i64, scratch_operands = 0 : i64, tpu.core_type = #tpu.core_type<tc>, window_params = [{transform_indices = @transform_0, window_bounds = array<i64: 1, 8, 64>}, {pipeline_mode = #tpu.pipeline_mode<synchronous>, transform_indices = @transform_1, window_bounds = array<i64: 1, 8, 1>}, {transform_indices = @transform_2, window_bounds = array<i64: 1, 8, 64>}, {transform_indices = @transform_3, window_bounds = array<i64: 1, 64>}]} {
    %c0 = arith.constant 0 : index
    %c0_0 = arith.constant 0 : index
    %c0_1 = arith.constant 0 : index
    %0 = vector.load %arg1[%c0, %c0_0, %c0_1] : memref<1x8x64xf32, #tpu.memory_space<vmem>>, vector<1x8x64xf32>
    %cst = arith.constant dense<0xFF800000> : vector<1x64xf32>
    %1 = vector.multi_reduction <maximumf>, %0, %cst [1] : vector<1x8x64xf32> to vector<1x64xf32>
    %2 = vector.shape_cast %1 : vector<1x64xf32> to vector<1x1x64xf32>
    %3 = vector.broadcast %2 : vector<1x1x64xf32> to vector<1x8x64xf32>
    %4 = arith.subf %0, %3 : vector<1x8x64xf32>
    %5 = math.exp %4 : vector<1x8x64xf32>
    %cst_2 = arith.constant dense<0.000000e+00> : vector<1x64xf32>
    %6 = vector.multi_reduction <add>, %5, %cst_2 [1] : vector<1x8x64xf32> to vector<1x64xf32>
    %7 = vector.shape_cast %6 : vector<1x64xf32> to vector<1x1x64xf32>
    %8 = tpu.reciprocal %7 {approx = true} : vector<1x1x64xf32> -> vector<1x1x64xf32>
    %9 = arith.mulf %7, %8 : vector<1x1x64xf32>
    %cst_3 = arith.constant 2.000000e+00 : f32
    %10 = vector.broadcast %cst_3 : f32 to vector<1x1x64xf32>
    %11 = arith.subf %10, %9 : vector<1x1x64xf32>
    %12 = arith.mulf %8, %11 : vector<1x1x64xf32>
    %13 = vector.broadcast %12 : vector<1x1x64xf32> to vector<1x8x64xf32>
    %14 = arith.mulf %5, %13 : vector<1x8x64xf32>
    %c0_4 = arith.constant 0 : index
    %c0_5 = arith.constant 0 : index
    %c0_6 = arith.constant 0 : index
    %15 = vector.load %arg3[%c0_4, %c0_5, %c0_6] : memref<1x8x64xf32, #tpu.memory_space<vmem>>, vector<1x8x64xf32>
    tpu.vector_store %arg3[%c0_4, %c0_5, %c0_6], %14 {strides = array<i32>} : memref<1x8x64xf32, #tpu.memory_space<vmem>>, vector<1x8x64xf32>,
    %c0_7 = arith.constant 0 : index
    %c0_8 = arith.constant 0 : index
    %c0_9 = arith.constant 0 : index
    %16 = vector.load %arg2[%c0_7, %c0_8, %c0_9] : memref<1x8x1xf32, #tpu.memory_space<vmem>>, vector<1x8x1xf32>
    %17 = vector.broadcast %16 : vector<1x8x1xf32> to vector<1x8x64xf32>
    %18 = arith.mulf %14, %17 : vector<1x8x64xf32>
    %cst_10 = arith.constant dense<0.000000e+00> : vector<1x64xf32>
    %19 = vector.multi_reduction <add>, %18, %cst_10 [1] : vector<1x8x64xf32> to vector<1x64xf32>
    %c0_11 = arith.constant 0 : index
    %c0_12 = arith.constant 0 : index
    %20 = vector.load %arg4[%c0_11, %c0_12] : memref<1x64xf32, #tpu.memory_space<vmem>>, vector<1x64xf32>
    tpu.vector_store %arg4[%c0_11, %c0_12], %19 {strides = array<i32>} : memref<1x64xf32, #tpu.memory_space<vmem>>, vector<1x64xf32>,
    return
  }
  func.func @transform_0(%arg0: i32) -> (i32, i32, i32) {
    %c0_i32 = arith.constant 0 : i32
    %c0_i32_0 = arith.constant 0 : i32
    %c0_i32_1 = arith.constant 0 : i32
    return %c0_i32, %c0_i32_0, %arg0 : i32, i32, i32
  }
  func.func @transform_1(%arg0: i32) -> (i32, i32, i32) {
    %c0_i32 = arith.constant 0 : i32
    %c0_i32_0 = arith.constant 0 : i32
    %c0_i32_1 = arith.constant 0 : i32
    %c0_i32_2 = arith.constant 0 : i32
    return %c0_i32, %c0_i32_0, %c0_i32_1 : i32, i32, i32
  }
  func.func @transform_2(%arg0: i32) -> (i32, i32, i32) {
    %c0_i32 = arith.constant 0 : i32
    %c0_i32_0 = arith.constant 0 : i32
    %c0_i32_1 = arith.constant 0 : i32
    return %c0_i32, %c0_i32_0, %arg0 : i32, i32, i32
  }
  func.func @transform_3(%arg0: i32) -> (i32, i32) {
    %c0_i32 = arith.constant 0 : i32
    %c0_i32_0 = arith.constant 0 : i32
    return %c0_i32, %arg0 : i32, i32
  }
}

</mosaic_0001>

<llo_original>
// kernel: occlusion_net_forward.11
$region0: #{occlusion_net_forward.11}
  #allocation0 [shape = 'u32[]', space=smem, size = 0x4, offset = 0x4, fixed_abs, tag = 'smem constant byte address 0x4 - core index']
  #allocation1 [shape = 'u32[144,128]{1,0:T(1,128)}', space=vmem, size = 0x12000, scoped, tag = 'internal scratch']
  %s0 = inlined_call_operand.vmem [shape: bf16[512,256], index: 0, kind: input, shape index: {}]
  %s1 = inlined_call_operand.vmem [shape: bf16[256,128], index: 1, kind: input, shape index: {}]
  %s2 = inlined_call_operand.vmem [shape: f32[1,128], index: 2, kind: input, shape index: {}]
  %s3 = inlined_call_operand.vmem [shape: f32[1,128], index: 3, kind: input, shape index: {}]
  %s4 = inlined_call_operand.vmem [shape: bf16[512,128], index: 4, kind: output, shape index: {}]
  %s5 = sld [smem:[#allocation0]]
  $region26: #{occlusion_net_forward.11} parent=0
    _
  %s7 = ssub.s32 1, %s5
  %s8 = scalar_select 0, %s7, %s5
  // Predicated region
  $region2: #{occlusion_net_forward.11} parent=0 // pred_check
    _
  $region3: #{occlusion_net_forward.11} parent=0 // pred_check_branch
    %10 = sbr.rel (0) target = $region5
  $region4: #{occlusion_net_forward.11} parent=0 // pred_region
    _
  $region5: #{occlusion_net_forward.11} parent=0 // pred_fallthru
    _
  // Predicated region
  $region6: #{occlusion_net_forward.11} parent=0 // pred_check
    _
  $region7: #{occlusion_net_forward.11} parent=0 // pred_check_branch
    %12 = sbr.rel (0) target = $region9
  $region8: #{occlusion_net_forward.11} parent=0 // pred_region
    _
  $region9: #{occlusion_net_forward.11} parent=0 // pred_fallthru
    _
  // Predicated region
  $region10: #{occlusion_net_forward.11} parent=0 // pred_check
    _
  $region11: #{occlusion_net_forward.11} parent=0 // pred_check_branch
    %14 = sbr.rel (0) target = $region13
  $region12: #{occlusion_net_forward.11} parent=0 // pred_region
    _
  $region13: #{occlusion_net_forward.11} parent=0 // pred_fallthru
    _
  // Predicated region
  $region14: #{occlusion_net_forward.11} parent=0 // pred_check
    _
  $region15: #{occlusion_net_forward.11} parent=0 // pred_check_branch
    %16 = sbr.rel (0) target = $region17
  $region16: #{occlusion_net_forward.11} parent=0 // pred_region
    _
  $region17: #{occlusion_net_forward.11} parent=0 // pred_fallthru
    _
  %v18 = vld [vmem:[%s0] sm:$0xff]
  %v19 = vld [vmem:[%s0 + $0x8] sm:$0xff]
  %v20 = vld [vmem:[%s0 + $0x10] sm:$0xff]
  %v21 = vld [vmem:[%s0 + $0x18] sm:$0xff]
  %v22 = vld [vmem:[%s0 + $0x20] sm:$0xff]
  %v23 = vld [vmem:[%s0 + $0x28] sm:$0xff]
  %v24 = vld [vmem:[%s0 + $0x30] sm:$0xff]
  %v25 = vld [vmem:[%s0 + $0x38] sm:$0xff]
  %v26 = vld [vmem:[%s0 + $0x40] sm:$0xff]
  %v27 = vld [vmem:[%s0 + $0x48] sm:$0xff]
  %v28 = vld [vmem:[%s0 + $0x50] sm:$0xff]
  %v29 = vld [vmem:[%s0 + $0x58] sm:$0xff]
  %v30 = vld [vmem:[%s0 + $0x60] sm:$0xff]
  %v31 = vld [vmem:[%s0 + $0x68] sm:$0xff]
  %v32 = vld [vmem:[%s0 + $0x70] sm:$0xff]
  %v33 = vld [vmem:[%s0 + $0x78] sm:$0xff]
  %v34 = vld [vmem:[%s0 + $0x80] sm:$0xff]
  %v35 = vld [vmem:[%s0 + $0x88] sm:$0xff]
  %v36 = vld [vmem:[%s0 + $0x90] sm:$0xff]
  %v37 = vld [vmem:[%s0 + $0x98] sm:$0xff]
  %v38 = vld [vmem:[%s0 + $0xa0] sm:$0xff]
  %v39 = vld [vmem:[%s0 + $0xa8] sm:$0xff]
  %v40 = vld [vmem:[%s0 + $0xb0] sm:$0xff]
  %v41 = vld [vmem:[%s0 + $0xb8] sm:$0xff]
  %v42 = vld [vmem:[%s0 + $0xc0] sm:$0xff]
  %v43 = vld [vmem:[%s0 + $0xc8] sm:$0xff]
  %v44 = vld [vmem:[%s0 + $0xd0] sm:$0xff]
  %v45 = vld [vmem:[%s0 + $0xd8] sm:$0xff]
  %v46 = vld [vmem:[%s0 + $0xe0] sm:$0xff]
  %v47 = vld [vmem:[%s0 + $0xe8] sm:$0xff]
  %v48 = vld [vmem:[%s0 + $0xf0] sm:$0xff]
  %v49 = vld [vmem:[%s0 + $0xf8] sm:$0xff]
  %v50 = vld [vmem:[%s0 + $0x100] sm:$0xff]
  %v51 = vld [vmem:[%s0 + $0x108] sm:$0xff]
  %v52 = vld [vmem:[%s0 + $0x110] sm:$0xff]
  %v53 = vld [vmem:[%s0 + $0x118] sm:$0xff]
  %v54 = vld [vmem:[%s0 + $0x120] sm:$0xff]
  %v55 = vld [vmem:[%s0 + $0x128] sm:$0xff]
  %v56 = vld [vmem:[%s0 + $0x130] sm:$0xff]
  %v57 = vld [vmem:[%s0 + $0x138] sm:$0xff]
  %v58 = vld [vmem:[%s0 + $0x140] sm:$0xff]
  %v59 = vld [vmem:[%s0 + $0x148] sm:$0xff]
  %v60 = vld [vmem:[%s0 + $0x150] sm:$0xff]
  %v61 = vld [vmem:[%s0 + $0x158] sm:$0xff]
  %v62 = vld [vmem:[%s0 + $0x160] sm:$0xff]
  %v63 = vld [vmem:[%s0 + $0x168] sm:$0xff]
  %v64 = vld [vmem:[%s0 + $0x170] sm:$0xff]
  %v65 = vld [vmem:[%s0 + $0x178] sm:$0xff]
  %v66 = vld [vmem:[%s0 + $0x180] sm:$0xff]
  %v67 = vld [vmem:[%s0 + $0x188] sm:$0xff]
  %v68 = vld [vmem:[%s0 + $0x190] sm:$0xff]
  %v69 = vld [vmem:[%s0 + $0x198] sm:$0xff]
  %v70 = vld [vmem:[%s0 + $0x1a0] sm:$0xff]
  %v71 = vld [vmem:[%s0 + $0x1a8] sm:$0xff]
  %v72 = vld [vmem:[%s0 + $0x1b0] sm:$0xff]
  %v73 = vld [vmem:[%s0 + $0x1b8] sm:$0xff]
  %v74 = vld [vmem:[%s0 + $0x1c0] sm:$0xff]
  %v75 = vld [vmem:[%s0 + $0x1c8] sm:$0xff]
  %v76 = vld [vmem:[%s0 + $0x1d0] sm:$0xff]
  %v77 = vld [vmem:[%s0 + $0x1d8] sm:$0xff]
  %v78 = vld [vmem:[%s0 + $0x1e0] sm:$0xff]
  %v79 = vld [vmem:[%s0 + $0x1e8] sm:$0xff]
  %v80 = vld [vmem:[%s0 + $0x1f0] sm:$0xff]
  %v81 = vld [vmem:[%s0 + $0x1f8] sm:$0xff]
  %v82 = vld [vmem:[%s1] sm:$0xf]
  %v83 = vld [vmem:[%s1 + $0x4] sm:$0xf]
  %v84 = vld [vmem:[%s1 + $0x8] sm:$0xf]
  %v85 = vld [vmem:[%s1 + $0xc] sm:$0xf]
  %v86 = vld [vmem:[%s1 + $0x10] sm:$0xf]
  %v87 = vld [vmem:[%s1 + $0x14] sm:$0xf]
  %v88 = vld [vmem:[%s1 + $0x18] sm:$0xf]
  %v89 = vld [vmem:[%s1 + $0x1c] sm:$0xf]
  %v90 = vld [vmem:[%s1 + $0x20] sm:$0xf]
  %v91 = vld [vmem:[%s1 + $0x24] sm:$0xf]
  %v92 = vld [vmem:[%s1 + $0x28] sm:$0xf]
  %v93 = vld [vmem:[%s1 + $0x2c] sm:$0xf]
  %v94 = vld [vmem:[%s1 + $0x30] sm:$0xf]
  %v95 = vld [vmem:[%s1 + $0x34] sm:$0xf]
  %v96 = vld [vmem:[%s1 + $0x38] sm:$0xf]
  %v97 = vld [vmem:[%s1 + $0x3c] sm:$0xf]
  %v98 = vld [vmem:[%s1 + $0x40] sm:$0xf]
  %v99 = vld [vmem:[%s1 + $0x44] sm:$0xf]
  %v100 = vld [vmem:[%s1 + $0x48] sm:$0xf]
  %v101 = vld [vmem:[%s1 + $0x4c] sm:$0xf]
  %v102 = vld [vmem:[%s1 + $0x50] sm:$0xf]
  %v103 = vld [vmem:[%s1 + $0x54] sm:$0xf]
  %v104 = vld [vmem:[%s1 + $0x58] sm:$0xf]
  %v105 = vld [vmem:[%s1 + $0x5c] sm:$0xf]
  %v106 = vld [vmem:[%s1 + $0x60] sm:$0xf]
  %v107 = vld [vmem:[%s1 + $0x64] sm:$0xf]
  %v108 = vld [vmem:[%s1 + $0x68] sm:$0xf]
  %v109 = vld [vmem:[%s1 + $0x6c] sm:$0xf]
  %v110 = vld [vmem:[%s1 + $0x70] sm:$0xf]
  %v111 = vld [vmem:[%s1 + $0x74] sm:$0xf]
  %v112 = vld [vmem:[%s1 + $0x78] sm:$0xf]
  %v113 = vld [vmem:[%s1 + $0x7c] sm:$0xf]
  %v178 = vunpack.c.l.b16 %v18
  %v179 = vunpack.c.h.b16 %v18
  %v180 = vunpack.c.l.b16 %v19
  %v181 = vunpack.c.h.b16 %v19
  %v182 = vunpack.c.l.b16 %v20
  %v183 = vunpack.c.h.b16 %v20
  %v184 = vunpack.c.l.b16 %v21
  %v185 = vunpack.c.h.b16 %v21
  %v186 = vunpack.c.l.b16 %v22
  %v187 = vunpack.c.h.b16 %v22
  %v188 = vunpack.c.l.b16 %v23
  %v189 = vunpack.c.h.b16 %v23
  %v190 = vunpack.c.l.b16 %v24
  %v191 = vunpack.c.h.b16 %v24
  %v192 = vunpack.c.l.b16 %v25
  %v193 = vunpack.c.h.b16 %v25
  %v194 = vunpack.c.l.b16 %v26
  %v195 = vunpack.c.h.b16 %v26
  %v196 = vunpack.c.l.b16 %v27
  %v197 = vunpack.c.h.b16 %v27
  %v198 = vunpack.c.l.b16 %v28
  %v199 = vunpack.c.h.b16 %v28
  %v200 = vunpack.c.l.b16 %v29
  %v201 = vunpack.c.h.b16 %v29
  %v202 = vunpack.c.l.b16 %v30
  %v203 = vunpack.c.h.b16 %v30
  %v204 = vunpack.c.l.b16 %v31
  %v205 = vunpack.c.h.b16 %v31
  %v206 = vunpack.c.l.b16 %v32
  %v207 = vunpack.c.h.b16 %v32
  %v208 = vunpack.c.l.b16 %v33
  %v209 = vunpack.c.h.b16 %v33
  %v210 = vunpack.c.l.b16 %v34
  %v211 = vunpack.c.h.b16 %v34
  %v212 = vunpack.c.l.b16 %v35
  %v213 = vunpack.c.h.b16 %v35
  %v214 = vunpack.c.l.b16 %v36
  %v215 = vunpack.c.h.b16 %v36
  %v216 = vunpack.c.l.b16 %v37
  %v217 = vunpack.c.h.b16 %v37
  %v218 = vunpack.c.l.b16 %v38
  %v219 = vunpack.c.h.b16 %v38
  %v220 = vunpack.c.l.b16 %v39
  %v221 = vunpack.c.h.b16 %v39
  %v222 = vunpack.c.l.b16 %v40
  %v223 = vunpack.c.h.b16 %v40
  %v224 = vunpack.c.l.b16 %v41
  %v225 = vunpack.c.h.b16 %v41
  %v226 = vunpack.c.l.b16 %v42
  %v227 = vunpack.c.h.b16 %v42
  %v228 = vunpack.c.l.b16 %v43
  %v229 = vunpack.c.h.b16 %v43
  %v230 = vunpack.c.l.b16 %v44
  %v231 = vunpack.c.h.b16 %v44
  %v232 = vunpack.c.l.b16 %v45
  %v233 = vunpack.c.h.b16 %v45
  %v234 = vunpack.c.l.b16 %v46
  %v235 = vunpack.c.h.b16 %v46
  %v236 = vunpack.c.l.b16 %v47
  %v237 = vunpack.c.h.b16 %v47
  %v238 = vunpack.c.l.b16 %v48
  %v239 = vunpack.c.h.b16 %v48
  %v240 = vunpack.c.l.b16 %v49
  %v241 = vunpack.c.h.b16 %v49
  %v242 = vunpack.c.l.b16 %v50
  %v243 = vunpack.c.h.b16 %v50
  %v244 = vunpack.c.l.b16 %v51
  %v245 = vunpack.c.h.b16 %v51
  %v246 = vunpack.c.l.b16 %v52
  %v247 = vunpack.c.h.b16 %v52
  %v248 = vunpack.c.l.b16 %v53
  %v249 = vunpack.c.h.b16 %v53
  %v250 = vunpack.c.l.b16 %v54
  %v251 = vunpack.c.h.b16 %v54
  %v252 = vunpack.c.l.b16 %v55
  %v253 = vunpack.c.h.b16 %v55
  %v254 = vunpack.c.l.b16 %v56
  %v255 = vunpack.c.h.b16 %v56
  %v256 = vunpack.c.l.b16 %v57
  %v257 = vunpack.c.h.b16 %v57
  %v258 = vunpack.c.l.b16 %v58
  %v259 = vunpack.c.h.b16 %v58
  %v260 = vunpack.c.l.b16 %v59
  %v261 = vunpack.c.h.b16 %v59
  %v262 = vunpack.c.l.b16 %v60
  %v263 = vunpack.c.h.b16 %v60
  %v264 = vunpack.c.l.b16 %v61
  %v265 = vunpack.c.h.b16 %v61
  %v266 = vunpack.c.l.b16 %v62
  %v267 = vunpack.c.h.b16 %v62
  %v268 = vunpack.c.l.b16 %v63
  %v269 = vunpack.c.h.b16 %v63
  %v270 = vunpack.c.l.b16 %v64
  %v271 = vunpack.c.h.b16 %v64
  %v272 = vunpack.c.l.b16 %v65
  %v273 = vunpack.c.h.b16 %v65
  %v274 = vunpack.c.l.b16 %v66
  %v275 = vunpack.c.h.b16 %v66
  %v276 = vunpack.c.l.b16 %v67
  %v277 = vunpack.c.h.b16 %v67
  %v278 = vunpack.c.l.b16 %v68
  %v279 = vunpack.c.h.b16 %v68
  %v280 = vunpack.c.l.b16 %v69
  %v281 = vunpack.c.h.b16 %v69
  %v282 = vunpack.c.l.b16 %v70
  %v283 = vunpack.c.h.b16 %v70
  %v284 = vunpack.c.l.b16 %v71
  %v285 = vunpack.c.h.b16 %v71
  %v286 = vunpack.c.l.b16 %v72
  %v287 = vunpack.c.h.b16 %v72
  %v288 = vunpack.c.l.b16 %v73
  %v289 = vunpack.c.h.b16 %v73
  %v290 = vunpack.c.l.b16 %v74
  %v291 = vunpack.c.h.b16 %v74
  %v292 = vunpack.c.l.b16 %v75
  %v293 = vunpack.c.h.b16 %v75
  %v294 = vunpack.c.l.b16 %v76
  %v295 = vunpack.c.h.b16 %v76
  %v296 = vunpack.c.l.b16 %v77
  %v297 = vunpack.c.h.b16 %v77
  %v298 = vunpack.c.l.b16 %v78
  %v299 = vunpack.c.h.b16 %v78
  %v300 = vunpack.c.l.b16 %v79
  %v301 = vunpack.c.h.b16 %v79
  %v302 = vunpack.c.l.b16 %v80
  %v303 = vunpack.c.h.b16 %v80
  %v304 = vunpack.c.l.b16 %v81
  %v305 = vunpack.c.h.b16 %v81
  %v306 = vpack.c.b16 %v180, %v178
  %v307 = vpack.c.b16 %v181, %v179
  %v308 = vpack.c.b16 %v184, %v182
  %v309 = vpack.c.b16 %v185, %v183
  %v310 = vpack.c.b16 %v188, %v186
  %v311 = vpack.c.b16 %v189, %v187
  %v312 = vpack.c.b16 %v192, %v190
  %v313 = vpack.c.b16 %v193, %v191
  %v314 = vpack.c.b16 %v196, %v194
  %v315 = vpack.c.b16 %v197, %v195
  %v316 = vpack.c.b16 %v200, %v198
  %v317 = vpack.c.b16 %v201, %v199
  %v318 = vpack.c.b16 %v204, %v202
  %v319 = vpack.c.b16 %v205, %v203
  %v320 = vpack.c.b16 %v208, %v206
  %v321 = vpack.c.b16 %v209, %v207
  %v322 = vpack.c.b16 %v212, %v210
  %v323 = vpack.c.b16 %v213, %v211
  %v324 = vpack.c.b16 %v216, %v214
  %v325 = vpack.c.b16 %v217, %v215
  %v326 = vpack.c.b16 %v220, %v218
  %v327 = vpack.c.b16 %v221, %v219
  %v328 = vpack.c.b16 %v224, %v222
  %v329 = vpack.c.b16 %v225, %v223
  %v330 = vpack.c.b16 %v228, %v226
  %v331 = vpack.c.b16 %v229, %v227
  %v332 = vpack.c.b16 %v232, %v230
  %v333 = vpack.c.b16 %v233, %v231
  %v334 = vpack.c.b16 %v236, %v234
  %v335 = vpack.c.b16 %v237, %v235
  %v336 = vpack.c.b16 %v240, %v238
  %v337 = vpack.c.b16 %v241, %v239
  %v338 = vpack.c.b16 %v244, %v242
  %v339 = vpack.c.b16 %v245, %v243
  %v340 = vpack.c.b16 %v248, %v246
  %v341 = vpack.c.b16 %v249, %v247
  %v342 = vpack.c.b16 %v252, %v250
  %v343 = vpack.c.b16 %v253, %v251
  %v344 = vpack.c.b16 %v256, %v254
  %v345 = vpack.c.b16 %v257, %v255
  %v346 = vpack.c.b16 %v260, %v258
  %v347 = vpack.c.b16 %v261, %v259
  %v348 = vpack.c.b16 %v264, %v262
  %v349 = vpack.c.b16 %v265, %v263
  %v350 = vpack.c.b16 %v268, %v266
  %v351 = vpack.c.b16 %v269, %v267
  %v352 = vpack.c.b16 %v272, %v270
  %v353 = vpack.c.b16 %v273, %v271
  %v354 = vpack.c.b16 %v276, %v274
  %v355 = vpack.c.b16 %v277, %v275
  %v356 = vpack.c.b16 %v280, %v278
  %v357 = vpack.c.b16 %v281, %v279
  %v358 = vpack.c.b16 %v284, %v282
  %v359 = vpack.c.b16 %v285, %v283
  %v360 = vpack.c.b16 %v288, %v286
  %v361 = vpack.c.b16 %v289, %v287
  %v362 = vpack.c.b16 %v292, %v290
  %v363 = vpack.c.b16 %v293, %v291
  %v364 = vpack.c.b16 %v296, %v294
  %v365 = vpack.c.b16 %v297, %v295
  %v366 = vpack.c.b16 %v300, %v298
  %v367 = vpack.c.b16 %v301, %v299
  %v368 = vpack.c.b16 %v304, %v302
  %v369 = vpack.c.b16 %v305, %v303
  %v466 = vunpack.c.l.b16 %v82
  %v467 = vunpack.c.l.b16 %v83
  %v468 = vunpack.c.l.b16 %v84
  %v469 = vunpack.c.l.b16 %v85
  %v470 = vunpack.c.l.b16 %v86
  %v471 = vunpack.c.l.b16 %v87
  %v472 = vunpack.c.l.b16 %v88
  %v473 = vunpack.c.l.b16 %v89
  %v474 = vunpack.c.l.b16 %v90
  %v475 = vunpack.c.l.b16 %v91
  %v476 = vunpack.c.l.b16 %v92
  %v477 = vunpack.c.l.b16 %v93
  %v478 = vunpack.c.l.b16 %v94
  %v479 = vunpack.c.l.b16 %v95
  %v480 = vunpack.c.l.b16 %v96
  %v481 = vunpack.c.l.b16 %v97
  %v482 = vunpack.c.l.b16 %v98
  %v483 = vunpack.c.l.b16 %v99
  %v484 = vunpack.c.l.b16 %v100
  %v485 = vunpack.c.l.b16 %v101
  %v486 = vunpack.c.l.b16 %v102
  %v487 = vunpack.c.l.b16 %v103
  %v488 = vunpack.c.l.b16 %v104
  %v489 = vunpack.c.l.b16 %v105
  %v490 = vunpack.c.l.b16 %v106
  %v491 = vunpack.c.l.b16 %v107
  %v492 = vunpack.c.l.b16 %v108
  %v493 = vunpack.c.l.b16 %v109
  %v494 = vunpack.c.l.b16 %v110
  %v495 = vunpack.c.l.b16 %v111
  %v496 = vunpack.c.l.b16 %v112
  %v497 = vunpack.c.l.b16 %v113
  %v498 = vpack.c.b16 %v467, %v466
  %v499 = vpack.c.b16 %v469, %v468
  %v500 = vpack.c.b16 %v471, %v470
  %v501 = vpack.c.b16 %v473, %v472
  %v502 = vpack.c.b16 %v475, %v474
  %v503 = vpack.c.b16 %v477, %v476
  %v504 = vpack.c.b16 %v479, %v478
  %v505 = vpack.c.b16 %v481, %v480
  %v506 = vpack.c.b16 %v483, %v482
  %v507 = vpack.c.b16 %v485, %v484
  %v508 = vpack.c.b16 %v487, %v486
  %v509 = vpack.c.b16 %v489, %v488
  %v510 = vpack.c.b16 %v491, %v490
  %v511 = vpack.c.b16 %v493, %v492
  %v512 = vpack.c.b16 %v495, %v494
  %v513 = vpack.c.b16 %v497, %v496
  %530 = vmatprep.subr.bf16.mxu0 0
  %531 = vmatpush1.bf16.msra.mxu0 %v505
  %532 = vmatprep.subr.bf16.mxu0 0
  %533 = vmatpush1.bf16.msra.mxu0 %v504
  %534 = vmatprep.subr.bf16.mxu0 0
  %535 = vmatpush1.bf16.msra.mxu0 %v503
  %536 = vmatprep.subr.bf16.mxu0 0
  %537 = vmatpush1.bf16.msra.mxu0 %v502
  %538 = vmatprep.subr.bf16.mxu0 0
  %539 = vmatpush1.bf16.msra.mxu0 %v501
  %540 = vmatprep.subr.bf16.mxu0 0
  %541 = vmatpush1.bf16.msra.mxu0 %v500
  %542 = vmatprep.subr.bf16.mxu0 0
  %543 = vmatpush1.bf16.msra.mxu0 %v499
  %544 = vmatprep.subr.bf16.mxu0 0
  %545 = vmatpush1.bf16.msra.mxu0 %v498
  %546 = vmatprep.subr.bf16.mxu0 0
  %547 = vmatpush2.bf16.msra.mxu0 %v513
  %548 = vmatprep.subr.bf16.mxu0 0
  %549 = vmatpush2.bf16.msra.mxu0 %v512
  %550 = vmatprep.subr.bf16.mxu0 0
  %551 = vmatpush2.bf16.msra.mxu0 %v511
  %552 = vmatprep.subr.bf16.mxu0 0
  %553 = vmatpush2.bf16.msra.mxu0 %v510
  %554 = vmatprep.subr.bf16.mxu0 0
  %555 = vmatpush2.bf16.msra.mxu0 %v509
  %556 = vmatprep.subr.bf16.mxu0 0
  %557 = vmatpush2.bf16.msra.mxu0 %v508
  %558 = vmatprep.subr.bf16.mxu0 0
  %559 = vmatpush2.bf16.msra.mxu0 %v507
  %560 = vmatprep.subr.bf16.mxu0 0
  %561 = vmatpush2.bf16.msra.mxu0 %v506
  %562 = vmatprep.mubr.bf16.mxu0 %v307
  %563 = vmatmul.mubr.bf16.gmra.mxu0 %v306
  %v564 = vpop.f32.mrf.mxu0
  %v565 = vadd.f32 0.0, %v564
  %v566 = vpop.f32.mrf.mxu0
  %v567 = vpop.f32.mrf.mxu0
  %v568 = vadd.f32 0.0, %v567
  %v569 = vpop.f32.mrf.mxu0
  %570 = vmatprep.mubr.bf16.mxu0 %v309
  %571 = vmatmul.mubr.bf16.gmra.mxu0 %v308
  %v572 = vpop.f32.mrf.mxu0
  %v573 = vadd.f32 0.0, %v572
  %v574 = vpop.f32.mrf.mxu0
  %v575 = vpop.f32.mrf.mxu0
  %v576 = vadd.f32 0.0, %v575
  %v577 = vpop.f32.mrf.mxu0
  %578 = vmatprep.mubr.bf16.mxu0 %v311
  %579 = vmatmul.mubr.bf16.gmra.mxu0 %v310
  %v580 = vpop.f32.mrf.mxu0
  %v581 = vadd.f32 0.0, %v580
  %v582 = vpop.f32.mrf.mxu0
  %v583 = vpop.f32.mrf.mxu0
  %v584 = vadd.f32 0.0, %v583
  %v585 = vpop.f32.mrf.mxu0
  %586 = vmatprep.mubr.bf16.mxu0 %v313
  %587 = vmatmul.mubr.bf16.gmra.mxu0 %v312
  %v588 = vpop.f32.mrf.mxu0
  %v589 = vadd.f32 0.0, %v588
  %v590 = vpop.f32.mrf.mxu0
  %v591 = vpop.f32.mrf.mxu0
  %v592 = vadd.f32 0.0, %v591
  %v593 = vpop.f32.mrf.mxu0
  %594 = vmatprep.mubr.bf16.mxu0 %v315
  %595 = vmatmul.mubr.bf16.gmra.mxu0 %v314
  %v596 = vpop.f32.mrf.mxu0
  %v597 = vadd.f32 0.0, %v596
  %v598 = vpop.f32.mrf.mxu0
  %v599 = vpop.f32.mrf.mxu0
  %v600 = vadd.f32 0.0, %v599
  %v601 = vpop.f32.mrf.mxu0
  %602 = vmatprep.mubr.bf16.mxu0 %v317
  %603 = vmatmul.mubr.bf16.gmra.mxu0 %v316
  %v604 = vpop.f32.mrf.mxu0
  %v605 = vadd.f32 0.0, %v604
  %v606 = vpop.f32.mrf.mxu0
  %v607 = vpop.f32.mrf.mxu0
  %v608 = vadd.f32 0.0, %v607
  %v609 = vpop.f32.mrf.mxu0
  %610 = vmatprep.mubr.bf16.mxu0 %v319
  %611 = vmatmul.mubr.bf16.gmra.mxu0 %v318
  %v612 = vpop.f32.mrf.mxu0
  %v613 = vadd.f32 0.0, %v612
  %v614 = vpop.f32.mrf.mxu0
  %v615 = vpop.f32.mrf.mxu0
  %v616 = vadd.f32 0.0, %v615
  %v617 = vpop.f32.mrf.mxu0
  %618 = vmatprep.mubr.bf16.mxu0 %v321
  %619 = vmatmul.mubr.bf16.gmra.mxu0 %v320
  %v620 = vpop.f32.mrf.mxu0
  %v621 = vadd.f32 0.0, %v620
  %v622 = vpop.f32.mrf.mxu0
  %v623 = vpop.f32.mrf.mxu0
  %v624 = vadd.f32 0.0, %v623
  %v625 = vpop.f32.mrf.mxu0
  %626 = vmatprep.mubr.bf16.mxu0 %v323
  %627 = vmatmul.mubr.bf16.gmra.mxu0 %v322
  %v628 = vpop.f32.mrf.mxu0
  %v629 = vadd.f32 0.0, %v628
  %v630 = vpop.f32.mrf.mxu0
  %v631 = vpop.f32.mrf.mxu0
  %v632 = vadd.f32 0.0, %v631
  %v633 = vpop.f32.mrf.mxu0
  %634 = vmatprep.mubr.bf16.mxu0 %v325
  %635 = vmatmul.mubr.bf16.gmra.mxu0 %v324
  %v636 = vpop.f32.mrf.mxu0
  %v637 = vadd.f32 0.0, %v636
  %v638 = vpop.f32.mrf.mxu0
  %v639 = vpop.f32.mrf.mxu0
  %v640 = vadd.f32 0.0, %v639
  %v641 = vpop.f32.mrf.mxu0
  %642 = vmatprep.mubr.bf16.mxu0 %v327
  %643 = vmatmul.mubr.bf16.gmra.mxu0 %v326
  %v644 = vpop.f32.mrf.mxu0
  %v645 = vadd.f32 0.0, %v644
  %v646 = vpop.f32.mrf.mxu0
  %v647 = vpop.f32.mrf.mxu0
  %v648 = vadd.f32 0.0, %v647
  %v649 = vpop.f32.mrf.mxu0
  %650 = vmatprep.mubr.bf16.mxu0 %v329
  %651 = vmatmul.mubr.bf16.gmra.mxu0 %v328
  %v652 = vpop.f32.mrf.mxu0
  %v653 = vadd.f32 0.0, %v652
  %v654 = vpop.f32.mrf.mxu0
  %v655 = vpop.f32.mrf.mxu0
  %v656 = vadd.f32 0.0, %v655
  %v657 = vpop.f32.mrf.mxu0
  %658 = vmatprep.mubr.bf16.mxu0 %v331
  %659 = vmatmul.mubr.bf16.gmra.mxu0 %v330
  %v660 = vpop.f32.mrf.mxu0
  %v661 = vadd.f32 0.0, %v660
  %v662 = vpop.f32.mrf.mxu0
  %v663 = vpop.f32.mrf.mxu0
  %v664 = vadd.f32 0.0, %v663
  %v665 = vpop.f32.mrf.mxu0
  %666 = vmatprep.mubr.bf16.mxu0 %v333
  %667 = vmatmul.mubr.bf16.gmra.mxu0 %v332
  %v668 = vpop.f32.mrf.mxu0
  %v669 = vadd.f32 0.0, %v668
  %v670 = vpop.f32.mrf.mxu0
  %v671 = vpop.f32.mrf.mxu0
  %v672 = vadd.f32 0.0, %v671
  %v673 = vpop.f32.mrf.mxu0
  %674 = vmatprep.mubr.bf16.mxu0 %v335
  %675 = vmatmul.mubr.bf16.gmra.mxu0 %v334
  %v676 = vpop.f32.mrf.mxu0
  %v677 = vadd.f32 0.0, %v676
  %v678 = vpop.f32.mrf.mxu0
  %v679 = vpop.f32.mrf.mxu0
  %v680 = vadd.f32 0.0, %v679
  %v681 = vpop.f32.mrf.mxu0
  %682 = vmatprep.mubr.bf16.mxu0 %v337
  %683 = vmatmul.mubr.bf16.gmra.mxu0 %v336
  %v684 = vpop.f32.mrf.mxu0
  %v685 = vadd.f32 0.0, %v684
  %v686 = vpop.f32.mrf.mxu0
  %v687 = vpop.f32.mrf.mxu0
  %v688 = vadd.f32 0.0, %v687
  %v689 = vpop.f32.mrf.mxu0
  %690 = vmatprep.mubr.bf16.mxu0 %v339
  %691 = vmatmul.mubr.bf16.gmra.mxu0 %v338
  %v692 = vpop.f32.mrf.mxu0
  %v693 = vadd.f32 0.0, %v692
  %v694 = vpop.f32.mrf.mxu0
  %v695 = vpop.f32.mrf.mxu0
  %v696 = vadd.f32 0.0, %v695
  %v697 = vpop.f32.mrf.mxu0
  %698 = vmatprep.mubr.bf16.mxu0 %v341
  %699 = vmatmul.mubr.bf16.gmra.mxu0 %v340
  %v700 = vpop.f32.mrf.mxu0
  %v701 = vadd.f32 0.0, %v700
  %v702 = vpop.f32.mrf.mxu0
  %v703 = vpop.f32.mrf.mxu0
  %v704 = vadd.f32 0.0, %v703
  %v705 = vpop.f32.mrf.mxu0
  %706 = vmatprep.mubr.bf16.mxu0 %v343
  %707 = vmatmul.mubr.bf16.gmra.mxu0 %v342
  %v708 = vpop.f32.mrf.mxu0
  %v709 = vadd.f32 0.0, %v708
  %v710 = vpop.f32.mrf.mxu0
  %v711 = vpop.f32.mrf.mxu0
  %v712 = vadd.f32 0.0, %v711
  %v713 = vpop.f32.mrf.mxu0
  %714 = vmatprep.mubr.bf16.mxu0 %v345
  %715 = vmatmul.mubr.bf16.gmra.mxu0 %v344
  %v716 = vpop.f32.mrf.mxu0
  %v717 = vadd.f32 0.0, %v716
  %v718 = vpop.f32.mrf.mxu0
  %v719 = vpop.f32.mrf.mxu0
  %v720 = vadd.f32 0.0, %v719
  %v721 = vpop.f32.mrf.mxu0
  %722 = vmatprep.mubr.bf16.mxu0 %v347
  %723 = vmatmul.mubr.bf16.gmra.mxu0 %v346
  %v724 = vpop.f32.mrf.mxu0
  %v725 = vadd.f32 0.0, %v724
  %v726 = vpop.f32.mrf.mxu0
  %v727 = vpop.f32.mrf.mxu0
  %v728 = vadd.f32 0.0, %v727
  %v729 = vpop.f32.mrf.mxu0
  %730 = vmatprep.mubr.bf16.mxu0 %v349
  %731 = vmatmul.mubr.bf16.gmra.mxu0 %v348
  %v732 = vpop.f32.mrf.mxu0
  %v733 = vadd.f32 0.0, %v732
  %v734 = vpop.f32.mrf.mxu0
  %v735 = vpop.f32.mrf.mxu0
  %v736 = vadd.f32 0.0, %v735
  %v737 = vpop.f32.mrf.mxu0
  %738 = vmatprep.mubr.bf16.mxu0 %v351
  %739 = vmatmul.mubr.bf16.gmra.mxu0 %v350
  %v740 = vpop.f32.mrf.mxu0
  %v741 = vadd.f32 0.0, %v740
  %v742 = vpop.f32.mrf.mxu0
  %v743 = vpop.f32.mrf.mxu0
  %v744 = vadd.f32 0.0, %v743
  %v745 = vpop.f32.mrf.mxu0
  %746 = vmatprep.mubr.bf16.mxu0 %v353
  %747 = vmatmul.mubr.bf16.gmra.mxu0 %v352
  %v748 = vpop.f32.mrf.mxu0
  %v749 = vadd.f32 0.0, %v748
  %v750 = vpop.f32.mrf.mxu0
  %v751 = vpop.f32.mrf.mxu0
  %v752 = vadd.f32 0.0, %v751
  %v753 = vpop.f32.mrf.mxu0
  %754 = vmatprep.mubr.bf16.mxu0 %v355
  %755 = vmatmul.mubr.bf16.gmra.mxu0 %v354
  %v756 = vpop.f32.mrf.mxu0
  %v757 = vadd.f32 0.0, %v756
  %v758 = vpop.f32.mrf.mxu0
  %v759 = vpop.f32.mrf.mxu0
  %v760 = vadd.f32 0.0, %v759
  %v761 = vpop.f32.mrf.mxu0
  %762 = vmatprep.mubr.bf16.mxu0 %v357
  %763 = vmatmul.mubr.bf16.gmra.mxu0 %v356
  %v764 = vpop.f32.mrf.mxu0
  %v765 = vadd.f32 0.0, %v764
  %v766 = vpop.f32.mrf.mxu0
  %v767 = vpop.f32.mrf.mxu0
  %v768 = vadd.f32 0.0, %v767
  %v769 = vpop.f32.mrf.mxu0
  %770 = vmatprep.mubr.bf16.mxu0 %v359
  %771 = vmatmul.mubr.bf16.gmra.mxu0 %v358
  %v772 = vpop.f32.mrf.mxu0
  %v773 = vadd.f32 0.0, %v772
  %v774 = vpop.f32.mrf.mxu0
  %v775 = vpop.f32.mrf.mxu0
  %v776 = vadd.f32 0.0, %v775
  %v777 = vpop.f32.mrf.mxu0
  %778 = vmatprep.mubr.bf16.mxu0 %v361
  %779 = vmatmul.mubr.bf16.gmra.mxu0 %v360
  %v780 = vpop.f32.mrf.mxu0
  %v781 = vadd.f32 0.0, %v780
  %v782 = vpop.f32.mrf.mxu0
  %v783 = vpop.f32.mrf.mxu0
  %v784 = vadd.f32 0.0, %v783
  %v785 = vpop.f32.mrf.mxu0
  %786 = vmatprep.mubr.bf16.mxu0 %v363
  %787 = vmatmul.mubr.bf16.gmra.mxu0 %v362
  %v788 = vpop.f32.mrf.mxu0
  %v789 = vadd.f32 0.0, %v788
  %v790 = vpop.f32.mrf.mxu0
  %v791 = vpop.f32.mrf.mxu0
  %v792 = vadd.f32 0.0, %v791
  %v793 = vpop.f32.mrf.mxu0
  %794 = vmatprep.mubr.bf16.mxu0 %v365
  %795 = vmatmul.mubr.bf16.gmra.mxu0 %v364
  %v796 = vpop.f32.mrf.mxu0
  %v797 = vadd.f32 0.0, %v796
  %v798 = vpop.f32.mrf.mxu0
  %v799 = vpop.f32.mrf.mxu0
  %v800 = vadd.f32 0.0, %v799
  %v801 = vpop.f32.mrf.mxu0
  %802 = vmatprep.mubr.bf16.mxu0 %v367
  %803 = vmatmul.mubr.bf16.gmra.mxu0 %v366
  %v804 = vpop.f32.mrf.mxu0
  %v805 = vadd.f32 0.0, %v804
  %v806 = vpop.f32.mrf.mxu0
  %v807 = vpop.f32.mrf.mxu0
  %v808 = vadd.f32 0.0, %v807
  %v809 = vpop.f32.mrf.mxu0
  %810 = vmatprep.mubr.bf16.mxu0 %v369
  %811 = vmatmul.mubr.bf16.gmra.mxu0 %v368
  %v812 = vpop.f32.mrf.mxu0
  %v813 = vadd.f32 0.0, %v812
  %v814 = vpop.f32.mrf.mxu0
  %v815 = vpop.f32.mrf.mxu0
  %v816 = vadd.f32 0.0, %v815
  %v817 = vpop.f32.mrf.mxu0
  %818 = vdwg.mxu0
  %v819 = vld [vmem:[%s2] sm:$0x1]
  %v821 = vlaneseq
  %v822 = vshrl.u32 %v821, 7
  %v823 = vsub.s32 0, %v822
  %v824 = vrot.slane %v819, %v823
  %v826 = vmul.f32 %v565, %v824
  %v827 = vmul.f32 %v568, %v824
  %v828 = vmul.f32 %v573, %v824
  %v829 = vmul.f32 %v576, %v824
  %v830 = vmul.f32 %v581, %v824
  %v831 = vmul.f32 %v584, %v824
  %v832 = vmul.f32 %v589, %v824
  %v833 = vmul.f32 %v592, %v824
  %v834 = vmul.f32 %v597, %v824
  %v835 = vmul.f32 %v600, %v824
  %v836 = vmul.f32 %v605, %v824
  %v837 = vmul.f32 %v608, %v824
  %v838 = vmul.f32 %v613, %v824
  %v839 = vmul.f32 %v616, %v824
  %v840 = vmul.f32 %v621, %v824
  %v841 = vmul.f32 %v624, %v824
  %v842 = vmul.f32 %v629, %v824
  %v843 = vmul.f32 %v632, %v824
  %v844 = vmul.f32 %v637, %v824
  %v845 = vmul.f32 %v640, %v824
  %v846 = vmul.f32 %v645, %v824
  %v847 = vmul.f32 %v648, %v824
  %v848 = vmul.f32 %v653, %v824
  %v849 = vmul.f32 %v656, %v824
  %v850 = vmul.f32 %v661, %v824
  %v851 = vmul.f32 %v664, %v824
  %v852 = vmul.f32 %v669, %v824
  %v853 = vmul.f32 %v672, %v824
  %v854 = vmul.f32 %v677, %v824
  %v855 = vmul.f32 %v680, %v824
  %v856 = vmul.f32 %v685, %v824
  %v857 = vmul.f32 %v688, %v824
  %v858 = vmul.f32 %v693, %v824
  %v859 = vmul.f32 %v696, %v824
  %v860 = vmul.f32 %v701, %v824
  %v861 = vmul.f32 %v704, %v824
  %v862 = vmul.f32 %v709, %v824
  %v863 = vmul.f32 %v712, %v824
  %v864 = vmul.f32 %v717, %v824
  %v865 = vmul.f32 %v720, %v824
  %v866 = vmul.f32 %v725, %v824
  %v867 = vmul.f32 %v728, %v824
  %v868 = vmul.f32 %v733, %v824
  %v869 = vmul.f32 %v736, %v824
  %v870 = vmul.f32 %v741, %v824
  %v871 = vmul.f32 %v744, %v824
  %v872 = vmul.f32 %v749, %v824
  %v873 = vmul.f32 %v752, %v824
  %v874 = vmul.f32 %v757, %v824
  %v875 = vmul.f32 %v760, %v824
  %v876 = vmul.f32 %v765, %v824
  %v877 = vmul.f32 %v768, %v824
  %v878 = vmul.f32 %v773, %v824
  %v879 = vmul.f32 %v776, %v824
  %v880 = vmul.f32 %v781, %v824
  %v881 = vmul.f32 %v784, %v824
  %v882 = vmul.f32 %v789, %v824
  %v883 = vmul.f32 %v792, %v824
  %v884 = vmul.f32 %v797, %v824
  %v885 = vmul.f32 %v800, %v824
  %v886 = vmul.f32 %v805, %v824
  %v887 = vmul.f32 %v808, %v824
  %v888 = vmul.f32 %v813, %v824
  %v889 = vmul.f32 %v816, %v824
  %v890 = vld [vmem:[%s3] sm:$0x1]
  %v892 = vlaneseq
  %v893 = vshrl.u32 %v892, 7
  %v894 = vsub.s32 0, %v893
  %v895 = vrot.slane %v890, %v894
  %v897 = vadd.f32 %v826, %v895
  %v898 = vadd.f32 %v827, %v895
  %v899 = vadd.f32 %v828, %v895
  %v900 = vadd.f32 %v829, %v895
  %v901 = vadd.f32 %v830, %v895
  %v902 = vadd.f32 %v831, %v895
  %v903 = vadd.f32 %v832, %v895
  %v904 = vadd.f32 %v833, %v895
  %v905 = vadd.f32 %v834, %v895
  %v906 = vadd.f32 %v835, %v895
  %v907 = vadd.f32 %v836, %v895
  %v908 = vadd.f32 %v837, %v895
  %v909 = vadd.f32 %v838, %v895
  %v910 = vadd.f32 %v839, %v895
  %v911 = vadd.f32 %v840, %v895
  %v912 = vadd.f32 %v841, %v895
  %v913 = vadd.f32 %v842, %v895
  %v914 = vadd.f32 %v843, %v895
  %v915 = vadd.f32 %v844, %v895
  %v916 = vadd.f32 %v845, %v895
  %v917 = vadd.f32 %v846, %v895
  %v918 = vadd.f32 %v847, %v895
  %v919 = vadd.f32 %v848, %v895
  %v920 = vadd.f32 %v849, %v895
  %v921 = vadd.f32 %v850, %v895
  %v922 = vadd.f32 %v851, %v895
  %v923 = vadd.f32 %v852, %v895
  %v924 = vadd.f32 %v853, %v895
  %v925 = vadd.f32 %v854, %v895
  %v926 = vadd.f32 %v855, %v895
  %v927 = vadd.f32 %v856, %v895
  %v928 = vadd.f32 %v857, %v895
  %v929 = vadd.f32 %v858, %v895
  %v930 = vadd.f32 %v859, %v895
  %v931 = vadd.f32 %v860, %v895
  %v932 = vadd.f32 %v861, %v895
  %v933 = vadd.f32 %v862, %v895
  %v934 = vadd.f32 %v863, %v895
  %v935 = vadd.f32 %v864, %v895
  %v936 = vadd.f32 %v865, %v895
  %v937 = vadd.f32 %v866, %v895
  %v938 = vadd.f32 %v867, %v895
  %v939 = vadd.f32 %v868, %v895
  %v940 = vadd.f32 %v869, %v895
  %v941 = vadd.f32 %v870, %v895
  %v942 = vadd.f32 %v871, %v895
  %v943 = vadd.f32 %v872, %v895
  %v944 = vadd.f32 %v873, %v895
  %v945 = vadd.f32 %v874, %v895
  %v946 = vadd.f32 %v875, %v895
  %v947 = vadd.f32 %v876, %v895
  %v948 = vadd.f32 %v877, %v895
  %v949 = vadd.f32 %v878, %v895
  %v950 = vadd.f32 %v879, %v895
  %v951 = vadd.f32 %v880, %v895
  %v952 = vadd.f32 %v881, %v895
  %v953 = vadd.f32 %v882, %v895
  %v954 = vadd.f32 %v883, %v895
  %v955 = vadd.f32 %v884, %v895
  %v956 = vadd.f32 %v885, %v895
  %v957 = vadd.f32 %v886, %v895
  %v958 = vadd.f32 %v887, %v895
  %v959 = vadd.f32 %v888, %v895
  %v960 = vadd.f32 %v889, %v895
  %v961 = vmax.f32 %v897, 0.0
  %v962 = vmax.f32 %v898, 0.0
  %v963 = vmax.f32 %v899, 0.0
  %v964 = vmax.f32 %v900, 0.0
  %v965 = vmax.f32 %v901, 0.0
  %v966 = vmax.f32 %v902, 0.0
  %v967 = vmax.f32 %v903, 0.0
  %v968 = vmax.f32 %v904, 0.0
  %v969 = vmax.f32 %v905, 0.0
  %v970 = vmax.f32 %v906, 0.0
  %v971 = vmax.f32 %v907, 0.0
  %v972 = vmax.f32 %v908, 0.0
  %v973 = vmax.f32 %v909, 0.0
  %v974 = vmax.f32 %v910, 0.0
  %v975 = vmax.f32 %v911, 0.0
  %v976 = vmax.f32 %v912, 0.0
  %v977 = vmax.f32 %v913, 0.0
  %v978 = vmax.f32 %v914, 0.0
  %v979 = vmax.f32 %v915, 0.0
  %v980 = vmax.f32 %v916, 0.0
  %v981 = vmax.f32 %v917, 0.0
  %v982 = vmax.f32 %v918, 0.0
  %v983 = vmax.f32 %v919, 0.0
  %v984 = vmax.f32 %v920, 0.0
  %v985 = vmax.f32 %v921, 0.0
  %v986 = vmax.f32 %v922, 0.0
  %v987 = vmax.f32 %v923, 0.0
  %v988 = vmax.f32 %v924, 0.0
  %v989 = vmax.f32 %v925, 0.0
  %v990 = vmax.f32 %v926, 0.0
  %v991 = vmax.f32 %v927, 0.0
  %v992 = vmax.f32 %v928, 0.0
  %v993 = vmax.f32 %v929, 0.0
  %v994 = vmax.f32 %v930, 0.0
  %v995 = vmax.f32 %v931, 0.0
  %v996 = vmax.f32 %v932, 0.0
  %v997 = vmax.f32 %v933, 0.0
  %v998 = vmax.f32 %v934, 0.0
  %v999 = vmax.f32 %v935, 0.0
  %v1000 = vmax.f32 %v936, 0.0
  %v1001 = vmax.f32 %v937, 0.0
  %v1002 = vmax.f32 %v938, 0.0
  %v1003 = vmax.f32 %v939, 0.0
  %v1004 = vmax.f32 %v940, 0.0
  %v1005 = vmax.f32 %v941, 0.0
  %v1006 = vmax.f32 %v942, 0.0
  %v1007 = vmax.f32 %v943, 0.0
  %v1008 = vmax.f32 %v944, 0.0
  %v1009 = vmax.f32 %v945, 0.0
  %v1010 = vmax.f32 %v946, 0.0
  %v1011 = vmax.f32 %v947, 0.0
  %v1012 = vmax.f32 %v948, 0.0
  %v1013 = vmax.f32 %v949, 0.0
  %v1014 = vmax.f32 %v950, 0.0
  %v1015 = vmax.f32 %v951, 0.0
  %v1016 = vmax.f32 %v952, 0.0
  %v1017 = vmax.f32 %v953, 0.0
  %v1018 = vmax.f32 %v954, 0.0
  %v1019 = vmax.f32 %v955, 0.0
  %v1020 = vmax.f32 %v956, 0.0
  %v1021 = vmax.f32 %v957, 0.0
  %v1022 = vmax.f32 %v958, 0.0
  %v1023 = vmax.f32 %v959, 0.0
  %v1024 = vmax.f32 %v960, 0.0
  %v1025 = vpack.c.bf16 %v962, %v961
  %v1026 = vpack.c.bf16 %v964, %v963
  %v1027 = vpack.c.bf16 %v966, %v965
  %v1028 = vpack.c.bf16 %v968, %v967
  %v1029 = vpack.c.bf16 %v970, %v969
  %v1030 = vpack.c.bf16 %v972, %v971
  %v1031 = vpack.c.bf16 %v974, %v973
  %v1032 = vpack.c.bf16 %v976, %v975
  %v1033 = vpack.c.bf16 %v978, %v977
  %v1034 = vpack.c.bf16 %v980, %v979
  %v1035 = vpack.c.bf16 %v982, %v981
  %v1036 = vpack.c.bf16 %v984, %v983
  %v1037 = vpack.c.bf16 %v986, %v985
  %v1038 = vpack.c.bf16 %v988, %v987
  %v1039 = vpack.c.bf16 %v990, %v989
  %v1040 = vpack.c.bf16 %v992, %v991
  %v1041 = vpack.c.bf16 %v994, %v993
  %v1042 = vpack.c.bf16 %v996, %v995
  %v1043 = vpack.c.bf16 %v998, %v997
  %v1044 = vpack.c.bf16 %v1000, %v999
  %v1045 = vpack.c.bf16 %v1002, %v1001
  %v1046 = vpack.c.bf16 %v1004, %v1003
  %v1047 = vpack.c.bf16 %v1006, %v1005
  %v1048 = vpack.c.bf16 %v1008, %v1007
  %v1049 = vpack.c.bf16 %v1010, %v1009
  %v1050 = vpack.c.bf16 %v1012, %v1011
  %v1051 = vpack.c.bf16 %v1014, %v1013
  %v1052 = vpack.c.bf16 %v1016, %v1015
  %v1053 = vpack.c.bf16 %v1018, %v1017
  %v1054 = vpack.c.bf16 %v1020, %v1019
  %v1055 = vpack.c.bf16 %v1022, %v1021
  %v1056 = vpack.c.bf16 %v1024, %v1023
  %v1089 = vunpack.c.l.b16 %v1025
  %v1090 = vunpack.c.h.b16 %v1025
  %v1091 = vunpack.c.l.b16 %v1026
  %v1092 = vunpack.c.h.b16 %v1026
  %v1093 = vunpack.c.l.b16 %v1027
  %v1094 = vunpack.c.h.b16 %v1027
  %v1095 = vunpack.c.l.b16 %v1028
  %v1096 = vunpack.c.h.b16 %v1028
  %v1097 = vunpack.c.l.b16 %v1029
  %v1098 = vunpack.c.h.b16 %v1029
  %v1099 = vunpack.c.l.b16 %v1030
  %v1100 = vunpack.c.h.b16 %v1030
  %v1101 = vunpack.c.l.b16 %v1031
  %v1102 = vunpack.c.h.b16 %v1031
  %v1103 = vunpack.c.l.b16 %v1032
  %v1104 = vunpack.c.h.b16 %v1032
  %v1105 = vunpack.c.l.b16 %v1033
  %v1106 = vunpack.c.h.b16 %v1033
  %v1107 = vunpack.c.l.b16 %v1034
  %v1108 = vunpack.c.h.b16 %v1034
  %v1109 = vunpack.c.l.b16 %v1035
  %v1110 = vunpack.c.h.b16 %v1035
  %v1111 = vunpack.c.l.b16 %v1036
  %v1112 = vunpack.c.h.b16 %v1036
  %v1113 = vunpack.c.l.b16 %v1037
  %v1114 = vunpack.c.h.b16 %v1037
  %v1115 = vunpack.c.l.b16 %v1038
  %v1116 = vunpack.c.h.b16 %v1038
  %v1117 = vunpack.c.l.b16 %v1039
  %v1118 = vunpack.c.h.b16 %v1039
  %v1119 = vunpack.c.l.b16 %v1040
  %v1120 = vunpack.c.h.b16 %v1040
  %v1121 = vunpack.c.l.b16 %v1041
  %v1122 = vunpack.c.h.b16 %v1041
  %v1123 = vunpack.c.l.b16 %v1042
  %v1124 = vunpack.c.h.b16 %v1042
  %v1125 = vunpack.c.l.b16 %v1043
  %v1126 = vunpack.c.h.b16 %v1043
  %v1127 = vunpack.c.l.b16 %v1044
  %v1128 = vunpack.c.h.b16 %v1044
  %v1129 = vunpack.c.l.b16 %v1045
  %v1130 = vunpack.c.h.b16 %v1045
  %v1131 = vunpack.c.l.b16 %v1046
  %v1132 = vunpack.c.h.b16 %v1046
  %v1133 = vunpack.c.l.b16 %v1047
  %v1134 = vunpack.c.h.b16 %v1047
  %v1135 = vunpack.c.l.b16 %v1048
  %v1136 = vunpack.c.h.b16 %v1048
  %v1137 = vunpack.c.l.b16 %v1049
  %v1138 = vunpack.c.h.b16 %v1049
  %v1139 = vunpack.c.l.b16 %v1050
  %v1140 = vunpack.c.h.b16 %v1050
  %v1141 = vunpack.c.l.b16 %v1051
  %v1142 = vunpack.c.h.b16 %v1051
  %v1143 = vunpack.c.l.b16 %v1052
  %v1144 = vunpack.c.h.b16 %v1052
  %v1145 = vunpack.c.l.b16 %v1053
  %v1146 = vunpack.c.h.b16 %v1053
  %v1147 = vunpack.c.l.b16 %v1054
  %v1148 = vunpack.c.h.b16 %v1054
  %v1149 = vunpack.c.l.b16 %v1055
  %v1150 = vunpack.c.h.b16 %v1055
  %v1151 = vunpack.c.l.b16 %v1056
  %v1152 = vunpack.c.h.b16 %v1056
  %v1153 = vpack.c.b16 %v1089, %v1089
  %v1154 = vpack.c.b16 %v1090, %v1090
  %v1155 = vpack.c.b16 %v1091, %v1091
  %v1156 = vpack.c.b16 %v1092, %v1092
  %v1157 = vpack.c.b16 %v1093, %v1093
  %v1158 = vpack.c.b16 %v1094, %v1094
  %v1159 = vpack.c.b16 %v1095, %v1095
  %v1160 = vpack.c.b16 %v1096, %v1096
  %v1161 = vpack.c.b16 %v1097, %v1097
  %v1162 = vpack.c.b16 %v1098, %v1098
  %v1163 = vpack.c.b16 %v1099, %v1099
  %v1164 = vpack.c.b16 %v1100, %v1100
  %v1165 = vpack.c.b16 %v1101, %v1101
  %v1166 = vpack.c.b16 %v1102, %v1102
  %v1167 = vpack.c.b16 %v1103, %v1103
  %v1168 = vpack.c.b16 %v1104, %v1104
  %v1169 = vpack.c.b16 %v1105, %v1105
  %v1170 = vpack.c.b16 %v1106, %v1106
  %v1171 = vpack.c.b16 %v1107, %v1107
  %v1172 = vpack.c.b16 %v1108, %v1108
  %v1173 = vpack.c.b16 %v1109, %v1109
  %v1174 = vpack.c.b16 %v1110, %v1110
  %v1175 = vpack.c.b16 %v1111, %v1111
  %v1176 = vpack.c.b16 %v1112, %v1112
  %v1177 = vpack.c.b16 %v1113, %v1113
  %v1178 = vpack.c.b16 %v1114, %v1114
  %v1179 = vpack.c.b16 %v1115, %v1115
  %v1180 = vpack.c.b16 %v1116, %v1116
  %v1181 = vpack.c.b16 %v1117, %v1117
  %v1182 = vpack.c.b16 %v1118, %v1118
  %v1183 = vpack.c.b16 %v1119, %v1119
  %v1184 = vpack.c.b16 %v1120, %v1120
  %v1185 = vpack.c.b16 %v1121, %v1121
  %v1186 = vpack.c.b16 %v1122, %v1122
  %v1187 = vpack.c.b16 %v1123, %v1123
  %v1188 = vpack.c.b16 %v1124, %v1124
  %v1189 = vpack.c.b16 %v1125, %v1125
  %v1190 = vpack.c.b16 %v1126, %v1126
  %v1191 = vpack.c.b16 %v1127, %v1127
  %v1192 = vpack.c.b16 %v1128, %v1128
  %v1193 = vpack.c.b16 %v1129, %v1129
  %v1194 = vpack.c.b16 %v1130, %v1130
  %v1195 = vpack.c.b16 %v1131, %v1131
  %v1196 = vpack.c.b16 %v1132, %v1132
  %v1197 = vpack.c.b16 %v1133, %v1133
  %v1198 = vpack.c.b16 %v1134, %v1134
  %v1199 = vpack.c.b16 %v1135, %v1135
  %v1200 = vpack.c.b16 %v1136, %v1136
  %v1201 = vpack.c.b16 %v1137, %v1137
  %v1202 = vpack.c.b16 %v1138, %v1138
  %v1203 = vpack.c.b16 %v1139, %v1139
  %v1204 = vpack.c.b16 %v1140, %v1140
  %v1205 = vpack.c.b16 %v1141, %v1141
  %v1206 = vpack.c.b16 %v1142, %v1142
  %v1207 = vpack.c.b16 %v1143, %v1143
  %v1208 = vpack.c.b16 %v1144, %v1144
  %v1209 = vpack.c.b16 %v1145, %v1145
  %v1210 = vpack.c.b16 %v1146, %v1146
  %v1211 = vpack.c.b16 %v1147, %v1147
  %v1212 = vpack.c.b16 %v1148, %v1148
  %v1213 = vpack.c.b16 %v1149, %v1149
  %v1214 = vpack.c.b16 %v1150, %v1150
  %v1215 = vpack.c.b16 %v1151, %v1151
  %v1216 = vpack.c.b16 %v1152, %v1152
  %1281 = vst [vmem:[%s4] sm:$0xf] %v1153
  %1282 = vst [vmem:[%s4 + $0x4] sm:$0xf] %v1154
  %1283 = vst [vmem:[%s4 + $0x8] sm:$0xf] %v1155
  %1284 = vst [vmem:[%s4 + $0xc] sm:$0xf] %v1156
  %1285 = vst [vmem:[%s4 + $0x10] sm:$0xf] %v1157
  %1286 = vst [vmem:[%s4 + $0x14] sm:$0xf] %v1158
  %1287 = vst [vmem:[%s4 + $0x18] sm:$0xf] %v1159
  %1288 = vst [vmem:[%s4 + $0x1c] sm:$0xf] %v1160
  %1289 = vst [vmem:[%s4 + $0x20] sm:$0xf] %v1161
  %1290 = vst [vmem:[%s4 + $0x24] sm:$0xf] %v1162
  %1291 = vst [vmem:[%s4 + $0x28] sm:$0xf] %v1163
  %1292 = vst [vmem:[%s4 + $0x2c] sm:$0xf] %v1164
  %1293 = vst [vmem:[%s4 + $0x30] sm:$0xf] %v1165
  %1294 = vst [vmem:[%s4 + $0x34] sm:$0xf] %v1166
  %1295 = vst [vmem:[%s4 + $0x38] sm:$0xf] %v1167
  %1296 = vst [vmem:[%s4 + $0x3c] sm:$0xf] %v1168
  %1297 = vst [vmem:[%s4 + $0x40] sm:$0xf] %v1169
  %1298 = vst [vmem:[%s4 + $0x44] sm:$0xf] %v1170
  %1299 = vst [vmem:[%s4 + $0x48] sm:$0xf] %v1171
  %1300 = vst [vmem:[%s4 + $0x4c] sm:$0xf] %v1172
  %1301 = vst [vmem:[%s4 + $0x50] sm:$0xf] %v1173
  %1302 = vst [vmem:[%s4 + $0x54] sm:$0xf] %v1174
  %1303 = vst [vmem:[%s4 + $0x58] sm:$0xf] %v1175
  %1304 = vst [vmem:[%s4 + $0x5c] sm:$0xf] %v1176
  %1305 = vst [vmem:[%s4 + $0x60] sm:$0xf] %v1177
  %1306 = vst [vmem:[%s4 + $0x64] sm:$0xf] %v1178
  %1307 = vst [vmem:[%s4 + $0x68] sm:$0xf] %v1179
  %1308 = vst [vmem:[%s4 + $0x6c] sm:$0xf] %v1180
  %1309 = vst [vmem:[%s4 + $0x70] sm:$0xf] %v1181
  %1310 = vst [vmem:[%s4 + $0x74] sm:$0xf] %v1182
  %1311 = vst [vmem:[%s4 + $0x78] sm:$0xf] %v1183
  %1312 = vst [vmem:[%s4 + $0x7c] sm:$0xf] %v1184
  %1313 = vst [vmem:[%s4 + $0x80] sm:$0xf] %v1185
  %1314 = vst [vmem:[%s4 + $0x84] sm:$0xf] %v1186
  %1315 = vst [vmem:[%s4 + $0x88] sm:$0xf] %v1187
  %1316 = vst [vmem:[%s4 + $0x8c] sm:$0xf] %v1188
  %1317 = vst [vmem:[%s4 + $0x90] sm:$0xf] %v1189
  %1318 = vst [vmem:[%s4 + $0x94] sm:$0xf] %v1190
  %1319 = vst [vmem:[%s4 + $0x98] sm:$0xf] %v1191
  %1320 = vst [vmem:[%s4 + $0x9c] sm:$0xf] %v1192
  %1321 = vst [vmem:[%s4 + $0xa0] sm:$0xf] %v1193
  %1322 = vst [vmem:[%s4 + $0xa4] sm:$0xf] %v1194
  %1323 = vst [vmem:[%s4 + $0xa8] sm:$0xf] %v1195
  %1324 = vst [vmem:[%s4 + $0xac] sm:$0xf] %v1196
  %1325 = vst [vmem:[%s4 + $0xb0] sm:$0xf] %v1197
  %1326 = vst [vmem:[%s4 + $0xb4] sm:$0xf] %v1198
  %1327 = vst [vmem:[%s4 + $0xb8] sm:$0xf] %v1199
  %1328 = vst [vmem:[%s4 + $0xbc] sm:$0xf] %v1200
  %1329 = vst [vmem:[%s4 + $0xc0] sm:$0xf] %v1201
  %1330 = vst [vmem:[%s4 + $0xc4] sm:$0xf] %v1202
  %1331 = vst [vmem:[%s4 + $0xc8] sm:$0xf] %v1203
  %1332 = vst [vmem:[%s4 + $0xcc] sm:$0xf] %v1204
  %1333 = vst [vmem:[%s4 + $0xd0] sm:$0xf] %v1205
  %1334 = vst [vmem:[%s4 + $0xd4] sm:$0xf] %v1206
  %1335 = vst [vmem:[%s4 + $0xd8] sm:$0xf] %v1207
  %1336 = vst [vmem:[%s4 + $0xdc] sm:$0xf] %v1208
  %1337 = vst [vmem:[%s4 + $0xe0] sm:$0xf] %v1209
  %1338 = vst [vmem:[%s4 + $0xe4] sm:$0xf] %v1210
  %1339 = vst [vmem:[%s4 + $0xe8] sm:$0xf] %v1211
  %1340 = vst [vmem:[%s4 + $0xec] sm:$0xf] %v1212
  %1341 = vst [vmem:[%s4 + $0xf0] sm:$0xf] %v1213
  %1342 = vst [vmem:[%s4 + $0xf4] sm:$0xf] %v1214
  %1343 = vst [vmem:[%s4 + $0xf8] sm:$0xf] %v1215
  %1344 = vst [vmem:[%s4 + $0xfc] sm:$0xf] %v1216
  // Predicated region
  $region18: #{occlusion_net_forward.11} parent=0 // pred_check
    _
  $region19: #{occlusion_net_forward.11} parent=0 // pred_check_branch
    %1346 = sbr.rel (0) target = $region21
  $region20: #{occlusion_net_forward.11} parent=0 // pred_region
    _
  $region21: #{occlusion_net_forward.11} parent=0 // pred_fallthru
    _
  // Predicated region
  $region22: #{occlusion_net_forward.11} parent=0 // pred_check
    _
  $region23: #{occlusion_net_forward.11} parent=0 // pred_check_branch
    %1348 = sbr.rel (0) target = $region25
  $region24: #{occlusion_net_forward.11} parent=0 // pred_region
    _
  $region25: #{occlusion_net_forward.11} parent=0 // pred_fallthru
    _

// kernel: occlusion_net_forward.12
$region0: #{occlusion_net_forward.12}
  #allocation0 [shape = 'u32[]', space=smem, size = 0x4, offset = 0x4, fixed_abs, tag = 'smem constant byte address 0x4 - core index']
  #allocation1 [shape = 'u32[144,128]{1,0:T(1,128)}', space=vmem, size = 0x12000, scoped, tag = 'internal scratch']
  %s0 = inlined_call_operand.vmem [shape: bf16[512,128], index: 0, kind: input, shape index: {}]
  %s1 = inlined_call_operand.vmem [shape: bf16[128,128], index: 1, kind: input, shape index: {}]
  %s2 = inlined_call_operand.vmem [shape: f32[1,128], index: 2, kind: input, shape index: {}]
  %s3 = inlined_call_operand.vmem [shape: f32[1,128], index: 3, kind: input, shape index: {}]
  %s4 = inlined_call_operand.vmem [shape: bf16[512,128], index: 4, kind: output, shape index: {}]
  %s5 = sld [smem:[#allocation0]]
  $region26: #{occlusion_net_forward.12} parent=0
    _
  %s7 = ssub.s32 1, %s5
  %s8 = scalar_select 0, %s7, %s5
  // Predicated region
  $region2: #{occlusion_net_forward.12} parent=0 // pred_check
    _
  $region3: #{occlusion_net_forward.12} parent=0 // pred_check_branch
    %10 = sbr.rel (0) target = $region5
  $region4: #{occlusion_net_forward.12} parent=0 // pred_region
    _
  $region5: #{occlusion_net_forward.12} parent=0 // pred_fallthru
    _
  // Predicated region
  $region6: #{occlusion_net_forward.12} parent=0 // pred_check
    _
  $region7: #{occlusion_net_forward.12} parent=0 // pred_check_branch
    %12 = sbr.rel (0) target = $region9
  $region8: #{occlusion_net_forward.12} parent=0 // pred_region
    _
  $region9: #{occlusion_net_forward.12} parent=0 // pred_fallthru
    _
  // Predicated region
  $region10: #{occlusion_net_forward.12} parent=0 // pred_check
    _
  $region11: #{occlusion_net_forward.12} parent=0 // pred_check_branch
    %14 = sbr.rel (0) target = $region13
  $region12: #{occlusion_net_forward.12} parent=0 // pred_region
    _
  $region13: #{occlusion_net_forward.12} parent=0 // pred_fallthru
    _
  // Predicated region
  $region14: #{occlusion_net_forward.12} parent=0 // pred_check
    _
  $region15: #{occlusion_net_forward.12} parent=0 // pred_check_branch
    %16 = sbr.rel (0) target = $region17
  $region16: #{occlusion_net_forward.12} parent=0 // pred_region
    _
  $region17: #{occlusion_net_forward.12} parent=0 // pred_fallthru
    _
  %v18 = vld [vmem:[%s0] sm:$0xf]
  %v19 = vld [vmem:[%s0 + $0x4] sm:$0xf]
  %v20 = vld [vmem:[%s0 + $0x8] sm:$0xf]
  %v21 = vld [vmem:[%s0 + $0xc] sm:$0xf]
  %v22 = vld [vmem:[%s0 + $0x10] sm:$0xf]
  %v23 = vld [vmem:[%s0 + $0x14] sm:$0xf]
  %v24 = vld [vmem:[%s0 + $0x18] sm:$0xf]
  %v25 = vld [vmem:[%s0 + $0x1c] sm:$0xf]
  %v26 = vld [vmem:[%s0 + $0x20] sm:$0xf]
  %v27 = vld [vmem:[%s0 + $0x24] sm:$0xf]
  %v28 = vld [vmem:[%s0 + $0x28] sm:$0xf]
  %v29 = vld [vmem:[%s0 + $0x2c] sm:$0xf]
  %v30 = vld [vmem:[%s0 + $0x30] sm:$0xf]
  %v31 = vld [vmem:[%s0 + $0x34] sm:$0xf]
  %v32 = vld [vmem:[%s0 + $0x38] sm:$0xf]
  %v33 = vld [vmem:[%s0 + $0x3c] sm:$0xf]
  %v34 = vld [vmem:[%s0 + $0x40] sm:$0xf]
  %v35 = vld [vmem:[%s0 + $0x44] sm:$0xf]
  %v36 = vld [vmem:[%s0 + $0x48] sm:$0xf]
  %v37 = vld [vmem:[%s0 + $0x4c] sm:$0xf]
  %v38 = vld [vmem:[%s0 + $0x50] sm:$0xf]
  %v39 = vld [vmem:[%s0 + $0x54] sm:$0xf]
  %v40 = vld [vmem:[%s0 + $0x58] sm:$0xf]
  %v41 = vld [vmem:[%s0 + $0x5c] sm:$0xf]
  %v42 = vld [vmem:[%s0 + $0x60] sm:$0xf]
  %v43 = vld [vmem:[%s0 + $0x64] sm:$0xf]
  %v44 = vld [vmem:[%s0 + $0x68] sm:$0xf]
  %v45 = vld [vmem:[%s0 + $0x6c] sm:$0xf]
  %v46 = vld [vmem:[%s0 + $0x70] sm:$0xf]
  %v47 = vld [vmem:[%s0 + $0x74] sm:$0xf]
  %v48 = vld [vmem:[%s0 + $0x78] sm:$0xf]
  %v49 = vld [vmem:[%s0 + $0x7c] sm:$0xf]
  %v50 = vld [vmem:[%s0 + $0x80] sm:$0xf]
  %v51 = vld [vmem:[%s0 + $0x84] sm:$0xf]
  %v52 = vld [vmem:[%s0 + $0x88] sm:$0xf]
  %v53 = vld [vmem:[%s0 + $0x8c] sm:$0xf]
  %v54 = vld [vmem:[%s0 + $0x90] sm:$0xf]
  %v55 = vld [vmem:[%s0 + $0x94] sm:$0xf]
  %v56 = vld [vmem:[%s0 + $0x98] sm:$0xf]
  %v57 = vld [vmem:[%s0 + $0x9c] sm:$0xf]
  %v58 = vld [vmem:[%s0 + $0xa0] sm:$0xf]
  %v59 = vld [vmem:[%s0 + $0xa4] sm:$0xf]
  %v60 = vld [vmem:[%s0 + $0xa8] sm:$0xf]
  %v61 = vld [vmem:[%s0 + $0xac] sm:$0xf]
  %v62 = vld [vmem:[%s0 + $0xb0] sm:$0xf]
  %v63 = vld [vmem:[%s0 + $0xb4] sm:$0xf]
  %v64 = vld [vmem:[%s0 + $0xb8] sm:$0xf]
  %v65 = vld [vmem:[%s0 + $0xbc] sm:$0xf]
  %v66 = vld [vmem:[%s0 + $0xc0] sm:$0xf]
  %v67 = vld [vmem:[%s0 + $0xc4] sm:$0xf]
  %v68 = vld [vmem:[%s0 + $0xc8] sm:$0xf]
  %v69 = vld [vmem:[%s0 + $0xcc] sm:$0xf]
  %v70 = vld [vmem:[%s0 + $0xd0] sm:$0xf]
  %v71 = vld [vmem:[%s0 + $0xd4] sm:$0xf]
  %v72 = vld [vmem:[%s0 + $0xd8] sm:$0xf]
  %v73 = vld [vmem:[%s0 + $0xdc] sm:$0xf]
  %v74 = vld [vmem:[%s0 + $0xe0] sm:$0xf]
  %v75 = vld [vmem:[%s0 + $0xe4] sm:$0xf]
  %v76 = vld [vmem:[%s0 + $0xe8] sm:$0xf]
  %v77 = vld [vmem:[%s0 + $0xec] sm:$0xf]
  %v78 = vld [vmem:[%s0 + $0xf0] sm:$0xf]
  %v79 = vld [vmem:[%s0 + $0xf4] sm:$0xf]
  %v80 = vld [vmem:[%s0 + $0xf8] sm:$0xf]
  %v81 = vld [vmem:[%s0 + $0xfc] sm:$0xf]
  %v82 = vld [vmem:[%s1] sm:$0xf]
  %v83 = vld [vmem:[%s1 + $0x4] sm:$0xf]
  %v84 = vld [vmem:[%s1 + $0x8] sm:$0xf]
  %v85 = vld [vmem:[%s1 + $0xc] sm:$0xf]
  %v86 = vld [vmem:[%s1 + $0x10] sm:$0xf]
  %v87 = vld [vmem:[%s1 + $0x14] sm:$0xf]
  %v88 = vld [vmem:[%s1 + $0x18] sm:$0xf]
  %v89 = vld [vmem:[%s1 + $0x1c] sm:$0xf]
  %v90 = vld [vmem:[%s1 + $0x20] sm:$0xf]
  %v91 = vld [vmem:[%s1 + $0x24] sm:$0xf]
  %v92 = vld [vmem:[%s1 + $0x28] sm:$0xf]
  %v93 = vld [vmem:[%s1 + $0x2c] sm:$0xf]
  %v94 = vld [vmem:[%s1 + $0x30] sm:$0xf]
  %v95 = vld [vmem:[%s1 + $0x34] sm:$0xf]
  %v96 = vld [vmem:[%s1 + $0x38] sm:$0xf]
  %v97 = vld [vmem:[%s1 + $0x3c] sm:$0xf]
  %v162 = vunpack.c.l.b16 %v18
  %v163 = vunpack.c.l.b16 %v19
  %v164 = vunpack.c.l.b16 %v20
  %v165 = vunpack.c.l.b16 %v21
  %v166 = vunpack.c.l.b16 %v22
  %v167 = vunpack.c.l.b16 %v23
  %v168 = vunpack.c.l.b16 %v24
  %v169 = vunpack.c.l.b16 %v25
  %v170 = vunpack.c.l.b16 %v26
  %v171 = vunpack.c.l.b16 %v27
  %v172 = vunpack.c.l.b16 %v28
  %v173 = vunpack.c.l.b16 %v29
  %v174 = vunpack.c.l.b16 %v30
  %v175 = vunpack.c.l.b16 %v31
  %v176 = vunpack.c.l.b16 %v32
  %v177 = vunpack.c.l.b16 %v33
  %v178 = vunpack.c.l.b16 %v34
  %v179 = vunpack.c.l.b16 %v35
  %v180 = vunpack.c.l.b16 %v36
  %v181 = vunpack.c.l.b16 %v37
  %v182 = vunpack.c.l.b16 %v38
  %v183 = vunpack.c.l.b16 %v39
  %v184 = vunpack.c.l.b16 %v40
  %v185 = vunpack.c.l.b16 %v41
  %v186 = vunpack.c.l.b16 %v42
  %v187 = vunpack.c.l.b16 %v43
  %v188 = vunpack.c.l.b16 %v44
  %v189 = vunpack.c.l.b16 %v45
  %v190 = vunpack.c.l.b16 %v46
  %v191 = vunpack.c.l.b16 %v47
  %v192 = vunpack.c.l.b16 %v48
  %v193 = vunpack.c.l.b16 %v49
  %v194 = vunpack.c.l.b16 %v50
  %v195 = vunpack.c.l.b16 %v51
  %v196 = vunpack.c.l.b16 %v52
  %v197 = vunpack.c.l.b16 %v53
  %v198 = vunpack.c.l.b16 %v54
  %v199 = vunpack.c.l.b16 %v55
  %v200 = vunpack.c.l.b16 %v56
  %v201 = vunpack.c.l.b16 %v57
  %v202 = vunpack.c.l.b16 %v58
  %v203 = vunpack.c.l.b16 %v59
  %v204 = vunpack.c.l.b16 %v60
  %v205 = vunpack.c.l.b16 %v61
  %v206 = vunpack.c.l.b16 %v62
  %v207 = vunpack.c.l.b16 %v63
  %v208 = vunpack.c.l.b16 %v64
  %v209 = vunpack.c.l.b16 %v65
  %v210 = vunpack.c.l.b16 %v66
  %v211 = vunpack.c.l.b16 %v67
  %v212 = vunpack.c.l.b16 %v68
  %v213 = vunpack.c.l.b16 %v69
  %v214 = vunpack.c.l.b16 %v70
  %v215 = vunpack.c.l.b16 %v71
  %v216 = vunpack.c.l.b16 %v72
  %v217 = vunpack.c.l.b16 %v73
  %v218 = vunpack.c.l.b16 %v74
  %v219 = vunpack.c.l.b16 %v75
  %v220 = vunpack.c.l.b16 %v76
  %v221 = vunpack.c.l.b16 %v77
  %v222 = vunpack.c.l.b16 %v78
  %v223 = vunpack.c.l.b16 %v79
  %v224 = vunpack.c.l.b16 %v80
  %v225 = vunpack.c.l.b16 %v81
  %v226 = vpack.c.b16 %v163, %v162
  %v227 = vpack.c.b16 %v165, %v164
  %v228 = vpack.c.b16 %v167, %v166
  %v229 = vpack.c.b16 %v169, %v168
  %v230 = vpack.c.b16 %v171, %v170
  %v231 = vpack.c.b16 %v173, %v172
  %v232 = vpack.c.b16 %v175, %v174
  %v233 = vpack.c.b16 %v177, %v176
  %v234 = vpack.c.b16 %v179, %v178
  %v235 = vpack.c.b16 %v181, %v180
  %v236 = vpack.c.b16 %v183, %v182
  %v237 = vpack.c.b16 %v185, %v184
  %v238 = vpack.c.b16 %v187, %v186
  %v239 = vpack.c.b16 %v189, %v188
  %v240 = vpack.c.b16 %v191, %v190
  %v241 = vpack.c.b16 %v193, %v192
  %v242 = vpack.c.b16 %v195, %v194
  %v243 = vpack.c.b16 %v197, %v196
  %v244 = vpack.c.b16 %v199, %v198
  %v245 = vpack.c.b16 %v201, %v200
  %v246 = vpack.c.b16 %v203, %v202
  %v247 = vpack.c.b16 %v205, %v204
  %v248 = vpack.c.b16 %v207, %v206
  %v249 = vpack.c.b16 %v209, %v208
  %v250 = vpack.c.b16 %v211, %v210
  %v251 = vpack.c.b16 %v213, %v212
  %v252 = vpack.c.b16 %v215, %v214
  %v253 = vpack.c.b16 %v217, %v216
  %v254 = vpack.c.b16 %v219, %v218
  %v255 = vpack.c.b16 %v221, %v220
  %v256 = vpack.c.b16 %v223, %v222
  %v257 = vpack.c.b16 %v225, %v224
  %v306 = vunpack.c.l.b16 %v82
  %v307 = vunpack.c.l.b16 %v83
  %v308 = vunpack.c.l.b16 %v84
  %v309 = vunpack.c.l.b16 %v85
  %v310 = vunpack.c.l.b16 %v86
  %v311 = vunpack.c.l.b16 %v87
  %v312 = vunpack.c.l.b16 %v88
  %v313 = vunpack.c.l.b16 %v89
  %v314 = vunpack.c.l.b16 %v90
  %v315 = vunpack.c.l.b16 %v91
  %v316 = vunpack.c.l.b16 %v92
  %v317 = vunpack.c.l.b16 %v93
  %v318 = vunpack.c.l.b16 %v94
  %v319 = vunpack.c.l.b16 %v95
  %v320 = vunpack.c.l.b16 %v96
  %v321 = vunpack.c.l.b16 %v97
  %v322 = vpack.c.b16 %v307, %v306
  %v323 = vpack.c.b16 %v309, %v308
  %v324 = vpack.c.b16 %v311, %v310
  %v325 = vpack.c.b16 %v313, %v312
  %v326 = vpack.c.b16 %v315, %v314
  %v327 = vpack.c.b16 %v317, %v316
  %v328 = vpack.c.b16 %v319, %v318
  %v329 = vpack.c.b16 %v321, %v320
  %338 = vmatprep.subr.bf16.mxu0 0
  %339 = vmatpush1.bf16.msra.mxu0 %v329
  %340 = vmatprep.subr.bf16.mxu0 0
  %341 = vmatpush1.bf16.msra.mxu0 %v328
  %342 = vmatprep.subr.bf16.mxu0 0
  %343 = vmatpush1.bf16.msra.mxu0 %v327
  %344 = vmatprep.subr.bf16.mxu0 0
  %345 = vmatpush1.bf16.msra.mxu0 %v326
  %346 = vmatprep.subr.bf16.mxu0 0
  %347 = vmatpush1.bf16.msra.mxu0 %v325
  %348 = vmatprep.subr.bf16.mxu0 0
  %349 = vmatpush1.bf16.msra.mxu0 %v324
  %350 = vmatprep.subr.bf16.mxu0 0
  %351 = vmatpush1.bf16.msra.mxu0 %v323
  %352 = vmatprep.subr.bf16.mxu0 0
  %353 = vmatpush1.bf16.msra.mxu0 %v322
  %354 = vmatprep.subr.bf16.mxu0 0
  %355 = vmatpush2.bf16.msra.mxu0 0
  %356 = vmatprep.subr.bf16.mxu0 0
  %357 = vmatpush2.bf16.msra.mxu0 0
  %358 = vmatprep.subr.bf16.mxu0 0
  %359 = vmatpush2.bf16.msra.mxu0 0
  %360 = vmatprep.subr.bf16.mxu0 0
  %361 = vmatpush2.bf16.msra.mxu0 0
  %362 = vmatprep.subr.bf16.mxu0 0
  %363 = vmatpush2.bf16.msra.mxu0 0
  %364 = vmatprep.subr.bf16.mxu0 0
  %365 = vmatpush2.bf16.msra.mxu0 0
  %366 = vmatprep.subr.bf16.mxu0 0
  %367 = vmatpush2.bf16.msra.mxu0 0
  %368 = vmatprep.subr.bf16.mxu0 0
  %369 = vmatpush2.bf16.msra.mxu0 0
  %370 = vmatprep.mubr.bf16.mxu0 0
  %371 = vmatmul.mubr.bf16.gmra.mxu0 %v226
  %v372 = vpop.f32.mrf.mxu0
  %v373 = vadd.f32 0.0, %v372
  %v374 = vpop.f32.mrf.mxu0
  %v375 = vpop.f32.mrf.mxu0
  %v376 = vadd.f32 0.0, %v375
  %v377 = vpop.f32.mrf.mxu0
  %378 = vmatprep.mubr.bf16.mxu0 0
  %379 = vmatmul.mubr.bf16.gmra.mxu0 %v227
  %v380 = vpop.f32.mrf.mxu0
  %v381 = vadd.f32 0.0, %v380
  %v382 = vpop.f32.mrf.mxu0
  %v383 = vpop.f32.mrf.mxu0
  %v384 = vadd.f32 0.0, %v383
  %v385 = vpop.f32.mrf.mxu0
  %386 = vmatprep.mubr.bf16.mxu0 0
  %387 = vmatmul.mubr.bf16.gmra.mxu0 %v228
  %v388 = vpop.f32.mrf.mxu0
  %v389 = vadd.f32 0.0, %v388
  %v390 = vpop.f32.mrf.mxu0
  %v391 = vpop.f32.mrf.mxu0
  %v392 = vadd.f32 0.0, %v391
  %v393 = vpop.f32.mrf.mxu0
  %394 = vmatprep.mubr.bf16.mxu0 0
  %395 = vmatmul.mubr.bf16.gmra.mxu0 %v229
  %v396 = vpop.f32.mrf.mxu0
  %v397 = vadd.f32 0.0, %v396
  %v398 = vpop.f32.mrf.mxu0
  %v399 = vpop.f32.mrf.mxu0
  %v400 = vadd.f32 0.0, %v399
  %v401 = vpop.f32.mrf.mxu0
  %402 = vmatprep.mubr.bf16.mxu0 0
  %403 = vmatmul.mubr.bf16.gmra.mxu0 %v230
  %v404 = vpop.f32.mrf.mxu0
  %v405 = vadd.f32 0.0, %v404
  %v406 = vpop.f32.mrf.mxu0
  %v407 = vpop.f32.mrf.mxu0
  %v408 = vadd.f32 0.0, %v407
  %v409 = vpop.f32.mrf.mxu0
  %410 = vmatprep.mubr.bf16.mxu0 0
  %411 = vmatmul.mubr.bf16.gmra.mxu0 %v231
  %v412 = vpop.f32.mrf.mxu0
  %v413 = vadd.f32 0.0, %v412
  %v414 = vpop.f32.mrf.mxu0
  %v415 = vpop.f32.mrf.mxu0
  %v416 = vadd.f32 0.0, %v415
  %v417 = vpop.f32.mrf.mxu0
  %418 = vmatprep.mubr.bf16.mxu0 0
  %419 = vmatmul.mubr.bf16.gmra.mxu0 %v232
  %v420 = vpop.f32.mrf.mxu0
  %v421 = vadd.f32 0.0, %v420
  %v422 = vpop.f32.mrf.mxu0
  %v423 = vpop.f32.mrf.mxu0
  %v424 = vadd.f32 0.0, %v423
  %v425 = vpop.f32.mrf.mxu0
  %426 = vmatprep.mubr.bf16.mxu0 0
  %427 = vmatmul.mubr.bf16.gmra.mxu0 %v233
  %v428 = vpop.f32.mrf.mxu0
  %v429 = vadd.f32 0.0, %v428
  %v430 = vpop.f32.mrf.mxu0
  %v431 = vpop.f32.mrf.mxu0
  %v432 = vadd.f32 0.0, %v431
  %v433 = vpop.f32.mrf.mxu0
  %434 = vmatprep.mubr.bf16.mxu0 0
  %435 = vmatmul.mubr.bf16.gmra.mxu0 %v234
  %v436 = vpop.f32.mrf.mxu0
  %v437 = vadd.f32 0.0, %v436
  %v438 = vpop.f32.mrf.mxu0
  %v439 = vpop.f32.mrf.mxu0
  %v440 = vadd.f32 0.0, %v439
  %v441 = vpop.f32.mrf.mxu0
  %442 = vmatprep.mubr.bf16.mxu0 0
  %443 = vmatmul.mubr.bf16.gmra.mxu0 %v235
  %v444 = vpop.f32.mrf.mxu0
  %v445 = vadd.f32 0.0, %v444
  %v446 = vpop.f32.mrf.mxu0
  %v447 = vpop.f32.mrf.mxu0
  %v448 = vadd.f32 0.0, %v447
  %v449 = vpop.f32.mrf.mxu0
  %450 = vmatprep.mubr.bf16.mxu0 0
  %451 = vmatmul.mubr.bf16.gmra.mxu0 %v236
  %v452 = vpop.f32.mrf.mxu0
  %v453 = vadd.f32 0.0, %v452
  %v454 = vpop.f32.mrf.mxu0
  %v455 = vpop.f32.mrf.mxu0
  %v456 = vadd.f32 0.0, %v455
  %v457 = vpop.f32.mrf.mxu0
  %458 = vmatprep.mubr.bf16.mxu0 0
  %459 = vmatmul.mubr.bf16.gmra.mxu0 %v237
  %v460 = vpop.f32.mrf.mxu0
  %v461 = vadd.f32 0.0, %v460
  %v462 = vpop.f32.mrf.mxu0
  %v463 = vpop.f32.mrf.mxu0
  %v464 = vadd.f32 0.0, %v463
  %v465 = vpop.f32.mrf.mxu0
  %466 = vmatprep.mubr.bf16.mxu0 0
  %467 = vmatmul.mubr.bf16.gmra.mxu0 %v238
  %v468 = vpop.f32.mrf.mxu0
  %v469 = vadd.f32 0.0, %v468
  %v470 = vpop.f32.mrf.mxu0
  %v471 = vpop.f32.mrf.mxu0
  %v472 = vadd.f32 0.0, %v471
  %v473 = vpop.f32.mrf.mxu0
  %474 = vmatprep.mubr.bf16.mxu0 0
  %475 = vmatmul.mubr.bf16.gmra.mxu0 %v239
  %v476 = vpop.f32.mrf.mxu0
  %v477 = vadd.f32 0.0, %v476
  %v478 = vpop.f32.mrf.mxu0
  %v479 = vpop.f32.mrf.mxu0
  %v480 = vadd.f32 0.0, %v479
  %v481 = vpop.f32.mrf.mxu0
  %482 = vmatprep.mubr.bf16.mxu0 0
  %483 = vmatmul.mubr.bf16.gmra.mxu0 %v240
  %v484 = vpop.f32.mrf.mxu0
  %v485 = vadd.f32 0.0, %v484
  %v486 = vpop.f32.mrf.mxu0
  %v487 = vpop.f32.mrf.mxu0
  %v488 = vadd.f32 0.0, %v487
  %v489 = vpop.f32.mrf.mxu0
  %490 = vmatprep.mubr.bf16.mxu0 0
  %491 = vmatmul.mubr.bf16.gmra.mxu0 %v241
  %v492 = vpop.f32.mrf.mxu0
  %v493 = vadd.f32 0.0, %v492
  %v494 = vpop.f32.mrf.mxu0
  %v495 = vpop.f32.mrf.mxu0
  %v496 = vadd.f32 0.0, %v495
  %v497 = vpop.f32.mrf.mxu0
  %498 = vmatprep.mubr.bf16.mxu0 0
  %499 = vmatmul.mubr.bf16.gmra.mxu0 %v242
  %v500 = vpop.f32.mrf.mxu0
  %v501 = vadd.f32 0.0, %v500
  %v502 = vpop.f32.mrf.mxu0
  %v503 = vpop.f32.mrf.mxu0
  %v504 = vadd.f32 0.0, %v503
  %v505 = vpop.f32.mrf.mxu0
  %506 = vmatprep.mubr.bf16.mxu0 0
  %507 = vmatmul.mubr.bf16.gmra.mxu0 %v243
  %v508 = vpop.f32.mrf.mxu0
  %v509 = vadd.f32 0.0, %v508
  %v510 = vpop.f32.mrf.mxu0
  %v511 = vpop.f32.mrf.mxu0
  %v512 = vadd.f32 0.0, %v511
  %v513 = vpop.f32.mrf.mxu0
  %514 = vmatprep.mubr.bf16.mxu0 0
  %515 = vmatmul.mubr.bf16.gmra.mxu0 %v244
  %v516 = vpop.f32.mrf.mxu0
  %v517 = vadd.f32 0.0, %v516
  %v518 = vpop.f32.mrf.mxu0
  %v519 = vpop.f32.mrf.mxu0
  %v520 = vadd.f32 0.0, %v519
  %v521 = vpop.f32.mrf.mxu0
  %522 = vmatprep.mubr.bf16.mxu0 0
  %523 = vmatmul.mubr.bf16.gmra.mxu0 %v245
  %v524 = vpop.f32.mrf.mxu0
  %v525 = vadd.f32 0.0, %v524
  %v526 = vpop.f32.mrf.mxu0
  %v527 = vpop.f32.mrf.mxu0
  %v528 = vadd.f32 0.0, %v527
  %v529 = vpop.f32.mrf.mxu0
  %530 = vmatprep.mubr.bf16.mxu0 0
  %531 = vmatmul.mubr.bf16.gmra.mxu0 %v246
  %v532 = vpop.f32.mrf.mxu0
  %v533 = vadd.f32 0.0, %v532
  %v534 = vpop.f32.mrf.mxu0
  %v535 = vpop.f32.mrf.mxu0
  %v536 = vadd.f32 0.0, %v535
  %v537 = vpop.f32.mrf.mxu0
  %538 = vmatprep.mubr.bf16.mxu0 0
  %539 = vmatmul.mubr.bf16.gmra.mxu0 %v247
  %v540 = vpop.f32.mrf.mxu0
  %v541 = vadd.f32 0.0, %v540
  %v542 = vpop.f32.mrf.mxu0
  %v543 = vpop.f32.mrf.mxu0
  %v544 = vadd.f32 0.0, %v543
  %v545 = vpop.f32.mrf.mxu0
  %546 = vmatprep.mubr.bf16.mxu0 0
  %547 = vmatmul.mubr.bf16.gmra.mxu0 %v248
  %v548 = vpop.f32.mrf.mxu0
  %v549 = vadd.f32 0.0, %v548
  %v550 = vpop.f32.mrf.mxu0
  %v551 = vpop.f32.mrf.mxu0
  %v552 = vadd.f32 0.0, %v551
  %v553 = vpop.f32.mrf.mxu0
  %554 = vmatprep.mubr.bf16.mxu0 0
  %555 = vmatmul.mubr.bf16.gmra.mxu0 %v249
  %v556 = vpop.f32.mrf.mxu0
  %v557 = vadd.f32 0.0, %v556
  %v558 = vpop.f32.mrf.mxu0
  %v559 = vpop.f32.mrf.mxu0
  %v560 = vadd.f32 0.0, %v559
  %v561 = vpop.f32.mrf.mxu0
  %562 = vmatprep.mubr.bf16.mxu0 0
  %563 = vmatmul.mubr.bf16.gmra.mxu0 %v250
  %v564 = vpop.f32.mrf.mxu0
  %v565 = vadd.f32 0.0, %v564
  %v566 = vpop.f32.mrf.mxu0
  %v567 = vpop.f32.mrf.mxu0
  %v568 = vadd.f32 0.0, %v567
  %v569 = vpop.f32.mrf.mxu0
  %570 = vmatprep.mubr.bf16.mxu0 0
  %571 = vmatmul.mubr.bf16.gmra.mxu0 %v251
  %v572 = vpop.f32.mrf.mxu0
  %v573 = vadd.f32 0.0, %v572
  %v574 = vpop.f32.mrf.mxu0
  %v575 = vpop.f32.mrf.mxu0
  %v576 = vadd.f32 0.0, %v575
  %v577 = vpop.f32.mrf.mxu0
  %578 = vmatprep.mubr.bf16.mxu0 0
  %579 = vmatmul.mubr.bf16.gmra.mxu0 %v252
  %v580 = vpop.f32.mrf.mxu0
  %v581 = vadd.f32 0.0, %v580
  %v582 = vpop.f32.mrf.mxu0
  %v583 = vpop.f32.mrf.mxu0
  %v584 = vadd.f32 0.0, %v583
  %v585 = vpop.f32.mrf.mxu0
  %586 = vmatprep.mubr.bf16.mxu0 0
  %587 = vmatmul.mubr.bf16.gmra.mxu0 %v253
  %v588 = vpop.f32.mrf.mxu0
  %v589 = vadd.f32 0.0, %v588
  %v590 = vpop.f32.mrf.mxu0
  %v591 = vpop.f32.mrf.mxu0
  %v592 = vadd.f32 0.0, %v591
  %v593 = vpop.f32.mrf.mxu0
  %594 = vmatprep.mubr.bf16.mxu0 0
  %595 = vmatmul.mubr.bf16.gmra.mxu0 %v254
  %v596 = vpop.f32.mrf.mxu0
  %v597 = vadd.f32 0.0, %v596
  %v598 = vpop.f32.mrf.mxu0
  %v599 = vpop.f32.mrf.mxu0
  %v600 = vadd.f32 0.0, %v599
  %v601 = vpop.f32.mrf.mxu0
  %602 = vmatprep.mubr.bf16.mxu0 0
  %603 = vmatmul.mubr.bf16.gmra.mxu0 %v255
  %v604 = vpop.f32.mrf.mxu0
  %v605 = vadd.f32 0.0, %v604
  %v606 = vpop.f32.mrf.mxu0
  %v607 = vpop.f32.mrf.mxu0
  %v608 = vadd.f32 0.0, %v607
  %v609 = vpop.f32.mrf.mxu0
  %610 = vmatprep.mubr.bf16.mxu0 0
  %611 = vmatmul.mubr.bf16.gmra.mxu0 %v256
  %v612 = vpop.f32.mrf.mxu0
  %v613 = vadd.f32 0.0, %v612
  %v614 = vpop.f32.mrf.mxu0
  %v615 = vpop.f32.mrf.mxu0
  %v616 = vadd.f32 0.0, %v615
  %v617 = vpop.f32.mrf.mxu0
  %618 = vmatprep.mubr.bf16.mxu0 0
  %619 = vmatmul.mubr.bf16.gmra.mxu0 %v257
  %v620 = vpop.f32.mrf.mxu0
  %v621 = vadd.f32 0.0, %v620
  %v622 = vpop.f32.mrf.mxu0
  %v623 = vpop.f32.mrf.mxu0
  %v624 = vadd.f32 0.0, %v623
  %v625 = vpop.f32.mrf.mxu0
  %626 = vdwg.mxu0
  %v627 = vld [vmem:[%s2] sm:$0x1]
  %v629 = vlaneseq
  %v630 = vshrl.u32 %v629, 7
  %v631 = vsub.s32 0, %v630
  %v632 = vrot.slane %v627, %v631
  %v634 = vmul.f32 %v373, %v632
  %v635 = vmul.f32 %v376, %v632
  %v636 = vmul.f32 %v381, %v632
  %v637 = vmul.f32 %v384, %v632
  %v638 = vmul.f32 %v389, %v632
  %v639 = vmul.f32 %v392, %v632
  %v640 = vmul.f32 %v397, %v632
  %v641 = vmul.f32 %v400, %v632
  %v642 = vmul.f32 %v405, %v632
  %v643 = vmul.f32 %v408, %v632
  %v644 = vmul.f32 %v413, %v632
  %v645 = vmul.f32 %v416, %v632
  %v646 = vmul.f32 %v421, %v632
  %v647 = vmul.f32 %v424, %v632
  %v648 = vmul.f32 %v429, %v632
  %v649 = vmul.f32 %v432, %v632
  %v650 = vmul.f32 %v437, %v632
  %v651 = vmul.f32 %v440, %v632
  %v652 = vmul.f32 %v445, %v632
  %v653 = vmul.f32 %v448, %v632
  %v654 = vmul.f32 %v453, %v632
  %v655 = vmul.f32 %v456, %v632
  %v656 = vmul.f32 %v461, %v632
  %v657 = vmul.f32 %v464, %v632
  %v658 = vmul.f32 %v469, %v632
  %v659 = vmul.f32 %v472, %v632
  %v660 = vmul.f32 %v477, %v632
  %v661 = vmul.f32 %v480, %v632
  %v662 = vmul.f32 %v485, %v632
  %v663 = vmul.f32 %v488, %v632
  %v664 = vmul.f32 %v493, %v632
  %v665 = vmul.f32 %v496, %v632
  %v666 = vmul.f32 %v501, %v632
  %v667 = vmul.f32 %v504, %v632
  %v668 = vmul.f32 %v509, %v632
  %v669 = vmul.f32 %v512, %v632
  %v670 = vmul.f32 %v517, %v632
  %v671 = vmul.f32 %v520, %v632
  %v672 = vmul.f32 %v525, %v632
  %v673 = vmul.f32 %v528, %v632
  %v674 = vmul.f32 %v533, %v632
  %v675 = vmul.f32 %v536, %v632
  %v676 = vmul.f32 %v541, %v632
  %v677 = vmul.f32 %v544, %v632
  %v678 = vmul.f32 %v549, %v632
  %v679 = vmul.f32 %v552, %v632
  %v680 = vmul.f32 %v557, %v632
  %v681 = vmul.f32 %v560, %v632
  %v682 = vmul.f32 %v565, %v632
  %v683 = vmul.f32 %v568, %v632
  %v684 = vmul.f32 %v573, %v632
  %v685 = vmul.f32 %v576, %v632
  %v686 = vmul.f32 %v581, %v632
  %v687 = vmul.f32 %v584, %v632
  %v688 = vmul.f32 %v589, %v632
  %v689 = vmul.f32 %v592, %v632
  %v690 = vmul.f32 %v597, %v632
  %v691 = vmul.f32 %v600, %v632
  %v692 = vmul.f32 %v605, %v632
  %v693 = vmul.f32 %v608, %v632
  %v694 = vmul.f32 %v613, %v632
  %v695 = vmul.f32 %v616, %v632
  %v696 = vmul.f32 %v621, %v632
  %v697 = vmul.f32 %v624, %v632
  %v698 = vld [vmem:[%s3] sm:$0x1]
  %v700 = vlaneseq
  %v701 = vshrl.u32 %v700, 7
  %v702 = vsub.s32 0, %v701
  %v703 = vrot.slane %v698, %v702
  %v705 = vadd.f32 %v634, %v703
  %v706 = vadd.f32 %v635, %v703
  %v707 = vadd.f32 %v636, %v703
  %v708 = vadd.f32 %v637, %v703
  %v709 = vadd.f32 %v638, %v703
  %v710 = vadd.f32 %v639, %v703
  %v711 = vadd.f32 %v640, %v703
  %v712 = vadd.f32 %v641, %v703
  %v713 = vadd.f32 %v642, %v703
  %v714 = vadd.f32 %v643, %v703
  %v715 = vadd.f32 %v644, %v703
  %v716 = vadd.f32 %v645, %v703
  %v717 = vadd.f32 %v646, %v703
  %v718 = vadd.f32 %v647, %v703
  %v719 = vadd.f32 %v648, %v703
  %v720 = vadd.f32 %v649, %v703
  %v721 = vadd.f32 %v650, %v703
  %v722 = vadd.f32 %v651, %v703
  %v723 = vadd.f32 %v652, %v703
  %v724 = vadd.f32 %v653, %v703
  %v725 = vadd.f32 %v654, %v703
  %v726 = vadd.f32 %v655, %v703
  %v727 = vadd.f32 %v656, %v703
  %v728 = vadd.f32 %v657, %v703
  %v729 = vadd.f32 %v658, %v703
  %v730 = vadd.f32 %v659, %v703
  %v731 = vadd.f32 %v660, %v703
  %v732 = vadd.f32 %v661, %v703
  %v733 = vadd.f32 %v662, %v703
  %v734 = vadd.f32 %v663, %v703
  %v735 = vadd.f32 %v664, %v703
  %v736 = vadd.f32 %v665, %v703
  %v737 = vadd.f32 %v666, %v703
  %v738 = vadd.f32 %v667, %v703
  %v739 = vadd.f32 %v668, %v703
  %v740 = vadd.f32 %v669, %v703
  %v741 = vadd.f32 %v670, %v703
  %v742 = vadd.f32 %v671, %v703
  %v743 = vadd.f32 %v672, %v703
  %v744 = vadd.f32 %v673, %v703
  %v745 = vadd.f32 %v674, %v703
  %v746 = vadd.f32 %v675, %v703
  %v747 = vadd.f32 %v676, %v703
  %v748 = vadd.f32 %v677, %v703
  %v749 = vadd.f32 %v678, %v703
  %v750 = vadd.f32 %v679, %v703
  %v751 = vadd.f32 %v680, %v703
  %v752 = vadd.f32 %v681, %v703
  %v753 = vadd.f32 %v682, %v703
  %v754 = vadd.f32 %v683, %v703
  %v755 = vadd.f32 %v684, %v703
  %v756 = vadd.f32 %v685, %v703
  %v757 = vadd.f32 %v686, %v703
  %v758 = vadd.f32 %v687, %v703
  %v759 = vadd.f32 %v688, %v703
  %v760 = vadd.f32 %v689, %v703
  %v761 = vadd.f32 %v690, %v703
  %v762 = vadd.f32 %v691, %v703
  %v763 = vadd.f32 %v692, %v703
  %v764 = vadd.f32 %v693, %v703
  %v765 = vadd.f32 %v694, %v703
  %v766 = vadd.f32 %v695, %v703
  %v767 = vadd.f32 %v696, %v703
  %v768 = vadd.f32 %v697, %v703
  %vm769 = vcmp.gt.f32.partialorder %v705, 0.0
  %vm770 = vcmp.gt.f32.partialorder %v706, 0.0
  %vm771 = vcmp.gt.f32.partialorder %v707, 0.0
  %vm772 = vcmp.gt.f32.partialorder %v708, 0.0
  %vm773 = vcmp.gt.f32.partialorder %v709, 0.0
  %vm774 = vcmp.gt.f32.partialorder %v710, 0.0
  %vm775 = vcmp.gt.f32.partialorder %v711, 0.0
  %vm776 = vcmp.gt.f32.partialorder %v712, 0.0
  %vm777 = vcmp.gt.f32.partialorder %v713, 0.0
  %vm778 = vcmp.gt.f32.partialorder %v714, 0.0
  %vm779 = vcmp.gt.f32.partialorder %v715, 0.0
  %vm780 = vcmp.gt.f32.partialorder %v716, 0.0
  %vm781 = vcmp.gt.f32.partialorder %v717, 0.0
  %vm782 = vcmp.gt.f32.partialorder %v718, 0.0
  %vm783 = vcmp.gt.f32.partialorder %v719, 0.0
  %vm784 = vcmp.gt.f32.partialorder %v720, 0.0
  %vm785 = vcmp.gt.f32.partialorder %v721, 0.0
  %vm786 = vcmp.gt.f32.partialorder %v722, 0.0
  %vm787 = vcmp.gt.f32.partialorder %v723, 0.0
  %vm788 = vcmp.gt.f32.partialorder %v724, 0.0
  %vm789 = vcmp.gt.f32.partialorder %v725, 0.0
  %vm790 = vcmp.gt.f32.partialorder %v726, 0.0
  %vm791 = vcmp.gt.f32.partialorder %v727, 0.0
  %vm792 = vcmp.gt.f32.partialorder %v728, 0.0
  %vm793 = vcmp.gt.f32.partialorder %v729, 0.0
  %vm794 = vcmp.gt.f32.partialorder %v730, 0.0
  %vm795 = vcmp.gt.f32.partialorder %v731, 0.0
  %vm796 = vcmp.gt.f32.partialorder %v732, 0.0
  %vm797 = vcmp.gt.f32.partialorder %v733, 0.0
  %vm798 = vcmp.gt.f32.partialorder %v734, 0.0
  %vm799 = vcmp.gt.f32.partialorder %v735, 0.0
  %vm800 = vcmp.gt.f32.partialorder %v736, 0.0
  %vm801 = vcmp.gt.f32.partialorder %v737, 0.0
  %vm802 = vcmp.gt.f32.partialorder %v738, 0.0
  %vm803 = vcmp.gt.f32.partialorder %v739, 0.0
  %vm804 = vcmp.gt.f32.partialorder %v740, 0.0
  %vm805 = vcmp.gt.f32.partialorder %v741, 0.0
  %vm806 = vcmp.gt.f32.partialorder %v742, 0.0
  %vm807 = vcmp.gt.f32.partialorder %v743, 0.0
  %vm808 = vcmp.gt.f32.partialorder %v744, 0.0
  %vm809 = vcmp.gt.f32.partialorder %v745, 0.0
  %vm810 = vcmp.gt.f32.partialorder %v746, 0.0
  %vm811 = vcmp.gt.f32.partialorder %v747, 0.0
  %vm812 = vcmp.gt.f32.partialorder %v748, 0.0
  %vm813 = vcmp.gt.f32.partialorder %v749, 0.0
  %vm814 = vcmp.gt.f32.partialorder %v750, 0.0
  %vm815 = vcmp.gt.f32.partialorder %v751, 0.0
  %vm816 = vcmp.gt.f32.partialorder %v752, 0.0
  %vm817 = vcmp.gt.f32.partialorder %v753, 0.0
  %vm818 = vcmp.gt.f32.partialorder %v754, 0.0
  %vm819 = vcmp.gt.f32.partialorder %v755, 0.0
  %vm820 = vcmp.gt.f32.partialorder %v756, 0.0
  %vm821 = vcmp.gt.f32.partialorder %v757, 0.0
  %vm822 = vcmp.gt.f32.partialorder %v758, 0.0
  %vm823 = vcmp.gt.f32.partialorder %v759, 0.0
  %vm824 = vcmp.gt.f32.partialorder %v760, 0.0
  %vm825 = vcmp.gt.f32.partialorder %v761, 0.0
  %vm826 = vcmp.gt.f32.partialorder %v762, 0.0
  %vm827 = vcmp.gt.f32.partialorder %v763, 0.0
  %vm828 = vcmp.gt.f32.partialorder %v764, 0.0
  %vm829 = vcmp.gt.f32.partialorder %v765, 0.0
  %vm830 = vcmp.gt.f32.partialorder %v766, 0.0
  %vm831 = vcmp.gt.f32.partialorder %v767, 0.0
  %vm832 = vcmp.gt.f32.partialorder %v768, 0.0
  %v833 = vmul.f32 %v705, 0.2
  %v834 = vmul.f32 %v706, 0.2
  %v835 = vmul.f32 %v707, 0.2
  %v836 = vmul.f32 %v708, 0.2
  %v837 = vmul.f32 %v709, 0.2
  %v838 = vmul.f32 %v710, 0.2
  %v839 = vmul.f32 %v711, 0.2
  %v840 = vmul.f32 %v712, 0.2
  %v841 = vmul.f32 %v713, 0.2
  %v842 = vmul.f32 %v714, 0.2
  %v843 = vmul.f32 %v715, 0.2
  %v844 = vmul.f32 %v716, 0.2
  %v845 = vmul.f32 %v717, 0.2
  %v846 = vmul.f32 %v718, 0.2
  %v847 = vmul.f32 %v719, 0.2
  %v848 = vmul.f32 %v720, 0.2
  %v849 = vmul.f32 %v721, 0.2
  %v850 = vmul.f32 %v722, 0.2
  %v851 = vmul.f32 %v723, 0.2
  %v852 = vmul.f32 %v724, 0.2
  %v853 = vmul.f32 %v725, 0.2
  %v854 = vmul.f32 %v726, 0.2
  %v855 = vmul.f32 %v727, 0.2
  %v856 = vmul.f32 %v728, 0.2
  %v857 = vmul.f32 %v729, 0.2
  %v858 = vmul.f32 %v730, 0.2
  %v859 = vmul.f32 %v731, 0.2
  %v860 = vmul.f32 %v732, 0.2
  %v861 = vmul.f32 %v733, 0.2
  %v862 = vmul.f32 %v734, 0.2
  %v863 = vmul.f32 %v735, 0.2
  %v864 = vmul.f32 %v736, 0.2
  %v865 = vmul.f32 %v737, 0.2
  %v866 = vmul.f32 %v738, 0.2
  %v867 = vmul.f32 %v739, 0.2
  %v868 = vmul.f32 %v740, 0.2
  %v869 = vmul.f32 %v741, 0.2
  %v870 = vmul.f32 %v742, 0.2
  %v871 = vmul.f32 %v743, 0.2
  %v872 = vmul.f32 %v744, 0.2
  %v873 = vmul.f32 %v745, 0.2
  %v874 = vmul.f32 %v746, 0.2
  %v875 = vmul.f32 %v747, 0.2
  %v876 = vmul.f32 %v748, 0.2
  %v877 = vmul.f32 %v749, 0.2
  %v878 = vmul.f32 %v750, 0.2
  %v879 = vmul.f32 %v751, 0.2
  %v880 = vmul.f32 %v752, 0.2
  %v881 = vmul.f32 %v753, 0.2
  %v882 = vmul.f32 %v754, 0.2
  %v883 = vmul.f32 %v755, 0.2
  %v884 = vmul.f32 %v756, 0.2
  %v885 = vmul.f32 %v757, 0.2
  %v886 = vmul.f32 %v758, 0.2
  %v887 = vmul.f32 %v759, 0.2
  %v888 = vmul.f32 %v760, 0.2
  %v889 = vmul.f32 %v761, 0.2
  %v890 = vmul.f32 %v762, 0.2
  %v891 = vmul.f32 %v763, 0.2
  %v892 = vmul.f32 %v764, 0.2
  %v893 = vmul.f32 %v765, 0.2
  %v894 = vmul.f32 %v766, 0.2
  %v895 = vmul.f32 %v767, 0.2
  %v896 = vmul.f32 %v768, 0.2
  %v897 = vsel %vm769, %v705, %v833
  %v898 = vsel %vm770, %v706, %v834
  %v899 = vsel %vm771, %v707, %v835
  %v900 = vsel %vm772, %v708, %v836
  %v901 = vsel %vm773, %v709, %v837
  %v902 = vsel %vm774, %v710, %v838
  %v903 = vsel %vm775, %v711, %v839
  %v904 = vsel %vm776, %v712, %v840
  %v905 = vsel %vm777, %v713, %v841
  %v906 = vsel %vm778, %v714, %v842
  %v907 = vsel %vm779, %v715, %v843
  %v908 = vsel %vm780, %v716, %v844
  %v909 = vsel %vm781, %v717, %v845
  %v910 = vsel %vm782, %v718, %v846
  %v911 = vsel %vm783, %v719, %v847
  %v912 = vsel %vm784, %v720, %v848
  %v913 = vsel %vm785, %v721, %v849
  %v914 = vsel %vm786, %v722, %v850
  %v915 = vsel %vm787, %v723, %v851
  %v916 = vsel %vm788, %v724, %v852
  %v917 = vsel %vm789, %v725, %v853
  %v918 = vsel %vm790, %v726, %v854
  %v919 = vsel %vm791, %v727, %v855
  %v920 = vsel %vm792, %v728, %v856
  %v921 = vsel %vm793, %v729, %v857
  %v922 = vsel %vm794, %v730, %v858
  %v923 = vsel %vm795, %v731, %v859
  %v924 = vsel %vm796, %v732, %v860
  %v925 = vsel %vm797, %v733, %v861
  %v926 = vsel %vm798, %v734, %v862
  %v927 = vsel %vm799, %v735, %v863
  %v928 = vsel %vm800, %v736, %v864
  %v929 = vsel %vm801, %v737, %v865
  %v930 = vsel %vm802, %v738, %v866
  %v931 = vsel %vm803, %v739, %v867
  %v932 = vsel %vm804, %v740, %v868
  %v933 = vsel %vm805, %v741, %v869
  %v934 = vsel %vm806, %v742, %v870
  %v935 = vsel %vm807, %v743, %v871
  %v936 = vsel %vm808, %v744, %v872
  %v937 = vsel %vm809, %v745, %v873
  %v938 = vsel %vm810, %v746, %v874
  %v939 = vsel %vm811, %v747, %v875
  %v940 = vsel %vm812, %v748, %v876
  %v941 = vsel %vm813, %v749, %v877
  %v942 = vsel %vm814, %v750, %v878
  %v943 = vsel %vm815, %v751, %v879
  %v944 = vsel %vm816, %v752, %v880
  %v945 = vsel %vm817, %v753, %v881
  %v946 = vsel %vm818, %v754, %v882
  %v947 = vsel %vm819, %v755, %v883
  %v948 = vsel %vm820, %v756, %v884
  %v949 = vsel %vm821, %v757, %v885
  %v950 = vsel %vm822, %v758, %v886
  %v951 = vsel %vm823, %v759, %v887
  %v952 = vsel %vm824, %v760, %v888
  %v953 = vsel %vm825, %v761, %v889
  %v954 = vsel %vm826, %v762, %v890
  %v955 = vsel %vm827, %v763, %v891
  %v956 = vsel %vm828, %v764, %v892
  %v957 = vsel %vm829, %v765, %v893
  %v958 = vsel %vm830, %v766, %v894
  %v959 = vsel %vm831, %v767, %v895
  %v960 = vsel %vm832, %v768, %v896
  %v961 = vpack.c.bf16 %v898, %v897
  %v962 = vpack.c.bf16 %v900, %v899
  %v963 = vpack.c.bf16 %v902, %v901
  %v964 = vpack.c.bf16 %v904, %v903
  %v965 = vpack.c.bf16 %v906, %v905
  %v966 = vpack.c.bf16 %v908, %v907
  %v967 = vpack.c.bf16 %v910, %v909
  %v968 = vpack.c.bf16 %v912, %v911
  %v969 = vpack.c.bf16 %v914, %v913
  %v970 = vpack.c.bf16 %v916, %v915
  %v971 = vpack.c.bf16 %v918, %v917
  %v972 = vpack.c.bf16 %v920, %v919
  %v973 = vpack.c.bf16 %v922, %v921
  %v974 = vpack.c.bf16 %v924, %v923
  %v975 = vpack.c.bf16 %v926, %v925
  %v976 = vpack.c.bf16 %v928, %v927
  %v977 = vpack.c.bf16 %v930, %v929
  %v978 = vpack.c.bf16 %v932, %v931
  %v979 = vpack.c.bf16 %v934, %v933
  %v980 = vpack.c.bf16 %v936, %v935
  %v981 = vpack.c.bf16 %v938, %v937
  %v982 = vpack.c.bf16 %v940, %v939
  %v983 = vpack.c.bf16 %v942, %v941
  %v984 = vpack.c.bf16 %v944, %v943
  %v985 = vpack.c.bf16 %v946, %v945
  %v986 = vpack.c.bf16 %v948, %v947
  %v987 = vpack.c.bf16 %v950, %v949
  %v988 = vpack.c.bf16 %v952, %v951
  %v989 = vpack.c.bf16 %v954, %v953
  %v990 = vpack.c.bf16 %v956, %v955
  %v991 = vpack.c.bf16 %v958, %v957
  %v992 = vpack.c.bf16 %v960, %v959
  %v1025 = vunpack.c.l.b16 %v961
  %v1026 = vunpack.c.h.b16 %v961
  %v1027 = vunpack.c.l.b16 %v962
  %v1028 = vunpack.c.h.b16 %v962
  %v1029 = vunpack.c.l.b16 %v963
  %v1030 = vunpack.c.h.b16 %v963
  %v1031 = vunpack.c.l.b16 %v964
  %v1032 = vunpack.c.h.b16 %v964
  %v1033 = vunpack.c.l.b16 %v965
  %v1034 = vunpack.c.h.b16 %v965
  %v1035 = vunpack.c.l.b16 %v966
  %v1036 = vunpack.c.h.b16 %v966
  %v1037 = vunpack.c.l.b16 %v967
  %v1038 = vunpack.c.h.b16 %v967
  %v1039 = vunpack.c.l.b16 %v968
  %v1040 = vunpack.c.h.b16 %v968
  %v1041 = vunpack.c.l.b16 %v969
  %v1042 = vunpack.c.h.b16 %v969
  %v1043 = vunpack.c.l.b16 %v970
  %v1044 = vunpack.c.h.b16 %v970
  %v1045 = vunpack.c.l.b16 %v971
  %v1046 = vunpack.c.h.b16 %v971
  %v1047 = vunpack.c.l.b16 %v972
  %v1048 = vunpack.c.h.b16 %v972
  %v1049 = vunpack.c.l.b16 %v973
  %v1050 = vunpack.c.h.b16 %v973
  %v1051 = vunpack.c.l.b16 %v974
  %v1052 = vunpack.c.h.b16 %v974
  %v1053 = vunpack.c.l.b16 %v975
  %v1054 = vunpack.c.h.b16 %v975
  %v1055 = vunpack.c.l.b16 %v976
  %v1056 = vunpack.c.h.b16 %v976
  %v1057 = vunpack.c.l.b16 %v977
  %v1058 = vunpack.c.h.b16 %v977
  %v1059 = vunpack.c.l.b16 %v978
  %v1060 = vunpack.c.h.b16 %v978
  %v1061 = vunpack.c.l.b16 %v979
  %v1062 = vunpack.c.h.b16 %v979
  %v1063 = vunpack.c.l.b16 %v980
  %v1064 = vunpack.c.h.b16 %v980
  %v1065 = vunpack.c.l.b16 %v981
  %v1066 = vunpack.c.h.b16 %v981
  %v1067 = vunpack.c.l.b16 %v982
  %v1068 = vunpack.c.h.b16 %v982
  %v1069 = vunpack.c.l.b16 %v983
  %v1070 = vunpack.c.h.b16 %v983
  %v1071 = vunpack.c.l.b16 %v984
  %v1072 = vunpack.c.h.b16 %v984
  %v1073 = vunpack.c.l.b16 %v985
  %v1074 = vunpack.c.h.b16 %v985
  %v1075 = vunpack.c.l.b16 %v986
  %v1076 = vunpack.c.h.b16 %v986
  %v1077 = vunpack.c.l.b16 %v987
  %v1078 = vunpack.c.h.b16 %v987
  %v1079 = vunpack.c.l.b16 %v988
  %v1080 = vunpack.c.h.b16 %v988
  %v1081 = vunpack.c.l.b16 %v989
  %v1082 = vunpack.c.h.b16 %v989
  %v1083 = vunpack.c.l.b16 %v990
  %v1084 = vunpack.c.h.b16 %v990
  %v1085 = vunpack.c.l.b16 %v991
  %v1086 = vunpack.c.h.b16 %v991
  %v1087 = vunpack.c.l.b16 %v992
  %v1088 = vunpack.c.h.b16 %v992
  %v1089 = vpack.c.b16 %v1025, %v1025
  %v1090 = vpack.c.b16 %v1026, %v1026
  %v1091 = vpack.c.b16 %v1027, %v1027
  %v1092 = vpack.c.b16 %v1028, %v1028
  %v1093 = vpack.c.b16 %v1029, %v1029
  %v1094 = vpack.c.b16 %v1030, %v1030
  %v1095 = vpack.c.b16 %v1031, %v1031
  %v1096 = vpack.c.b16 %v1032, %v1032
  %v1097 = vpack.c.b16 %v1033, %v1033
  %v1098 = vpack.c.b16 %v1034, %v1034
  %v1099 = vpack.c.b16 %v1035, %v1035
  %v1100 = vpack.c.b16 %v1036, %v1036
  %v1101 = vpack.c.b16 %v1037, %v1037
  %v1102 = vpack.c.b16 %v1038, %v1038
  %v1103 = vpack.c.b16 %v1039, %v1039
  %v1104 = vpack.c.b16 %v1040, %v1040
  %v1105 = vpack.c.b16 %v1041, %v1041
  %v1106 = vpack.c.b16 %v1042, %v1042
  %v1107 = vpack.c.b16 %v1043, %v1043
  %v1108 = vpack.c.b16 %v1044, %v1044
  %v1109 = vpack.c.b16 %v1045, %v1045
  %v1110 = vpack.c.b16 %v1046, %v1046
  %v1111 = vpack.c.b16 %v1047, %v1047
  %v1112 = vpack.c.b16 %v1048, %v1048
  %v1113 = vpack.c.b16 %v1049, %v1049
  %v1114 = vpack.c.b16 %v1050, %v1050
  %v1115 = vpack.c.b16 %v1051, %v1051
  %v1116 = vpack.c.b16 %v1052, %v1052
  %v1117 = vpack.c.b16 %v1053, %v1053
  %v1118 = vpack.c.b16 %v1054, %v1054
  %v1119 = vpack.c.b16 %v1055, %v1055
  %v1120 = vpack.c.b16 %v1056, %v1056
  %v1121 = vpack.c.b16 %v1057, %v1057
  %v1122 = vpack.c.b16 %v1058, %v1058
  %v1123 = vpack.c.b16 %v1059, %v1059
  %v1124 = vpack.c.b16 %v1060, %v1060
  %v1125 = vpack.c.b16 %v1061, %v1061
  %v1126 = vpack.c.b16 %v1062, %v1062
  %v1127 = vpack.c.b16 %v1063, %v1063
  %v1128 = vpack.c.b16 %v1064, %v1064
  %v1129 = vpack.c.b16 %v1065, %v1065
  %v1130 = vpack.c.b16 %v1066, %v1066
  %v1131 = vpack.c.b16 %v1067, %v1067
  %v1132 = vpack.c.b16 %v1068, %v1068
  %v1133 = vpack.c.b16 %v1069, %v1069
  %v1134 = vpack.c.b16 %v1070, %v1070
  %v1135 = vpack.c.b16 %v1071, %v1071
  %v1136 = vpack.c.b16 %v1072, %v1072
  %v1137 = vpack.c.b16 %v1073, %v1073
  %v1138 = vpack.c.b16 %v1074, %v1074
  %v1139 = vpack.c.b16 %v1075, %v1075
  %v1140 = vpack.c.b16 %v1076, %v1076
  %v1141 = vpack.c.b16 %v1077, %v1077
  %v1142 = vpack.c.b16 %v1078, %v1078
  %v1143 = vpack.c.b16 %v1079, %v1079
  %v1144 = vpack.c.b16 %v1080, %v1080
  %v1145 = vpack.c.b16 %v1081, %v1081
  %v1146 = vpack.c.b16 %v1082, %v1082
  %v1147 = vpack.c.b16 %v1083, %v1083
  %v1148 = vpack.c.b16 %v1084, %v1084
  %v1149 = vpack.c.b16 %v1085, %v1085
  %v1150 = vpack.c.b16 %v1086, %v1086
  %v1151 = vpack.c.b16 %v1087, %v1087
  %v1152 = vpack.c.b16 %v1088, %v1088
  %1217 = vst [vmem:[%s4] sm:$0xf] %v1089
  %1218 = vst [vmem:[%s4 + $0x4] sm:$0xf] %v1090
  %1219 = vst [vmem:[%s4 + $0x8] sm:$0xf] %v1091
  %1220 = vst [vmem:[%s4 + $0xc] sm:$0xf] %v1092
  %1221 = vst [vmem:[%s4 + $0x10] sm:$0xf] %v1093
  %1222 = vst [vmem:[%s4 + $0x14] sm:$0xf] %v1094
  %1223 = vst [vmem:[%s4 + $0x18] sm:$0xf] %v1095
  %1224 = vst [vmem:[%s4 + $0x1c] sm:$0xf] %v1096
  %1225 = vst [vmem:[%s4 + $0x20] sm:$0xf] %v1097
  %1226 = vst [vmem:[%s4 + $0x24] sm:$0xf] %v1098
  %1227 = vst [vmem:[%s4 + $0x28] sm:$0xf] %v1099
  %1228 = vst [vmem:[%s4 + $0x2c] sm:$0xf] %v1100
  %1229 = vst [vmem:[%s4 + $0x30] sm:$0xf] %v1101
  %1230 = vst [vmem:[%s4 + $0x34] sm:$0xf] %v1102
  %1231 = vst [vmem:[%s4 + $0x38] sm:$0xf] %v1103
  %1232 = vst [vmem:[%s4 + $0x3c] sm:$0xf] %v1104
  %1233 = vst [vmem:[%s4 + $0x40] sm:$0xf] %v1105
  %1234 = vst [vmem:[%s4 + $0x44] sm:$0xf] %v1106
  %1235 = vst [vmem:[%s4 + $0x48] sm:$0xf] %v1107
  %1236 = vst [vmem:[%s4 + $0x4c] sm:$0xf] %v1108
  %1237 = vst [vmem:[%s4 + $0x50] sm:$0xf] %v1109
  %1238 = vst [vmem:[%s4 + $0x54] sm:$0xf] %v1110
  %1239 = vst [vmem:[%s4 + $0x58] sm:$0xf] %v1111
  %1240 = vst [vmem:[%s4 + $0x5c] sm:$0xf] %v1112
  %1241 = vst [vmem:[%s4 + $0x60] sm:$0xf] %v1113
  %1242 = vst [vmem:[%s4 + $0x64] sm:$0xf] %v1114
  %1243 = vst [vmem:[%s4 + $0x68] sm:$0xf] %v1115
  %1244 = vst [vmem:[%s4 + $0x6c] sm:$0xf] %v1116
  %1245 = vst [vmem:[%s4 + $0x70] sm:$0xf] %v1117
  %1246 = vst [vmem:[%s4 + $0x74] sm:$0xf] %v1118
  %1247 = vst [vmem:[%s4 + $0x78] sm:$0xf] %v1119
  %1248 = vst [vmem:[%s4 + $0x7c] sm:$0xf] %v1120
  %1249 = vst [vmem:[%s4 + $0x80] sm:$0xf] %v1121
  %1250 = vst [vmem:[%s4 + $0x84] sm:$0xf] %v1122
  %1251 = vst [vmem:[%s4 + $0x88] sm:$0xf] %v1123
  %1252 = vst [vmem:[%s4 + $0x8c] sm:$0xf] %v1124
  %1253 = vst [vmem:[%s4 + $0x90] sm:$0xf] %v1125
  %1254 = vst [vmem:[%s4 + $0x94] sm:$0xf] %v1126
  %1255 = vst [vmem:[%s4 + $0x98] sm:$0xf] %v1127
  %1256 = vst [vmem:[%s4 + $0x9c] sm:$0xf] %v1128
  %1257 = vst [vmem:[%s4 + $0xa0] sm:$0xf] %v1129
  %1258 = vst [vmem:[%s4 + $0xa4] sm:$0xf] %v1130
  %1259 = vst [vmem:[%s4 + $0xa8] sm:$0xf] %v1131
  %1260 = vst [vmem:[%s4 + $0xac] sm:$0xf] %v1132
  %1261 = vst [vmem:[%s4 + $0xb0] sm:$0xf] %v1133
  %1262 = vst [vmem:[%s4 + $0xb4] sm:$0xf] %v1134
  %1263 = vst [vmem:[%s4 + $0xb8] sm:$0xf] %v1135
  %1264 = vst [vmem:[%s4 + $0xbc] sm:$0xf] %v1136
  %1265 = vst [vmem:[%s4 + $0xc0] sm:$0xf] %v1137
  %1266 = vst [vmem:[%s4 + $0xc4] sm:$0xf] %v1138
  %1267 = vst [vmem:[%s4 + $0xc8] sm:$0xf] %v1139
  %1268 = vst [vmem:[%s4 + $0xcc] sm:$0xf] %v1140
  %1269 = vst [vmem:[%s4 + $0xd0] sm:$0xf] %v1141
  %1270 = vst [vmem:[%s4 + $0xd4] sm:$0xf] %v1142
  %1271 = vst [vmem:[%s4 + $0xd8] sm:$0xf] %v1143
  %1272 = vst [vmem:[%s4 + $0xdc] sm:$0xf] %v1144
  %1273 = vst [vmem:[%s4 + $0xe0] sm:$0xf] %v1145
  %1274 = vst [vmem:[%s4 + $0xe4] sm:$0xf] %v1146
  %1275 = vst [vmem:[%s4 + $0xe8] sm:$0xf] %v1147
  %1276 = vst [vmem:[%s4 + $0xec] sm:$0xf] %v1148
  %1277 = vst [vmem:[%s4 + $0xf0] sm:$0xf] %v1149
  %1278 = vst [vmem:[%s4 + $0xf4] sm:$0xf] %v1150
  %1279 = vst [vmem:[%s4 + $0xf8] sm:$0xf] %v1151
  %1280 = vst [vmem:[%s4 + $0xfc] sm:$0xf] %v1152
  // Predicated region
  $region18: #{occlusion_net_forward.12} parent=0 // pred_check
    _
  $region19: #{occlusion_net_forward.12} parent=0 // pred_check_branch
    %1282 = sbr.rel (0) target = $region21
  $region20: #{occlusion_net_forward.12} parent=0 // pred_region
    _
  $region21: #{occlusion_net_forward.12} parent=0 // pred_fallthru
    _
  // Predicated region
  $region22: #{occlusion_net_forward.12} parent=0 // pred_check
    _
  $region23: #{occlusion_net_forward.12} parent=0 // pred_check_branch
    %1284 = sbr.rel (0) target = $region25
  $region24: #{occlusion_net_forward.12} parent=0 // pred_region
    _
  $region25: #{occlusion_net_forward.12} parent=0 // pred_fallthru
    _

// kernel: occlusion_net_forward.13
$region0: #{occlusion_net_forward.13}
  #allocation0 [shape = 'u32[]', space=smem, size = 0x4, offset = 0x4, fixed_abs, tag = 'smem constant byte address 0x4 - core index']
  #allocation1 [shape = 'u32[144,128]{1,0:T(1,128)}', space=vmem, size = 0x12000, scoped, tag = 'internal scratch']
  %s0 = inlined_call_operand.vmem [shape: bf16[64,256], index: 0, kind: input, shape index: {}]
  %s1 = inlined_call_operand.vmem [shape: bf16[256,128], index: 1, kind: input, shape index: {}]
  %s2 = inlined_call_operand.vmem [shape: f32[1,128], index: 2, kind: input, shape index: {}]
  %s3 = inlined_call_operand.vmem [shape: f32[1,128], index: 3, kind: input, shape index: {}]
  %s4 = inlined_call_operand.vmem [shape: bf16[64,128], index: 4, kind: output, shape index: {}]
  %s5 = sld [smem:[#allocation0]]
  $region26: #{occlusion_net_forward.13} parent=0
    _
  %s7 = ssub.s32 1, %s5
  %s8 = scalar_select 0, %s7, %s5
  // Predicated region
  $region2: #{occlusion_net_forward.13} parent=0 // pred_check
    _
  $region3: #{occlusion_net_forward.13} parent=0 // pred_check_branch
    %10 = sbr.rel (0) target = $region5
  $region4: #{occlusion_net_forward.13} parent=0 // pred_region
    _
  $region5: #{occlusion_net_forward.13} parent=0 // pred_fallthru
    _
  // Predicated region
  $region6: #{occlusion_net_forward.13} parent=0 // pred_check
    _
  $region7: #{occlusion_net_forward.13} parent=0 // pred_check_branch
    %12 = sbr.rel (0) target = $region9
  $region8: #{occlusion_net_forward.13} parent=0 // pred_region
    _
  $region9: #{occlusion_net_forward.13} parent=0 // pred_fallthru
    _
  // Predicated region
  $region10: #{occlusion_net_forward.13} parent=0 // pred_check
    _
  $region11: #{occlusion_net_forward.13} parent=0 // pred_check_branch
    %14 = sbr.rel (0) target = $region13
  $region12: #{occlusion_net_forward.13} parent=0 // pred_region
    _
  $region13: #{occlusion_net_forward.13} parent=0 // pred_fallthru
    _
  // Predicated region
  $region14: #{occlusion_net_forward.13} parent=0 // pred_check
    _
  $region15: #{occlusion_net_forward.13} parent=0 // pred_check_branch
    %16 = sbr.rel (0) target = $region17
  $region16: #{occlusion_net_forward.13} parent=0 // pred_region
    _
  $region17: #{occlusion_net_forward.13} parent=0 // pred_fallthru
    _
  %v18 = vld [vmem:[%s0] sm:$0xff]
  %v19 = vld [vmem:[%s0 + $0x8] sm:$0xff]
  %v20 = vld [vmem:[%s0 + $0x10] sm:$0xff]
  %v21 = vld [vmem:[%s0 + $0x18] sm:$0xff]
  %v22 = vld [vmem:[%s0 + $0x20] sm:$0xff]
  %v23 = vld [vmem:[%s0 + $0x28] sm:$0xff]
  %v24 = vld [vmem:[%s0 + $0x30] sm:$0xff]
  %v25 = vld [vmem:[%s0 + $0x38] sm:$0xff]
  %v26 = vld [vmem:[%s1] sm:$0xf]
  %v27 = vld [vmem:[%s1 + $0x4] sm:$0xf]
  %v28 = vld [vmem:[%s1 + $0x8] sm:$0xf]
  %v29 = vld [vmem:[%s1 + $0xc] sm:$0xf]
  %v30 = vld [vmem:[%s1 + $0x10] sm:$0xf]
  %v31 = vld [vmem:[%s1 + $0x14] sm:$0xf]
  %v32 = vld [vmem:[%s1 + $0x18] sm:$0xf]
  %v33 = vld [vmem:[%s1 + $0x1c] sm:$0xf]
  %v34 = vld [vmem:[%s1 + $0x20] sm:$0xf]
  %v35 = vld [vmem:[%s1 + $0x24] sm:$0xf]
  %v36 = vld [vmem:[%s1 + $0x28] sm:$0xf]
  %v37 = vld [vmem:[%s1 + $0x2c] sm:$0xf]
  %v38 = vld [vmem:[%s1 + $0x30] sm:$0xf]
  %v39 = vld [vmem:[%s1 + $0x34] sm:$0xf]
  %v40 = vld [vmem:[%s1 + $0x38] sm:$0xf]
  %v41 = vld [vmem:[%s1 + $0x3c] sm:$0xf]
  %v42 = vld [vmem:[%s1 + $0x40] sm:$0xf]
  %v43 = vld [vmem:[%s1 + $0x44] sm:$0xf]
  %v44 = vld [vmem:[%s1 + $0x48] sm:$0xf]
  %v45 = vld [vmem:[%s1 + $0x4c] sm:$0xf]
  %v46 = vld [vmem:[%s1 + $0x50] sm:$0xf]
  %v47 = vld [vmem:[%s1 + $0x54] sm:$0xf]
  %v48 = vld [vmem:[%s1 + $0x58] sm:$0xf]
  %v49 = vld [vmem:[%s1 + $0x5c] sm:$0xf]
  %v50 = vld [vmem:[%s1 + $0x60] sm:$0xf]
  %v51 = vld [vmem:[%s1 + $0x64] sm:$0xf]
  %v52 = vld [vmem:[%s1 + $0x68] sm:$0xf]
  %v53 = vld [vmem:[%s1 + $0x6c] sm:$0xf]
  %v54 = vld [vmem:[%s1 + $0x70] sm:$0xf]
  %v55 = vld [vmem:[%s1 + $0x74] sm:$0xf]
  %v56 = vld [vmem:[%s1 + $0x78] sm:$0xf]
  %v57 = vld [vmem:[%s1 + $0x7c] sm:$0xf]
  %v66 = vunpack.c.l.b16 %v18
  %v67 = vunpack.c.h.b16 %v18
  %v68 = vunpack.c.l.b16 %v19
  %v69 = vunpack.c.h.b16 %v19
  %v70 = vunpack.c.l.b16 %v20
  %v71 = vunpack.c.h.b16 %v20
  %v72 = vunpack.c.l.b16 %v21
  %v73 = vunpack.c.h.b16 %v21
  %v74 = vunpack.c.l.b16 %v22
  %v75 = vunpack.c.h.b16 %v22
  %v76 = vunpack.c.l.b16 %v23
  %v77 = vunpack.c.h.b16 %v23
  %v78 = vunpack.c.l.b16 %v24
  %v79 = vunpack.c.h.b16 %v24
  %v80 = vunpack.c.l.b16 %v25
  %v81 = vunpack.c.h.b16 %v25
  %v82 = vpack.c.b16 %v68, %v66
  %v83 = vpack.c.b16 %v69, %v67
  %v84 = vpack.c.b16 %v72, %v70
  %v85 = vpack.c.b16 %v73, %v71
  %v86 = vpack.c.b16 %v76, %v74
  %v87 = vpack.c.b16 %v77, %v75
  %v88 = vpack.c.b16 %v80, %v78
  %v89 = vpack.c.b16 %v81, %v79
  %v130 = vunpack.c.l.b16 %v26
  %v131 = vunpack.c.l.b16 %v27
  %v132 = vunpack.c.l.b16 %v28
  %v133 = vunpack.c.l.b16 %v29
  %v134 = vunpack.c.l.b16 %v30
  %v135 = vunpack.c.l.b16 %v31
  %v136 = vunpack.c.l.b16 %v32
  %v137 = vunpack.c.l.b16 %v33
  %v138 = vunpack.c.l.b16 %v34
  %v139 = vunpack.c.l.b16 %v35
  %v140 = vunpack.c.l.b16 %v36
  %v141 = vunpack.c.l.b16 %v37
  %v142 = vunpack.c.l.b16 %v38
  %v143 = vunpack.c.l.b16 %v39
  %v144 = vunpack.c.l.b16 %v40
  %v145 = vunpack.c.l.b16 %v41
  %v146 = vunpack.c.l.b16 %v42
  %v147 = vunpack.c.l.b16 %v43
  %v148 = vunpack.c.l.b16 %v44
  %v149 = vunpack.c.l.b16 %v45
  %v150 = vunpack.c.l.b16 %v46
  %v151 = vunpack.c.l.b16 %v47
  %v152 = vunpack.c.l.b16 %v48
  %v153 = vunpack.c.l.b16 %v49
  %v154 = vunpack.c.l.b16 %v50
  %v155 = vunpack.c.l.b16 %v51
  %v156 = vunpack.c.l.b16 %v52
  %v157 = vunpack.c.l.b16 %v53
  %v158 = vunpack.c.l.b16 %v54
  %v159 = vunpack.c.l.b16 %v55
  %v160 = vunpack.c.l.b16 %v56
  %v161 = vunpack.c.l.b16 %v57
  %v162 = vpack.c.b16 %v131, %v130
  %v163 = vpack.c.b16 %v133, %v132
  %v164 = vpack.c.b16 %v135, %v134
  %v165 = vpack.c.b16 %v137, %v136
  %v166 = vpack.c.b16 %v139, %v138
  %v167 = vpack.c.b16 %v141, %v140
  %v168 = vpack.c.b16 %v143, %v142
  %v169 = vpack.c.b16 %v145, %v144
  %v170 = vpack.c.b16 %v147, %v146
  %v171 = vpack.c.b16 %v149, %v148
  %v172 = vpack.c.b16 %v151, %v150
  %v173 = vpack.c.b16 %v153, %v152
  %v174 = vpack.c.b16 %v155, %v154
  %v175 = vpack.c.b16 %v157, %v156
  %v176 = vpack.c.b16 %v159, %v158
  %v177 = vpack.c.b16 %v161, %v160
  %194 = vmatprep.subr.bf16.mxu0 0
  %195 = vmatpush1.bf16.msra.mxu0 %v169
  %196 = vmatprep.subr.bf16.mxu0 0
  %197 = vmatpush1.bf16.msra.mxu0 %v168
  %198 = vmatprep.subr.bf16.mxu0 0
  %199 = vmatpush1.bf16.msra.mxu0 %v167
  %200 = vmatprep.subr.bf16.mxu0 0
  %201 = vmatpush1.bf16.msra.mxu0 %v166
  %202 = vmatprep.subr.bf16.mxu0 0
  %203 = vmatpush1.bf16.msra.mxu0 %v165
  %204 = vmatprep.subr.bf16.mxu0 0
  %205 = vmatpush1.bf16.msra.mxu0 %v164
  %206 = vmatprep.subr.bf16.mxu0 0
  %207 = vmatpush1.bf16.msra.mxu0 %v163
  %208 = vmatprep.subr.bf16.mxu0 0
  %209 = vmatpush1.bf16.msra.mxu0 %v162
  %210 = vmatprep.subr.bf16.mxu0 0
  %211 = vmatpush2.bf16.msra.mxu0 %v177
  %212 = vmatprep.subr.bf16.mxu0 0
  %213 = vmatpush2.bf16.msra.mxu0 %v176
  %214 = vmatprep.subr.bf16.mxu0 0
  %215 = vmatpush2.bf16.msra.mxu0 %v175
  %216 = vmatprep.subr.bf16.mxu0 0
  %217 = vmatpush2.bf16.msra.mxu0 %v174
  %218 = vmatprep.subr.bf16.mxu0 0
  %219 = vmatpush2.bf16.msra.mxu0 %v173
  %220 = vmatprep.subr.bf16.mxu0 0
  %221 = vmatpush2.bf16.msra.mxu0 %v172
  %222 = vmatprep.subr.bf16.mxu0 0
  %223 = vmatpush2.bf16.msra.mxu0 %v171
  %224 = vmatprep.subr.bf16.mxu0 0
  %225 = vmatpush2.bf16.msra.mxu0 %v170
  %226 = vmatprep.mubr.bf16.mxu0 %v83
  %227 = vmatmul.mubr.bf16.gmra.mxu0 %v82
  %v228 = vpop.f32.mrf.mxu0
  %v229 = vadd.f32 0.0, %v228
  %v230 = vpop.f32.mrf.mxu0
  %v231 = vpop.f32.mrf.mxu0
  %v232 = vadd.f32 0.0, %v231
  %v233 = vpop.f32.mrf.mxu0
  %234 = vmatprep.mubr.bf16.mxu0 %v85
  %235 = vmatmul.mubr.bf16.gmra.mxu0 %v84
  %v236 = vpop.f32.mrf.mxu0
  %v237 = vadd.f32 0.0, %v236
  %v238 = vpop.f32.mrf.mxu0
  %v239 = vpop.f32.mrf.mxu0
  %v240 = vadd.f32 0.0, %v239
  %v241 = vpop.f32.mrf.mxu0
  %242 = vmatprep.mubr.bf16.mxu0 %v87
  %243 = vmatmul.mubr.bf16.gmra.mxu0 %v86
  %v244 = vpop.f32.mrf.mxu0
  %v245 = vadd.f32 0.0, %v244
  %v246 = vpop.f32.mrf.mxu0
  %v247 = vpop.f32.mrf.mxu0
  %v248 = vadd.f32 0.0, %v247
  %v249 = vpop.f32.mrf.mxu0
  %250 = vmatprep.mubr.bf16.mxu0 %v89
  %251 = vmatmul.mubr.bf16.gmra.mxu0 %v88
  %v252 = vpop.f32.mrf.mxu0
  %v253 = vadd.f32 0.0, %v252
  %v254 = vpop.f32.mrf.mxu0
  %v255 = vpop.f32.mrf.mxu0
  %v256 = vadd.f32 0.0, %v255
  %v257 = vpop.f32.mrf.mxu0
  %258 = vdwg.mxu0
  %v259 = vld [vmem:[%s2] sm:$0x1]
  %v261 = vlaneseq
  %v262 = vshrl.u32 %v261, 7
  %v263 = vsub.s32 0, %v262
  %v264 = vrot.slane %v259, %v263
  %v266 = vmul.f32 %v229, %v264
  %v267 = vmul.f32 %v232, %v264
  %v268 = vmul.f32 %v237, %v264
  %v269 = vmul.f32 %v240, %v264
  %v270 = vmul.f32 %v245, %v264
  %v271 = vmul.f32 %v248, %v264
  %v272 = vmul.f32 %v253, %v264
  %v273 = vmul.f32 %v256, %v264
  %v274 = vld [vmem:[%s3] sm:$0x1]
  %v276 = vlaneseq
  %v277 = vshrl.u32 %v276, 7
  %v278 = vsub.s32 0, %v277
  %v279 = vrot.slane %v274, %v278
  %v281 = vadd.f32 %v266, %v279
  %v282 = vadd.f32 %v267, %v279
  %v283 = vadd.f32 %v268, %v279
  %v284 = vadd.f32 %v269, %v279
  %v285 = vadd.f32 %v270, %v279
  %v286 = vadd.f32 %v271, %v279
  %v287 = vadd.f32 %v272, %v279
  %v288 = vadd.f32 %v273, %v279
  %vm289 = vcmp.gt.f32.partialorder %v281, 0.0
  %vm290 = vcmp.gt.f32.partialorder %v282, 0.0
  %vm291 = vcmp.gt.f32.partialorder %v283, 0.0
  %vm292 = vcmp.gt.f32.partialorder %v284, 0.0
  %vm293 = vcmp.gt.f32.partialorder %v285, 0.0
  %vm294 = vcmp.gt.f32.partialorder %v286, 0.0
  %vm295 = vcmp.gt.f32.partialorder %v287, 0.0
  %vm296 = vcmp.gt.f32.partialorder %v288, 0.0
  %v297 = vmul.f32 %v281, 0.2
  %v298 = vmul.f32 %v282, 0.2
  %v299 = vmul.f32 %v283, 0.2
  %v300 = vmul.f32 %v284, 0.2
  %v301 = vmul.f32 %v285, 0.2
  %v302 = vmul.f32 %v286, 0.2
  %v303 = vmul.f32 %v287, 0.2
  %v304 = vmul.f32 %v288, 0.2
  %v305 = vsel %vm289, %v281, %v297
  %v306 = vsel %vm290, %v282, %v298
  %v307 = vsel %vm291, %v283, %v299
  %v308 = vsel %vm292, %v284, %v300
  %v309 = vsel %vm293, %v285, %v301
  %v310 = vsel %vm294, %v286, %v302
  %v311 = vsel %vm295, %v287, %v303
  %v312 = vsel %vm296, %v288, %v304
  %v313 = vpack.c.bf16 %v306, %v305
  %v314 = vpack.c.bf16 %v308, %v307
  %v315 = vpack.c.bf16 %v310, %v309
  %v316 = vpack.c.bf16 %v312, %v311
  %v321 = vunpack.c.l.b16 %v313
  %v322 = vunpack.c.h.b16 %v313
  %v323 = vunpack.c.l.b16 %v314
  %v324 = vunpack.c.h.b16 %v314
  %v325 = vunpack.c.l.b16 %v315
  %v326 = vunpack.c.h.b16 %v315
  %v327 = vunpack.c.l.b16 %v316
  %v328 = vunpack.c.h.b16 %v316
  %v329 = vpack.c.b16 %v321, %v321
  %v330 = vpack.c.b16 %v322, %v322
  %v331 = vpack.c.b16 %v323, %v323
  %v332 = vpack.c.b16 %v324, %v324
  %v333 = vpack.c.b16 %v325, %v325
  %v334 = vpack.c.b16 %v326, %v326
  %v335 = vpack.c.b16 %v327, %v327
  %v336 = vpack.c.b16 %v328, %v328
  %345 = vst [vmem:[%s4] sm:$0xf] %v329
  %346 = vst [vmem:[%s4 + $0x4] sm:$0xf] %v330
  %347 = vst [vmem:[%s4 + $0x8] sm:$0xf] %v331
  %348 = vst [vmem:[%s4 + $0xc] sm:$0xf] %v332
  %349 = vst [vmem:[%s4 + $0x10] sm:$0xf] %v333
  %350 = vst [vmem:[%s4 + $0x14] sm:$0xf] %v334
  %351 = vst [vmem:[%s4 + $0x18] sm:$0xf] %v335
  %352 = vst [vmem:[%s4 + $0x1c] sm:$0xf] %v336
  // Predicated region
  $region18: #{occlusion_net_forward.13} parent=0 // pred_check
    _
  $region19: #{occlusion_net_forward.13} parent=0 // pred_check_branch
    %354 = sbr.rel (0) target = $region21
  $region20: #{occlusion_net_forward.13} parent=0 // pred_region
    _
  $region21: #{occlusion_net_forward.13} parent=0 // pred_fallthru
    _
  // Predicated region
  $region22: #{occlusion_net_forward.13} parent=0 // pred_check
    _
  $region23: #{occlusion_net_forward.13} parent=0 // pred_check_branch
    %356 = sbr.rel (0) target = $region25
  $region24: #{occlusion_net_forward.13} parent=0 // pred_region
    _
  $region25: #{occlusion_net_forward.13} parent=0 // pred_fallthru
    _

// kernel: occlusion_net_forward.14
$region0: #{occlusion_net_forward.14}
  #allocation0 [shape = 'u32[]', space=smem, size = 0x4, offset = 0x4, fixed_abs, tag = 'smem constant byte address 0x4 - core index']
  #allocation1 [shape = 'u32[144,128]{1,0:T(1,128)}', space=vmem, size = 0x12000, scoped, tag = 'internal scratch']
  %s0 = inlined_call_operand.vmem [shape: bf16[8,512], index: 0, kind: input, shape index: {}]
  %s1 = inlined_call_operand.vmem [shape: bf16[512,128], index: 1, kind: input, shape index: {}]
  %s2 = inlined_call_operand.vmem [shape: f32[1,128], index: 2, kind: input, shape index: {}]
  %s3 = inlined_call_operand.vmem [shape: f32[1,128], index: 3, kind: input, shape index: {}]
  %s4 = inlined_call_operand.vmem [shape: bf16[8,128], index: 4, kind: output, shape index: {}]
  %s5 = sld [smem:[#allocation0]]
  $region26: #{occlusion_net_forward.14} parent=0
    _
  %s7 = ssub.s32 1, %s5
  %s8 = scalar_select 0, %s7, %s5
  // Predicated region
  $region2: #{occlusion_net_forward.14} parent=0 // pred_check
    _
  $region3: #{occlusion_net_forward.14} parent=0 // pred_check_branch
    %10 = sbr.rel (0) target = $region5
  $region4: #{occlusion_net_forward.14} parent=0 // pred_region
    _
  $region5: #{occlusion_net_forward.14} parent=0 // pred_fallthru
    _
  // Predicated region
  $region6: #{occlusion_net_forward.14} parent=0 // pred_check
    _
  $region7: #{occlusion_net_forward.14} parent=0 // pred_check_branch
    %12 = sbr.rel (0) target = $region9
  $region8: #{occlusion_net_forward.14} parent=0 // pred_region
    _
  $region9: #{occlusion_net_forward.14} parent=0 // pred_fallthru
    _
  // Predicated region
  $region10: #{occlusion_net_forward.14} parent=0 // pred_check
    _
  $region11: #{occlusion_net_forward.14} parent=0 // pred_check_branch
    %14 = sbr.rel (0) target = $region13
  $region12: #{occlusion_net_forward.14} parent=0 // pred_region
    _
  $region13: #{occlusion_net_forward.14} parent=0 // pred_fallthru
    _
  // Predicated region
  $region14: #{occlusion_net_forward.14} parent=0 // pred_check
    _
  $region15: #{occlusion_net_forward.14} parent=0 // pred_check_branch
    %16 = sbr.rel (0) target = $region17
  $region16: #{occlusion_net_forward.14} parent=0 // pred_region
    _
  $region17: #{occlusion_net_forward.14} parent=0 // pred_fallthru
    _
  %v18 = vld [vmem:[%s0] sm:$0xff]
  %v19 = vld [vmem:[%s0 + $0x8] sm:$0xff]
  %v20 = vld [vmem:[%s1] sm:$0xf]
  %v21 = vld [vmem:[%s1 + $0x4] sm:$0xf]
  %v22 = vld [vmem:[%s1 + $0x8] sm:$0xf]
  %v23 = vld [vmem:[%s1 + $0xc] sm:$0xf]
  %v24 = vld [vmem:[%s1 + $0x10] sm:$0xf]
  %v25 = vld [vmem:[%s1 + $0x14] sm:$0xf]
  %v26 = vld [vmem:[%s1 + $0x18] sm:$0xf]
  %v27 = vld [vmem:[%s1 + $0x1c] sm:$0xf]
  %v28 = vld [vmem:[%s1 + $0x20] sm:$0xf]
  %v29 = vld [vmem:[%s1 + $0x24] sm:$0xf]
  %v30 = vld [vmem:[%s1 + $0x28] sm:$0xf]
  %v31 = vld [vmem:[%s1 + $0x2c] sm:$0xf]
  %v32 = vld [vmem:[%s1 + $0x30] sm:$0xf]
  %v33 = vld [vmem:[%s1 + $0x34] sm:$0xf]
  %v34 = vld [vmem:[%s1 + $0x38] sm:$0xf]
  %v35 = vld [vmem:[%s1 + $0x3c] sm:$0xf]
  %v36 = vld [vmem:[%s1 + $0x40] sm:$0xf]
  %v37 = vld [vmem:[%s1 + $0x44] sm:$0xf]
  %v38 = vld [vmem:[%s1 + $0x48] sm:$0xf]
  %v39 = vld [vmem:[%s1 + $0x4c] sm:$0xf]
  %v40 = vld [vmem:[%s1 + $0x50] sm:$0xf]
  %v41 = vld [vmem:[%s1 + $0x54] sm:$0xf]
  %v42 = vld [vmem:[%s1 + $0x58] sm:$0xf]
  %v43 = vld [vmem:[%s1 + $0x5c] sm:$0xf]
  %v44 = vld [vmem:[%s1 + $0x60] sm:$0xf]
  %v45 = vld [vmem:[%s1 + $0x64] sm:$0xf]
  %v46 = vld [vmem:[%s1 + $0x68] sm:$0xf]
  %v47 = vld [vmem:[%s1 + $0x6c] sm:$0xf]
  %v48 = vld [vmem:[%s1 + $0x70] sm:$0xf]
  %v49 = vld [vmem:[%s1 + $0x74] sm:$0xf]
  %v50 = vld [vmem:[%s1 + $0x78] sm:$0xf]
  %v51 = vld [vmem:[%s1 + $0x7c] sm:$0xf]
  %v52 = vld [vmem:[%s1 + $0x80] sm:$0xf]
  %v53 = vld [vmem:[%s1 + $0x84] sm:$0xf]
  %v54 = vld [vmem:[%s1 + $0x88] sm:$0xf]
  %v55 = vld [vmem:[%s1 + $0x8c] sm:$0xf]
  %v56 = vld [vmem:[%s1 + $0x90] sm:$0xf]
  %v57 = vld [vmem:[%s1 + $0x94] sm:$0xf]
  %v58 = vld [vmem:[%s1 + $0x98] sm:$0xf]
  %v59 = vld [vmem:[%s1 + $0x9c] sm:$0xf]
  %v60 = vld [vmem:[%s1 + $0xa0] sm:$0xf]
  %v61 = vld [vmem:[%s1 + $0xa4] sm:$0xf]
  %v62 = vld [vmem:[%s1 + $0xa8] sm:$0xf]
  %v63 = vld [vmem:[%s1 + $0xac] sm:$0xf]
  %v64 = vld [vmem:[%s1 + $0xb0] sm:$0xf]
  %v65 = vld [vmem:[%s1 + $0xb4] sm:$0xf]
  %v66 = vld [vmem:[%s1 + $0xb8] sm:$0xf]
  %v67 = vld [vmem:[%s1 + $0xbc] sm:$0xf]
  %v68 = vld [vmem:[%s1 + $0xc0] sm:$0xf]
  %v69 = vld [vmem:[%s1 + $0xc4] sm:$0xf]
  %v70 = vld [vmem:[%s1 + $0xc8] sm:$0xf]
  %v71 = vld [vmem:[%s1 + $0xcc] sm:$0xf]
  %v72 = vld [vmem:[%s1 + $0xd0] sm:$0xf]
  %v73 = vld [vmem:[%s1 + $0xd4] sm:$0xf]
  %v74 = vld [vmem:[%s1 + $0xd8] sm:$0xf]
  %v75 = vld [vmem:[%s1 + $0xdc] sm:$0xf]
  %v76 = vld [vmem:[%s1 + $0xe0] sm:$0xf]
  %v77 = vld [vmem:[%s1 + $0xe4] sm:$0xf]
  %v78 = vld [vmem:[%s1 + $0xe8] sm:$0xf]
  %v79 = vld [vmem:[%s1 + $0xec] sm:$0xf]
  %v80 = vld [vmem:[%s1 + $0xf0] sm:$0xf]
  %v81 = vld [vmem:[%s1 + $0xf4] sm:$0xf]
  %v82 = vld [vmem:[%s1 + $0xf8] sm:$0xf]
  %v83 = vld [vmem:[%s1 + $0xfc] sm:$0xf]
  %v86 = vunpack.c.l.b16 %v18
  %v87 = vunpack.c.h.b16 %v18
  %v88 = vunpack.c.l.b16 %v19
  %v89 = vunpack.c.h.b16 %v19
  %v90 = vpack.c.b16 %v86, %v86
  %v91 = vpack.c.b16 %v87, %v87
  %v92 = vpack.c.b16 %v88, %v88
  %v93 = vpack.c.b16 %v89, %v89
  %v162 = vunpack.c.l.b16 %v20
  %v163 = vunpack.c.l.b16 %v21
  %v164 = vunpack.c.l.b16 %v22
  %v165 = vunpack.c.l.b16 %v23
  %v166 = vunpack.c.l.b16 %v24
  %v167 = vunpack.c.l.b16 %v25
  %v168 = vunpack.c.l.b16 %v26
  %v169 = vunpack.c.l.b16 %v27
  %v170 = vunpack.c.l.b16 %v28
  %v171 = vunpack.c.l.b16 %v29
  %v172 = vunpack.c.l.b16 %v30
  %v173 = vunpack.c.l.b16 %v31
  %v174 = vunpack.c.l.b16 %v32
  %v175 = vunpack.c.l.b16 %v33
  %v176 = vunpack.c.l.b16 %v34
  %v177 = vunpack.c.l.b16 %v35
  %v178 = vunpack.c.l.b16 %v36
  %v179 = vunpack.c.l.b16 %v37
  %v180 = vunpack.c.l.b16 %v38
  %v181 = vunpack.c.l.b16 %v39
  %v182 = vunpack.c.l.b16 %v40
  %v183 = vunpack.c.l.b16 %v41
  %v184 = vunpack.c.l.b16 %v42
  %v185 = vunpack.c.l.b16 %v43
  %v186 = vunpack.c.l.b16 %v44
  %v187 = vunpack.c.l.b16 %v45
  %v188 = vunpack.c.l.b16 %v46
  %v189 = vunpack.c.l.b16 %v47
  %v190 = vunpack.c.l.b16 %v48
  %v191 = vunpack.c.l.b16 %v49
  %v192 = vunpack.c.l.b16 %v50
  %v193 = vunpack.c.l.b16 %v51
  %v194 = vunpack.c.l.b16 %v52
  %v195 = vunpack.c.l.b16 %v53
  %v196 = vunpack.c.l.b16 %v54
  %v197 = vunpack.c.l.b16 %v55
  %v198 = vunpack.c.l.b16 %v56
  %v199 = vunpack.c.l.b16 %v57
  %v200 = vunpack.c.l.b16 %v58
  %v201 = vunpack.c.l.b16 %v59
  %v202 = vunpack.c.l.b16 %v60
  %v203 = vunpack.c.l.b16 %v61
  %v204 = vunpack.c.l.b16 %v62
  %v205 = vunpack.c.l.b16 %v63
  %v206 = vunpack.c.l.b16 %v64
  %v207 = vunpack.c.l.b16 %v65
  %v208 = vunpack.c.l.b16 %v66
  %v209 = vunpack.c.l.b16 %v67
  %v210 = vunpack.c.l.b16 %v68
  %v211 = vunpack.c.l.b16 %v69
  %v212 = vunpack.c.l.b16 %v70
  %v213 = vunpack.c.l.b16 %v71
  %v214 = vunpack.c.l.b16 %v72
  %v215 = vunpack.c.l.b16 %v73
  %v216 = vunpack.c.l.b16 %v74
  %v217 = vunpack.c.l.b16 %v75
  %v218 = vunpack.c.l.b16 %v76
  %v219 = vunpack.c.l.b16 %v77
  %v220 = vunpack.c.l.b16 %v78
  %v221 = vunpack.c.l.b16 %v79
  %v222 = vunpack.c.l.b16 %v80
  %v223 = vunpack.c.l.b16 %v81
  %v224 = vunpack.c.l.b16 %v82
  %v225 = vunpack.c.l.b16 %v83
  %v226 = vpack.c.b16 %v163, %v162
  %v227 = vpack.c.b16 %v165, %v164
  %v228 = vpack.c.b16 %v167, %v166
  %v229 = vpack.c.b16 %v169, %v168
  %v230 = vpack.c.b16 %v171, %v170
  %v231 = vpack.c.b16 %v173, %v172
  %v232 = vpack.c.b16 %v175, %v174
  %v233 = vpack.c.b16 %v177, %v176
  %v234 = vpack.c.b16 %v179, %v178
  %v235 = vpack.c.b16 %v181, %v180
  %v236 = vpack.c.b16 %v183, %v182
  %v237 = vpack.c.b16 %v185, %v184
  %v238 = vpack.c.b16 %v187, %v186
  %v239 = vpack.c.b16 %v189, %v188
  %v240 = vpack.c.b16 %v191, %v190
  %v241 = vpack.c.b16 %v193, %v192
  %v242 = vpack.c.b16 %v195, %v194
  %v243 = vpack.c.b16 %v197, %v196
  %v244 = vpack.c.b16 %v199, %v198
  %v245 = vpack.c.b16 %v201, %v200
  %v246 = vpack.c.b16 %v203, %v202
  %v247 = vpack.c.b16 %v205, %v204
  %v248 = vpack.c.b16 %v207, %v206
  %v249 = vpack.c.b16 %v209, %v208
  %v250 = vpack.c.b16 %v211, %v210
  %v251 = vpack.c.b16 %v213, %v212
  %v252 = vpack.c.b16 %v215, %v214
  %v253 = vpack.c.b16 %v217, %v216
  %v254 = vpack.c.b16 %v219, %v218
  %v255 = vpack.c.b16 %v221, %v220
  %v256 = vpack.c.b16 %v223, %v222
  %v257 = vpack.c.b16 %v225, %v224
  %290 = vmatprep.subr.bf16.mxu0 0
  %291 = vmatpush1.bf16.msra.mxu0 %v233
  %292 = vmatprep.subr.bf16.mxu0 0
  %293 = vmatpush1.bf16.msra.mxu0 %v232
  %294 = vmatprep.subr.bf16.mxu0 0
  %295 = vmatpush1.bf16.msra.mxu0 %v231
  %296 = vmatprep.subr.bf16.mxu0 0
  %297 = vmatpush1.bf16.msra.mxu0 %v230
  %298 = vmatprep.subr.bf16.mxu0 0
  %299 = vmatpush1.bf16.msra.mxu0 %v229
  %300 = vmatprep.subr.bf16.mxu0 0
  %301 = vmatpush1.bf16.msra.mxu0 %v228
  %302 = vmatprep.subr.bf16.mxu0 0
  %303 = vmatpush1.bf16.msra.mxu0 %v227
  %304 = vmatprep.subr.bf16.mxu0 0
  %305 = vmatpush1.bf16.msra.mxu0 %v226
  %306 = vmatprep.subr.bf16.mxu0 0
  %307 = vmatpush2.bf16.msra.mxu0 %v241
  %308 = vmatprep.subr.bf16.mxu0 0
  %309 = vmatpush2.bf16.msra.mxu0 %v240
  %310 = vmatprep.subr.bf16.mxu0 0
  %311 = vmatpush2.bf16.msra.mxu0 %v239
  %312 = vmatprep.subr.bf16.mxu0 0
  %313 = vmatpush2.bf16.msra.mxu0 %v238
  %314 = vmatprep.subr.bf16.mxu0 0
  %315 = vmatpush2.bf16.msra.mxu0 %v237
  %316 = vmatprep.subr.bf16.mxu0 0
  %317 = vmatpush2.bf16.msra.mxu0 %v236
  %318 = vmatprep.subr.bf16.mxu0 0
  %319 = vmatpush2.bf16.msra.mxu0 %v235
  %320 = vmatprep.subr.bf16.mxu0 0
  %321 = vmatpush2.bf16.msra.mxu0 %v234
  %322 = vmatprep.mubr.bf16.mxu0 %v91
  %323 = vmatmul.mubr.bf16.gmra.mxu0 %v90
  %v324 = vpop.f32.mrf.mxu0
  %v325 = vadd.f32 0.0, %v324
  %v326 = vpop.f32.mrf.mxu0
  %v327 = vpop.f32.mrf.mxu0
  %v328 = vpop.f32.mrf.mxu0
  %329 = vdwg.mxu0
  %330 = vmatprep.subr.bf16.mxu0 0
  %331 = vmatpush1.bf16.msra.mxu0 %v249
  %332 = vmatprep.subr.bf16.mxu0 0
  %333 = vmatpush1.bf16.msra.mxu0 %v248
  %334 = vmatprep.subr.bf16.mxu0 0
  %335 = vmatpush1.bf16.msra.mxu0 %v247
  %336 = vmatprep.subr.bf16.mxu0 0
  %337 = vmatpush1.bf16.msra.mxu0 %v246
  %338 = vmatprep.subr.bf16.mxu0 0
  %339 = vmatpush1.bf16.msra.mxu0 %v245
  %340 = vmatprep.subr.bf16.mxu0 0
  %341 = vmatpush1.bf16.msra.mxu0 %v244
  %342 = vmatprep.subr.bf16.mxu0 0
  %343 = vmatpush1.bf16.msra.mxu0 %v243
  %344 = vmatprep.subr.bf16.mxu0 0
  %345 = vmatpush1.bf16.msra.mxu0 %v242
  %346 = vmatprep.subr.bf16.mxu0 0
  %347 = vmatpush2.bf16.msra.mxu0 %v257
  %348 = vmatprep.subr.bf16.mxu0 0
  %349 = vmatpush2.bf16.msra.mxu0 %v256
  %350 = vmatprep.subr.bf16.mxu0 0
  %351 = vmatpush2.bf16.msra.mxu0 %v255
  %352 = vmatprep.subr.bf16.mxu0 0
  %353 = vmatpush2.bf16.msra.mxu0 %v254
  %354 = vmatprep.subr.bf16.mxu0 0
  %355 = vmatpush2.bf16.msra.mxu0 %v253
  %356 = vmatprep.subr.bf16.mxu0 0
  %357 = vmatpush2.bf16.msra.mxu0 %v252
  %358 = vmatprep.subr.bf16.mxu0 0
  %359 = vmatpush2.bf16.msra.mxu0 %v251
  %360 = vmatprep.subr.bf16.mxu0 0
  %361 = vmatpush2.bf16.msra.mxu0 %v250
  %362 = vmatprep.mubr.bf16.mxu0 %v93
  %363 = vmatmul.mubr.bf16.gmra.mxu0 %v92
  %v364 = vpop.f32.mrf.mxu0
  %v365 = vadd.f32 %v325, %v364
  %v366 = vpop.f32.mrf.mxu0
  %v367 = vpop.f32.mrf.mxu0
  %v368 = vpop.f32.mrf.mxu0
  %369 = vdwg.mxu0
  %v370 = vld [vmem:[%s2] sm:$0x1]
  %v372 = vlaneseq
  %v373 = vshrl.u32 %v372, 7
  %v374 = vsub.s32 0, %v373
  %v375 = vrot.slane %v370, %v374
  %v377 = vmul.f32 %v365, %v375
  %v378 = vld [vmem:[%s3] sm:$0x1]
  %v380 = vlaneseq
  %v381 = vshrl.u32 %v380, 7
  %v382 = vsub.s32 0, %v381
  %v383 = vrot.slane %v378, %v382
  %v385 = vadd.f32 %v377, %v383
  %vm386 = vcmp.gt.f32.partialorder %v385, 0.0
  %v387 = vmul.f32 %v385, 0.2
  %v388 = vsel %vm386, %v385, %v387
  %v389 = vpack.c.bf16 %v388, %v388
  %390 = vst [vmem:[%s4] sm:$0xf] %v389
  // Predicated region
  $region18: #{occlusion_net_forward.14} parent=0 // pred_check
    _
  $region19: #{occlusion_net_forward.14} parent=0 // pred_check_branch
    %392 = sbr.rel (0) target = $region21
  $region20: #{occlusion_net_forward.14} parent=0 // pred_region
    _
  $region21: #{occlusion_net_forward.14} parent=0 // pred_fallthru
    _
  // Predicated region
  $region22: #{occlusion_net_forward.14} parent=0 // pred_check
    _
  $region23: #{occlusion_net_forward.14} parent=0 // pred_check_branch
    %394 = sbr.rel (0) target = $region25
  $region24: #{occlusion_net_forward.14} parent=0 // pred_region
    _
  $region25: #{occlusion_net_forward.14} parent=0 // pred_fallthru
    _

// kernel: occlusion_net_forward.15
$region0: #{occlusion_net_forward.15}
  #allocation0 [shape = 'u32[]', space=smem, size = 0x4, offset = 0x4, fixed_abs, tag = 'smem constant byte address 0x4 - core index']
  #allocation1 [shape = 'u32[144,128]{1,0:T(1,128)}', space=vmem, size = 0x12000, scoped, tag = 'internal scratch']
  %s0 = inlined_call_operand.vmem [shape: bf16[8,1024], index: 0, kind: input, shape index: {}]
  %s1 = inlined_call_operand.vmem [shape: bf16[1024,128], index: 1, kind: input, shape index: {}]
  %s2 = inlined_call_operand.vmem [shape: f32[1,128], index: 2, kind: input, shape index: {}]
  %s3 = inlined_call_operand.vmem [shape: f32[1,128], index: 3, kind: input, shape index: {}]
  %s4 = inlined_call_operand.vmem [shape: bf16[8,128], index: 4, kind: output, shape index: {}]
  %s5 = sld [smem:[#allocation0]]
  $region26: #{occlusion_net_forward.15} parent=0
    _
  %s7 = ssub.s32 1, %s5
  %s8 = scalar_select 0, %s7, %s5
  // Predicated region
  $region2: #{occlusion_net_forward.15} parent=0 // pred_check
    _
  $region3: #{occlusion_net_forward.15} parent=0 // pred_check_branch
    %10 = sbr.rel (0) target = $region5
  $region4: #{occlusion_net_forward.15} parent=0 // pred_region
    _
  $region5: #{occlusion_net_forward.15} parent=0 // pred_fallthru
    _
  // Predicated region
  $region6: #{occlusion_net_forward.15} parent=0 // pred_check
    _
  $region7: #{occlusion_net_forward.15} parent=0 // pred_check_branch
    %12 = sbr.rel (0) target = $region9
  $region8: #{occlusion_net_forward.15} parent=0 // pred_region
    _
  $region9: #{occlusion_net_forward.15} parent=0 // pred_fallthru
    _
  // Predicated region
  $region10: #{occlusion_net_forward.15} parent=0 // pred_check
    _
  $region11: #{occlusion_net_forward.15} parent=0 // pred_check_branch
    %14 = sbr.rel (0) target = $region13
  $region12: #{occlusion_net_forward.15} parent=0 // pred_region
    _
  $region13: #{occlusion_net_forward.15} parent=0 // pred_fallthru
    _
  // Predicated region
  $region14: #{occlusion_net_forward.15} parent=0 // pred_check
    _
  $region15: #{occlusion_net_forward.15} parent=0 // pred_check_branch
    %16 = sbr.rel (0) target = $region17
  $region16: #{occlusion_net_forward.15} parent=0 // pred_region
    _
  $region17: #{occlusion_net_forward.15} parent=0 // pred_fallthru
    _
  %v18 = vld [vmem:[%s0] sm:$0xff]
  %v19 = vld [vmem:[%s0 + $0x8] sm:$0xff]
  %v20 = vld [vmem:[%s0 + $0x10] sm:$0xff]
  %v21 = vld [vmem:[%s0 + $0x18] sm:$0xff]
  %v22 = vld [vmem:[%s1] sm:$0xf]
  %v23 = vld [vmem:[%s1 + $0x4] sm:$0xf]
  %v24 = vld [vmem:[%s1 + $0x8] sm:$0xf]
  %v25 = vld [vmem:[%s1 + $0xc] sm:$0xf]
  %v26 = vld [vmem:[%s1 + $0x10] sm:$0xf]
  %v27 = vld [vmem:[%s1 + $0x14] sm:$0xf]
  %v28 = vld [vmem:[%s1 + $0x18] sm:$0xf]
  %v29 = vld [vmem:[%s1 + $0x1c] sm:$0xf]
  %v30 = vld [vmem:[%s1 + $0x20] sm:$0xf]
  %v31 = vld [vmem:[%s1 + $0x24] sm:$0xf]
  %v32 = vld [vmem:[%s1 + $0x28] sm:$0xf]
  %v33 = vld [vmem:[%s1 + $0x2c] sm:$0xf]
  %v34 = vld [vmem:[%s1 + $0x30] sm:$0xf]
  %v35 = vld [vmem:[%s1 + $0x34] sm:$0xf]
  %v36 = vld [vmem:[%s1 + $0x38] sm:$0xf]
  %v37 = vld [vmem:[%s1 + $0x3c] sm:$0xf]
  %v38 = vld [vmem:[%s1 + $0x40] sm:$0xf]
  %v39 = vld [vmem:[%s1 + $0x44] sm:$0xf]
  %v40 = vld [vmem:[%s1 + $0x48] sm:$0xf]
  %v41 = vld [vmem:[%s1 + $0x4c] sm:$0xf]
  %v42 = vld [vmem:[%s1 + $0x50] sm:$0xf]
  %v43 = vld [vmem:[%s1 + $0x54] sm:$0xf]
  %v44 = vld [vmem:[%s1 + $0x58] sm:$0xf]
  %v45 = vld [vmem:[%s1 + $0x5c] sm:$0xf]
  %v46 = vld [vmem:[%s1 + $0x60] sm:$0xf]
  %v47 = vld [vmem:[%s1 + $0x64] sm:$0xf]
  %v48 = vld [vmem:[%s1 + $0x68] sm:$0xf]
  %v49 = vld [vmem:[%s1 + $0x6c] sm:$0xf]
  %v50 = vld [vmem:[%s1 + $0x70] sm:$0xf]
  %v51 = vld [vmem:[%s1 + $0x74] sm:$0xf]
  %v52 = vld [vmem:[%s1 + $0x78] sm:$0xf]
  %v53 = vld [vmem:[%s1 + $0x7c] sm:$0xf]
  %v54 = vld [vmem:[%s1 + $0x80] sm:$0xf]
  %v55 = vld [vmem:[%s1 + $0x84] sm:$0xf]
  %v56 = vld [vmem:[%s1 + $0x88] sm:$0xf]
  %v57 = vld [vmem:[%s1 + $0x8c] sm:$0xf]
  %v58 = vld [vmem:[%s1 + $0x90] sm:$0xf]
  %v59 = vld [vmem:[%s1 + $0x94] sm:$0xf]
  %v60 = vld [vmem:[%s1 + $0x98] sm:$0xf]
  %v61 = vld [vmem:[%s1 + $0x9c] sm:$0xf]
  %v62 = vld [vmem:[%s1 + $0xa0] sm:$0xf]
  %v63 = vld [vmem:[%s1 + $0xa4] sm:$0xf]
  %v64 = vld [vmem:[%s1 + $0xa8] sm:$0xf]
  %v65 = vld [vmem:[%s1 + $0xac] sm:$0xf]
  %v66 = vld [vmem:[%s1 + $0xb0] sm:$0xf]
  %v67 = vld [vmem:[%s1 + $0xb4] sm:$0xf]
  %v68 = vld [vmem:[%s1 + $0xb8] sm:$0xf]
  %v69 = vld [vmem:[%s1 + $0xbc] sm:$0xf]
  %v70 = vld [vmem:[%s1 + $0xc0] sm:$0xf]
  %v71 = vld [vmem:[%s1 + $0xc4] sm:$0xf]
  %v72 = vld [vmem:[%s1 + $0xc8] sm:$0xf]
  %v73 = vld [vmem:[%s1 + $0xcc] sm:$0xf]
  %v74 = vld [vmem:[%s1 + $0xd0] sm:$0xf]
  %v75 = vld [vmem:[%s1 + $0xd4] sm:$0xf]
  %v76 = vld [vmem:[%s1 + $0xd8] sm:$0xf]
  %v77 = vld [vmem:[%s1 + $0xdc] sm:$0xf]
  %v78 = vld [vmem:[%s1 + $0xe0] sm:$0xf]
  %v79 = vld [vmem:[%s1 + $0xe4] sm:$0xf]
  %v80 = vld [vmem:[%s1 + $0xe8] sm:$0xf]
  %v81 = vld [vmem:[%s1 + $0xec] sm:$0xf]
  %v82 = vld [vmem:[%s1 + $0xf0] sm:$0xf]
  %v83 = vld [vmem:[%s1 + $0xf4] sm:$0xf]
  %v84 = vld [vmem:[%s1 + $0xf8] sm:$0xf]
  %v85 = vld [vmem:[%s1 + $0xfc] sm:$0xf]
  %v86 = vld [vmem:[%s1 + $0x100] sm:$0xf]
  %v87 = vld [vmem:[%s1 + $0x104] sm:$0xf]
  %v88 = vld [vmem:[%s1 + $0x108] sm:$0xf]
  %v89 = vld [vmem:[%s1 + $0x10c] sm:$0xf]
  %v90 = vld [vmem:[%s1 + $0x110] sm:$0xf]
  %v91 = vld [vmem:[%s1 + $0x114] sm:$0xf]
  %v92 = vld [vmem:[%s1 + $0x118] sm:$0xf]
  %v93 = vld [vmem:[%s1 + $0x11c] sm:$0xf]
  %v94 = vld [vmem:[%s1 + $0x120] sm:$0xf]
  %v95 = vld [vmem:[%s1 + $0x124] sm:$0xf]
  %v96 = vld [vmem:[%s1 + $0x128] sm:$0xf]
  %v97 = vld [vmem:[%s1 + $0x12c] sm:$0xf]
  %v98 = vld [vmem:[%s1 + $0x130] sm:$0xf]
  %v99 = vld [vmem:[%s1 + $0x134] sm:$0xf]
  %v100 = vld [vmem:[%s1 + $0x138] sm:$0xf]
  %v101 = vld [vmem:[%s1 + $0x13c] sm:$0xf]
  %v102 = vld [vmem:[%s1 + $0x140] sm:$0xf]
  %v103 = vld [vmem:[%s1 + $0x144] sm:$0xf]
  %v104 = vld [vmem:[%s1 + $0x148] sm:$0xf]
  %v105 = vld [vmem:[%s1 + $0x14c] sm:$0xf]
  %v106 = vld [vmem:[%s1 + $0x150] sm:$0xf]
  %v107 = vld [vmem:[%s1 + $0x154] sm:$0xf]
  %v108 = vld [vmem:[%s1 + $0x158] sm:$0xf]
  %v109 = vld [vmem:[%s1 + $0x15c] sm:$0xf]
  %v110 = vld [vmem:[%s1 + $0x160] sm:$0xf]
  %v111 = vld [vmem:[%s1 + $0x164] sm:$0xf]
  %v112 = vld [vmem:[%s1 + $0x168] sm:$0xf]
  %v113 = vld [vmem:[%s1 + $0x16c] sm:$0xf]
  %v114 = vld [vmem:[%s1 + $0x170] sm:$0xf]
  %v115 = vld [vmem:[%s1 + $0x174] sm:$0xf]
  %v116 = vld [vmem:[%s1 + $0x178] sm:$0xf]
  %v117 = vld [vmem:[%s1 + $0x17c] sm:$0xf]
  %v118 = vld [vmem:[%s1 + $0x180] sm:$0xf]
  %v119 = vld [vmem:[%s1 + $0x184] sm:$0xf]
  %v120 = vld [vmem:[%s1 + $0x188] sm:$0xf]
  %v121 = vld [vmem:[%s1 + $0x18c] sm:$0xf]
  %v122 = vld [vmem:[%s1 + $0x190] sm:$0xf]
  %v123 = vld [vmem:[%s1 + $0x194] sm:$0xf]
  %v124 = vld [vmem:[%s1 + $0x198] sm:$0xf]
  %v125 = vld [vmem:[%s1 + $0x19c] sm:$0xf]
  %v126 = vld [vmem:[%s1 + $0x1a0] sm:$0xf]
  %v127 = vld [vmem:[%s1 + $0x1a4] sm:$0xf]
  %v128 = vld [vmem:[%s1 + $0x1a8] sm:$0xf]
  %v129 = vld [vmem:[%s1 + $0x1ac] sm:$0xf]
  %v130 = vld [vmem:[%s1 + $0x1b0] sm:$0xf]
  %v131 = vld [vmem:[%s1 + $0x1b4] sm:$0xf]
  %v132 = vld [vmem:[%s1 + $0x1b8] sm:$0xf]
  %v133 = vld [vmem:[%s1 + $0x1bc] sm:$0xf]
  %v134 = vld [vmem:[%s1 + $0x1c0] sm:$0xf]
  %v135 = vld [vmem:[%s1 + $0x1c4] sm:$0xf]
  %v136 = vld [vmem:[%s1 + $0x1c8] sm:$0xf]
  %v137 = vld [vmem:[%s1 + $0x1cc] sm:$0xf]
  %v138 = vld [vmem:[%s1 + $0x1d0] sm:$0xf]
  %v139 = vld [vmem:[%s1 + $0x1d4] sm:$0xf]
  %v140 = vld [vmem:[%s1 + $0x1d8] sm:$0xf]
  %v141 = vld [vmem:[%s1 + $0x1dc] sm:$0xf]
  %v142 = vld [vmem:[%s1 + $0x1e0] sm:$0xf]
  %v143 = vld [vmem:[%s1 + $0x1e4] sm:$0xf]
  %v144 = vld [vmem:[%s1 + $0x1e8] sm:$0xf]
  %v145 = vld [vmem:[%s1 + $0x1ec] sm:$0xf]
  %v146 = vld [vmem:[%s1 + $0x1f0] sm:$0xf]
  %v147 = vld [vmem:[%s1 + $0x1f4] sm:$0xf]
  %v148 = vld [vmem:[%s1 + $0x1f8] sm:$0xf]
  %v149 = vld [vmem:[%s1 + $0x1fc] sm:$0xf]
  %v154 = vunpack.c.l.b16 %v18
  %v155 = vunpack.c.h.b16 %v18
  %v156 = vunpack.c.l.b16 %v19
  %v157 = vunpack.c.h.b16 %v19
  %v158 = vunpack.c.l.b16 %v20
  %v159 = vunpack.c.h.b16 %v20
  %v160 = vunpack.c.l.b16 %v21
  %v161 = vunpack.c.h.b16 %v21
  %v162 = vpack.c.b16 %v154, %v154
  %v163 = vpack.c.b16 %v155, %v155
  %v164 = vpack.c.b16 %v156, %v156
  %v165 = vpack.c.b16 %v157, %v157
  %v166 = vpack.c.b16 %v158, %v158
  %v167 = vpack.c.b16 %v159, %v159
  %v168 = vpack.c.b16 %v160, %v160
  %v169 = vpack.c.b16 %v161, %v161
  %v306 = vunpack.c.l.b16 %v22
  %v307 = vunpack.c.l.b16 %v23
  %v308 = vunpack.c.l.b16 %v24
  %v309 = vunpack.c.l.b16 %v25
  %v310 = vunpack.c.l.b16 %v26
  %v311 = vunpack.c.l.b16 %v27
  %v312 = vunpack.c.l.b16 %v28
  %v313 = vunpack.c.l.b16 %v29
  %v314 = vunpack.c.l.b16 %v30
  %v315 = vunpack.c.l.b16 %v31
  %v316 = vunpack.c.l.b16 %v32
  %v317 = vunpack.c.l.b16 %v33
  %v318 = vunpack.c.l.b16 %v34
  %v319 = vunpack.c.l.b16 %v35
  %v320 = vunpack.c.l.b16 %v36
  %v321 = vunpack.c.l.b16 %v37
  %v322 = vunpack.c.l.b16 %v38
  %v323 = vunpack.c.l.b16 %v39
  %v324 = vunpack.c.l.b16 %v40
  %v325 = vunpack.c.l.b16 %v41
  %v326 = vunpack.c.l.b16 %v42
  %v327 = vunpack.c.l.b16 %v43
  %v328 = vunpack.c.l.b16 %v44
  %v329 = vunpack.c.l.b16 %v45
  %v330 = vunpack.c.l.b16 %v46
  %v331 = vunpack.c.l.b16 %v47
  %v332 = vunpack.c.l.b16 %v48
  %v333 = vunpack.c.l.b16 %v49
  %v334 = vunpack.c.l.b16 %v50
  %v335 = vunpack.c.l.b16 %v51
  %v336 = vunpack.c.l.b16 %v52
  %v337 = vunpack.c.l.b16 %v53
  %v338 = vunpack.c.l.b16 %v54
  %v339 = vunpack.c.l.b16 %v55
  %v340 = vunpack.c.l.b16 %v56
  %v341 = vunpack.c.l.b16 %v57
  %v342 = vunpack.c.l.b16 %v58
  %v343 = vunpack.c.l.b16 %v59
  %v344 = vunpack.c.l.b16 %v60
  %v345 = vunpack.c.l.b16 %v61
  %v346 = vunpack.c.l.b16 %v62
  %v347 = vunpack.c.l.b16 %v63
  %v348 = vunpack.c.l.b16 %v64
  %v349 = vunpack.c.l.b16 %v65
  %v350 = vunpack.c.l.b16 %v66
  %v351 = vunpack.c.l.b16 %v67
  %v352 = vunpack.c.l.b16 %v68
  %v353 = vunpack.c.l.b16 %v69
  %v354 = vunpack.c.l.b16 %v70
  %v355 = vunpack.c.l.b16 %v71
  %v356 = vunpack.c.l.b16 %v72
  %v357 = vunpack.c.l.b16 %v73
  %v358 = vunpack.c.l.b16 %v74
  %v359 = vunpack.c.l.b16 %v75
  %v360 = vunpack.c.l.b16 %v76
  %v361 = vunpack.c.l.b16 %v77
  %v362 = vunpack.c.l.b16 %v78
  %v363 = vunpack.c.l.b16 %v79
  %v364 = vunpack.c.l.b16 %v80
  %v365 = vunpack.c.l.b16 %v81
  %v366 = vunpack.c.l.b16 %v82
  %v367 = vunpack.c.l.b16 %v83
  %v368 = vunpack.c.l.b16 %v84
  %v369 = vunpack.c.l.b16 %v85
  %v370 = vunpack.c.l.b16 %v86
  %v371 = vunpack.c.l.b16 %v87
  %v372 = vunpack.c.l.b16 %v88
  %v373 = vunpack.c.l.b16 %v89
  %v374 = vunpack.c.l.b16 %v90
  %v375 = vunpack.c.l.b16 %v91
  %v376 = vunpack.c.l.b16 %v92
  %v377 = vunpack.c.l.b16 %v93
  %v378 = vunpack.c.l.b16 %v94
  %v379 = vunpack.c.l.b16 %v95
  %v380 = vunpack.c.l.b16 %v96
  %v381 = vunpack.c.l.b16 %v97
  %v382 = vunpack.c.l.b16 %v98
  %v383 = vunpack.c.l.b16 %v99
  %v384 = vunpack.c.l.b16 %v100
  %v385 = vunpack.c.l.b16 %v101
  %v386 = vunpack.c.l.b16 %v102
  %v387 = vunpack.c.l.b16 %v103
  %v388 = vunpack.c.l.b16 %v104
  %v389 = vunpack.c.l.b16 %v105
  %v390 = vunpack.c.l.b16 %v106
  %v391 = vunpack.c.l.b16 %v107
  %v392 = vunpack.c.l.b16 %v108
  %v393 = vunpack.c.l.b16 %v109
  %v394 = vunpack.c.l.b16 %v110
  %v395 = vunpack.c.l.b16 %v111
  %v396 = vunpack.c.l.b16 %v112
  %v397 = vunpack.c.l.b16 %v113
  %v398 = vunpack.c.l.b16 %v114
  %v399 = vunpack.c.l.b16 %v115
  %v400 = vunpack.c.l.b16 %v116
  %v401 = vunpack.c.l.b16 %v117
  %v402 = vunpack.c.l.b16 %v118
  %v403 = vunpack.c.l.b16 %v119
  %v404 = vunpack.c.l.b16 %v120
  %v405 = vunpack.c.l.b16 %v121
  %v406 = vunpack.c.l.b16 %v122
  %v407 = vunpack.c.l.b16 %v123
  %v408 = vunpack.c.l.b16 %v124
  %v409 = vunpack.c.l.b16 %v125
  %v410 = vunpack.c.l.b16 %v126
  %v411 = vunpack.c.l.b16 %v127
  %v412 = vunpack.c.l.b16 %v128
  %v413 = vunpack.c.l.b16 %v129
  %v414 = vunpack.c.l.b16 %v130
  %v415 = vunpack.c.l.b16 %v131
  %v416 = vunpack.c.l.b16 %v132
  %v417 = vunpack.c.l.b16 %v133
  %v418 = vunpack.c.l.b16 %v134
  %v419 = vunpack.c.l.b16 %v135
  %v420 = vunpack.c.l.b16 %v136
  %v421 = vunpack.c.l.b16 %v137
  %v422 = vunpack.c.l.b16 %v138
  %v423 = vunpack.c.l.b16 %v139
  %v424 = vunpack.c.l.b16 %v140
  %v425 = vunpack.c.l.b16 %v141
  %v426 = vunpack.c.l.b16 %v142
  %v427 = vunpack.c.l.b16 %v143
  %v428 = vunpack.c.l.b16 %v144
  %v429 = vunpack.c.l.b16 %v145
  %v430 = vunpack.c.l.b16 %v146
  %v431 = vunpack.c.l.b16 %v147
  %v432 = vunpack.c.l.b16 %v148
  %v433 = vunpack.c.l.b16 %v149
  %v434 = vpack.c.b16 %v307, %v306
  %v435 = vpack.c.b16 %v309, %v308
  %v436 = vpack.c.b16 %v311, %v310
  %v437 = vpack.c.b16 %v313, %v312
  %v438 = vpack.c.b16 %v315, %v314
  %v439 = vpack.c.b16 %v317, %v316
  %v440 = vpack.c.b16 %v319, %v318
  %v441 = vpack.c.b16 %v321, %v320
  %v442 = vpack.c.b16 %v323, %v322
  %v443 = vpack.c.b16 %v325, %v324
  %v444 = vpack.c.b16 %v327, %v326
  %v445 = vpack.c.b16 %v329, %v328
  %v446 = vpack.c.b16 %v331, %v330
  %v447 = vpack.c.b16 %v333, %v332
  %v448 = vpack.c.b16 %v335, %v334
  %v449 = vpack.c.b16 %v337, %v336
  %v450 = vpack.c.b16 %v339, %v338
  %v451 = vpack.c.b16 %v341, %v340
  %v452 = vpack.c.b16 %v343, %v342
  %v453 = vpack.c.b16 %v345, %v344
  %v454 = vpack.c.b16 %v347, %v346
  %v455 = vpack.c.b16 %v349, %v348
  %v456 = vpack.c.b16 %v351, %v350
  %v457 = vpack.c.b16 %v353, %v352
  %v458 = vpack.c.b16 %v355, %v354
  %v459 = vpack.c.b16 %v357, %v356
  %v460 = vpack.c.b16 %v359, %v358
  %v461 = vpack.c.b16 %v361, %v360
  %v462 = vpack.c.b16 %v363, %v362
  %v463 = vpack.c.b16 %v365, %v364
  %v464 = vpack.c.b16 %v367, %v366
  %v465 = vpack.c.b16 %v369, %v368
  %v466 = vpack.c.b16 %v371, %v370
  %v467 = vpack.c.b16 %v373, %v372
  %v468 = vpack.c.b16 %v375, %v374
  %v469 = vpack.c.b16 %v377, %v376
  %v470 = vpack.c.b16 %v379, %v378
  %v471 = vpack.c.b16 %v381, %v380
  %v472 = vpack.c.b16 %v383, %v382
  %v473 = vpack.c.b16 %v385, %v384
  %v474 = vpack.c.b16 %v387, %v386
  %v475 = vpack.c.b16 %v389, %v388
  %v476 = vpack.c.b16 %v391, %v390
  %v477 = vpack.c.b16 %v393, %v392
  %v478 = vpack.c.b16 %v395, %v394
  %v479 = vpack.c.b16 %v397, %v396
  %v480 = vpack.c.b16 %v399, %v398
  %v481 = vpack.c.b16 %v401, %v400
  %v482 = vpack.c.b16 %v403, %v402
  %v483 = vpack.c.b16 %v405, %v404
  %v484 = vpack.c.b16 %v407, %v406
  %v485 = vpack.c.b16 %v409, %v408
  %v486 = vpack.c.b16 %v411, %v410
  %v487 = vpack.c.b16 %v413, %v412
  %v488 = vpack.c.b16 %v415, %v414
  %v489 = vpack.c.b16 %v417, %v416
  %v490 = vpack.c.b16 %v419, %v418
  %v491 = vpack.c.b16 %v421, %v420
  %v492 = vpack.c.b16 %v423, %v422
  %v493 = vpack.c.b16 %v425, %v424
  %v494 = vpack.c.b16 %v427, %v426
  %v495 = vpack.c.b16 %v429, %v428
  %v496 = vpack.c.b16 %v431, %v430
  %v497 = vpack.c.b16 %v433, %v432
  %562 = vmatprep.subr.bf16.mxu0 0
  %563 = vmatpush1.bf16.msra.mxu0 %v441
  %564 = vmatprep.subr.bf16.mxu0 0
  %565 = vmatpush1.bf16.msra.mxu0 %v440
  %566 = vmatprep.subr.bf16.mxu0 0
  %567 = vmatpush1.bf16.msra.mxu0 %v439
  %568 = vmatprep.subr.bf16.mxu0 0
  %569 = vmatpush1.bf16.msra.mxu0 %v438
  %570 = vmatprep.subr.bf16.mxu0 0
  %571 = vmatpush1.bf16.msra.mxu0 %v437
  %572 = vmatprep.subr.bf16.mxu0 0
  %573 = vmatpush1.bf16.msra.mxu0 %v436
  %574 = vmatprep.subr.bf16.mxu0 0
  %575 = vmatpush1.bf16.msra.mxu0 %v435
  %576 = vmatprep.subr.bf16.mxu0 0
  %577 = vmatpush1.bf16.msra.mxu0 %v434
  %578 = vmatprep.subr.bf16.mxu0 0
  %579 = vmatpush2.bf16.msra.mxu0 %v449
  %580 = vmatprep.subr.bf16.mxu0 0
  %581 = vmatpush2.bf16.msra.mxu0 %v448
  %582 = vmatprep.subr.bf16.mxu0 0
  %583 = vmatpush2.bf16.msra.mxu0 %v447
  %584 = vmatprep.subr.bf16.mxu0 0
  %585 = vmatpush2.bf16.msra.mxu0 %v446
  %586 = vmatprep.subr.bf16.mxu0 0
  %587 = vmatpush2.bf16.msra.mxu0 %v445
  %588 = vmatprep.subr.bf16.mxu0 0
  %589 = vmatpush2.bf16.msra.mxu0 %v444
  %590 = vmatprep.subr.bf16.mxu0 0
  %591 = vmatpush2.bf16.msra.mxu0 %v443
  %592 = vmatprep.subr.bf16.mxu0 0
  %593 = vmatpush2.bf16.msra.mxu0 %v442
  %594 = vmatprep.mubr.bf16.mxu0 %v163
  %595 = vmatmul.mubr.bf16.gmra.mxu0 %v162
  %v596 = vpop.f32.mrf.mxu0
  %v597 = vadd.f32 0.0, %v596
  %v598 = vpop.f32.mrf.mxu0
  %v599 = vpop.f32.mrf.mxu0
  %v600 = vpop.f32.mrf.mxu0
  %601 = vdwg.mxu0
  %602 = vmatprep.subr.bf16.mxu0 0
  %603 = vmatpush1.bf16.msra.mxu0 %v457
  %604 = vmatprep.subr.bf16.mxu0 0
  %605 = vmatpush1.bf16.msra.mxu0 %v456
  %606 = vmatprep.subr.bf16.mxu0 0
  %607 = vmatpush1.bf16.msra.mxu0 %v455
  %608 = vmatprep.subr.bf16.mxu0 0
  %609 = vmatpush1.bf16.msra.mxu0 %v454
  %610 = vmatprep.subr.bf16.mxu0 0
  %611 = vmatpush1.bf16.msra.mxu0 %v453
  %612 = vmatprep.subr.bf16.mxu0 0
  %613 = vmatpush1.bf16.msra.mxu0 %v452
  %614 = vmatprep.subr.bf16.mxu0 0
  %615 = vmatpush1.bf16.msra.mxu0 %v451
  %616 = vmatprep.subr.bf16.mxu0 0
  %617 = vmatpush1.bf16.msra.mxu0 %v450
  %618 = vmatprep.subr.bf16.mxu0 0
  %619 = vmatpush2.bf16.msra.mxu0 %v465
  %620 = vmatprep.subr.bf16.mxu0 0
  %621 = vmatpush2.bf16.msra.mxu0 %v464
  %622 = vmatprep.subr.bf16.mxu0 0
  %623 = vmatpush2.bf16.msra.mxu0 %v463
  %624 = vmatprep.subr.bf16.mxu0 0
  %625 = vmatpush2.bf16.msra.mxu0 %v462
  %626 = vmatprep.subr.bf16.mxu0 0
  %627 = vmatpush2.bf16.msra.mxu0 %v461
  %628 = vmatprep.subr.bf16.mxu0 0
  %629 = vmatpush2.bf16.msra.mxu0 %v460
  %630 = vmatprep.subr.bf16.mxu0 0
  %631 = vmatpush2.bf16.msra.mxu0 %v459
  %632 = vmatprep.subr.bf16.mxu0 0
  %633 = vmatpush2.bf16.msra.mxu0 %v458
  %634 = vmatprep.mubr.bf16.mxu0 %v165
  %635 = vmatmul.mubr.bf16.gmra.mxu0 %v164
  %v636 = vpop.f32.mrf.mxu0
  %v637 = vadd.f32 %v597, %v636
  %v638 = vpop.f32.mrf.mxu0
  %v639 = vpop.f32.mrf.mxu0
  %v640 = vpop.f32.mrf.mxu0
  %641 = vdwg.mxu0
  %642 = vmatprep.subr.bf16.mxu0 0
  %643 = vmatpush1.bf16.msra.mxu0 %v473
  %644 = vmatprep.subr.bf16.mxu0 0
  %645 = vmatpush1.bf16.msra.mxu0 %v472
  %646 = vmatprep.subr.bf16.mxu0 0
  %647 = vmatpush1.bf16.msra.mxu0 %v471
  %648 = vmatprep.subr.bf16.mxu0 0
  %649 = vmatpush1.bf16.msra.mxu0 %v470
  %650 = vmatprep.subr.bf16.mxu0 0
  %651 = vmatpush1.bf16.msra.mxu0 %v469
  %652 = vmatprep.subr.bf16.mxu0 0
  %653 = vmatpush1.bf16.msra.mxu0 %v468
  %654 = vmatprep.subr.bf16.mxu0 0
  %655 = vmatpush1.bf16.msra.mxu0 %v467
  %656 = vmatprep.subr.bf16.mxu0 0
  %657 = vmatpush1.bf16.msra.mxu0 %v466
  %658 = vmatprep.subr.bf16.mxu0 0
  %659 = vmatpush2.bf16.msra.mxu0 %v481
  %660 = vmatprep.subr.bf16.mxu0 0
  %661 = vmatpush2.bf16.msra.mxu0 %v480
  %662 = vmatprep.subr.bf16.mxu0 0
  %663 = vmatpush2.bf16.msra.mxu0 %v479
  %664 = vmatprep.subr.bf16.mxu0 0
  %665 = vmatpush2.bf16.msra.mxu0 %v478
  %666 = vmatprep.subr.bf16.mxu0 0
  %667 = vmatpush2.bf16.msra.mxu0 %v477
  %668 = vmatprep.subr.bf16.mxu0 0
  %669 = vmatpush2.bf16.msra.mxu0 %v476
  %670 = vmatprep.subr.bf16.mxu0 0
  %671 = vmatpush2.bf16.msra.mxu0 %v475
  %672 = vmatprep.subr.bf16.mxu0 0
  %673 = vmatpush2.bf16.msra.mxu0 %v474
  %674 = vmatprep.mubr.bf16.mxu0 %v167
  %675 = vmatmul.mubr.bf16.gmra.mxu0 %v166
  %v676 = vpop.f32.mrf.mxu0
  %v677 = vadd.f32 %v637, %v676
  %v678 = vpop.f32.mrf.mxu0
  %v679 = vpop.f32.mrf.mxu0
  %v680 = vpop.f32.mrf.mxu0
  %681 = vdwg.mxu0
  %682 = vmatprep.subr.bf16.mxu0 0
  %683 = vmatpush1.bf16.msra.mxu0 %v489
  %684 = vmatprep.subr.bf16.mxu0 0
  %685 = vmatpush1.bf16.msra.mxu0 %v488
  %686 = vmatprep.subr.bf16.mxu0 0
  %687 = vmatpush1.bf16.msra.mxu0 %v487
  %688 = vmatprep.subr.bf16.mxu0 0
  %689 = vmatpush1.bf16.msra.mxu0 %v486
  %690 = vmatprep.subr.bf16.mxu0 0
  %691 = vmatpush1.bf16.msra.mxu0 %v485
  %692 = vmatprep.subr.bf16.mxu0 0
  %693 = vmatpush1.bf16.msra.mxu0 %v484
  %694 = vmatprep.subr.bf16.mxu0 0
  %695 = vmatpush1.bf16.msra.mxu0 %v483
  %696 = vmatprep.subr.bf16.mxu0 0
  %697 = vmatpush1.bf16.msra.mxu0 %v482
  %698 = vmatprep.subr.bf16.mxu0 0
  %699 = vmatpush2.bf16.msra.mxu0 %v497
  %700 = vmatprep.subr.bf16.mxu0 0
  %701 = vmatpush2.bf16.msra.mxu0 %v496
  %702 = vmatprep.subr.bf16.mxu0 0
  %703 = vmatpush2.bf16.msra.mxu0 %v495
  %704 = vmatprep.subr.bf16.mxu0 0
  %705 = vmatpush2.bf16.msra.mxu0 %v494
  %706 = vmatprep.subr.bf16.mxu0 0
  %707 = vmatpush2.bf16.msra.mxu0 %v493
  %708 = vmatprep.subr.bf16.mxu0 0
  %709 = vmatpush2.bf16.msra.mxu0 %v492
  %710 = vmatprep.subr.bf16.mxu0 0
  %711 = vmatpush2.bf16.msra.mxu0 %v491
  %712 = vmatprep.subr.bf16.mxu0 0
  %713 = vmatpush2.bf16.msra.mxu0 %v490
  %714 = vmatprep.mubr.bf16.mxu0 %v169
  %715 = vmatmul.mubr.bf16.gmra.mxu0 %v168
  %v716 = vpop.f32.mrf.mxu0
  %v717 = vadd.f32 %v677, %v716
  %v718 = vpop.f32.mrf.mxu0
  %v719 = vpop.f32.mrf.mxu0
  %v720 = vpop.f32.mrf.mxu0
  %721 = vdwg.mxu0
  %v722 = vld [vmem:[%s2] sm:$0x1]
  %v724 = vlaneseq
  %v725 = vshrl.u32 %v724, 7
  %v726 = vsub.s32 0, %v725
  %v727 = vrot.slane %v722, %v726
  %v729 = vmul.f32 %v717, %v727
  %v730 = vld [vmem:[%s3] sm:$0x1]
  %v732 = vlaneseq
  %v733 = vshrl.u32 %v732, 7
  %v734 = vsub.s32 0, %v733
  %v735 = vrot.slane %v730, %v734
  %v737 = vadd.f32 %v729, %v735
  %vm738 = vcmp.gt.f32.partialorder %v737, 0.0
  %v739 = vmul.f32 %v737, 0.2
  %v740 = vsel %vm738, %v737, %v739
  %v741 = vpack.c.bf16 %v740, %v740
  %742 = vst [vmem:[%s4] sm:$0xf] %v741
  // Predicated region
  $region18: #{occlusion_net_forward.15} parent=0 // pred_check
    _
  $region19: #{occlusion_net_forward.15} parent=0 // pred_check_branch
    %744 = sbr.rel (0) target = $region21
  $region20: #{occlusion_net_forward.15} parent=0 // pred_region
    _
  $region21: #{occlusion_net_forward.15} parent=0 // pred_fallthru
    _
  // Predicated region
  $region22: #{occlusion_net_forward.15} parent=0 // pred_check
    _
  $region23: #{occlusion_net_forward.15} parent=0 // pred_check_branch
    %746 = sbr.rel (0) target = $region25
  $region24: #{occlusion_net_forward.15} parent=0 // pred_region
    _
  $region25: #{occlusion_net_forward.15} parent=0 // pred_fallthru
    _

// kernel: tile.33
$region0: #{tile.33}
  #allocation0 [shape = 's32[1]{0}', space=sflag, size = 0x4, scoped, tag = 'scoped memory for tile.33']
  %s0 = inlined_call_operand.vmem [shape: f32[16], index: 0, kind: input, shape index: {}]
  %s1 = inlined_call_operand.vmem [shape: f32[8,16], index: 1, kind: output, shape index: {}]
  // Predicated region
  $region2: #{tile.33} parent=0 // pred_check
    _
  $region3: #{tile.33} parent=0 // pred_check_branch
    %3 = sbr.rel (0) target = $region5
  $region4: #{tile.33} parent=0 // pred_region
    _
  $region5: #{tile.33} parent=0 // pred_fallthru
    _
  %v4 = vld [vmem:[%s0] ss:$0 sm:$0xff]
  %5 = vst [vmem:[%s1] sm:$0xff] %v4

// kernel: occlusion_net_forward.16
$region0: #{occlusion_net_forward.16}
  #allocation0 [shape = 'u32[]', space=smem, size = 0x4, offset = 0x4, fixed_abs, tag = 'smem constant byte address 0x4 - core index']
  #allocation1 [shape = 'u32[144,128]{1,0:T(1,128)}', space=vmem, size = 0x12000, scoped, tag = 'internal scratch']
  %s0 = inlined_call_operand.vmem [shape: bf16[8,512], index: 0, kind: input, shape index: {}]
  %s1 = inlined_call_operand.vmem [shape: bf16[512,128], index: 1, kind: input, shape index: {}]
  %s2 = inlined_call_operand.vmem [shape: f32[1,128], index: 2, kind: input, shape index: {}]
  %s3 = inlined_call_operand.vmem [shape: f32[1,128], index: 3, kind: input, shape index: {}]
  %s4 = inlined_call_operand.vmem [shape: bf16[8,128], index: 4, kind: output, shape index: {}]
  %s5 = sld [smem:[#allocation0]]
  $region26: #{occlusion_net_forward.16} parent=0
    _
  %s7 = ssub.s32 1, %s5
  %s8 = scalar_select 0, %s7, %s5
  // Predicated region
  $region2: #{occlusion_net_forward.16} parent=0 // pred_check
    _
  $region3: #{occlusion_net_forward.16} parent=0 // pred_check_branch
    %10 = sbr.rel (0) target = $region5
  $region4: #{occlusion_net_forward.16} parent=0 // pred_region
    _
  $region5: #{occlusion_net_forward.16} parent=0 // pred_fallthru
    _
  // Predicated region
  $region6: #{occlusion_net_forward.16} parent=0 // pred_check
    _
  $region7: #{occlusion_net_forward.16} parent=0 // pred_check_branch
    %12 = sbr.rel (0) target = $region9
  $region8: #{occlusion_net_forward.16} parent=0 // pred_region
    _
  $region9: #{occlusion_net_forward.16} parent=0 // pred_fallthru
    _
  // Predicated region
  $region10: #{occlusion_net_forward.16} parent=0 // pred_check
    _
  $region11: #{occlusion_net_forward.16} parent=0 // pred_check_branch
    %14 = sbr.rel (0) target = $region13
  $region12: #{occlusion_net_forward.16} parent=0 // pred_region
    _
  $region13: #{occlusion_net_forward.16} parent=0 // pred_fallthru
    _
  // Predicated region
  $region14: #{occlusion_net_forward.16} parent=0 // pred_check
    _
  $region15: #{occlusion_net_forward.16} parent=0 // pred_check_branch
    %16 = sbr.rel (0) target = $region17
  $region16: #{occlusion_net_forward.16} parent=0 // pred_region
    _
  $region17: #{occlusion_net_forward.16} parent=0 // pred_fallthru
    _
  %v18 = vld [vmem:[%s0] sm:$0xff]
  %v19 = vld [vmem:[%s0 + $0x8] sm:$0xff]
  %v20 = vld [vmem:[%s1] sm:$0xf]
  %v21 = vld [vmem:[%s1 + $0x4] sm:$0xf]
  %v22 = vld [vmem:[%s1 + $0x8] sm:$0xf]
  %v23 = vld [vmem:[%s1 + $0xc] sm:$0xf]
  %v24 = vld [vmem:[%s1 + $0x10] sm:$0xf]
  %v25 = vld [vmem:[%s1 + $0x14] sm:$0xf]
  %v26 = vld [vmem:[%s1 + $0x18] sm:$0xf]
  %v27 = vld [vmem:[%s1 + $0x1c] sm:$0xf]
  %v28 = vld [vmem:[%s1 + $0x20] sm:$0xf]
  %v29 = vld [vmem:[%s1 + $0x24] sm:$0xf]
  %v30 = vld [vmem:[%s1 + $0x28] sm:$0xf]
  %v31 = vld [vmem:[%s1 + $0x2c] sm:$0xf]
  %v32 = vld [vmem:[%s1 + $0x30] sm:$0xf]
  %v33 = vld [vmem:[%s1 + $0x34] sm:$0xf]
  %v34 = vld [vmem:[%s1 + $0x38] sm:$0xf]
  %v35 = vld [vmem:[%s1 + $0x3c] sm:$0xf]
  %v36 = vld [vmem:[%s1 + $0x40] sm:$0xf]
  %v37 = vld [vmem:[%s1 + $0x44] sm:$0xf]
  %v38 = vld [vmem:[%s1 + $0x48] sm:$0xf]
  %v39 = vld [vmem:[%s1 + $0x4c] sm:$0xf]
  %v40 = vld [vmem:[%s1 + $0x50] sm:$0xf]
  %v41 = vld [vmem:[%s1 + $0x54] sm:$0xf]
  %v42 = vld [vmem:[%s1 + $0x58] sm:$0xf]
  %v43 = vld [vmem:[%s1 + $0x5c] sm:$0xf]
  %v44 = vld [vmem:[%s1 + $0x60] sm:$0xf]
  %v45 = vld [vmem:[%s1 + $0x64] sm:$0xf]
  %v46 = vld [vmem:[%s1 + $0x68] sm:$0xf]
  %v47 = vld [vmem:[%s1 + $0x6c] sm:$0xf]
  %v48 = vld [vmem:[%s1 + $0x70] sm:$0xf]
  %v49 = vld [vmem:[%s1 + $0x74] sm:$0xf]
  %v50 = vld [vmem:[%s1 + $0x78] sm:$0xf]
  %v51 = vld [vmem:[%s1 + $0x7c] sm:$0xf]
  %v52 = vld [vmem:[%s1 + $0x80] sm:$0xf]
  %v53 = vld [vmem:[%s1 + $0x84] sm:$0xf]
  %v54 = vld [vmem:[%s1 + $0x88] sm:$0xf]
  %v55 = vld [vmem:[%s1 + $0x8c] sm:$0xf]
  %v56 = vld [vmem:[%s1 + $0x90] sm:$0xf]
  %v57 = vld [vmem:[%s1 + $0x94] sm:$0xf]
  %v58 = vld [vmem:[%s1 + $0x98] sm:$0xf]
  %v59 = vld [vmem:[%s1 + $0x9c] sm:$0xf]
  %v60 = vld [vmem:[%s1 + $0xa0] sm:$0xf]
  %v61 = vld [vmem:[%s1 + $0xa4] sm:$0xf]
  %v62 = vld [vmem:[%s1 + $0xa8] sm:$0xf]
  %v63 = vld [vmem:[%s1 + $0xac] sm:$0xf]
  %v64 = vld [vmem:[%s1 + $0xb0] sm:$0xf]
  %v65 = vld [vmem:[%s1 + $0xb4] sm:$0xf]
  %v66 = vld [vmem:[%s1 + $0xb8] sm:$0xf]
  %v67 = vld [vmem:[%s1 + $0xbc] sm:$0xf]
  %v68 = vld [vmem:[%s1 + $0xc0] sm:$0xf]
  %v69 = vld [vmem:[%s1 + $0xc4] sm:$0xf]
  %v70 = vld [vmem:[%s1 + $0xc8] sm:$0xf]
  %v71 = vld [vmem:[%s1 + $0xcc] sm:$0xf]
  %v72 = vld [vmem:[%s1 + $0xd0] sm:$0xf]
  %v73 = vld [vmem:[%s1 + $0xd4] sm:$0xf]
  %v74 = vld [vmem:[%s1 + $0xd8] sm:$0xf]
  %v75 = vld [vmem:[%s1 + $0xdc] sm:$0xf]
  %v76 = vld [vmem:[%s1 + $0xe0] sm:$0xf]
  %v77 = vld [vmem:[%s1 + $0xe4] sm:$0xf]
  %v78 = vld [vmem:[%s1 + $0xe8] sm:$0xf]
  %v79 = vld [vmem:[%s1 + $0xec] sm:$0xf]
  %v80 = vld [vmem:[%s1 + $0xf0] sm:$0xf]
  %v81 = vld [vmem:[%s1 + $0xf4] sm:$0xf]
  %v82 = vld [vmem:[%s1 + $0xf8] sm:$0xf]
  %v83 = vld [vmem:[%s1 + $0xfc] sm:$0xf]
  %v86 = vunpack.c.l.b16 %v18
  %v87 = vunpack.c.h.b16 %v18
  %v88 = vunpack.c.l.b16 %v19
  %v89 = vunpack.c.h.b16 %v19
  %v90 = vpack.c.b16 %v86, %v86
  %v91 = vpack.c.b16 %v87, %v87
  %v92 = vpack.c.b16 %v88, %v88
  %v93 = vpack.c.b16 %v89, %v89
  %v162 = vunpack.c.l.b16 %v20
  %v163 = vunpack.c.l.b16 %v21
  %v164 = vunpack.c.l.b16 %v22
  %v165 = vunpack.c.l.b16 %v23
  %v166 = vunpack.c.l.b16 %v24
  %v167 = vunpack.c.l.b16 %v25
  %v168 = vunpack.c.l.b16 %v26
  %v169 = vunpack.c.l.b16 %v27
  %v170 = vunpack.c.l.b16 %v28
  %v171 = vunpack.c.l.b16 %v29
  %v172 = vunpack.c.l.b16 %v30
  %v173 = vunpack.c.l.b16 %v31
  %v174 = vunpack.c.l.b16 %v32
  %v175 = vunpack.c.l.b16 %v33
  %v176 = vunpack.c.l.b16 %v34
  %v177 = vunpack.c.l.b16 %v35
  %v178 = vunpack.c.l.b16 %v36
  %v179 = vunpack.c.l.b16 %v37
  %v180 = vunpack.c.l.b16 %v38
  %v181 = vunpack.c.l.b16 %v39
  %v182 = vunpack.c.l.b16 %v40
  %v183 = vunpack.c.l.b16 %v41
  %v184 = vunpack.c.l.b16 %v42
  %v185 = vunpack.c.l.b16 %v43
  %v186 = vunpack.c.l.b16 %v44
  %v187 = vunpack.c.l.b16 %v45
  %v188 = vunpack.c.l.b16 %v46
  %v189 = vunpack.c.l.b16 %v47
  %v190 = vunpack.c.l.b16 %v48
  %v191 = vunpack.c.l.b16 %v49
  %v192 = vunpack.c.l.b16 %v50
  %v193 = vunpack.c.l.b16 %v51
  %v194 = vunpack.c.l.b16 %v52
  %v195 = vunpack.c.l.b16 %v53
  %v196 = vunpack.c.l.b16 %v54
  %v197 = vunpack.c.l.b16 %v55
  %v198 = vunpack.c.l.b16 %v56
  %v199 = vunpack.c.l.b16 %v57
  %v200 = vunpack.c.l.b16 %v58
  %v201 = vunpack.c.l.b16 %v59
  %v202 = vunpack.c.l.b16 %v60
  %v203 = vunpack.c.l.b16 %v61
  %v204 = vunpack.c.l.b16 %v62
  %v205 = vunpack.c.l.b16 %v63
  %v206 = vunpack.c.l.b16 %v64
  %v207 = vunpack.c.l.b16 %v65
  %v208 = vunpack.c.l.b16 %v66
  %v209 = vunpack.c.l.b16 %v67
  %v210 = vunpack.c.l.b16 %v68
  %v211 = vunpack.c.l.b16 %v69
  %v212 = vunpack.c.l.b16 %v70
  %v213 = vunpack.c.l.b16 %v71
  %v214 = vunpack.c.l.b16 %v72
  %v215 = vunpack.c.l.b16 %v73
  %v216 = vunpack.c.l.b16 %v74
  %v217 = vunpack.c.l.b16 %v75
  %v218 = vunpack.c.l.b16 %v76
  %v219 = vunpack.c.l.b16 %v77
  %v220 = vunpack.c.l.b16 %v78
  %v221 = vunpack.c.l.b16 %v79
  %v222 = vunpack.c.l.b16 %v80
  %v223 = vunpack.c.l.b16 %v81
  %v224 = vunpack.c.l.b16 %v82
  %v225 = vunpack.c.l.b16 %v83
  %v226 = vpack.c.b16 %v163, %v162
  %v227 = vpack.c.b16 %v165, %v164
  %v228 = vpack.c.b16 %v167, %v166
  %v229 = vpack.c.b16 %v169, %v168
  %v230 = vpack.c.b16 %v171, %v170
  %v231 = vpack.c.b16 %v173, %v172
  %v232 = vpack.c.b16 %v175, %v174
  %v233 = vpack.c.b16 %v177, %v176
  %v234 = vpack.c.b16 %v179, %v178
  %v235 = vpack.c.b16 %v181, %v180
  %v236 = vpack.c.b16 %v183, %v182
  %v237 = vpack.c.b16 %v185, %v184
  %v238 = vpack.c.b16 %v187, %v186
  %v239 = vpack.c.b16 %v189, %v188
  %v240 = vpack.c.b16 %v191, %v190
  %v241 = vpack.c.b16 %v193, %v192
  %v242 = vpack.c.b16 %v195, %v194
  %v243 = vpack.c.b16 %v197, %v196
  %v244 = vpack.c.b16 %v199, %v198
  %v245 = vpack.c.b16 %v201, %v200
  %v246 = vpack.c.b16 %v203, %v202
  %v247 = vpack.c.b16 %v205, %v204
  %v248 = vpack.c.b16 %v207, %v206
  %v249 = vpack.c.b16 %v209, %v208
  %v250 = vpack.c.b16 %v211, %v210
  %v251 = vpack.c.b16 %v213, %v212
  %v252 = vpack.c.b16 %v215, %v214
  %v253 = vpack.c.b16 %v217, %v216
  %v254 = vpack.c.b16 %v219, %v218
  %v255 = vpack.c.b16 %v221, %v220
  %v256 = vpack.c.b16 %v223, %v222
  %v257 = vpack.c.b16 %v225, %v224
  %290 = vmatprep.subr.bf16.mxu0 0
  %291 = vmatpush1.bf16.msra.mxu0 %v233
  %292 = vmatprep.subr.bf16.mxu0 0
  %293 = vmatpush1.bf16.msra.mxu0 %v232
  %294 = vmatprep.subr.bf16.mxu0 0
  %295 = vmatpush1.bf16.msra.mxu0 %v231
  %296 = vmatprep.subr.bf16.mxu0 0
  %297 = vmatpush1.bf16.msra.mxu0 %v230
  %298 = vmatprep.subr.bf16.mxu0 0
  %299 = vmatpush1.bf16.msra.mxu0 %v229
  %300 = vmatprep.subr.bf16.mxu0 0
  %301 = vmatpush1.bf16.msra.mxu0 %v228
  %302 = vmatprep.subr.bf16.mxu0 0
  %303 = vmatpush1.bf16.msra.mxu0 %v227
  %304 = vmatprep.subr.bf16.mxu0 0
  %305 = vmatpush1.bf16.msra.mxu0 %v226
  %306 = vmatprep.subr.bf16.mxu0 0
  %307 = vmatpush2.bf16.msra.mxu0 %v241
  %308 = vmatprep.subr.bf16.mxu0 0
  %309 = vmatpush2.bf16.msra.mxu0 %v240
  %310 = vmatprep.subr.bf16.mxu0 0
  %311 = vmatpush2.bf16.msra.mxu0 %v239
  %312 = vmatprep.subr.bf16.mxu0 0
  %313 = vmatpush2.bf16.msra.mxu0 %v238
  %314 = vmatprep.subr.bf16.mxu0 0
  %315 = vmatpush2.bf16.msra.mxu0 %v237
  %316 = vmatprep.subr.bf16.mxu0 0
  %317 = vmatpush2.bf16.msra.mxu0 %v236
  %318 = vmatprep.subr.bf16.mxu0 0
  %319 = vmatpush2.bf16.msra.mxu0 %v235
  %320 = vmatprep.subr.bf16.mxu0 0
  %321 = vmatpush2.bf16.msra.mxu0 %v234
  %322 = vmatprep.mubr.bf16.mxu0 %v91
  %323 = vmatmul.mubr.bf16.gmra.mxu0 %v90
  %v324 = vpop.f32.mrf.mxu0
  %v325 = vadd.f32 0.0, %v324
  %v326 = vpop.f32.mrf.mxu0
  %v327 = vpop.f32.mrf.mxu0
  %v328 = vpop.f32.mrf.mxu0
  %329 = vdwg.mxu0
  %330 = vmatprep.subr.bf16.mxu0 0
  %331 = vmatpush1.bf16.msra.mxu0 %v249
  %332 = vmatprep.subr.bf16.mxu0 0
  %333 = vmatpush1.bf16.msra.mxu0 %v248
  %334 = vmatprep.subr.bf16.mxu0 0
  %335 = vmatpush1.bf16.msra.mxu0 %v247
  %336 = vmatprep.subr.bf16.mxu0 0
  %337 = vmatpush1.bf16.msra.mxu0 %v246
  %338 = vmatprep.subr.bf16.mxu0 0
  %339 = vmatpush1.bf16.msra.mxu0 %v245
  %340 = vmatprep.subr.bf16.mxu0 0
  %341 = vmatpush1.bf16.msra.mxu0 %v244
  %342 = vmatprep.subr.bf16.mxu0 0
  %343 = vmatpush1.bf16.msra.mxu0 %v243
  %344 = vmatprep.subr.bf16.mxu0 0
  %345 = vmatpush1.bf16.msra.mxu0 %v242
  %346 = vmatprep.subr.bf16.mxu0 0
  %347 = vmatpush2.bf16.msra.mxu0 %v257
  %348 = vmatprep.subr.bf16.mxu0 0
  %349 = vmatpush2.bf16.msra.mxu0 %v256
  %350 = vmatprep.subr.bf16.mxu0 0
  %351 = vmatpush2.bf16.msra.mxu0 %v255
  %352 = vmatprep.subr.bf16.mxu0 0
  %353 = vmatpush2.bf16.msra.mxu0 %v254
  %354 = vmatprep.subr.bf16.mxu0 0
  %355 = vmatpush2.bf16.msra.mxu0 %v253
  %356 = vmatprep.subr.bf16.mxu0 0
  %357 = vmatpush2.bf16.msra.mxu0 %v252
  %358 = vmatprep.subr.bf16.mxu0 0
  %359 = vmatpush2.bf16.msra.mxu0 %v251
  %360 = vmatprep.subr.bf16.mxu0 0
  %361 = vmatpush2.bf16.msra.mxu0 %v250
  %362 = vmatprep.mubr.bf16.mxu0 %v93
  %363 = vmatmul.mubr.bf16.gmra.mxu0 %v92
  %v364 = vpop.f32.mrf.mxu0
  %v365 = vadd.f32 %v325, %v364
  %v366 = vpop.f32.mrf.mxu0
  %v367 = vpop.f32.mrf.mxu0
  %v368 = vpop.f32.mrf.mxu0
  %369 = vdwg.mxu0
  %v370 = vld [vmem:[%s2] sm:$0x1]
  %v372 = vlaneseq
  %v373 = vshrl.u32 %v372, 7
  %v374 = vsub.s32 0, %v373
  %v375 = vrot.slane %v370, %v374
  %v377 = vmul.f32 %v365, %v375
  %v378 = vld [vmem:[%s3] sm:$0x1]
  %v380 = vlaneseq
  %v381 = vshrl.u32 %v380, 7
  %v382 = vsub.s32 0, %v381
  %v383 = vrot.slane %v378, %v382
  %v385 = vadd.f32 %v377, %v383
  %v386 = vmax.f32 %v385, 0.0
  %v387 = vpack.c.bf16 %v386, %v386
  %388 = vst [vmem:[%s4] sm:$0xf] %v387
  // Predicated region
  $region18: #{occlusion_net_forward.16} parent=0 // pred_check
    _
  $region19: #{occlusion_net_forward.16} parent=0 // pred_check_branch
    %390 = sbr.rel (0) target = $region21
  $region20: #{occlusion_net_forward.16} parent=0 // pred_region
    _
  $region21: #{occlusion_net_forward.16} parent=0 // pred_fallthru
    _
  // Predicated region
  $region22: #{occlusion_net_forward.16} parent=0 // pred_check
    _
  $region23: #{occlusion_net_forward.16} parent=0 // pred_check_branch
    %392 = sbr.rel (0) target = $region25
  $region24: #{occlusion_net_forward.16} parent=0 // pred_region
    _
  $region25: #{occlusion_net_forward.16} parent=0 // pred_fallthru
    _

// kernel: tile.43
$region0: #{tile.43}
  #allocation0 [shape = 's32[1]{0}', space=sflag, size = 0x4, scoped, tag = 'scoped memory for tile.43']
  %s0 = inlined_call_operand.vmem [shape: f32[8], index: 0, kind: input, shape index: {}]
  %s1 = inlined_call_operand.vmem [shape: f32[8,8], index: 1, kind: output, shape index: {}]
  // Predicated region
  $region2: #{tile.43} parent=0 // pred_check
    _
  $region3: #{tile.43} parent=0 // pred_check_branch
    %3 = sbr.rel (0) target = $region5
  $region4: #{tile.43} parent=0 // pred_region
    _
  $region5: #{tile.43} parent=0 // pred_fallthru
    _
  %v4 = vld [vmem:[%s0] ss:$0 sm:$0xff]
  %5 = vst [vmem:[%s1] sm:$0xff] %v4

// kernel: tile.44
$region0: #{tile.44}
  %s0 = inlined_call_operand.vmem [shape: f32[8,8], index: 0, kind: input, shape index: {}]
  %s1 = inlined_call_operand.vmem [shape: f32[64], index: 1, kind: output, shape index: {}]
  $region1: #{tile.44} parent=0
    #allocation0 [shape = 'u8[4096]{0}', space=vmem, size = 0x1000, scoped, tag = 'scoped mem for output reshape']
    %v2 = vld [vmem:[%s0] sm:$0x1]
    %vm3 = vcmask 64512
    %4 = vst.msk [vmem:[#allocation0] sm:$0x1] %vm3, %v2
    %s5 = scalar_lea.vmem %s0, 7
    %v6 = vld [vmem:[%s5] sm:$0x1]
    %7 = vrot.lane.b32.xlu0 %v6, 56
    %v8 = vpop.permute.xlu0 %7
    %vm9 = vcmask 523712
    %10 = vst.msk [vmem:[#allocation0] sm:$0x1] %vm9, %v8
    %s11 = scalar_lea.vmem %s0, 6
    %v12 = vld [vmem:[%s11] sm:$0x1]
    %13 = vrot.lane.b32.xlu0 %v12, 48
    %v14 = vpop.permute.xlu0 %13
    %vm15 = vcmask 458112
    %16 = vst.msk [vmem:[#allocation0] sm:$0x1] %vm15, %v14
    %s17 = scalar_lea.vmem %s0, 5
    %v18 = vld [vmem:[%s17] sm:$0x1]
    %19 = vrot.lane.b32.xlu0 %v18, 40
    %v20 = vpop.permute.xlu0 %19
    %vm21 = vcmask 392512
    %22 = vst.msk [vmem:[#allocation0] sm:$0x1] %vm21, %v20
    %s23 = scalar_lea.vmem %s0, 4
    %v24 = vld [vmem:[%s23] sm:$0x1]
    %25 = vrot.lane.b32.xlu0 %v24, 32
    %v26 = vpop.permute.xlu0 %25
    %vm27 = vcmask 326912
    %28 = vst.msk [vmem:[#allocation0] sm:$0x1] %vm27, %v26
    %s29 = scalar_lea.vmem %s0, 3
    %v30 = vld [vmem:[%s29] sm:$0x1]
    %31 = vrot.lane.b32.xlu0 %v30, 24
    %v32 = vpop.permute.xlu0 %31
    %vm33 = vcmask 261312
    %34 = vst.msk [vmem:[#allocation0] sm:$0x1] %vm33, %v32
    %s35 = scalar_lea.vmem %s0, 2
    %v36 = vld [vmem:[%s35] sm:$0x1]
    %37 = vrot.lane.b32.xlu0 %v36, 16
    %v38 = vpop.permute.xlu0 %37
    %vm39 = vcmask 195712
    %40 = vst.msk [vmem:[#allocation0] sm:$0x1] %vm39, %v38
    %s41 = scalar_lea.vmem %s0, 1
    %v42 = vld [vmem:[%s41] sm:$0x1]
    %43 = vrot.lane.b32.xlu0 %v42, 8
    %v44 = vpop.permute.xlu0 %43
    %vm45 = vcmask 130112
    %46 = vst.msk [vmem:[#allocation0] sm:$0x1] %vm45, %v44
    %s48 = sshll.u32 1, 1
    %s49 = ssub.s32 %s48, 1
    %v51 = vld [vmem:[#allocation0] sm:%s49]
    %s52 = sshll.u32 1, 1
    %s53 = ssub.s32 %s52, 1
    %54 = vst [vmem:[%s1] sm:%s53] %v51

// kernel: occlusion_net_forward.17
$region0: #{occlusion_net_forward.17}
  #allocation0 [shape = 'u32[]', space=smem, size = 0x4, offset = 0x4, fixed_abs, tag = 'smem constant byte address 0x4 - core index']
  #allocation1 [shape = 'u32[144,128]{1,0:T(1,128)}', space=vmem, size = 0x12000, scoped, tag = 'internal scratch']
  %s0 = inlined_call_operand.vmem [shape: bf16[8,896], index: 0, kind: input, shape index: {}]
  %s1 = inlined_call_operand.vmem [shape: bf16[896,128], index: 1, kind: input, shape index: {}]
  %s2 = inlined_call_operand.vmem [shape: f32[1,128], index: 2, kind: input, shape index: {}]
  %s3 = inlined_call_operand.vmem [shape: f32[1,128], index: 3, kind: input, shape index: {}]
  %s4 = inlined_call_operand.vmem [shape: bf16[8,128], index: 4, kind: output, shape index: {}]
  %s5 = sld [smem:[#allocation0]]
  $region26: #{occlusion_net_forward.17} parent=0
    _
  %s7 = ssub.s32 1, %s5
  %s8 = scalar_select 0, %s7, %s5
  // Predicated region
  $region2: #{occlusion_net_forward.17} parent=0 // pred_check
    _
  $region3: #{occlusion_net_forward.17} parent=0 // pred_check_branch
    %10 = sbr.rel (0) target = $region5
  $region4: #{occlusion_net_forward.17} parent=0 // pred_region
    _
  $region5: #{occlusion_net_forward.17} parent=0 // pred_fallthru
    _
  // Predicated region
  $region6: #{occlusion_net_forward.17} parent=0 // pred_check
    _
  $region7: #{occlusion_net_forward.17} parent=0 // pred_check_branch
    %12 = sbr.rel (0) target = $region9
  $region8: #{occlusion_net_forward.17} parent=0 // pred_region
    _
  $region9: #{occlusion_net_forward.17} parent=0 // pred_fallthru
    _
  // Predicated region
  $region10: #{occlusion_net_forward.17} parent=0 // pred_check
    _
  $region11: #{occlusion_net_forward.17} parent=0 // pred_check_branch
    %14 = sbr.rel (0) target = $region13
  $region12: #{occlusion_net_forward.17} parent=0 // pred_region
    _
  $region13: #{occlusion_net_forward.17} parent=0 // pred_fallthru
    _
  // Predicated region
  $region14: #{occlusion_net_forward.17} parent=0 // pred_check
    _
  $region15: #{occlusion_net_forward.17} parent=0 // pred_check_branch
    %16 = sbr.rel (0) target = $region17
  $region16: #{occlusion_net_forward.17} parent=0 // pred_region
    _
  $region17: #{occlusion_net_forward.17} parent=0 // pred_fallthru
    _
  %v18 = vld [vmem:[%s0] sm:$0xff]
  %v19 = vld [vmem:[%s0 + $0x8] sm:$0xff]
  %v20 = vld [vmem:[%s0 + $0x10] sm:$0xff]
  %v21 = vld [vmem:[%s0 + $0x18] sm:$0xf]
  %v22 = vld [vmem:[%s1] sm:$0xf]
  %v23 = vld [vmem:[%s1 + $0x4] sm:$0xf]
  %v24 = vld [vmem:[%s1 + $0x8] sm:$0xf]
  %v25 = vld [vmem:[%s1 + $0xc] sm:$0xf]
  %v26 = vld [vmem:[%s1 + $0x10] sm:$0xf]
  %v27 = vld [vmem:[%s1 + $0x14] sm:$0xf]
  %v28 = vld [vmem:[%s1 + $0x18] sm:$0xf]
  %v29 = vld [vmem:[%s1 + $0x1c] sm:$0xf]
  %v30 = vld [vmem:[%s1 + $0x20] sm:$0xf]
  %v31 = vld [vmem:[%s1 + $0x24] sm:$0xf]
  %v32 = vld [vmem:[%s1 + $0x28] sm:$0xf]
  %v33 = vld [vmem:[%s1 + $0x2c] sm:$0xf]
  %v34 = vld [vmem:[%s1 + $0x30] sm:$0xf]
  %v35 = vld [vmem:[%s1 + $0x34] sm:$0xf]
  %v36 = vld [vmem:[%s1 + $0x38] sm:$0xf]
  %v37 = vld [vmem:[%s1 + $0x3c] sm:$0xf]
  %v38 = vld [vmem:[%s1 + $0x40] sm:$0xf]
  %v39 = vld [vmem:[%s1 + $0x44] sm:$0xf]
  %v40 = vld [vmem:[%s1 + $0x48] sm:$0xf]
  %v41 = vld [vmem:[%s1 + $0x4c] sm:$0xf]
  %v42 = vld [vmem:[%s1 + $0x50] sm:$0xf]
  %v43 = vld [vmem:[%s1 + $0x54] sm:$0xf]
  %v44 = vld [vmem:[%s1 + $0x58] sm:$0xf]
  %v45 = vld [vmem:[%s1 + $0x5c] sm:$0xf]
  %v46 = vld [vmem:[%s1 + $0x60] sm:$0xf]
  %v47 = vld [vmem:[%s1 + $0x64] sm:$0xf]
  %v48 = vld [vmem:[%s1 + $0x68] sm:$0xf]
  %v49 = vld [vmem:[%s1 + $0x6c] sm:$0xf]
  %v50 = vld [vmem:[%s1 + $0x70] sm:$0xf]
  %v51 = vld [vmem:[%s1 + $0x74] sm:$0xf]
  %v52 = vld [vmem:[%s1 + $0x78] sm:$0xf]
  %v53 = vld [vmem:[%s1 + $0x7c] sm:$0xf]
  %v54 = vld [vmem:[%s1 + $0x80] sm:$0xf]
  %v55 = vld [vmem:[%s1 + $0x84] sm:$0xf]
  %v56 = vld [vmem:[%s1 + $0x88] sm:$0xf]
  %v57 = vld [vmem:[%s1 + $0x8c] sm:$0xf]
  %v58 = vld [vmem:[%s1 + $0x90] sm:$0xf]
  %v59 = vld [vmem:[%s1 + $0x94] sm:$0xf]
  %v60 = vld [vmem:[%s1 + $0x98] sm:$0xf]
  %v61 = vld [vmem:[%s1 + $0x9c] sm:$0xf]
  %v62 = vld [vmem:[%s1 + $0xa0] sm:$0xf]
  %v63 = vld [vmem:[%s1 + $0xa4] sm:$0xf]
  %v64 = vld [vmem:[%s1 + $0xa8] sm:$0xf]
  %v65 = vld [vmem:[%s1 + $0xac] sm:$0xf]
  %v66 = vld [vmem:[%s1 + $0xb0] sm:$0xf]
  %v67 = vld [vmem:[%s1 + $0xb4] sm:$0xf]
  %v68 = vld [vmem:[%s1 + $0xb8] sm:$0xf]
  %v69 = vld [vmem:[%s1 + $0xbc] sm:$0xf]
  %v70 = vld [vmem:[%s1 + $0xc0] sm:$0xf]
  %v71 = vld [vmem:[%s1 + $0xc4] sm:$0xf]
  %v72 = vld [vmem:[%s1 + $0xc8] sm:$0xf]
  %v73 = vld [vmem:[%s1 + $0xcc] sm:$0xf]
  %v74 = vld [vmem:[%s1 + $0xd0] sm:$0xf]
  %v75 = vld [vmem:[%s1 + $0xd4] sm:$0xf]
  %v76 = vld [vmem:[%s1 + $0xd8] sm:$0xf]
  %v77 = vld [vmem:[%s1 + $0xdc] sm:$0xf]
  %v78 = vld [vmem:[%s1 + $0xe0] sm:$0xf]
  %v79 = vld [vmem:[%s1 + $0xe4] sm:$0xf]
  %v80 = vld [vmem:[%s1 + $0xe8] sm:$0xf]
  %v81 = vld [vmem:[%s1 + $0xec] sm:$0xf]
  %v82 = vld [vmem:[%s1 + $0xf0] sm:$0xf]
  %v83 = vld [vmem:[%s1 + $0xf4] sm:$0xf]
  %v84 = vld [vmem:[%s1 + $0xf8] sm:$0xf]
  %v85 = vld [vmem:[%s1 + $0xfc] sm:$0xf]
  %v86 = vld [vmem:[%s1 + $0x100] sm:$0xf]
  %v87 = vld [vmem:[%s1 + $0x104] sm:$0xf]
  %v88 = vld [vmem:[%s1 + $0x108] sm:$0xf]
  %v89 = vld [vmem:[%s1 + $0x10c] sm:$0xf]
  %v90 = vld [vmem:[%s1 + $0x110] sm:$0xf]
  %v91 = vld [vmem:[%s1 + $0x114] sm:$0xf]
  %v92 = vld [vmem:[%s1 + $0x118] sm:$0xf]
  %v93 = vld [vmem:[%s1 + $0x11c] sm:$0xf]
  %v94 = vld [vmem:[%s1 + $0x120] sm:$0xf]
  %v95 = vld [vmem:[%s1 + $0x124] sm:$0xf]
  %v96 = vld [vmem:[%s1 + $0x128] sm:$0xf]
  %v97 = vld [vmem:[%s1 + $0x12c] sm:$0xf]
  %v98 = vld [vmem:[%s1 + $0x130] sm:$0xf]
  %v99 = vld [vmem:[%s1 + $0x134] sm:$0xf]
  %v100 = vld [vmem:[%s1 + $0x138] sm:$0xf]
  %v101 = vld [vmem:[%s1 + $0x13c] sm:$0xf]
  %v102 = vld [vmem:[%s1 + $0x140] sm:$0xf]
  %v103 = vld [vmem:[%s1 + $0x144] sm:$0xf]
  %v104 = vld [vmem:[%s1 + $0x148] sm:$0xf]
  %v105 = vld [vmem:[%s1 + $0x14c] sm:$0xf]
  %v106 = vld [vmem:[%s1 + $0x150] sm:$0xf]
  %v107 = vld [vmem:[%s1 + $0x154] sm:$0xf]
  %v108 = vld [vmem:[%s1 + $0x158] sm:$0xf]
  %v109 = vld [vmem:[%s1 + $0x15c] sm:$0xf]
  %v110 = vld [vmem:[%s1 + $0x160] sm:$0xf]
  %v111 = vld [vmem:[%s1 + $0x164] sm:$0xf]
  %v112 = vld [vmem:[%s1 + $0x168] sm:$0xf]
  %v113 = vld [vmem:[%s1 + $0x16c] sm:$0xf]
  %v114 = vld [vmem:[%s1 + $0x170] sm:$0xf]
  %v115 = vld [vmem:[%s1 + $0x174] sm:$0xf]
  %v116 = vld [vmem:[%s1 + $0x178] sm:$0xf]
  %v117 = vld [vmem:[%s1 + $0x17c] sm:$0xf]
  %v118 = vld [vmem:[%s1 + $0x180] sm:$0xf]
  %v119 = vld [vmem:[%s1 + $0x184] sm:$0xf]
  %v120 = vld [vmem:[%s1 + $0x188] sm:$0xf]
  %v121 = vld [vmem:[%s1 + $0x18c] sm:$0xf]
  %v122 = vld [vmem:[%s1 + $0x190] sm:$0xf]
  %v123 = vld [vmem:[%s1 + $0x194] sm:$0xf]
  %v124 = vld [vmem:[%s1 + $0x198] sm:$0xf]
  %v125 = vld [vmem:[%s1 + $0x19c] sm:$0xf]
  %v126 = vld [vmem:[%s1 + $0x1a0] sm:$0xf]
  %v127 = vld [vmem:[%s1 + $0x1a4] sm:$0xf]
  %v128 = vld [vmem:[%s1 + $0x1a8] sm:$0xf]
  %v129 = vld [vmem:[%s1 + $0x1ac] sm:$0xf]
  %v130 = vld [vmem:[%s1 + $0x1b0] sm:$0xf]
  %v131 = vld [vmem:[%s1 + $0x1b4] sm:$0xf]
  %v132 = vld [vmem:[%s1 + $0x1b8] sm:$0xf]
  %v133 = vld [vmem:[%s1 + $0x1bc] sm:$0xf]
  %v138 = vunpack.c.l.b16 %v18
  %v139 = vunpack.c.h.b16 %v18
  %v140 = vunpack.c.l.b16 %v19
  %v141 = vunpack.c.h.b16 %v19
  %v142 = vunpack.c.l.b16 %v20
  %v143 = vunpack.c.h.b16 %v20
  %v144 = vunpack.c.l.b16 %v21
  %v145 = vpack.c.b16 %v138, %v138
  %v146 = vpack.c.b16 %v139, %v139
  %v147 = vpack.c.b16 %v140, %v140
  %v148 = vpack.c.b16 %v141, %v141
  %v149 = vpack.c.b16 %v142, %v142
  %v150 = vpack.c.b16 %v143, %v143
  %v151 = vpack.c.b16 %v144, %v144
  %v271 = vunpack.c.l.b16 %v22
  %v272 = vunpack.c.l.b16 %v23
  %v273 = vunpack.c.l.b16 %v24
  %v274 = vunpack.c.l.b16 %v25
  %v275 = vunpack.c.l.b16 %v26
  %v276 = vunpack.c.l.b16 %v27
  %v277 = vunpack.c.l.b16 %v28
  %v278 = vunpack.c.l.b16 %v29
  %v279 = vunpack.c.l.b16 %v30
  %v280 = vunpack.c.l.b16 %v31
  %v281 = vunpack.c.l.b16 %v32
  %v282 = vunpack.c.l.b16 %v33
  %v283 = vunpack.c.l.b16 %v34
  %v284 = vunpack.c.l.b16 %v35
  %v285 = vunpack.c.l.b16 %v36
  %v286 = vunpack.c.l.b16 %v37
  %v287 = vunpack.c.l.b16 %v38
  %v288 = vunpack.c.l.b16 %v39
  %v289 = vunpack.c.l.b16 %v40
  %v290 = vunpack.c.l.b16 %v41
  %v291 = vunpack.c.l.b16 %v42
  %v292 = vunpack.c.l.b16 %v43
  %v293 = vunpack.c.l.b16 %v44
  %v294 = vunpack.c.l.b16 %v45
  %v295 = vunpack.c.l.b16 %v46
  %v296 = vunpack.c.l.b16 %v47
  %v297 = vunpack.c.l.b16 %v48
  %v298 = vunpack.c.l.b16 %v49
  %v299 = vunpack.c.l.b16 %v50
  %v300 = vunpack.c.l.b16 %v51
  %v301 = vunpack.c.l.b16 %v52
  %v302 = vunpack.c.l.b16 %v53
  %v303 = vunpack.c.l.b16 %v54
  %v304 = vunpack.c.l.b16 %v55
  %v305 = vunpack.c.l.b16 %v56
  %v306 = vunpack.c.l.b16 %v57
  %v307 = vunpack.c.l.b16 %v58
  %v308 = vunpack.c.l.b16 %v59
  %v309 = vunpack.c.l.b16 %v60
  %v310 = vunpack.c.l.b16 %v61
  %v311 = vunpack.c.l.b16 %v62
  %v312 = vunpack.c.l.b16 %v63
  %v313 = vunpack.c.l.b16 %v64
  %v314 = vunpack.c.l.b16 %v65
  %v315 = vunpack.c.l.b16 %v66
  %v316 = vunpack.c.l.b16 %v67
  %v317 = vunpack.c.l.b16 %v68
  %v318 = vunpack.c.l.b16 %v69
  %v319 = vunpack.c.l.b16 %v70
  %v320 = vunpack.c.l.b16 %v71
  %v321 = vunpack.c.l.b16 %v72
  %v322 = vunpack.c.l.b16 %v73
  %v323 = vunpack.c.l.b16 %v74
  %v324 = vunpack.c.l.b16 %v75
  %v325 = vunpack.c.l.b16 %v76
  %v326 = vunpack.c.l.b16 %v77
  %v327 = vunpack.c.l.b16 %v78
  %v328 = vunpack.c.l.b16 %v79
  %v329 = vunpack.c.l.b16 %v80
  %v330 = vunpack.c.l.b16 %v81
  %v331 = vunpack.c.l.b16 %v82
  %v332 = vunpack.c.l.b16 %v83
  %v333 = vunpack.c.l.b16 %v84
  %v334 = vunpack.c.l.b16 %v85
  %v335 = vunpack.c.l.b16 %v86
  %v336 = vunpack.c.l.b16 %v87
  %v337 = vunpack.c.l.b16 %v88
  %v338 = vunpack.c.l.b16 %v89
  %v339 = vunpack.c.l.b16 %v90
  %v340 = vunpack.c.l.b16 %v91
  %v341 = vunpack.c.l.b16 %v92
  %v342 = vunpack.c.l.b16 %v93
  %v343 = vunpack.c.l.b16 %v94
  %v344 = vunpack.c.l.b16 %v95
  %v345 = vunpack.c.l.b16 %v96
  %v346 = vunpack.c.l.b16 %v97
  %v347 = vunpack.c.l.b16 %v98
  %v348 = vunpack.c.l.b16 %v99
  %v349 = vunpack.c.l.b16 %v100
  %v350 = vunpack.c.l.b16 %v101
  %v351 = vunpack.c.l.b16 %v102
  %v352 = vunpack.c.l.b16 %v103
  %v353 = vunpack.c.l.b16 %v104
  %v354 = vunpack.c.l.b16 %v105
  %v355 = vunpack.c.l.b16 %v106
  %v356 = vunpack.c.l.b16 %v107
  %v357 = vunpack.c.l.b16 %v108
  %v358 = vunpack.c.l.b16 %v109
  %v359 = vunpack.c.l.b16 %v110
  %v360 = vunpack.c.l.b16 %v111
  %v361 = vunpack.c.l.b16 %v112
  %v362 = vunpack.c.l.b16 %v113
  %v363 = vunpack.c.l.b16 %v114
  %v364 = vunpack.c.l.b16 %v115
  %v365 = vunpack.c.l.b16 %v116
  %v366 = vunpack.c.l.b16 %v117
  %v367 = vunpack.c.l.b16 %v118
  %v368 = vunpack.c.l.b16 %v119
  %v369 = vunpack.c.l.b16 %v120
  %v370 = vunpack.c.l.b16 %v121
  %v371 = vunpack.c.l.b16 %v122
  %v372 = vunpack.c.l.b16 %v123
  %v373 = vunpack.c.l.b16 %v124
  %v374 = vunpack.c.l.b16 %v125
  %v375 = vunpack.c.l.b16 %v126
  %v376 = vunpack.c.l.b16 %v127
  %v377 = vunpack.c.l.b16 %v128
  %v378 = vunpack.c.l.b16 %v129
  %v379 = vunpack.c.l.b16 %v130
  %v380 = vunpack.c.l.b16 %v131
  %v381 = vunpack.c.l.b16 %v132
  %v382 = vunpack.c.l.b16 %v133
  %v383 = vpack.c.b16 %v272, %v271
  %v384 = vpack.c.b16 %v274, %v273
  %v385 = vpack.c.b16 %v276, %v275
  %v386 = vpack.c.b16 %v278, %v277
  %v387 = vpack.c.b16 %v280, %v279
  %v388 = vpack.c.b16 %v282, %v281
  %v389 = vpack.c.b16 %v284, %v283
  %v390 = vpack.c.b16 %v286, %v285
  %v391 = vpack.c.b16 %v288, %v287
  %v392 = vpack.c.b16 %v290, %v289
  %v393 = vpack.c.b16 %v292, %v291
  %v394 = vpack.c.b16 %v294, %v293
  %v395 = vpack.c.b16 %v296, %v295
  %v396 = vpack.c.b16 %v298, %v297
  %v397 = vpack.c.b16 %v300, %v299
  %v398 = vpack.c.b16 %v302, %v301
  %v399 = vpack.c.b16 %v304, %v303
  %v400 = vpack.c.b16 %v306, %v305
  %v401 = vpack.c.b16 %v308, %v307
  %v402 = vpack.c.b16 %v310, %v309
  %v403 = vpack.c.b16 %v312, %v311
  %v404 = vpack.c.b16 %v314, %v313
  %v405 = vpack.c.b16 %v316, %v315
  %v406 = vpack.c.b16 %v318, %v317
  %v407 = vpack.c.b16 %v320, %v319
  %v408 = vpack.c.b16 %v322, %v321
  %v409 = vpack.c.b16 %v324, %v323
  %v410 = vpack.c.b16 %v326, %v325
  %v411 = vpack.c.b16 %v328, %v327
  %v412 = vpack.c.b16 %v330, %v329
  %v413 = vpack.c.b16 %v332, %v331
  %v414 = vpack.c.b16 %v334, %v333
  %v415 = vpack.c.b16 %v336, %v335
  %v416 = vpack.c.b16 %v338, %v337
  %v417 = vpack.c.b16 %v340, %v339
  %v418 = vpack.c.b16 %v342, %v341
  %v419 = vpack.c.b16 %v344, %v343
  %v420 = vpack.c.b16 %v346, %v345
  %v421 = vpack.c.b16 %v348, %v347
  %v422 = vpack.c.b16 %v350, %v349
  %v423 = vpack.c.b16 %v352, %v351
  %v424 = vpack.c.b16 %v354, %v353
  %v425 = vpack.c.b16 %v356, %v355
  %v426 = vpack.c.b16 %v358, %v357
  %v427 = vpack.c.b16 %v360, %v359
  %v428 = vpack.c.b16 %v362, %v361
  %v429 = vpack.c.b16 %v364, %v363
  %v430 = vpack.c.b16 %v366, %v365
  %v431 = vpack.c.b16 %v368, %v367
  %v432 = vpack.c.b16 %v370, %v369
  %v433 = vpack.c.b16 %v372, %v371
  %v434 = vpack.c.b16 %v374, %v373
  %v435 = vpack.c.b16 %v376, %v375
  %v436 = vpack.c.b16 %v378, %v377
  %v437 = vpack.c.b16 %v380, %v379
  %v438 = vpack.c.b16 %v382, %v381
  %495 = vmatprep.subr.bf16.mxu0 0
  %496 = vmatpush1.bf16.msra.mxu0 %v390
  %497 = vmatprep.subr.bf16.mxu0 0
  %498 = vmatpush1.bf16.msra.mxu0 %v389
  %499 = vmatprep.subr.bf16.mxu0 0
  %500 = vmatpush1.bf16.msra.mxu0 %v388
  %501 = vmatprep.subr.bf16.mxu0 0
  %502 = vmatpush1.bf16.msra.mxu0 %v387
  %503 = vmatprep.subr.bf16.mxu0 0
  %504 = vmatpush1.bf16.msra.mxu0 %v386
  %505 = vmatprep.subr.bf16.mxu0 0
  %506 = vmatpush1.bf16.msra.mxu0 %v385
  %507 = vmatprep.subr.bf16.mxu0 0
  %508 = vmatpush1.bf16.msra.mxu0 %v384
  %509 = vmatprep.subr.bf16.mxu0 0
  %510 = vmatpush1.bf16.msra.mxu0 %v383
  %511 = vmatprep.subr.bf16.mxu0 0
  %512 = vmatpush2.bf16.msra.mxu0 %v398
  %513 = vmatprep.subr.bf16.mxu0 0
  %514 = vmatpush2.bf16.msra.mxu0 %v397
  %515 = vmatprep.subr.bf16.mxu0 0
  %516 = vmatpush2.bf16.msra.mxu0 %v396
  %517 = vmatprep.subr.bf16.mxu0 0
  %518 = vmatpush2.bf16.msra.mxu0 %v395
  %519 = vmatprep.subr.bf16.mxu0 0
  %520 = vmatpush2.bf16.msra.mxu0 %v394
  %521 = vmatprep.subr.bf16.mxu0 0
  %522 = vmatpush2.bf16.msra.mxu0 %v393
  %523 = vmatprep.subr.bf16.mxu0 0
  %524 = vmatpush2.bf16.msra.mxu0 %v392
  %525 = vmatprep.subr.bf16.mxu0 0
  %526 = vmatpush2.bf16.msra.mxu0 %v391
  %527 = vmatprep.mubr.bf16.mxu0 %v146
  %528 = vmatmul.mubr.bf16.gmra.mxu0 %v145
  %v529 = vpop.f32.mrf.mxu0
  %v530 = vadd.f32 0.0, %v529
  %v531 = vpop.f32.mrf.mxu0
  %v532 = vpop.f32.mrf.mxu0
  %v533 = vpop.f32.mrf.mxu0
  %534 = vdwg.mxu0
  %535 = vmatprep.subr.bf16.mxu0 0
  %536 = vmatpush1.bf16.msra.mxu0 %v406
  %537 = vmatprep.subr.bf16.mxu0 0
  %538 = vmatpush1.bf16.msra.mxu0 %v405
  %539 = vmatprep.subr.bf16.mxu0 0
  %540 = vmatpush1.bf16.msra.mxu0 %v404
  %541 = vmatprep.subr.bf16.mxu0 0
  %542 = vmatpush1.bf16.msra.mxu0 %v403
  %543 = vmatprep.subr.bf16.mxu0 0
  %544 = vmatpush1.bf16.msra.mxu0 %v402
  %545 = vmatprep.subr.bf16.mxu0 0
  %546 = vmatpush1.bf16.msra.mxu0 %v401
  %547 = vmatprep.subr.bf16.mxu0 0
  %548 = vmatpush1.bf16.msra.mxu0 %v400
  %549 = vmatprep.subr.bf16.mxu0 0
  %550 = vmatpush1.bf16.msra.mxu0 %v399
  %551 = vmatprep.subr.bf16.mxu0 0
  %552 = vmatpush2.bf16.msra.mxu0 %v414
  %553 = vmatprep.subr.bf16.mxu0 0
  %554 = vmatpush2.bf16.msra.mxu0 %v413
  %555 = vmatprep.subr.bf16.mxu0 0
  %556 = vmatpush2.bf16.msra.mxu0 %v412
  %557 = vmatprep.subr.bf16.mxu0 0
  %558 = vmatpush2.bf16.msra.mxu0 %v411
  %559 = vmatprep.subr.bf16.mxu0 0
  %560 = vmatpush2.bf16.msra.mxu0 %v410
  %561 = vmatprep.subr.bf16.mxu0 0
  %562 = vmatpush2.bf16.msra.mxu0 %v409
  %563 = vmatprep.subr.bf16.mxu0 0
  %564 = vmatpush2.bf16.msra.mxu0 %v408
  %565 = vmatprep.subr.bf16.mxu0 0
  %566 = vmatpush2.bf16.msra.mxu0 %v407
  %567 = vmatprep.mubr.bf16.mxu0 %v148
  %568 = vmatmul.mubr.bf16.gmra.mxu0 %v147
  %v569 = vpop.f32.mrf.mxu0
  %v570 = vadd.f32 %v530, %v569
  %v571 = vpop.f32.mrf.mxu0
  %v572 = vpop.f32.mrf.mxu0
  %v573 = vpop.f32.mrf.mxu0
  %574 = vdwg.mxu0
  %575 = vmatprep.subr.bf16.mxu0 0
  %576 = vmatpush1.bf16.msra.mxu0 %v422
  %577 = vmatprep.subr.bf16.mxu0 0
  %578 = vmatpush1.bf16.msra.mxu0 %v421
  %579 = vmatprep.subr.bf16.mxu0 0
  %580 = vmatpush1.bf16.msra.mxu0 %v420
  %581 = vmatprep.subr.bf16.mxu0 0
  %582 = vmatpush1.bf16.msra.mxu0 %v419
  %583 = vmatprep.subr.bf16.mxu0 0
  %584 = vmatpush1.bf16.msra.mxu0 %v418
  %585 = vmatprep.subr.bf16.mxu0 0
  %586 = vmatpush1.bf16.msra.mxu0 %v417
  %587 = vmatprep.subr.bf16.mxu0 0
  %588 = vmatpush1.bf16.msra.mxu0 %v416
  %589 = vmatprep.subr.bf16.mxu0 0
  %590 = vmatpush1.bf16.msra.mxu0 %v415
  %591 = vmatprep.subr.bf16.mxu0 0
  %592 = vmatpush2.bf16.msra.mxu0 %v430
  %593 = vmatprep.subr.bf16.mxu0 0
  %594 = vmatpush2.bf16.msra.mxu0 %v429
  %595 = vmatprep.subr.bf16.mxu0 0
  %596 = vmatpush2.bf16.msra.mxu0 %v428
  %597 = vmatprep.subr.bf16.mxu0 0
  %598 = vmatpush2.bf16.msra.mxu0 %v427
  %599 = vmatprep.subr.bf16.mxu0 0
  %600 = vmatpush2.bf16.msra.mxu0 %v426
  %601 = vmatprep.subr.bf16.mxu0 0
  %602 = vmatpush2.bf16.msra.mxu0 %v425
  %603 = vmatprep.subr.bf16.mxu0 0
  %604 = vmatpush2.bf16.msra.mxu0 %v424
  %605 = vmatprep.subr.bf16.mxu0 0
  %606 = vmatpush2.bf16.msra.mxu0 %v423
  %607 = vmatprep.mubr.bf16.mxu0 %v150
  %608 = vmatmul.mubr.bf16.gmra.mxu0 %v149
  %v609 = vpop.f32.mrf.mxu0
  %v610 = vadd.f32 %v570, %v609
  %v611 = vpop.f32.mrf.mxu0
  %v612 = vpop.f32.mrf.mxu0
  %v613 = vpop.f32.mrf.mxu0
  %614 = vdwg.mxu0
  %615 = vmatprep.subr.bf16.mxu0 0
  %616 = vmatpush1.bf16.msra.mxu0 %v438
  %617 = vmatprep.subr.bf16.mxu0 0
  %618 = vmatpush1.bf16.msra.mxu0 %v437
  %619 = vmatprep.subr.bf16.mxu0 0
  %620 = vmatpush1.bf16.msra.mxu0 %v436
  %621 = vmatprep.subr.bf16.mxu0 0
  %622 = vmatpush1.bf16.msra.mxu0 %v435
  %623 = vmatprep.subr.bf16.mxu0 0
  %624 = vmatpush1.bf16.msra.mxu0 %v434
  %625 = vmatprep.subr.bf16.mxu0 0
  %626 = vmatpush1.bf16.msra.mxu0 %v433
  %627 = vmatprep.subr.bf16.mxu0 0
  %628 = vmatpush1.bf16.msra.mxu0 %v432
  %629 = vmatprep.subr.bf16.mxu0 0
  %630 = vmatpush1.bf16.msra.mxu0 %v431
  %631 = vmatprep.subr.bf16.mxu0 0
  %632 = vmatpush2.bf16.msra.mxu0 0
  %633 = vmatprep.subr.bf16.mxu0 0
  %634 = vmatpush2.bf16.msra.mxu0 0
  %635 = vmatprep.subr.bf16.mxu0 0
  %636 = vmatpush2.bf16.msra.mxu0 0
  %637 = vmatprep.subr.bf16.mxu0 0
  %638 = vmatpush2.bf16.msra.mxu0 0
  %639 = vmatprep.subr.bf16.mxu0 0
  %640 = vmatpush2.bf16.msra.mxu0 0
  %641 = vmatprep.subr.bf16.mxu0 0
  %642 = vmatpush2.bf16.msra.mxu0 0
  %643 = vmatprep.subr.bf16.mxu0 0
  %644 = vmatpush2.bf16.msra.mxu0 0
  %645 = vmatprep.subr.bf16.mxu0 0
  %646 = vmatpush2.bf16.msra.mxu0 0
  %647 = vmatprep.mubr.bf16.mxu0 0
  %648 = vmatmul.mubr.bf16.gmra.mxu0 %v151
  %v649 = vpop.f32.mrf.mxu0
  %v650 = vadd.f32 %v610, %v649
  %v651 = vpop.f32.mrf.mxu0
  %v652 = vpop.f32.mrf.mxu0
  %v653 = vpop.f32.mrf.mxu0
  %654 = vdwg.mxu0
  %v655 = vld [vmem:[%s2] sm:$0x1]
  %v657 = vlaneseq
  %v658 = vshrl.u32 %v657, 7
  %v659 = vsub.s32 0, %v658
  %v660 = vrot.slane %v655, %v659
  %v662 = vmul.f32 %v650, %v660
  %v663 = vld [vmem:[%s3] sm:$0x1]
  %v665 = vlaneseq
  %v666 = vshrl.u32 %v665, 7
  %v667 = vsub.s32 0, %v666
  %v668 = vrot.slane %v663, %v667
  %v670 = vadd.f32 %v662, %v668
  %v671 = vmax.f32 %v670, 0.0
  %v672 = vpack.c.bf16 %v671, %v671
  %673 = vst [vmem:[%s4] sm:$0xf] %v672
  // Predicated region
  $region18: #{occlusion_net_forward.17} parent=0 // pred_check
    _
  $region19: #{occlusion_net_forward.17} parent=0 // pred_check_branch
    %675 = sbr.rel (0) target = $region21
  $region20: #{occlusion_net_forward.17} parent=0 // pred_region
    _
  $region21: #{occlusion_net_forward.17} parent=0 // pred_fallthru
    _
  // Predicated region
  $region22: #{occlusion_net_forward.17} parent=0 // pred_check
    _
  $region23: #{occlusion_net_forward.17} parent=0 // pred_check_branch
    %677 = sbr.rel (0) target = $region25
  $region24: #{occlusion_net_forward.17} parent=0 // pred_region
    _
  $region25: #{occlusion_net_forward.17} parent=0 // pred_fallthru
    _

// kernel: tile.53
$region0: #{tile.53}
  #allocation0 [shape = 's32[1]{0}', space=sflag, size = 0x4, scoped, tag = 'scoped memory for tile.53']
  %s0 = inlined_call_operand.vmem [shape: f32[4], index: 0, kind: input, shape index: {}]
  %s1 = inlined_call_operand.vmem [shape: f32[8,4], index: 1, kind: output, shape index: {}]
  // Predicated region
  $region2: #{tile.53} parent=0 // pred_check
    _
  $region3: #{tile.53} parent=0 // pred_check_branch
    %3 = sbr.rel (0) target = $region5
  $region4: #{tile.53} parent=0 // pred_region
    _
  $region5: #{tile.53} parent=0 // pred_fallthru
    _
  %v4 = vld [vmem:[%s0] ss:$0 sm:$0xff]
  %5 = vst [vmem:[%s1] sm:$0xff] %v4

// kernel: tile.54
$region0: #{tile.54}
  %s0 = inlined_call_operand.vmem [shape: f32[8,4], index: 0, kind: input, shape index: {}]
  %s1 = inlined_call_operand.vmem [shape: f32[32], index: 1, kind: output, shape index: {}]
  $region1: #{tile.54} parent=0
    #allocation0 [shape = 'u8[4096]{0}', space=vmem, size = 0x1000, scoped, tag = 'scoped mem for output reshape']
    %v2 = vld [vmem:[%s0] sm:$0x1]
    %vm3 = vcmask 31744
    %4 = vst.msk [vmem:[#allocation0] sm:$0x1] %vm3, %v2
    %s5 = scalar_lea.vmem %s0, 7
    %v6 = vld [vmem:[%s5] sm:$0x1]
    %7 = vrot.lane.b32.xlu0 %v6, 28
    %v8 = vpop.permute.xlu0 %7
    %vm9 = vcmask 261344
    %10 = vst.msk [vmem:[#allocation0] sm:$0x1] %vm9, %v8
    %s11 = scalar_lea.vmem %s0, 6
    %v12 = vld [vmem:[%s11] sm:$0x1]
    %13 = vrot.lane.b32.xlu0 %v12, 24
    %v14 = vpop.permute.xlu0 %13
    %vm15 = vcmask 228544
    %16 = vst.msk [vmem:[#allocation0] sm:$0x1] %vm15, %v14
    %s17 = scalar_lea.vmem %s0, 5
    %v18 = vld [vmem:[%s17] sm:$0x1]
    %19 = vrot.lane.b32.xlu0 %v18, 20
    %v20 = vpop.permute.xlu0 %19
    %vm21 = vcmask 195744
    %22 = vst.msk [vmem:[#allocation0] sm:$0x1] %vm21, %v20
    %s23 = scalar_lea.vmem %s0, 4
    %v24 = vld [vmem:[%s23] sm:$0x1]
    %25 = vrot.lane.b32.xlu0 %v24, 16
    %v26 = vpop.permute.xlu0 %25
    %vm27 = vcmask 162944
    %28 = vst.msk [vmem:[#allocation0] sm:$0x1] %vm27, %v26
    %s29 = scalar_lea.vmem %s0, 3
    %v30 = vld [vmem:[%s29] sm:$0x1]
    %31 = vrot.lane.b32.xlu0 %v30, 12
    %v32 = vpop.permute.xlu0 %31
    %vm33 = vcmask 130144
    %34 = vst.msk [vmem:[#allocation0] sm:$0x1] %vm33, %v32
    %s35 = scalar_lea.vmem %s0, 2
    %v36 = vld [vmem:[%s35] sm:$0x1]
    %37 = vrot.lane.b32.xlu0 %v36, 8
    %v38 = vpop.permute.xlu0 %37
    %vm39 = vcmask 97344
    %40 = vst.msk [vmem:[#allocation0] sm:$0x1] %vm39, %v38
    %s41 = scalar_lea.vmem %s0, 1
    %v42 = vld [vmem:[%s41] sm:$0x1]
    %43 = vrot.lane.b32.xlu0 %v42, 4
    %v44 = vpop.permute.xlu0 %43
    %vm45 = vcmask 64544
    %46 = vst.msk [vmem:[#allocation0] sm:$0x1] %vm45, %v44
    %s48 = sshll.u32 1, 1
    %s49 = ssub.s32 %s48, 1
    %v51 = vld [vmem:[#allocation0] sm:%s49]
    %s52 = sshll.u32 1, 1
    %s53 = ssub.s32 %s52, 1
    %54 = vst [vmem:[%s1] sm:%s53] %v51

// kernel: occlusion_net_forward.18
$region0: #{occlusion_net_forward.18}
  #allocation0 [shape = 'u32[]', space=smem, size = 0x4, offset = 0x4, fixed_abs, tag = 'smem constant byte address 0x4 - core index']
  #allocation1 [shape = 'u32[144,128]{1,0:T(1,128)}', space=vmem, size = 0x12000, scoped, tag = 'internal scratch']
  %s0 = inlined_call_operand.vmem [shape: bf16[64,512], index: 0, kind: input, shape index: {}]
  %s1 = inlined_call_operand.vmem [shape: bf16[512,128], index: 1, kind: input, shape index: {}]
  %s2 = inlined_call_operand.vmem [shape: f32[1,128], index: 2, kind: input, shape index: {}]
  %s3 = inlined_call_operand.vmem [shape: f32[1,128], index: 3, kind: input, shape index: {}]
  %s4 = inlined_call_operand.vmem [shape: bf16[64,128], index: 4, kind: output, shape index: {}]
  %s5 = sld [smem:[#allocation0]]
  $region26: #{occlusion_net_forward.18} parent=0
    _
  %s7 = ssub.s32 1, %s5
  %s8 = scalar_select 0, %s7, %s5
  // Predicated region
  $region2: #{occlusion_net_forward.18} parent=0 // pred_check
    _
  $region3: #{occlusion_net_forward.18} parent=0 // pred_check_branch
    %10 = sbr.rel (0) target = $region5
  $region4: #{occlusion_net_forward.18} parent=0 // pred_region
    _
  $region5: #{occlusion_net_forward.18} parent=0 // pred_fallthru
    _
  // Predicated region
  $region6: #{occlusion_net_forward.18} parent=0 // pred_check
    _
  $region7: #{occlusion_net_forward.18} parent=0 // pred_check_branch
    %12 = sbr.rel (0) target = $region9
  $region8: #{occlusion_net_forward.18} parent=0 // pred_region
    _
  $region9: #{occlusion_net_forward.18} parent=0 // pred_fallthru
    _
  // Predicated region
  $region10: #{occlusion_net_forward.18} parent=0 // pred_check
    _
  $region11: #{occlusion_net_forward.18} parent=0 // pred_check_branch
    %14 = sbr.rel (0) target = $region13
  $region12: #{occlusion_net_forward.18} parent=0 // pred_region
    _
  $region13: #{occlusion_net_forward.18} parent=0 // pred_fallthru
    _
  // Predicated region
  $region14: #{occlusion_net_forward.18} parent=0 // pred_check
    _
  $region15: #{occlusion_net_forward.18} parent=0 // pred_check_branch
    %16 = sbr.rel (0) target = $region17
  $region16: #{occlusion_net_forward.18} parent=0 // pred_region
    _
  $region17: #{occlusion_net_forward.18} parent=0 // pred_fallthru
    _
  %v18 = vld [vmem:[%s0] sm:$0xff]
  %v19 = vld [vmem:[%s0 + $0x8] sm:$0xff]
  %v20 = vld [vmem:[%s0 + $0x10] sm:$0xff]
  %v21 = vld [vmem:[%s0 + $0x18] sm:$0xff]
  %v22 = vld [vmem:[%s0 + $0x20] sm:$0xff]
  %v23 = vld [vmem:[%s0 + $0x28] sm:$0xff]
  %v24 = vld [vmem:[%s0 + $0x30] sm:$0xff]
  %v25 = vld [vmem:[%s0 + $0x38] sm:$0xff]
  %v26 = vld [vmem:[%s0 + $0x40] sm:$0xff]
  %v27 = vld [vmem:[%s0 + $0x48] sm:$0xff]
  %v28 = vld [vmem:[%s0 + $0x50] sm:$0xff]
  %v29 = vld [vmem:[%s0 + $0x58] sm:$0xff]
  %v30 = vld [vmem:[%s0 + $0x60] sm:$0xff]
  %v31 = vld [vmem:[%s0 + $0x68] sm:$0xff]
  %v32 = vld [vmem:[%s0 + $0x70] sm:$0xff]
  %v33 = vld [vmem:[%s0 + $0x78] sm:$0xff]
  %v34 = vld [vmem:[%s1] sm:$0xf]
  %v35 = vld [vmem:[%s1 + $0x4] sm:$0xf]
  %v36 = vld [vmem:[%s1 + $0x8] sm:$0xf]
  %v37 = vld [vmem:[%s1 + $0xc] sm:$0xf]
  %v38 = vld [vmem:[%s1 + $0x10] sm:$0xf]
  %v39 = vld [vmem:[%s1 + $0x14] sm:$0xf]
  %v40 = vld [vmem:[%s1 + $0x18] sm:$0xf]
  %v41 = vld [vmem:[%s1 + $0x1c] sm:$0xf]
  %v42 = vld [vmem:[%s1 + $0x20] sm:$0xf]
  %v43 = vld [vmem:[%s1 + $0x24] sm:$0xf]
  %v44 = vld [vmem:[%s1 + $0x28] sm:$0xf]
  %v45 = vld [vmem:[%s1 + $0x2c] sm:$0xf]
  %v46 = vld [vmem:[%s1 + $0x30] sm:$0xf]
  %v47 = vld [vmem:[%s1 + $0x34] sm:$0xf]
  %v48 = vld [vmem:[%s1 + $0x38] sm:$0xf]
  %v49 = vld [vmem:[%s1 + $0x3c] sm:$0xf]
  %v50 = vld [vmem:[%s1 + $0x40] sm:$0xf]
  %v51 = vld [vmem:[%s1 + $0x44] sm:$0xf]
  %v52 = vld [vmem:[%s1 + $0x48] sm:$0xf]
  %v53 = vld [vmem:[%s1 + $0x4c] sm:$0xf]
  %v54 = vld [vmem:[%s1 + $0x50] sm:$0xf]
  %v55 = vld [vmem:[%s1 + $0x54] sm:$0xf]
  %v56 = vld [vmem:[%s1 + $0x58] sm:$0xf]
  %v57 = vld [vmem:[%s1 + $0x5c] sm:$0xf]
  %v58 = vld [vmem:[%s1 + $0x60] sm:$0xf]
  %v59 = vld [vmem:[%s1 + $0x64] sm:$0xf]
  %v60 = vld [vmem:[%s1 + $0x68] sm:$0xf]
  %v61 = vld [vmem:[%s1 + $0x6c] sm:$0xf]
  %v62 = vld [vmem:[%s1 + $0x70] sm:$0xf]
  %v63 = vld [vmem:[%s1 + $0x74] sm:$0xf]
  %v64 = vld [vmem:[%s1 + $0x78] sm:$0xf]
  %v65 = vld [vmem:[%s1 + $0x7c] sm:$0xf]
  %v66 = vld [vmem:[%s1 + $0x80] sm:$0xf]
  %v67 = vld [vmem:[%s1 + $0x84] sm:$0xf]
  %v68 = vld [vmem:[%s1 + $0x88] sm:$0xf]
  %v69 = vld [vmem:[%s1 + $0x8c] sm:$0xf]
  %v70 = vld [vmem:[%s1 + $0x90] sm:$0xf]
  %v71 = vld [vmem:[%s1 + $0x94] sm:$0xf]
  %v72 = vld [vmem:[%s1 + $0x98] sm:$0xf]
  %v73 = vld [vmem:[%s1 + $0x9c] sm:$0xf]
  %v74 = vld [vmem:[%s1 + $0xa0] sm:$0xf]
  %v75 = vld [vmem:[%s1 + $0xa4] sm:$0xf]
  %v76 = vld [vmem:[%s1 + $0xa8] sm:$0xf]
  %v77 = vld [vmem:[%s1 + $0xac] sm:$0xf]
  %v78 = vld [vmem:[%s1 + $0xb0] sm:$0xf]
  %v79 = vld [vmem:[%s1 + $0xb4] sm:$0xf]
  %v80 = vld [vmem:[%s1 + $0xb8] sm:$0xf]
  %v81 = vld [vmem:[%s1 + $0xbc] sm:$0xf]
  %v82 = vld [vmem:[%s1 + $0xc0] sm:$0xf]
  %v83 = vld [vmem:[%s1 + $0xc4] sm:$0xf]
  %v84 = vld [vmem:[%s1 + $0xc8] sm:$0xf]
  %v85 = vld [vmem:[%s1 + $0xcc] sm:$0xf]
  %v86 = vld [vmem:[%s1 + $0xd0] sm:$0xf]
  %v87 = vld [vmem:[%s1 + $0xd4] sm:$0xf]
  %v88 = vld [vmem:[%s1 + $0xd8] sm:$0xf]
  %v89 = vld [vmem:[%s1 + $0xdc] sm:$0xf]
  %v90 = vld [vmem:[%s1 + $0xe0] sm:$0xf]
  %v91 = vld [vmem:[%s1 + $0xe4] sm:$0xf]
  %v92 = vld [vmem:[%s1 + $0xe8] sm:$0xf]
  %v93 = vld [vmem:[%s1 + $0xec] sm:$0xf]
  %v94 = vld [vmem:[%s1 + $0xf0] sm:$0xf]
  %v95 = vld [vmem:[%s1 + $0xf4] sm:$0xf]
  %v96 = vld [vmem:[%s1 + $0xf8] sm:$0xf]
  %v97 = vld [vmem:[%s1 + $0xfc] sm:$0xf]
  %v114 = vunpack.c.l.b16 %v18
  %v115 = vunpack.c.h.b16 %v18
  %v116 = vunpack.c.l.b16 %v19
  %v117 = vunpack.c.h.b16 %v19
  %v118 = vunpack.c.l.b16 %v20
  %v119 = vunpack.c.h.b16 %v20
  %v120 = vunpack.c.l.b16 %v21
  %v121 = vunpack.c.h.b16 %v21
  %v122 = vunpack.c.l.b16 %v22
  %v123 = vunpack.c.h.b16 %v22
  %v124 = vunpack.c.l.b16 %v23
  %v125 = vunpack.c.h.b16 %v23
  %v126 = vunpack.c.l.b16 %v24
  %v127 = vunpack.c.h.b16 %v24
  %v128 = vunpack.c.l.b16 %v25
  %v129 = vunpack.c.h.b16 %v25
  %v130 = vunpack.c.l.b16 %v26
  %v131 = vunpack.c.h.b16 %v26
  %v132 = vunpack.c.l.b16 %v27
  %v133 = vunpack.c.h.b16 %v27
  %v134 = vunpack.c.l.b16 %v28
  %v135 = vunpack.c.h.b16 %v28
  %v136 = vunpack.c.l.b16 %v29
  %v137 = vunpack.c.h.b16 %v29
  %v138 = vunpack.c.l.b16 %v30
  %v139 = vunpack.c.h.b16 %v30
  %v140 = vunpack.c.l.b16 %v31
  %v141 = vunpack.c.h.b16 %v31
  %v142 = vunpack.c.l.b16 %v32
  %v143 = vunpack.c.h.b16 %v32
  %v144 = vunpack.c.l.b16 %v33
  %v145 = vunpack.c.h.b16 %v33
  %v146 = vpack.c.b16 %v118, %v114
  %v147 = vpack.c.b16 %v119, %v115
  %v148 = vpack.c.b16 %v120, %v116
  %v149 = vpack.c.b16 %v121, %v117
  %v150 = vpack.c.b16 %v126, %v122
  %v151 = vpack.c.b16 %v127, %v123
  %v152 = vpack.c.b16 %v128, %v124
  %v153 = vpack.c.b16 %v129, %v125
  %v154 = vpack.c.b16 %v134, %v130
  %v155 = vpack.c.b16 %v135, %v131
  %v156 = vpack.c.b16 %v136, %v132
  %v157 = vpack.c.b16 %v137, %v133
  %v158 = vpack.c.b16 %v142, %v138
  %v159 = vpack.c.b16 %v143, %v139
  %v160 = vpack.c.b16 %v144, %v140
  %v161 = vpack.c.b16 %v145, %v141
  %v242 = vunpack.c.l.b16 %v34
  %v243 = vunpack.c.l.b16 %v35
  %v244 = vunpack.c.l.b16 %v36
  %v245 = vunpack.c.l.b16 %v37
  %v246 = vunpack.c.l.b16 %v38
  %v247 = vunpack.c.l.b16 %v39
  %v248 = vunpack.c.l.b16 %v40
  %v249 = vunpack.c.l.b16 %v41
  %v250 = vunpack.c.l.b16 %v42
  %v251 = vunpack.c.l.b16 %v43
  %v252 = vunpack.c.l.b16 %v44
  %v253 = vunpack.c.l.b16 %v45
  %v254 = vunpack.c.l.b16 %v46
  %v255 = vunpack.c.l.b16 %v47
  %v256 = vunpack.c.l.b16 %v48
  %v257 = vunpack.c.l.b16 %v49
  %v258 = vunpack.c.l.b16 %v50
  %v259 = vunpack.c.l.b16 %v51
  %v260 = vunpack.c.l.b16 %v52
  %v261 = vunpack.c.l.b16 %v53
  %v262 = vunpack.c.l.b16 %v54
  %v263 = vunpack.c.l.b16 %v55
  %v264 = vunpack.c.l.b16 %v56
  %v265 = vunpack.c.l.b16 %v57
  %v266 = vunpack.c.l.b16 %v58
  %v267 = vunpack.c.l.b16 %v59
  %v268 = vunpack.c.l.b16 %v60
  %v269 = vunpack.c.l.b16 %v61
  %v270 = vunpack.c.l.b16 %v62
  %v271 = vunpack.c.l.b16 %v63
  %v272 = vunpack.c.l.b16 %v64
  %v273 = vunpack.c.l.b16 %v65
  %v274 = vunpack.c.l.b16 %v66
  %v275 = vunpack.c.l.b16 %v67
  %v276 = vunpack.c.l.b16 %v68
  %v277 = vunpack.c.l.b16 %v69
  %v278 = vunpack.c.l.b16 %v70
  %v279 = vunpack.c.l.b16 %v71
  %v280 = vunpack.c.l.b16 %v72
  %v281 = vunpack.c.l.b16 %v73
  %v282 = vunpack.c.l.b16 %v74
  %v283 = vunpack.c.l.b16 %v75
  %v284 = vunpack.c.l.b16 %v76
  %v285 = vunpack.c.l.b16 %v77
  %v286 = vunpack.c.l.b16 %v78
  %v287 = vunpack.c.l.b16 %v79
  %v288 = vunpack.c.l.b16 %v80
  %v289 = vunpack.c.l.b16 %v81
  %v290 = vunpack.c.l.b16 %v82
  %v291 = vunpack.c.l.b16 %v83
  %v292 = vunpack.c.l.b16 %v84
  %v293 = vunpack.c.l.b16 %v85
  %v294 = vunpack.c.l.b16 %v86
  %v295 = vunpack.c.l.b16 %v87
  %v296 = vunpack.c.l.b16 %v88
  %v297 = vunpack.c.l.b16 %v89
  %v298 = vunpack.c.l.b16 %v90
  %v299 = vunpack.c.l.b16 %v91
  %v300 = vunpack.c.l.b16 %v92
  %v301 = vunpack.c.l.b16 %v93
  %v302 = vunpack.c.l.b16 %v94
  %v303 = vunpack.c.l.b16 %v95
  %v304 = vunpack.c.l.b16 %v96
  %v305 = vunpack.c.l.b16 %v97
  %v306 = vpack.c.b16 %v243, %v242
  %v307 = vpack.c.b16 %v245, %v244
  %v308 = vpack.c.b16 %v247, %v246
  %v309 = vpack.c.b16 %v249, %v248
  %v310 = vpack.c.b16 %v251, %v250
  %v311 = vpack.c.b16 %v253, %v252
  %v312 = vpack.c.b16 %v255, %v254
  %v313 = vpack.c.b16 %v257, %v256
  %v314 = vpack.c.b16 %v259, %v258
  %v315 = vpack.c.b16 %v261, %v260
  %v316 = vpack.c.b16 %v263, %v262
  %v317 = vpack.c.b16 %v265, %v264
  %v318 = vpack.c.b16 %v267, %v266
  %v319 = vpack.c.b16 %v269, %v268
  %v320 = vpack.c.b16 %v271, %v270
  %v321 = vpack.c.b16 %v273, %v272
  %v322 = vpack.c.b16 %v275, %v274
  %v323 = vpack.c.b16 %v277, %v276
  %v324 = vpack.c.b16 %v279, %v278
  %v325 = vpack.c.b16 %v281, %v280
  %v326 = vpack.c.b16 %v283, %v282
  %v327 = vpack.c.b16 %v285, %v284
  %v328 = vpack.c.b16 %v287, %v286
  %v329 = vpack.c.b16 %v289, %v288
  %v330 = vpack.c.b16 %v291, %v290
  %v331 = vpack.c.b16 %v293, %v292
  %v332 = vpack.c.b16 %v295, %v294
  %v333 = vpack.c.b16 %v297, %v296
  %v334 = vpack.c.b16 %v299, %v298
  %v335 = vpack.c.b16 %v301, %v300
  %v336 = vpack.c.b16 %v303, %v302
  %v337 = vpack.c.b16 %v305, %v304
  %370 = vmatprep.subr.bf16.mxu0 0
  %371 = vmatpush1.bf16.msra.mxu0 %v313
  %372 = vmatprep.subr.bf16.mxu0 0
  %373 = vmatpush1.bf16.msra.mxu0 %v312
  %374 = vmatprep.subr.bf16.mxu0 0
  %375 = vmatpush1.bf16.msra.mxu0 %v311
  %376 = vmatprep.subr.bf16.mxu0 0
  %377 = vmatpush1.bf16.msra.mxu0 %v310
  %378 = vmatprep.subr.bf16.mxu0 0
  %379 = vmatpush1.bf16.msra.mxu0 %v309
  %380 = vmatprep.subr.bf16.mxu0 0
  %381 = vmatpush1.bf16.msra.mxu0 %v308
  %382 = vmatprep.subr.bf16.mxu0 0
  %383 = vmatpush1.bf16.msra.mxu0 %v307
  %384 = vmatprep.subr.bf16.mxu0 0
  %385 = vmatpush1.bf16.msra.mxu0 %v306
  %386 = vmatprep.subr.bf16.mxu0 0
  %387 = vmatpush2.bf16.msra.mxu0 %v321
  %388 = vmatprep.subr.bf16.mxu0 0
  %389 = vmatpush2.bf16.msra.mxu0 %v320
  %390 = vmatprep.subr.bf16.mxu0 0
  %391 = vmatpush2.bf16.msra.mxu0 %v319
  %392 = vmatprep.subr.bf16.mxu0 0
  %393 = vmatpush2.bf16.msra.mxu0 %v318
  %394 = vmatprep.subr.bf16.mxu0 0
  %395 = vmatpush2.bf16.msra.mxu0 %v317
  %396 = vmatprep.subr.bf16.mxu0 0
  %397 = vmatpush2.bf16.msra.mxu0 %v316
  %398 = vmatprep.subr.bf16.mxu0 0
  %399 = vmatpush2.bf16.msra.mxu0 %v315
  %400 = vmatprep.subr.bf16.mxu0 0
  %401 = vmatpush2.bf16.msra.mxu0 %v314
  %402 = vmatprep.mubr.bf16.mxu0 %v147
  %403 = vmatmul.mubr.bf16.gmra.mxu0 %v146
  %v404 = vpop.f32.mrf.mxu0
  %v405 = vadd.f32 0.0, %v404
  %v406 = vpop.f32.mrf.mxu0
  %v407 = vpop.f32.mrf.mxu0
  %v408 = vadd.f32 0.0, %v407
  %v409 = vpop.f32.mrf.mxu0
  %410 = vmatprep.mubr.bf16.mxu0 %v151
  %411 = vmatmul.mubr.bf16.gmra.mxu0 %v150
  %v412 = vpop.f32.mrf.mxu0
  %v413 = vadd.f32 0.0, %v412
  %v414 = vpop.f32.mrf.mxu0
  %v415 = vpop.f32.mrf.mxu0
  %v416 = vadd.f32 0.0, %v415
  %v417 = vpop.f32.mrf.mxu0
  %418 = vmatprep.mubr.bf16.mxu0 %v155
  %419 = vmatmul.mubr.bf16.gmra.mxu0 %v154
  %v420 = vpop.f32.mrf.mxu0
  %v421 = vadd.f32 0.0, %v420
  %v422 = vpop.f32.mrf.mxu0
  %v423 = vpop.f32.mrf.mxu0
  %v424 = vadd.f32 0.0, %v423
  %v425 = vpop.f32.mrf.mxu0
  %426 = vmatprep.mubr.bf16.mxu0 %v159
  %427 = vmatmul.mubr.bf16.gmra.mxu0 %v158
  %v428 = vpop.f32.mrf.mxu0
  %v429 = vadd.f32 0.0, %v428
  %v430 = vpop.f32.mrf.mxu0
  %v431 = vpop.f32.mrf.mxu0
  %v432 = vadd.f32 0.0, %v431
  %v433 = vpop.f32.mrf.mxu0
  %434 = vdwg.mxu0
  %435 = vmatprep.subr.bf16.mxu0 0
  %436 = vmatpush1.bf16.msra.mxu0 %v329
  %437 = vmatprep.subr.bf16.mxu0 0
  %438 = vmatpush1.bf16.msra.mxu0 %v328
  %439 = vmatprep.subr.bf16.mxu0 0
  %440 = vmatpush1.bf16.msra.mxu0 %v327
  %441 = vmatprep.subr.bf16.mxu0 0
  %442 = vmatpush1.bf16.msra.mxu0 %v326
  %443 = vmatprep.subr.bf16.mxu0 0
  %444 = vmatpush1.bf16.msra.mxu0 %v325
  %445 = vmatprep.subr.bf16.mxu0 0
  %446 = vmatpush1.bf16.msra.mxu0 %v324
  %447 = vmatprep.subr.bf16.mxu0 0
  %448 = vmatpush1.bf16.msra.mxu0 %v323
  %449 = vmatprep.subr.bf16.mxu0 0
  %450 = vmatpush1.bf16.msra.mxu0 %v322
  %451 = vmatprep.subr.bf16.mxu0 0
  %452 = vmatpush2.bf16.msra.mxu0 %v337
  %453 = vmatprep.subr.bf16.mxu0 0
  %454 = vmatpush2.bf16.msra.mxu0 %v336
  %455 = vmatprep.subr.bf16.mxu0 0
  %456 = vmatpush2.bf16.msra.mxu0 %v335
  %457 = vmatprep.subr.bf16.mxu0 0
  %458 = vmatpush2.bf16.msra.mxu0 %v334
  %459 = vmatprep.subr.bf16.mxu0 0
  %460 = vmatpush2.bf16.msra.mxu0 %v333
  %461 = vmatprep.subr.bf16.mxu0 0
  %462 = vmatpush2.bf16.msra.mxu0 %v332
  %463 = vmatprep.subr.bf16.mxu0 0
  %464 = vmatpush2.bf16.msra.mxu0 %v331
  %465 = vmatprep.subr.bf16.mxu0 0
  %466 = vmatpush2.bf16.msra.mxu0 %v330
  %467 = vmatprep.mubr.bf16.mxu0 %v149
  %468 = vmatmul.mubr.bf16.gmra.mxu0 %v148
  %v469 = vpop.f32.mrf.mxu0
  %v470 = vadd.f32 %v405, %v469
  %v471 = vpop.f32.mrf.mxu0
  %v472 = vpop.f32.mrf.mxu0
  %v473 = vadd.f32 %v408, %v472
  %v474 = vpop.f32.mrf.mxu0
  %475 = vmatprep.mubr.bf16.mxu0 %v153
  %476 = vmatmul.mubr.bf16.gmra.mxu0 %v152
  %v477 = vpop.f32.mrf.mxu0
  %v478 = vadd.f32 %v413, %v477
  %v479 = vpop.f32.mrf.mxu0
  %v480 = vpop.f32.mrf.mxu0
  %v481 = vadd.f32 %v416, %v480
  %v482 = vpop.f32.mrf.mxu0
  %483 = vmatprep.mubr.bf16.mxu0 %v157
  %484 = vmatmul.mubr.bf16.gmra.mxu0 %v156
  %v485 = vpop.f32.mrf.mxu0
  %v486 = vadd.f32 %v421, %v485
  %v487 = vpop.f32.mrf.mxu0
  %v488 = vpop.f32.mrf.mxu0
  %v489 = vadd.f32 %v424, %v488
  %v490 = vpop.f32.mrf.mxu0
  %491 = vmatprep.mubr.bf16.mxu0 %v161
  %492 = vmatmul.mubr.bf16.gmra.mxu0 %v160
  %v493 = vpop.f32.mrf.mxu0
  %v494 = vadd.f32 %v429, %v493
  %v495 = vpop.f32.mrf.mxu0
  %v496 = vpop.f32.mrf.mxu0
  %v497 = vadd.f32 %v432, %v496
  %v498 = vpop.f32.mrf.mxu0
  %499 = vdwg.mxu0
  %v500 = vld [vmem:[%s2] sm:$0x1]
  %v502 = vlaneseq
  %v503 = vshrl.u32 %v502, 7
  %v504 = vsub.s32 0, %v503
  %v505 = vrot.slane %v500, %v504
  %v507 = vmul.f32 %v470, %v505
  %v508 = vmul.f32 %v473, %v505
  %v509 = vmul.f32 %v478, %v505
  %v510 = vmul.f32 %v481, %v505
  %v511 = vmul.f32 %v486, %v505
  %v512 = vmul.f32 %v489, %v505
  %v513 = vmul.f32 %v494, %v505
  %v514 = vmul.f32 %v497, %v505
  %v515 = vld [vmem:[%s3] sm:$0x1]
  %v517 = vlaneseq
  %v518 = vshrl.u32 %v517, 7
  %v519 = vsub.s32 0, %v518
  %v520 = vrot.slane %v515, %v519
  %v522 = vadd.f32 %v507, %v520
  %v523 = vadd.f32 %v508, %v520
  %v524 = vadd.f32 %v509, %v520
  %v525 = vadd.f32 %v510, %v520
  %v526 = vadd.f32 %v511, %v520
  %v527 = vadd.f32 %v512, %v520
  %v528 = vadd.f32 %v513, %v520
  %v529 = vadd.f32 %v514, %v520
  %v530 = vmax.f32 %v522, 0.0
  %v531 = vmax.f32 %v523, 0.0
  %v532 = vmax.f32 %v524, 0.0
  %v533 = vmax.f32 %v525, 0.0
  %v534 = vmax.f32 %v526, 0.0
  %v535 = vmax.f32 %v527, 0.0
  %v536 = vmax.f32 %v528, 0.0
  %v537 = vmax.f32 %v529, 0.0
  %v538 = vpack.c.bf16 %v531, %v530
  %v539 = vpack.c.bf16 %v533, %v532
  %v540 = vpack.c.bf16 %v535, %v534
  %v541 = vpack.c.bf16 %v537, %v536
  %v546 = vunpack.c.l.b16 %v538
  %v547 = vunpack.c.h.b16 %v538
  %v548 = vunpack.c.l.b16 %v539
  %v549 = vunpack.c.h.b16 %v539
  %v550 = vunpack.c.l.b16 %v540
  %v551 = vunpack.c.h.b16 %v540
  %v552 = vunpack.c.l.b16 %v541
  %v553 = vunpack.c.h.b16 %v541
  %v554 = vpack.c.b16 %v546, %v546
  %v555 = vpack.c.b16 %v547, %v547
  %v556 = vpack.c.b16 %v548, %v548
  %v557 = vpack.c.b16 %v549, %v549
  %v558 = vpack.c.b16 %v550, %v550
  %v559 = vpack.c.b16 %v551, %v551
  %v560 = vpack.c.b16 %v552, %v552
  %v561 = vpack.c.b16 %v553, %v553
  %570 = vst [vmem:[%s4] sm:$0xf] %v554
  %571 = vst [vmem:[%s4 + $0x4] sm:$0xf] %v555
  %572 = vst [vmem:[%s4 + $0x8] sm:$0xf] %v556
  %573 = vst [vmem:[%s4 + $0xc] sm:$0xf] %v557
  %574 = vst [vmem:[%s4 + $0x10] sm:$0xf] %v558
  %575 = vst [vmem:[%s4 + $0x14] sm:$0xf] %v559
  %576 = vst [vmem:[%s4 + $0x18] sm:$0xf] %v560
  %577 = vst [vmem:[%s4 + $0x1c] sm:$0xf] %v561
  // Predicated region
  $region18: #{occlusion_net_forward.18} parent=0 // pred_check
    _
  $region19: #{occlusion_net_forward.18} parent=0 // pred_check_branch
    %579 = sbr.rel (0) target = $region21
  $region20: #{occlusion_net_forward.18} parent=0 // pred_region
    _
  $region21: #{occlusion_net_forward.18} parent=0 // pred_fallthru
    _
  // Predicated region
  $region22: #{occlusion_net_forward.18} parent=0 // pred_check
    _
  $region23: #{occlusion_net_forward.18} parent=0 // pred_check_branch
    %581 = sbr.rel (0) target = $region25
  $region24: #{occlusion_net_forward.18} parent=0 // pred_region
    _
  $region25: #{occlusion_net_forward.18} parent=0 // pred_fallthru
    _

// kernel: occlusion_net_forward.21
$region0: #{occlusion_net_forward.21}
  #allocation0 [shape = 'u32[]', space=smem, size = 0x4, offset = 0x4, fixed_abs, tag = 'smem constant byte address 0x4 - core index']
  #allocation1 [shape = 'u32[144,128]{1,0:T(1,128)}', space=vmem, size = 0x12000, scoped, tag = 'internal scratch']
  %s0 = inlined_call_operand.vmem [shape: f32[1,8,64], index: 0, kind: input, shape index: {}]
  %s1 = inlined_call_operand.vmem [shape: f32[1,8,1], index: 1, kind: input, shape index: {}]
  %s2 = inlined_call_operand.vmem [shape: f32[1,8,64], index: 2, kind: output, shape index: {0}]
  %s3 = inlined_call_operand.vmem [shape: f32[1,64], index: 3, kind: output, shape index: {1}]
  %4 = xla_tuple %s2, %s3
  %s5 = sld [smem:[#allocation0]]
  $region26: #{occlusion_net_forward.21} parent=0
    _
  %s7 = ssub.s32 1, %s5
  %s8 = scalar_select 0, %s7, %s5
  // Predicated region
  $region2: #{occlusion_net_forward.21} parent=0 // pred_check
    _
  $region3: #{occlusion_net_forward.21} parent=0 // pred_check_branch
    %10 = sbr.rel (0) target = $region5
  $region4: #{occlusion_net_forward.21} parent=0 // pred_region
    _
  $region5: #{occlusion_net_forward.21} parent=0 // pred_fallthru
    _
  // Predicated region
  $region6: #{occlusion_net_forward.21} parent=0 // pred_check
    _
  $region7: #{occlusion_net_forward.21} parent=0 // pred_check_branch
    %12 = sbr.rel (0) target = $region9
  $region8: #{occlusion_net_forward.21} parent=0 // pred_region
    _
  $region9: #{occlusion_net_forward.21} parent=0 // pred_fallthru
    _
  %v13 = vld [vmem:[%s0] sm:$0xff]
  %vm14 = vcmask 523264
  %v15 = vsel %vm14, %v13, -inf
  %v16 = vrot.slane %v15, 4
  %v17 = vmax.f32 %v15, %v16
  %v18 = vrot.slane %v17, 2
  %v19 = vmax.f32 %v17, %v18
  %v20 = vrot.slane %v19, 1
  %v21 = vmax.f32 %v19, %v20
  %v22 = vsub.f32 %v13, %v21
  %v23 = vmul.f32 %v22, 1.442695
  %v24 = vpow.pop %v23
  %v25 = vsel %vm14, %v24, 0.0
  %v26 = vrot.slane %v25, 4
  %v27 = vadd.f32 %v25, %v26
  %v28 = vrot.slane %v27, 2
  %v29 = vadd.f32 %v27, %v28
  %v30 = vrot.slane %v29, 1
  %v31 = vadd.f32 %v29, %v30
  %v32 = vrcp.pop %v31
  %v33 = vmul.f32 %v31, %v32
  %v34 = vsub.f32 2.0, %v33
  %v35 = vmul.f32 %v32, %v34
  %v36 = vmul.f32 %v24, %v35
  %37 = vst.msk [vmem:[%s2] sm:$0xff] %vm14, %v36
  %v38 = vld [vmem:[%s1] sm:$0xff]
  %40 = vset.pattern.permute.xlu0 0
  %41 = vperm.xlu0 %40, %v38
  %v42 = vpop.permute.xlu0 %41
  %v44 = vmul.f32 %v36, %v42
  %v45 = vsel %vm14, %v44, 0.0
  %v46 = vrot.slane %v45, 4
  %v47 = vadd.f32 %v45, %v46
  %v48 = vrot.slane %v47, 2
  %v49 = vadd.f32 %v47, %v48
  %v50 = vrot.slane %v49, 1
  %v51 = vadd.f32 %v49, %v50
  %vm52 = vcmask 516096
  %53 = vst.msk [vmem:[%s3] sm:$0x1] %vm52, %v51
  // Predicated region
  $region10: #{occlusion_net_forward.21} parent=0 // pred_check
    _
  $region11: #{occlusion_net_forward.21} parent=0 // pred_check_branch
    %55 = sbr.rel (0) target = $region13
  $region12: #{occlusion_net_forward.21} parent=0 // pred_region
    _
  $region13: #{occlusion_net_forward.21} parent=0 // pred_fallthru
    _
  // Predicated region
  $region14: #{occlusion_net_forward.21} parent=0 // pred_check
    _
  $region15: #{occlusion_net_forward.21} parent=0 // pred_check_branch
    %57 = sbr.rel (0) target = $region17
  $region16: #{occlusion_net_forward.21} parent=0 // pred_region
    _
  $region17: #{occlusion_net_forward.21} parent=0 // pred_fallthru
    _
  // Predicated region
  $region18: #{occlusion_net_forward.21} parent=0 // pred_check
    _
  $region19: #{occlusion_net_forward.21} parent=0 // pred_check_branch
    %59 = sbr.rel (0) target = $region21
  $region20: #{occlusion_net_forward.21} parent=0 // pred_region
    _
  $region21: #{occlusion_net_forward.21} parent=0 // pred_fallthru
    _
  // Predicated region
  $region22: #{occlusion_net_forward.21} parent=0 // pred_check
    _
  $region23: #{occlusion_net_forward.21} parent=0 // pred_check_branch
    %61 = sbr.rel (0) target = $region25
  $region24: #{occlusion_net_forward.21} parent=0 // pred_region
    _
  $region25: #{occlusion_net_forward.21} parent=0 // pred_fallthru
    _

// kernel: occlusion_net_forward.20
$region0: #{occlusion_net_forward.20}
  #allocation0 [shape = 'u32[]', space=smem, size = 0x4, offset = 0x4, fixed_abs, tag = 'smem constant byte address 0x4 - core index']
  #allocation1 [shape = 'u32[144,128]{1,0:T(1,128)}', space=vmem, size = 0x12000, scoped, tag = 'internal scratch']
  %s0 = inlined_call_operand.vmem [shape: bf16[512,256], index: 0, kind: input, shape index: {}]
  %s1 = inlined_call_operand.vmem [shape: bf16[256,128], index: 1, kind: input, shape index: {}]
  %s2 = inlined_call_operand.vmem [shape: f32[1,128], index: 2, kind: input, shape index: {}]
  %s3 = inlined_call_operand.vmem [shape: f32[1,128], index: 3, kind: input, shape index: {}]
  %s4 = inlined_call_operand.vmem [shape: f32[512,128], index: 4, kind: output, shape index: {}]
  %s5 = sld [smem:[#allocation0]]
  $region26: #{occlusion_net_forward.20} parent=0
    _
  %s7 = ssub.s32 1, %s5
  %s8 = scalar_select 0, %s7, %s5
  // Predicated region
  $region2: #{occlusion_net_forward.20} parent=0 // pred_check
    _
  $region3: #{occlusion_net_forward.20} parent=0 // pred_check_branch
    %10 = sbr.rel (0) target = $region5
  $region4: #{occlusion_net_forward.20} parent=0 // pred_region
    _
  $region5: #{occlusion_net_forward.20} parent=0 // pred_fallthru
    _
  // Predicated region
  $region6: #{occlusion_net_forward.20} parent=0 // pred_check
    _
  $region7: #{occlusion_net_forward.20} parent=0 // pred_check_branch
    %12 = sbr.rel (0) target = $region9
  $region8: #{occlusion_net_forward.20} parent=0 // pred_region
    _
  $region9: #{occlusion_net_forward.20} parent=0 // pred_fallthru
    _
  // Predicated region
  $region10: #{occlusion_net_forward.20} parent=0 // pred_check
    _
  $region11: #{occlusion_net_forward.20} parent=0 // pred_check_branch
    %14 = sbr.rel (0) target = $region13
  $region12: #{occlusion_net_forward.20} parent=0 // pred_region
    _
  $region13: #{occlusion_net_forward.20} parent=0 // pred_fallthru
    _
  // Predicated region
  $region14: #{occlusion_net_forward.20} parent=0 // pred_check
    _
  $region15: #{occlusion_net_forward.20} parent=0 // pred_check_branch
    %16 = sbr.rel (0) target = $region17
  $region16: #{occlusion_net_forward.20} parent=0 // pred_region
    _
  $region17: #{occlusion_net_forward.20} parent=0 // pred_fallthru
    _
  %v18 = vld [vmem:[%s0] sm:$0xff]
  %v19 = vld [vmem:[%s0 + $0x8] sm:$0xff]
  %v20 = vld [vmem:[%s0 + $0x10] sm:$0xff]
  %v21 = vld [vmem:[%s0 + $0x18] sm:$0xff]
  %v22 = vld [vmem:[%s0 + $0x20] sm:$0xff]
  %v23 = vld [vmem:[%s0 + $0x28] sm:$0xff]
  %v24 = vld [vmem:[%s0 + $0x30] sm:$0xff]
  %v25 = vld [vmem:[%s0 + $0x38] sm:$0xff]
  %v26 = vld [vmem:[%s0 + $0x40] sm:$0xff]
  %v27 = vld [vmem:[%s0 + $0x48] sm:$0xff]
  %v28 = vld [vmem:[%s0 + $0x50] sm:$0xff]
  %v29 = vld [vmem:[%s0 + $0x58] sm:$0xff]
  %v30 = vld [vmem:[%s0 + $0x60] sm:$0xff]
  %v31 = vld [vmem:[%s0 + $0x68] sm:$0xff]
  %v32 = vld [vmem:[%s0 + $0x70] sm:$0xff]
  %v33 = vld [vmem:[%s0 + $0x78] sm:$0xff]
  %v34 = vld [vmem:[%s0 + $0x80] sm:$0xff]
  %v35 = vld [vmem:[%s0 + $0x88] sm:$0xff]
  %v36 = vld [vmem:[%s0 + $0x90] sm:$0xff]
  %v37 = vld [vmem:[%s0 + $0x98] sm:$0xff]
  %v38 = vld [vmem:[%s0 + $0xa0] sm:$0xff]
  %v39 = vld [vmem:[%s0 + $0xa8] sm:$0xff]
  %v40 = vld [vmem:[%s0 + $0xb0] sm:$0xff]
  %v41 = vld [vmem:[%s0 + $0xb8] sm:$0xff]
  %v42 = vld [vmem:[%s0 + $0xc0] sm:$0xff]
  %v43 = vld [vmem:[%s0 + $0xc8] sm:$0xff]
  %v44 = vld [vmem:[%s0 + $0xd0] sm:$0xff]
  %v45 = vld [vmem:[%s0 + $0xd8] sm:$0xff]
  %v46 = vld [vmem:[%s0 + $0xe0] sm:$0xff]
  %v47 = vld [vmem:[%s0 + $0xe8] sm:$0xff]
  %v48 = vld [vmem:[%s0 + $0xf0] sm:$0xff]
  %v49 = vld [vmem:[%s0 + $0xf8] sm:$0xff]
  %v50 = vld [vmem:[%s0 + $0x100] sm:$0xff]
  %v51 = vld [vmem:[%s0 + $0x108] sm:$0xff]
  %v52 = vld [vmem:[%s0 + $0x110] sm:$0xff]
  %v53 = vld [vmem:[%s0 + $0x118] sm:$0xff]
  %v54 = vld [vmem:[%s0 + $0x120] sm:$0xff]
  %v55 = vld [vmem:[%s0 + $0x128] sm:$0xff]
  %v56 = vld [vmem:[%s0 + $0x130] sm:$0xff]
  %v57 = vld [vmem:[%s0 + $0x138] sm:$0xff]
  %v58 = vld [vmem:[%s0 + $0x140] sm:$0xff]
  %v59 = vld [vmem:[%s0 + $0x148] sm:$0xff]
  %v60 = vld [vmem:[%s0 + $0x150] sm:$0xff]
  %v61 = vld [vmem:[%s0 + $0x158] sm:$0xff]
  %v62 = vld [vmem:[%s0 + $0x160] sm:$0xff]
  %v63 = vld [vmem:[%s0 + $0x168] sm:$0xff]
  %v64 = vld [vmem:[%s0 + $0x170] sm:$0xff]
  %v65 = vld [vmem:[%s0 + $0x178] sm:$0xff]
  %v66 = vld [vmem:[%s0 + $0x180] sm:$0xff]
  %v67 = vld [vmem:[%s0 + $0x188] sm:$0xff]
  %v68 = vld [vmem:[%s0 + $0x190] sm:$0xff]
  %v69 = vld [vmem:[%s0 + $0x198] sm:$0xff]
  %v70 = vld [vmem:[%s0 + $0x1a0] sm:$0xff]
  %v71 = vld [vmem:[%s0 + $0x1a8] sm:$0xff]
  %v72 = vld [vmem:[%s0 + $0x1b0] sm:$0xff]
  %v73 = vld [vmem:[%s0 + $0x1b8] sm:$0xff]
  %v74 = vld [vmem:[%s0 + $0x1c0] sm:$0xff]
  %v75 = vld [vmem:[%s0 + $0x1c8] sm:$0xff]
  %v76 = vld [vmem:[%s0 + $0x1d0] sm:$0xff]
  %v77 = vld [vmem:[%s0 + $0x1d8] sm:$0xff]
  %v78 = vld [vmem:[%s0 + $0x1e0] sm:$0xff]
  %v79 = vld [vmem:[%s0 + $0x1e8] sm:$0xff]
  %v80 = vld [vmem:[%s0 + $0x1f0] sm:$0xff]
  %v81 = vld [vmem:[%s0 + $0x1f8] sm:$0xff]
  %v82 = vld [vmem:[%s1] sm:$0xf]
  %v83 = vld [vmem:[%s1 + $0x4] sm:$0xf]
  %v84 = vld [vmem:[%s1 + $0x8] sm:$0xf]
  %v85 = vld [vmem:[%s1 + $0xc] sm:$0xf]
  %v86 = vld [vmem:[%s1 + $0x10] sm:$0xf]
  %v87 = vld [vmem:[%s1 + $0x14] sm:$0xf]
  %v88 = vld [vmem:[%s1 + $0x18] sm:$0xf]
  %v89 = vld [vmem:[%s1 + $0x1c] sm:$0xf]
  %v90 = vld [vmem:[%s1 + $0x20] sm:$0xf]
  %v91 = vld [vmem:[%s1 + $0x24] sm:$0xf]
  %v92 = vld [vmem:[%s1 + $0x28] sm:$0xf]
  %v93 = vld [vmem:[%s1 + $0x2c] sm:$0xf]
  %v94 = vld [vmem:[%s1 + $0x30] sm:$0xf]
  %v95 = vld [vmem:[%s1 + $0x34] sm:$0xf]
  %v96 = vld [vmem:[%s1 + $0x38] sm:$0xf]
  %v97 = vld [vmem:[%s1 + $0x3c] sm:$0xf]
  %v98 = vld [vmem:[%s1 + $0x40] sm:$0xf]
  %v99 = vld [vmem:[%s1 + $0x44] sm:$0xf]
  %v100 = vld [vmem:[%s1 + $0x48] sm:$0xf]
  %v101 = vld [vmem:[%s1 + $0x4c] sm:$0xf]
  %v102 = vld [vmem:[%s1 + $0x50] sm:$0xf]
  %v103 = vld [vmem:[%s1 + $0x54] sm:$0xf]
  %v104 = vld [vmem:[%s1 + $0x58] sm:$0xf]
  %v105 = vld [vmem:[%s1 + $0x5c] sm:$0xf]
  %v106 = vld [vmem:[%s1 + $0x60] sm:$0xf]
  %v107 = vld [vmem:[%s1 + $0x64] sm:$0xf]
  %v108 = vld [vmem:[%s1 + $0x68] sm:$0xf]
  %v109 = vld [vmem:[%s1 + $0x6c] sm:$0xf]
  %v110 = vld [vmem:[%s1 + $0x70] sm:$0xf]
  %v111 = vld [vmem:[%s1 + $0x74] sm:$0xf]
  %v112 = vld [vmem:[%s1 + $0x78] sm:$0xf]
  %v113 = vld [vmem:[%s1 + $0x7c] sm:$0xf]
  %v178 = vunpack.c.l.b16 %v18
  %v179 = vunpack.c.h.b16 %v18
  %v180 = vunpack.c.l.b16 %v19
  %v181 = vunpack.c.h.b16 %v19
  %v182 = vunpack.c.l.b16 %v20
  %v183 = vunpack.c.h.b16 %v20
  %v184 = vunpack.c.l.b16 %v21
  %v185 = vunpack.c.h.b16 %v21
  %v186 = vunpack.c.l.b16 %v22
  %v187 = vunpack.c.h.b16 %v22
  %v188 = vunpack.c.l.b16 %v23
  %v189 = vunpack.c.h.b16 %v23
  %v190 = vunpack.c.l.b16 %v24
  %v191 = vunpack.c.h.b16 %v24
  %v192 = vunpack.c.l.b16 %v25
  %v193 = vunpack.c.h.b16 %v25
  %v194 = vunpack.c.l.b16 %v26
  %v195 = vunpack.c.h.b16 %v26
  %v196 = vunpack.c.l.b16 %v27
  %v197 = vunpack.c.h.b16 %v27
  %v198 = vunpack.c.l.b16 %v28
  %v199 = vunpack.c.h.b16 %v28
  %v200 = vunpack.c.l.b16 %v29
  %v201 = vunpack.c.h.b16 %v29
  %v202 = vunpack.c.l.b16 %v30
  %v203 = vunpack.c.h.b16 %v30
  %v204 = vunpack.c.l.b16 %v31
  %v205 = vunpack.c.h.b16 %v31
  %v206 = vunpack.c.l.b16 %v32
  %v207 = vunpack.c.h.b16 %v32
  %v208 = vunpack.c.l.b16 %v33
  %v209 = vunpack.c.h.b16 %v33
  %v210 = vunpack.c.l.b16 %v34
  %v211 = vunpack.c.h.b16 %v34
  %v212 = vunpack.c.l.b16 %v35
  %v213 = vunpack.c.h.b16 %v35
  %v214 = vunpack.c.l.b16 %v36
  %v215 = vunpack.c.h.b16 %v36
  %v216 = vunpack.c.l.b16 %v37
  %v217 = vunpack.c.h.b16 %v37
  %v218 = vunpack.c.l.b16 %v38
  %v219 = vunpack.c.h.b16 %v38
  %v220 = vunpack.c.l.b16 %v39
  %v221 = vunpack.c.h.b16 %v39
  %v222 = vunpack.c.l.b16 %v40
  %v223 = vunpack.c.h.b16 %v40
  %v224 = vunpack.c.l.b16 %v41
  %v225 = vunpack.c.h.b16 %v41
  %v226 = vunpack.c.l.b16 %v42
  %v227 = vunpack.c.h.b16 %v42
  %v228 = vunpack.c.l.b16 %v43
  %v229 = vunpack.c.h.b16 %v43
  %v230 = vunpack.c.l.b16 %v44
  %v231 = vunpack.c.h.b16 %v44
  %v232 = vunpack.c.l.b16 %v45
  %v233 = vunpack.c.h.b16 %v45
  %v234 = vunpack.c.l.b16 %v46
  %v235 = vunpack.c.h.b16 %v46
  %v236 = vunpack.c.l.b16 %v47
  %v237 = vunpack.c.h.b16 %v47
  %v238 = vunpack.c.l.b16 %v48
  %v239 = vunpack.c.h.b16 %v48
  %v240 = vunpack.c.l.b16 %v49
  %v241 = vunpack.c.h.b16 %v49
  %v242 = vunpack.c.l.b16 %v50
  %v243 = vunpack.c.h.b16 %v50
  %v244 = vunpack.c.l.b16 %v51
  %v245 = vunpack.c.h.b16 %v51
  %v246 = vunpack.c.l.b16 %v52
  %v247 = vunpack.c.h.b16 %v52
  %v248 = vunpack.c.l.b16 %v53
  %v249 = vunpack.c.h.b16 %v53
  %v250 = vunpack.c.l.b16 %v54
  %v251 = vunpack.c.h.b16 %v54
  %v252 = vunpack.c.l.b16 %v55
  %v253 = vunpack.c.h.b16 %v55
  %v254 = vunpack.c.l.b16 %v56
  %v255 = vunpack.c.h.b16 %v56
  %v256 = vunpack.c.l.b16 %v57
  %v257 = vunpack.c.h.b16 %v57
  %v258 = vunpack.c.l.b16 %v58
  %v259 = vunpack.c.h.b16 %v58
  %v260 = vunpack.c.l.b16 %v59
  %v261 = vunpack.c.h.b16 %v59
  %v262 = vunpack.c.l.b16 %v60
  %v263 = vunpack.c.h.b16 %v60
  %v264 = vunpack.c.l.b16 %v61
  %v265 = vunpack.c.h.b16 %v61
  %v266 = vunpack.c.l.b16 %v62
  %v267 = vunpack.c.h.b16 %v62
  %v268 = vunpack.c.l.b16 %v63
  %v269 = vunpack.c.h.b16 %v63
  %v270 = vunpack.c.l.b16 %v64
  %v271 = vunpack.c.h.b16 %v64
  %v272 = vunpack.c.l.b16 %v65
  %v273 = vunpack.c.h.b16 %v65
  %v274 = vunpack.c.l.b16 %v66
  %v275 = vunpack.c.h.b16 %v66
  %v276 = vunpack.c.l.b16 %v67
  %v277 = vunpack.c.h.b16 %v67
  %v278 = vunpack.c.l.b16 %v68
  %v279 = vunpack.c.h.b16 %v68
  %v280 = vunpack.c.l.b16 %v69
  %v281 = vunpack.c.h.b16 %v69
  %v282 = vunpack.c.l.b16 %v70
  %v283 = vunpack.c.h.b16 %v70
  %v284 = vunpack.c.l.b16 %v71
  %v285 = vunpack.c.h.b16 %v71
  %v286 = vunpack.c.l.b16 %v72
  %v287 = vunpack.c.h.b16 %v72
  %v288 = vunpack.c.l.b16 %v73
  %v289 = vunpack.c.h.b16 %v73
  %v290 = vunpack.c.l.b16 %v74
  %v291 = vunpack.c.h.b16 %v74
  %v292 = vunpack.c.l.b16 %v75
  %v293 = vunpack.c.h.b16 %v75
  %v294 = vunpack.c.l.b16 %v76
  %v295 = vunpack.c.h.b16 %v76
  %v296 = vunpack.c.l.b16 %v77
  %v297 = vunpack.c.h.b16 %v77
  %v298 = vunpack.c.l.b16 %v78
  %v299 = vunpack.c.h.b16 %v78
  %v300 = vunpack.c.l.b16 %v79
  %v301 = vunpack.c.h.b16 %v79
  %v302 = vunpack.c.l.b16 %v80
  %v303 = vunpack.c.h.b16 %v80
  %v304 = vunpack.c.l.b16 %v81
  %v305 = vunpack.c.h.b16 %v81
  %v306 = vpack.c.b16 %v180, %v178
  %v307 = vpack.c.b16 %v181, %v179
  %v308 = vpack.c.b16 %v184, %v182
  %v309 = vpack.c.b16 %v185, %v183
  %v310 = vpack.c.b16 %v188, %v186
  %v311 = vpack.c.b16 %v189, %v187
  %v312 = vpack.c.b16 %v192, %v190
  %v313 = vpack.c.b16 %v193, %v191
  %v314 = vpack.c.b16 %v196, %v194
  %v315 = vpack.c.b16 %v197, %v195
  %v316 = vpack.c.b16 %v200, %v198
  %v317 = vpack.c.b16 %v201, %v199
  %v318 = vpack.c.b16 %v204, %v202
  %v319 = vpack.c.b16 %v205, %v203
  %v320 = vpack.c.b16 %v208, %v206
  %v321 = vpack.c.b16 %v209, %v207
  %v322 = vpack.c.b16 %v212, %v210
  %v323 = vpack.c.b16 %v213, %v211
  %v324 = vpack.c.b16 %v216, %v214
  %v325 = vpack.c.b16 %v217, %v215
  %v326 = vpack.c.b16 %v220, %v218
  %v327 = vpack.c.b16 %v221, %v219
  %v328 = vpack.c.b16 %v224, %v222
  %v329 = vpack.c.b16 %v225, %v223
  %v330 = vpack.c.b16 %v228, %v226
  %v331 = vpack.c.b16 %v229, %v227
  %v332 = vpack.c.b16 %v232, %v230
  %v333 = vpack.c.b16 %v233, %v231
  %v334 = vpack.c.b16 %v236, %v234
  %v335 = vpack.c.b16 %v237, %v235
  %v336 = vpack.c.b16 %v240, %v238
  %v337 = vpack.c.b16 %v241, %v239
  %v338 = vpack.c.b16 %v244, %v242
  %v339 = vpack.c.b16 %v245, %v243
  %v340 = vpack.c.b16 %v248, %v246
  %v341 = vpack.c.b16 %v249, %v247
  %v342 = vpack.c.b16 %v252, %v250
  %v343 = vpack.c.b16 %v253, %v251
  %v344 = vpack.c.b16 %v256, %v254
  %v345 = vpack.c.b16 %v257, %v255
  %v346 = vpack.c.b16 %v260, %v258
  %v347 = vpack.c.b16 %v261, %v259
  %v348 = vpack.c.b16 %v264, %v262
  %v349 = vpack.c.b16 %v265, %v263
  %v350 = vpack.c.b16 %v268, %v266
  %v351 = vpack.c.b16 %v269, %v267
  %v352 = vpack.c.b16 %v272, %v270
  %v353 = vpack.c.b16 %v273, %v271
  %v354 = vpack.c.b16 %v276, %v274
  %v355 = vpack.c.b16 %v277, %v275
  %v356 = vpack.c.b16 %v280, %v278
  %v357 = vpack.c.b16 %v281, %v279
  %v358 = vpack.c.b16 %v284, %v282
  %v359 = vpack.c.b16 %v285, %v283
  %v360 = vpack.c.b16 %v288, %v286
  %v361 = vpack.c.b16 %v289, %v287
  %v362 = vpack.c.b16 %v292, %v290
  %v363 = vpack.c.b16 %v293, %v291
  %v364 = vpack.c.b16 %v296, %v294
  %v365 = vpack.c.b16 %v297, %v295
  %v366 = vpack.c.b16 %v300, %v298
  %v367 = vpack.c.b16 %v301, %v299
  %v368 = vpack.c.b16 %v304, %v302
  %v369 = vpack.c.b16 %v305, %v303
  %v466 = vunpack.c.l.b16 %v82
  %v467 = vunpack.c.l.b16 %v83
  %v468 = vunpack.c.l.b16 %v84
  %v469 = vunpack.c.l.b16 %v85
  %v470 = vunpack.c.l.b16 %v86
  %v471 = vunpack.c.l.b16 %v87
  %v472 = vunpack.c.l.b16 %v88
  %v473 = vunpack.c.l.b16 %v89
  %v474 = vunpack.c.l.b16 %v90
  %v475 = vunpack.c.l.b16 %v91
  %v476 = vunpack.c.l.b16 %v92
  %v477 = vunpack.c.l.b16 %v93
  %v478 = vunpack.c.l.b16 %v94
  %v479 = vunpack.c.l.b16 %v95
  %v480 = vunpack.c.l.b16 %v96
  %v481 = vunpack.c.l.b16 %v97
  %v482 = vunpack.c.l.b16 %v98
  %v483 = vunpack.c.l.b16 %v99
  %v484 = vunpack.c.l.b16 %v100
  %v485 = vunpack.c.l.b16 %v101
  %v486 = vunpack.c.l.b16 %v102
  %v487 = vunpack.c.l.b16 %v103
  %v488 = vunpack.c.l.b16 %v104
  %v489 = vunpack.c.l.b16 %v105
  %v490 = vunpack.c.l.b16 %v106
  %v491 = vunpack.c.l.b16 %v107
  %v492 = vunpack.c.l.b16 %v108
  %v493 = vunpack.c.l.b16 %v109
  %v494 = vunpack.c.l.b16 %v110
  %v495 = vunpack.c.l.b16 %v111
  %v496 = vunpack.c.l.b16 %v112
  %v497 = vunpack.c.l.b16 %v113
  %v498 = vpack.c.b16 %v467, %v466
  %v499 = vpack.c.b16 %v469, %v468
  %v500 = vpack.c.b16 %v471, %v470
  %v501 = vpack.c.b16 %v473, %v472
  %v502 = vpack.c.b16 %v475, %v474
  %v503 = vpack.c.b16 %v477, %v476
  %v504 = vpack.c.b16 %v479, %v478
  %v505 = vpack.c.b16 %v481, %v480
  %v506 = vpack.c.b16 %v483, %v482
  %v507 = vpack.c.b16 %v485, %v484
  %v508 = vpack.c.b16 %v487, %v486
  %v509 = vpack.c.b16 %v489, %v488
  %v510 = vpack.c.b16 %v491, %v490
  %v511 = vpack.c.b16 %v493, %v492
  %v512 = vpack.c.b16 %v495, %v494
  %v513 = vpack.c.b16 %v497, %v496
  %530 = vmatprep.subr.bf16.mxu0 0
  %531 = vmatpush1.bf16.msra.mxu0 %v505
  %532 = vmatprep.subr.bf16.mxu0 0
  %533 = vmatpush1.bf16.msra.mxu0 %v504
  %534 = vmatprep.subr.bf16.mxu0 0
  %535 = vmatpush1.bf16.msra.mxu0 %v503
  %536 = vmatprep.subr.bf16.mxu0 0
  %537 = vmatpush1.bf16.msra.mxu0 %v502
  %538 = vmatprep.subr.bf16.mxu0 0
  %539 = vmatpush1.bf16.msra.mxu0 %v501
  %540 = vmatprep.subr.bf16.mxu0 0
  %541 = vmatpush1.bf16.msra.mxu0 %v500
  %542 = vmatprep.subr.bf16.mxu0 0
  %543 = vmatpush1.bf16.msra.mxu0 %v499
  %544 = vmatprep.subr.bf16.mxu0 0
  %545 = vmatpush1.bf16.msra.mxu0 %v498
  %546 = vmatprep.subr.bf16.mxu0 0
  %547 = vmatpush2.bf16.msra.mxu0 %v513
  %548 = vmatprep.subr.bf16.mxu0 0
  %549 = vmatpush2.bf16.msra.mxu0 %v512
  %550 = vmatprep.subr.bf16.mxu0 0
  %551 = vmatpush2.bf16.msra.mxu0 %v511
  %552 = vmatprep.subr.bf16.mxu0 0
  %553 = vmatpush2.bf16.msra.mxu0 %v510
  %554 = vmatprep.subr.bf16.mxu0 0
  %555 = vmatpush2.bf16.msra.mxu0 %v509
  %556 = vmatprep.subr.bf16.mxu0 0
  %557 = vmatpush2.bf16.msra.mxu0 %v508
  %558 = vmatprep.subr.bf16.mxu0 0
  %559 = vmatpush2.bf16.msra.mxu0 %v507
  %560 = vmatprep.subr.bf16.mxu0 0
  %561 = vmatpush2.bf16.msra.mxu0 %v506
  %562 = vmatprep.mubr.bf16.mxu0 %v307
  %563 = vmatmul.mubr.bf16.gmra.mxu0 %v306
  %v564 = vpop.f32.mrf.mxu0
  %v565 = vadd.f32 0.0, %v564
  %v566 = vpop.f32.mrf.mxu0
  %v567 = vpop.f32.mrf.mxu0
  %v568 = vadd.f32 0.0, %v567
  %v569 = vpop.f32.mrf.mxu0
  %570 = vmatprep.mubr.bf16.mxu0 %v309
  %571 = vmatmul.mubr.bf16.gmra.mxu0 %v308
  %v572 = vpop.f32.mrf.mxu0
  %v573 = vadd.f32 0.0, %v572
  %v574 = vpop.f32.mrf.mxu0
  %v575 = vpop.f32.mrf.mxu0
  %v576 = vadd.f32 0.0, %v575
  %v577 = vpop.f32.mrf.mxu0
  %578 = vmatprep.mubr.bf16.mxu0 %v311
  %579 = vmatmul.mubr.bf16.gmra.mxu0 %v310
  %v580 = vpop.f32.mrf.mxu0
  %v581 = vadd.f32 0.0, %v580
  %v582 = vpop.f32.mrf.mxu0
  %v583 = vpop.f32.mrf.mxu0
  %v584 = vadd.f32 0.0, %v583
  %v585 = vpop.f32.mrf.mxu0
  %586 = vmatprep.mubr.bf16.mxu0 %v313
  %587 = vmatmul.mubr.bf16.gmra.mxu0 %v312
  %v588 = vpop.f32.mrf.mxu0
  %v589 = vadd.f32 0.0, %v588
  %v590 = vpop.f32.mrf.mxu0
  %v591 = vpop.f32.mrf.mxu0
  %v592 = vadd.f32 0.0, %v591
  %v593 = vpop.f32.mrf.mxu0
  %594 = vmatprep.mubr.bf16.mxu0 %v315
  %595 = vmatmul.mubr.bf16.gmra.mxu0 %v314
  %v596 = vpop.f32.mrf.mxu0
  %v597 = vadd.f32 0.0, %v596
  %v598 = vpop.f32.mrf.mxu0
  %v599 = vpop.f32.mrf.mxu0
  %v600 = vadd.f32 0.0, %v599
  %v601 = vpop.f32.mrf.mxu0
  %602 = vmatprep.mubr.bf16.mxu0 %v317
  %603 = vmatmul.mubr.bf16.gmra.mxu0 %v316
  %v604 = vpop.f32.mrf.mxu0
  %v605 = vadd.f32 0.0, %v604
  %v606 = vpop.f32.mrf.mxu0
  %v607 = vpop.f32.mrf.mxu0
  %v608 = vadd.f32 0.0, %v607
  %v609 = vpop.f32.mrf.mxu0
  %610 = vmatprep.mubr.bf16.mxu0 %v319
  %611 = vmatmul.mubr.bf16.gmra.mxu0 %v318
  %v612 = vpop.f32.mrf.mxu0
  %v613 = vadd.f32 0.0, %v612
  %v614 = vpop.f32.mrf.mxu0
  %v615 = vpop.f32.mrf.mxu0
  %v616 = vadd.f32 0.0, %v615
  %v617 = vpop.f32.mrf.mxu0
  %618 = vmatprep.mubr.bf16.mxu0 %v321
  %619 = vmatmul.mubr.bf16.gmra.mxu0 %v320
  %v620 = vpop.f32.mrf.mxu0
  %v621 = vadd.f32 0.0, %v620
  %v622 = vpop.f32.mrf.mxu0
  %v623 = vpop.f32.mrf.mxu0
  %v624 = vadd.f32 0.0, %v623
  %v625 = vpop.f32.mrf.mxu0
  %626 = vmatprep.mubr.bf16.mxu0 %v323
  %627 = vmatmul.mubr.bf16.gmra.mxu0 %v322
  %v628 = vpop.f32.mrf.mxu0
  %v629 = vadd.f32 0.0, %v628
  %v630 = vpop.f32.mrf.mxu0
  %v631 = vpop.f32.mrf.mxu0
  %v632 = vadd.f32 0.0, %v631
  %v633 = vpop.f32.mrf.mxu0
  %634 = vmatprep.mubr.bf16.mxu0 %v325
  %635 = vmatmul.mubr.bf16.gmra.mxu0 %v324
  %v636 = vpop.f32.mrf.mxu0
  %v637 = vadd.f32 0.0, %v636
  %v638 = vpop.f32.mrf.mxu0
  %v639 = vpop.f32.mrf.mxu0
  %v640 = vadd.f32 0.0, %v639
  %v641 = vpop.f32.mrf.mxu0
  %642 = vmatprep.mubr.bf16.mxu0 %v327
  %643 = vmatmul.mubr.bf16.gmra.mxu0 %v326
  %v644 = vpop.f32.mrf.mxu0
  %v645 = vadd.f32 0.0, %v644
  %v646 = vpop.f32.mrf.mxu0
  %v647 = vpop.f32.mrf.mxu0
  %v648 = vadd.f32 0.0, %v647
  %v649 = vpop.f32.mrf.mxu0
  %650 = vmatprep.mubr.bf16.mxu0 %v329
  %651 = vmatmul.mubr.bf16.gmra.mxu0 %v328
  %v652 = vpop.f32.mrf.mxu0
  %v653 = vadd.f32 0.0, %v652
  %v654 = vpop.f32.mrf.mxu0
  %v655 = vpop.f32.mrf.mxu0
  %v656 = vadd.f32 0.0, %v655
  %v657 = vpop.f32.mrf.mxu0
  %658 = vmatprep.mubr.bf16.mxu0 %v331
  %659 = vmatmul.mubr.bf16.gmra.mxu0 %v330
  %v660 = vpop.f32.mrf.mxu0
  %v661 = vadd.f32 0.0, %v660
  %v662 = vpop.f32.mrf.mxu0
  %v663 = vpop.f32.mrf.mxu0
  %v664 = vadd.f32 0.0, %v663
  %v665 = vpop.f32.mrf.mxu0
  %666 = vmatprep.mubr.bf16.mxu0 %v333
  %667 = vmatmul.mubr.bf16.gmra.mxu0 %v332
  %v668 = vpop.f32.mrf.mxu0
  %v669 = vadd.f32 0.0, %v668
  %v670 = vpop.f32.mrf.mxu0
  %v671 = vpop.f32.mrf.mxu0
  %v672 = vadd.f32 0.0, %v671
  %v673 = vpop.f32.mrf.mxu0
  %674 = vmatprep.mubr.bf16.mxu0 %v335
  %675 = vmatmul.mubr.bf16.gmra.mxu0 %v334
  %v676 = vpop.f32.mrf.mxu0
  %v677 = vadd.f32 0.0, %v676
  %v678 = vpop.f32.mrf.mxu0
  %v679 = vpop.f32.mrf.mxu0
  %v680 = vadd.f32 0.0, %v679
  %v681 = vpop.f32.mrf.mxu0
  %682 = vmatprep.mubr.bf16.mxu0 %v337
  %683 = vmatmul.mubr.bf16.gmra.mxu0 %v336
  %v684 = vpop.f32.mrf.mxu0
  %v685 = vadd.f32 0.0, %v684
  %v686 = vpop.f32.mrf.mxu0
  %v687 = vpop.f32.mrf.mxu0
  %v688 = vadd.f32 0.0, %v687
  %v689 = vpop.f32.mrf.mxu0
  %690 = vmatprep.mubr.bf16.mxu0 %v339
  %691 = vmatmul.mubr.bf16.gmra.mxu0 %v338
  %v692 = vpop.f32.mrf.mxu0
  %v693 = vadd.f32 0.0, %v692
  %v694 = vpop.f32.mrf.mxu0
  %v695 = vpop.f32.mrf.mxu0
  %v696 = vadd.f32 0.0, %v695
  %v697 = vpop.f32.mrf.mxu0
  %698 = vmatprep.mubr.bf16.mxu0 %v341
  %699 = vmatmul.mubr.bf16.gmra.mxu0 %v340
  %v700 = vpop.f32.mrf.mxu0
  %v701 = vadd.f32 0.0, %v700
  %v702 = vpop.f32.mrf.mxu0
  %v703 = vpop.f32.mrf.mxu0
  %v704 = vadd.f32 0.0, %v703
  %v705 = vpop.f32.mrf.mxu0
  %706 = vmatprep.mubr.bf16.mxu0 %v343
  %707 = vmatmul.mubr.bf16.gmra.mxu0 %v342
  %v708 = vpop.f32.mrf.mxu0
  %v709 = vadd.f32 0.0, %v708
  %v710 = vpop.f32.mrf.mxu0
  %v711 = vpop.f32.mrf.mxu0
  %v712 = vadd.f32 0.0, %v711
  %v713 = vpop.f32.mrf.mxu0
  %714 = vmatprep.mubr.bf16.mxu0 %v345
  %715 = vmatmul.mubr.bf16.gmra.mxu0 %v344
  %v716 = vpop.f32.mrf.mxu0
  %v717 = vadd.f32 0.0, %v716
  %v718 = vpop.f32.mrf.mxu0
  %v719 = vpop.f32.mrf.mxu0
  %v720 = vadd.f32 0.0, %v719
  %v721 = vpop.f32.mrf.mxu0
  %722 = vmatprep.mubr.bf16.mxu0 %v347
  %723 = vmatmul.mubr.bf16.gmra.mxu0 %v346
  %v724 = vpop.f32.mrf.mxu0
  %v725 = vadd.f32 0.0, %v724
  %v726 = vpop.f32.mrf.mxu0
  %v727 = vpop.f32.mrf.mxu0
  %v728 = vadd.f32 0.0, %v727
  %v729 = vpop.f32.mrf.mxu0
  %730 = vmatprep.mubr.bf16.mxu0 %v349
  %731 = vmatmul.mubr.bf16.gmra.mxu0 %v348
  %v732 = vpop.f32.mrf.mxu0
  %v733 = vadd.f32 0.0, %v732
  %v734 = vpop.f32.mrf.mxu0
  %v735 = vpop.f32.mrf.mxu0
  %v736 = vadd.f32 0.0, %v735
  %v737 = vpop.f32.mrf.mxu0
  %738 = vmatprep.mubr.bf16.mxu0 %v351
  %739 = vmatmul.mubr.bf16.gmra.mxu0 %v350
  %v740 = vpop.f32.mrf.mxu0
  %v741 = vadd.f32 0.0, %v740
  %v742 = vpop.f32.mrf.mxu0
  %v743 = vpop.f32.mrf.mxu0
  %v744 = vadd.f32 0.0, %v743
  %v745 = vpop.f32.mrf.mxu0
  %746 = vmatprep.mubr.bf16.mxu0 %v353
  %747 = vmatmul.mubr.bf16.gmra.mxu0 %v352
  %v748 = vpop.f32.mrf.mxu0
  %v749 = vadd.f32 0.0, %v748
  %v750 = vpop.f32.mrf.mxu0
  %v751 = vpop.f32.mrf.mxu0
  %v752 = vadd.f32 0.0, %v751
  %v753 = vpop.f32.mrf.mxu0
  %754 = vmatprep.mubr.bf16.mxu0 %v355
  %755 = vmatmul.mubr.bf16.gmra.mxu0 %v354
  %v756 = vpop.f32.mrf.mxu0
  %v757 = vadd.f32 0.0, %v756
  %v758 = vpop.f32.mrf.mxu0
  %v759 = vpop.f32.mrf.mxu0
  %v760 = vadd.f32 0.0, %v759
  %v761 = vpop.f32.mrf.mxu0
  %762 = vmatprep.mubr.bf16.mxu0 %v357
  %763 = vmatmul.mubr.bf16.gmra.mxu0 %v356
  %v764 = vpop.f32.mrf.mxu0
  %v765 = vadd.f32 0.0, %v764
  %v766 = vpop.f32.mrf.mxu0
  %v767 = vpop.f32.mrf.mxu0
  %v768 = vadd.f32 0.0, %v767
  %v769 = vpop.f32.mrf.mxu0
  %770 = vmatprep.mubr.bf16.mxu0 %v359
  %771 = vmatmul.mubr.bf16.gmra.mxu0 %v358
  %v772 = vpop.f32.mrf.mxu0
  %v773 = vadd.f32 0.0, %v772
  %v774 = vpop.f32.mrf.mxu0
  %v775 = vpop.f32.mrf.mxu0
  %v776 = vadd.f32 0.0, %v775
  %v777 = vpop.f32.mrf.mxu0
  %778 = vmatprep.mubr.bf16.mxu0 %v361
  %779 = vmatmul.mubr.bf16.gmra.mxu0 %v360
  %v780 = vpop.f32.mrf.mxu0
  %v781 = vadd.f32 0.0, %v780
  %v782 = vpop.f32.mrf.mxu0
  %v783 = vpop.f32.mrf.mxu0
  %v784 = vadd.f32 0.0, %v783
  %v785 = vpop.f32.mrf.mxu0
  %786 = vmatprep.mubr.bf16.mxu0 %v363
  %787 = vmatmul.mubr.bf16.gmra.mxu0 %v362
  %v788 = vpop.f32.mrf.mxu0
  %v789 = vadd.f32 0.0, %v788
  %v790 = vpop.f32.mrf.mxu0
  %v791 = vpop.f32.mrf.mxu0
  %v792 = vadd.f32 0.0, %v791
  %v793 = vpop.f32.mrf.mxu0
  %794 = vmatprep.mubr.bf16.mxu0 %v365
  %795 = vmatmul.mubr.bf16.gmra.mxu0 %v364
  %v796 = vpop.f32.mrf.mxu0
  %v797 = vadd.f32 0.0, %v796
  %v798 = vpop.f32.mrf.mxu0
  %v799 = vpop.f32.mrf.mxu0
  %v800 = vadd.f32 0.0, %v799
  %v801 = vpop.f32.mrf.mxu0
  %802 = vmatprep.mubr.bf16.mxu0 %v367
  %803 = vmatmul.mubr.bf16.gmra.mxu0 %v366
  %v804 = vpop.f32.mrf.mxu0
  %v805 = vadd.f32 0.0, %v804
  %v806 = vpop.f32.mrf.mxu0
  %v807 = vpop.f32.mrf.mxu0
  %v808 = vadd.f32 0.0, %v807
  %v809 = vpop.f32.mrf.mxu0
  %810 = vmatprep.mubr.bf16.mxu0 %v369
  %811 = vmatmul.mubr.bf16.gmra.mxu0 %v368
  %v812 = vpop.f32.mrf.mxu0
  %v813 = vadd.f32 0.0, %v812
  %v814 = vpop.f32.mrf.mxu0
  %v815 = vpop.f32.mrf.mxu0
  %v816 = vadd.f32 0.0, %v815
  %v817 = vpop.f32.mrf.mxu0
  %818 = vdwg.mxu0
  %v819 = vld [vmem:[%s2] sm:$0x1]
  %v821 = vlaneseq
  %v822 = vshrl.u32 %v821, 7
  %v823 = vsub.s32 0, %v822
  %v824 = vrot.slane %v819, %v823
  %v826 = vmul.f32 %v565, %v824
  %v827 = vmul.f32 %v568, %v824
  %v828 = vmul.f32 %v573, %v824
  %v829 = vmul.f32 %v576, %v824
  %v830 = vmul.f32 %v581, %v824
  %v831 = vmul.f32 %v584, %v824
  %v832 = vmul.f32 %v589, %v824
  %v833 = vmul.f32 %v592, %v824
  %v834 = vmul.f32 %v597, %v824
  %v835 = vmul.f32 %v600, %v824
  %v836 = vmul.f32 %v605, %v824
  %v837 = vmul.f32 %v608, %v824
  %v838 = vmul.f32 %v613, %v824
  %v839 = vmul.f32 %v616, %v824
  %v840 = vmul.f32 %v621, %v824
  %v841 = vmul.f32 %v624, %v824
  %v842 = vmul.f32 %v629, %v824
  %v843 = vmul.f32 %v632, %v824
  %v844 = vmul.f32 %v637, %v824
  %v845 = vmul.f32 %v640, %v824
  %v846 = vmul.f32 %v645, %v824
  %v847 = vmul.f32 %v648, %v824
  %v848 = vmul.f32 %v653, %v824
  %v849 = vmul.f32 %v656, %v824
  %v850 = vmul.f32 %v661, %v824
  %v851 = vmul.f32 %v664, %v824
  %v852 = vmul.f32 %v669, %v824
  %v853 = vmul.f32 %v672, %v824
  %v854 = vmul.f32 %v677, %v824
  %v855 = vmul.f32 %v680, %v824
  %v856 = vmul.f32 %v685, %v824
  %v857 = vmul.f32 %v688, %v824
  %v858 = vmul.f32 %v693, %v824
  %v859 = vmul.f32 %v696, %v824
  %v860 = vmul.f32 %v701, %v824
  %v861 = vmul.f32 %v704, %v824
  %v862 = vmul.f32 %v709, %v824
  %v863 = vmul.f32 %v712, %v824
  %v864 = vmul.f32 %v717, %v824
  %v865 = vmul.f32 %v720, %v824
  %v866 = vmul.f32 %v725, %v824
  %v867 = vmul.f32 %v728, %v824
  %v868 = vmul.f32 %v733, %v824
  %v869 = vmul.f32 %v736, %v824
  %v870 = vmul.f32 %v741, %v824
  %v871 = vmul.f32 %v744, %v824
  %v872 = vmul.f32 %v749, %v824
  %v873 = vmul.f32 %v752, %v824
  %v874 = vmul.f32 %v757, %v824
  %v875 = vmul.f32 %v760, %v824
  %v876 = vmul.f32 %v765, %v824
  %v877 = vmul.f32 %v768, %v824
  %v878 = vmul.f32 %v773, %v824
  %v879 = vmul.f32 %v776, %v824
  %v880 = vmul.f32 %v781, %v824
  %v881 = vmul.f32 %v784, %v824
  %v882 = vmul.f32 %v789, %v824
  %v883 = vmul.f32 %v792, %v824
  %v884 = vmul.f32 %v797, %v824
  %v885 = vmul.f32 %v800, %v824
  %v886 = vmul.f32 %v805, %v824
  %v887 = vmul.f32 %v808, %v824
  %v888 = vmul.f32 %v813, %v824
  %v889 = vmul.f32 %v816, %v824
  %v890 = vld [vmem:[%s3] sm:$0x1]
  %v892 = vlaneseq
  %v893 = vshrl.u32 %v892, 7
  %v894 = vsub.s32 0, %v893
  %v895 = vrot.slane %v890, %v894
  %v897 = vadd.f32 %v826, %v895
  %v898 = vadd.f32 %v827, %v895
  %v899 = vadd.f32 %v828, %v895
  %v900 = vadd.f32 %v829, %v895
  %v901 = vadd.f32 %v830, %v895
  %v902 = vadd.f32 %v831, %v895
  %v903 = vadd.f32 %v832, %v895
  %v904 = vadd.f32 %v833, %v895
  %v905 = vadd.f32 %v834, %v895
  %v906 = vadd.f32 %v835, %v895
  %v907 = vadd.f32 %v836, %v895
  %v908 = vadd.f32 %v837, %v895
  %v909 = vadd.f32 %v838, %v895
  %v910 = vadd.f32 %v839, %v895
  %v911 = vadd.f32 %v840, %v895
  %v912 = vadd.f32 %v841, %v895
  %v913 = vadd.f32 %v842, %v895
  %v914 = vadd.f32 %v843, %v895
  %v915 = vadd.f32 %v844, %v895
  %v916 = vadd.f32 %v845, %v895
  %v917 = vadd.f32 %v846, %v895
  %v918 = vadd.f32 %v847, %v895
  %v919 = vadd.f32 %v848, %v895
  %v920 = vadd.f32 %v849, %v895
  %v921 = vadd.f32 %v850, %v895
  %v922 = vadd.f32 %v851, %v895
  %v923 = vadd.f32 %v852, %v895
  %v924 = vadd.f32 %v853, %v895
  %v925 = vadd.f32 %v854, %v895
  %v926 = vadd.f32 %v855, %v895
  %v927 = vadd.f32 %v856, %v895
  %v928 = vadd.f32 %v857, %v895
  %v929 = vadd.f32 %v858, %v895
  %v930 = vadd.f32 %v859, %v895
  %v931 = vadd.f32 %v860, %v895
  %v932 = vadd.f32 %v861, %v895
  %v933 = vadd.f32 %v862, %v895
  %v934 = vadd.f32 %v863, %v895
  %v935 = vadd.f32 %v864, %v895
  %v936 = vadd.f32 %v865, %v895
  %v937 = vadd.f32 %v866, %v895
  %v938 = vadd.f32 %v867, %v895
  %v939 = vadd.f32 %v868, %v895
  %v940 = vadd.f32 %v869, %v895
  %v941 = vadd.f32 %v870, %v895
  %v942 = vadd.f32 %v871, %v895
  %v943 = vadd.f32 %v872, %v895
  %v944 = vadd.f32 %v873, %v895
  %v945 = vadd.f32 %v874, %v895
  %v946 = vadd.f32 %v875, %v895
  %v947 = vadd.f32 %v876, %v895
  %v948 = vadd.f32 %v877, %v895
  %v949 = vadd.f32 %v878, %v895
  %v950 = vadd.f32 %v879, %v895
  %v951 = vadd.f32 %v880, %v895
  %v952 = vadd.f32 %v881, %v895
  %v953 = vadd.f32 %v882, %v895
  %v954 = vadd.f32 %v883, %v895
  %v955 = vadd.f32 %v884, %v895
  %v956 = vadd.f32 %v885, %v895
  %v957 = vadd.f32 %v886, %v895
  %v958 = vadd.f32 %v887, %v895
  %v959 = vadd.f32 %v888, %v895
  %v960 = vadd.f32 %v889, %v895
  %961 = vst [vmem:[%s4] sm:$0xff] %v897
  %962 = vst [vmem:[%s4 + $0x8] sm:$0xff] %v898
  %963 = vst [vmem:[%s4 + $0x10] sm:$0xff] %v899
  %964 = vst [vmem:[%s4 + $0x18] sm:$0xff] %v900
  %965 = vst [vmem:[%s4 + $0x20] sm:$0xff] %v901
  %966 = vst [vmem:[%s4 + $0x28] sm:$0xff] %v902
  %967 = vst [vmem:[%s4 + $0x30] sm:$0xff] %v903
  %968 = vst [vmem:[%s4 + $0x38] sm:$0xff] %v904
  %969 = vst [vmem:[%s4 + $0x40] sm:$0xff] %v905
  %970 = vst [vmem:[%s4 + $0x48] sm:$0xff] %v906
  %971 = vst [vmem:[%s4 + $0x50] sm:$0xff] %v907
  %972 = vst [vmem:[%s4 + $0x58] sm:$0xff] %v908
  %973 = vst [vmem:[%s4 + $0x60] sm:$0xff] %v909
  %974 = vst [vmem:[%s4 + $0x68] sm:$0xff] %v910
  %975 = vst [vmem:[%s4 + $0x70] sm:$0xff] %v911
  %976 = vst [vmem:[%s4 + $0x78] sm:$0xff] %v912
  %977 = vst [vmem:[%s4 + $0x80] sm:$0xff] %v913
  %978 = vst [vmem:[%s4 + $0x88] sm:$0xff] %v914
  %979 = vst [vmem:[%s4 + $0x90] sm:$0xff] %v915
  %980 = vst [vmem:[%s4 + $0x98] sm:$0xff] %v916
  %981 = vst [vmem:[%s4 + $0xa0] sm:$0xff] %v917
  %982 = vst [vmem:[%s4 + $0xa8] sm:$0xff] %v918
  %983 = vst [vmem:[%s4 + $0xb0] sm:$0xff] %v919
  %984 = vst [vmem:[%s4 + $0xb8] sm:$0xff] %v920
  %985 = vst [vmem:[%s4 + $0xc0] sm:$0xff] %v921
  %986 = vst [vmem:[%s4 + $0xc8] sm:$0xff] %v922
  %987 = vst [vmem:[%s4 + $0xd0] sm:$0xff] %v923
  %988 = vst [vmem:[%s4 + $0xd8] sm:$0xff] %v924
  %989 = vst [vmem:[%s4 + $0xe0] sm:$0xff] %v925
  %990 = vst [vmem:[%s4 + $0xe8] sm:$0xff] %v926
  %991 = vst [vmem:[%s4 + $0xf0] sm:$0xff] %v927
  %992 = vst [vmem:[%s4 + $0xf8] sm:$0xff] %v928
  %993 = vst [vmem:[%s4 + $0x100] sm:$0xff] %v929
  %994 = vst [vmem:[%s4 + $0x108] sm:$0xff] %v930
  %995 = vst [vmem:[%s4 + $0x110] sm:$0xff] %v931
  %996 = vst [vmem:[%s4 + $0x118] sm:$0xff] %v932
  %997 = vst [vmem:[%s4 + $0x120] sm:$0xff] %v933
  %998 = vst [vmem:[%s4 + $0x128] sm:$0xff] %v934
  %999 = vst [vmem:[%s4 + $0x130] sm:$0xff] %v935
  %1000 = vst [vmem:[%s4 + $0x138] sm:$0xff] %v936
  %1001 = vst [vmem:[%s4 + $0x140] sm:$0xff] %v937
  %1002 = vst [vmem:[%s4 + $0x148] sm:$0xff] %v938
  %1003 = vst [vmem:[%s4 + $0x150] sm:$0xff] %v939
  %1004 = vst [vmem:[%s4 + $0x158] sm:$0xff] %v940
  %1005 = vst [vmem:[%s4 + $0x160] sm:$0xff] %v941
  %1006 = vst [vmem:[%s4 + $0x168] sm:$0xff] %v942
  %1007 = vst [vmem:[%s4 + $0x170] sm:$0xff] %v943
  %1008 = vst [vmem:[%s4 + $0x178] sm:$0xff] %v944
  %1009 = vst [vmem:[%s4 + $0x180] sm:$0xff] %v945
  %1010 = vst [vmem:[%s4 + $0x188] sm:$0xff] %v946
  %1011 = vst [vmem:[%s4 + $0x190] sm:$0xff] %v947
  %1012 = vst [vmem:[%s4 + $0x198] sm:$0xff] %v948
  %1013 = vst [vmem:[%s4 + $0x1a0] sm:$0xff] %v949
  %1014 = vst [vmem:[%s4 + $0x1a8] sm:$0xff] %v950
  %1015 = vst [vmem:[%s4 + $0x1b0] sm:$0xff] %v951
  %1016 = vst [vmem:[%s4 + $0x1b8] sm:$0xff] %v952
  %1017 = vst [vmem:[%s4 + $0x1c0] sm:$0xff] %v953
  %1018 = vst [vmem:[%s4 + $0x1c8] sm:$0xff] %v954
  %1019 = vst [vmem:[%s4 + $0x1d0] sm:$0xff] %v955
  %1020 = vst [vmem:[%s4 + $0x1d8] sm:$0xff] %v956
  %1021 = vst [vmem:[%s4 + $0x1e0] sm:$0xff] %v957
  %1022 = vst [vmem:[%s4 + $0x1e8] sm:$0xff] %v958
  %1023 = vst [vmem:[%s4 + $0x1f0] sm:$0xff] %v959
  %1024 = vst [vmem:[%s4 + $0x1f8] sm:$0xff] %v960
  // Predicated region
  $region18: #{occlusion_net_forward.20} parent=0 // pred_check
    _
  $region19: #{occlusion_net_forward.20} parent=0 // pred_check_branch
    %1026 = sbr.rel (0) target = $region21
  $region20: #{occlusion_net_forward.20} parent=0 // pred_region
    _
  $region21: #{occlusion_net_forward.20} parent=0 // pred_fallthru
    _
  // Predicated region
  $region22: #{occlusion_net_forward.20} parent=0 // pred_check
    _
  $region23: #{occlusion_net_forward.20} parent=0 // pred_check_branch
    %1028 = sbr.rel (0) target = $region25
  $region24: #{occlusion_net_forward.20} parent=0 // pred_region
    _
  $region25: #{occlusion_net_forward.20} parent=0 // pred_fallthru
    _

</llo_original>
